<compile_context>
chip_gen: v7x
topology: tpu7x:2x2x1
jax: 0.10.0
libtpu: 0.0.40
codegen_flags: <defaults>
</compile_context>

<pallas_src>
import jax
import jax.numpy as jnp
from jax.experimental import pallas as pl

# ---------------------------------------------------------------- config ----
NUM_TASKS = 4                 # len(paramslist)  ("4model")
NUM_ADD = NUM_TASKS - 1       # num_additional_tasks
HIDDEN = 256                  # alpha-predictor hidden dim
STAT_DIM = 6                  # alpha-predictor input dim

B, C, H, W = 2, 4, 16, 16
IN_DIM = C * H * W
FEAT = 32
NUM_CLASSES = 10

# per-task parameter list of the synthetic encoder:  W1, b1, W2, b2
PARAM_SHAPES = [(IN_DIM, FEAT), (FEAT,), (FEAT, FEAT), (FEAT,)]
# pre-stacked slab shapes (task-major, kept 2-D per task so no in-kernel reshape)
SLAB_SHAPES = [(NUM_TASKS, IN_DIM, FEAT), (NUM_TASKS, 1, FEAT),
               (NUM_TASKS, FEAT, FEAT), (NUM_TASKS, 1, FEAT)]
NUM_LAYERS = len(PARAM_SHAPES)
STATS_WIDTH = 128             # lane-dense stats output row (avoids masked vst)


# ---------------------------------------------------- kernel A: layer stats --
def _stats_kernel(w1_ref, b1_ref, w2_ref, b2_ref, out_ref):
    """For each layer, reduce the 3 additional-task parameter rows to
    [sum, g00, g01, g02, g11, g12, g22] where G = flat @ flat.T (3x3 Gram).

    Output row l is lane-dense (128 wide); unused lanes are zero.
    """
    lane = jax.lax.broadcasted_iota(jnp.int32, (1, STATS_WIDTH), 1)  # hoisted
    for l, ref in enumerate((w1_ref, b1_ref, w2_ref, b2_ref)):       # L=4 unroll
        slab = ref[...]                                  # (T, R, C)
        rows = [slab[t] for t in range(1, NUM_TASKS)]    # additional tasks only
        total = jnp.sum(rows[0] + rows[1] + rows[2])     # sum over all elements
        vals = [total]
        for i in range(NUM_ADD):                         # upper-triangular Gram
            for j in range(i, NUM_ADD):
                vals.append(jnp.sum(rows[i] * rows[j]))
        row = jnp.zeros((1, STATS_WIDTH), jnp.float32)
        for k, v in enumerate(vals):                     # 7 scalars -> one row
            row = jnp.where(lane == k, v, row)
        out_ref[l:l + 1, :] = row


def layer_stats_raw(slabs):
    return pl.pallas_call(
        _stats_kernel,
        out_shape=jax.ShapeDtypeStruct((NUM_LAYERS, STATS_WIDTH), jnp.float32),
    )(*slabs)


# ------------------------------------------- JAX glue: 3x3 eig -> (L,6) stats
def _sym3x3_eigvals_desc(g):
    """Closed-form (trigonometric) eigenvalues of symmetric 3x3, descending.
    g = (g00, g01, g02, g11, g12, g22), each shape (L,)."""
    g00, g01, g02, g11, g12, g22 = g
    q = (g00 + g11 + g22) / 3.0
    a00, a11, a22 = g00 - q, g11 - q, g22 - q
    p2 = (a00 * a00 + a11 * a11 + a22 * a22
          + 2.0 * (g01 * g01 + g02 * g02 + g12 * g12)) / 6.0
    p = jnp.sqrt(jnp.maximum(p2, 0.0))
    ps = jnp.where(p > 0.0, p, 1.0)
    b00, b11, b22 = a00 / ps, a11 / ps, a22 / ps
    b01, b02, b12 = g01 / ps, g02 / ps, g12 / ps
    det_b = (b00 * (b11 * b22 - b12 * b12)
             - b01 * (b01 * b22 - b12 * b02)
             + b02 * (b01 * b12 - b11 * b02))
    r = jnp.clip(det_b / 2.0, -1.0, 1.0)
    # TODO(synk): arccos has no Mosaic lowering, so this tiny eigensolve stays
    #             in plain (jitted) JAX; it is a handful of scalar ops per layer.
    phi = jnp.arccos(r) / 3.0
    e1 = q + 2.0 * p * jnp.cos(phi)
    e3 = q + 2.0 * p * jnp.cos(phi + 2.0 * jnp.pi / 3.0)
    e2 = 3.0 * q - e1 - e3
    eig = jnp.stack([e1, e2, e3], axis=-1)               # (L, 3) descending
    return jnp.where(p[:, None] > 0.0, eig, q[:, None])


def compute_layer_stats(slabs):
    """Equivalent of AdaMerging.get_alphas() statistics: (L, 6) =
    [mean, std, var, magnitude, top_sv, numerical rank]."""
    raw = layer_stats_raw(slabs)                         # (L, 128)
    s = raw[:, 0]
    g = tuple(raw[:, k] for k in range(1, 7))            # g00,g01,g02,g11,g12,g22
    ss = g[0] + g[3] + g[5]                              # sum of squares (trace G)
    n = jnp.asarray([NUM_ADD * sh[1] * sh[2] for sh in SLAB_SHAPES], jnp.float32)
    mean = s / n
    var = jnp.maximum((ss - n * mean * mean) / (n - 1.0), 0.0)  # unbiased, clamped
    std = jnp.sqrt(var)
    mag = jnp.sqrt(ss)                                   # flat.norm(p=2)
    sv = jnp.sqrt(jnp.maximum(_sym3x3_eigvals_desc(g), 0.0))    # singular values
    top_sv = sv[:, 0]
    rank = jnp.sum((sv > 1e-3).astype(jnp.float32), axis=-1)
    return jnp.stack([mean, std, var, mag, top_sv, rank], axis=-1)   # (L, 6)


# ------------------------- kernel B: alpha MLP + merge + encoder + head ------
def _fused_forward_kernel(stats_ref, w1p_ref, b1p_ref, w2p_ref, b2p_ref,
                          w3p_ref, b3p_ref, x_ref,
                          sw1_ref, sb1_ref, sw2_ref, sb2_ref,
                          hw_ref, hb_ref, out_ref):
    # ---- LayerwiseAlphaPredictor: batched Linear-ReLU-Linear-ReLU-Linear-Softmax
    st = stats_ref[...]                                          # (L, 1, 6)
    h = jnp.einsum('lqk,lkh->lqh', st, w1p_ref[...],
                   preferred_element_type=jnp.float32) + b1p_ref[...]
    h = jnp.maximum(h, 0.0)
    h = jnp.einsum('lqk,lkh->lqh', h, w2p_ref[...],
                   preferred_element_type=jnp.float32) + b2p_ref[...]
    h = jnp.maximum(h, 0.0)
    logit = jnp.einsum('lqk,lkh->lqh', h, w3p_ref[...],
                       preferred_element_type=jnp.float32) + b3p_ref[...]
    m = jnp.max(logit, axis=-1, keepdims=True)
    e = jnp.exp(logit - m)
    alphas = e * pl.reciprocal(jnp.sum(e, axis=-1, keepdims=True), approx=True)
    # alphas: (L, 1, NUM_ADD); the base task's coefficient is fixed to 1.

    # ---- merge: merged_l = param[0] + sum_t alphas[l, t] * param[t+1]
    #      (merged tensors stay in VMEM values; never written back to HBM)
    def merge(slab_ref, l):
        slab = slab_ref[...]                                     # (T, R, C)
        merged = slab[0]
        for t in range(1, NUM_TASKS):
            merged = merged + alphas[l, 0:1, t - 1:t] * slab[t]
        return merged

    w1m = merge(sw1_ref, 0)      # (IN_DIM, FEAT)
    b1m = merge(sb1_ref, 1)      # (1, FEAT)
    w2m = merge(sw2_ref, 2)      # (FEAT, FEAT)
    b2m = merge(sb2_ref, 3)      # (1, FEAT)

    # ---- synthetic image encoder (2-layer MLP) + classification head, fused
    hh = jnp.dot(x_ref[...], w1m, preferred_element_type=jnp.float32) + b1m
    hh = jnp.maximum(hh, 0.0)
    feats = jnp.dot(hh, w2m, preferred_element_type=jnp.float32) + b2m
    out_ref[...] = (jnp.dot(feats, hw_ref[...],
                            preferred_element_type=jnp.float32) + hb_ref[...])


def fused_forward(stats, pred_params, x_flat, slabs, head_w, head_b):
    w1p, b1p, w2p, b2p, w3p, b3p = pred_params
    return pl.pallas_call(
        _fused_forward_kernel,
        out_shape=jax.ShapeDtypeStruct((B, NUM_CLASSES), jnp.float32),
    )(stats.reshape(NUM_LAYERS, 1, STAT_DIM),
      w1p, b1p, w2p, b2p, w3p, b3p,
      x_flat, *slabs, head_w, head_b)


# ---------------------------------------------------------------- wrappers --
def prepare_slabs(paramslist):
    """Stack the per-task parameters ONCE per layer: (NUM_TASKS, rows, cols)."""
    slabs = []
    for l, shp in enumerate(SLAB_SHAPES):
        stacked = jnp.stack(
            [paramslist[t][l].reshape(shp[1:]) for t in range(NUM_TASKS)],
            axis=0)
        slabs.append(stacked.astype(jnp.float32))
    return tuple(slabs)


@jax.jit
def adamerging_forward(x, slabs, pred_params, head_w, head_b):
    """AdaMerging.forward(): stats -> alpha prediction -> merge -> encode -> head."""
    stats = compute_layer_stats(slabs)                   # (L, 6)
    x_flat = x.reshape(B, -1)                            # NCHW -> (B, C*H*W)
    return fused_forward(stats, pred_params, x_flat, slabs, head_w, head_b)


# ---------------------------------------------------------------- init ------
def xavier_uniform(key, shape):
    fan_in, fan_out = shape
    bound = (6.0 / (fan_in + fan_out)) ** 0.5
    return jax.random.uniform(key, shape, jnp.float32, -bound, bound)


def make_params(key):
    k_tasks, k_pred, k_head = jax.random.split(key, 3)

    # paramslist: NUM_TASKS tasks x NUM_LAYERS parameter tensors
    task_keys = jax.random.split(k_tasks, NUM_TASKS * NUM_LAYERS)
    paramslist = []
    ki = 0
    for _ in range(NUM_TASKS):
        task = []
        for shp in PARAM_SHAPES:
            task.append(0.02 * jax.random.normal(task_keys[ki], shp, jnp.float32))
            ki += 1
        paramslist.append(task)

    # LayerwiseAlphaPredictor: one 3-layer MLP per model layer (stacked over L)
    pk = jax.random.split(k_pred, NUM_LAYERS * 3)
    w1 = jnp.stack([xavier_uniform(pk[3 * l + 0], (STAT_DIM, HIDDEN))
                    for l in range(NUM_LAYERS)])
    w2 = jnp.stack([xavier_uniform(pk[3 * l + 1], (HIDDEN, HIDDEN))
                    for l in range(NUM_LAYERS)])
    w3 = jnp.stack([xavier_uniform(pk[3 * l + 2], (HIDDEN, NUM_ADD))
                    for l in range(NUM_LAYERS)])
    b1 = jnp.zeros((NUM_LAYERS, 1, HIDDEN), jnp.float32)
    b2 = jnp.zeros((NUM_LAYERS, 1, HIDDEN), jnp.float32)
    b3 = jnp.zeros((NUM_LAYERS, 1, NUM_ADD), jnp.float32)
    pred_params = (w1, b1, w2, b2, w3, b3)

    # synthetic classification head
    hk1, hk2 = jax.random.split(k_head)
    head_w = 0.02 * jax.random.normal(hk1, (FEAT, NUM_CLASSES), jnp.float32)
    head_b = 0.01 * jax.random.normal(hk2, (1, NUM_CLASSES), jnp.float32)
    return paramslist, pred_params, head_w, head_b


# ---------------------------------------------------------------- main ------
if __name__ == "__main__":
    key = jax.random.PRNGKey(0)
    k_x, k_p = jax.random.split(key)
    x = jax.random.normal(k_x, (B, C, H, W), jnp.float32)   # NCHW input
    paramslist, pred_params, head_w, head_b = make_params(k_p)
    slabs = prepare_slabs(paramslist)     # pre-stacked once, reused every forward

    logits = adamerging_forward(x, slabs, pred_params, head_w, head_b)
    logits = jax.block_until_ready(logits)
    assert logits.shape == (B, NUM_CLASSES)
    assert bool(jnp.all(jnp.isfinite(logits)))
    print("KERNEL_OK")
</pallas_src>

<mosaic_0001>
module attributes {stable_mosaic.version = 11 : i64} {
  func.func @_stats_kernel(%arg0: memref<4x1024x32xf32, #tpu.memory_space<vmem>>, %arg1: memref<4x1x32xf32, #tpu.memory_space<vmem>>, %arg2: memref<4x32x32xf32, #tpu.memory_space<vmem>>, %arg3: memref<4x1x32xf32, #tpu.memory_space<vmem>>, %arg4: memref<4x128xf32, #tpu.memory_space<vmem>>) attributes {dimension_semantics = [], scalar_prefetch = 0 : i64, scratch_operands = 0 : i64, tpu.core_type = #tpu.core_type<tc>} {
    %0 = tpu.iota {dimensions = array<i32: 1>} : vector<1x128xi32>
    %c0 = arith.constant 0 : index
    %c0_0 = arith.constant 0 : index
    %c0_1 = arith.constant 0 : index
    %1 = vector.load %arg0[%c0, %c0_0, %c0_1] : memref<4x1024x32xf32, #tpu.memory_space<vmem>>, vector<4x1024x32xf32>
    %2 = vector.extract_strided_slice %1 {offsets = [1, 0, 0], sizes = [1, 1024, 32], strides = [1, 1, 1]} : vector<4x1024x32xf32> to vector<1x1024x32xf32>
    %3 = vector.shape_cast %2 : vector<1x1024x32xf32> to vector<1024x32xf32>
    %4 = vector.extract_strided_slice %1 {offsets = [2, 0, 0], sizes = [1, 1024, 32], strides = [1, 1, 1]} : vector<4x1024x32xf32> to vector<1x1024x32xf32>
    %5 = vector.shape_cast %4 : vector<1x1024x32xf32> to vector<1024x32xf32>
    %6 = vector.extract_strided_slice %1 {offsets = [3, 0, 0], sizes = [1, 1024, 32], strides = [1, 1, 1]} : vector<4x1024x32xf32> to vector<1x1024x32xf32>
    %7 = vector.shape_cast %6 : vector<1x1024x32xf32> to vector<1024x32xf32>
    %8 = arith.addf %3, %5 : vector<1024x32xf32>
    %9 = arith.addf %8, %7 : vector<1024x32xf32>
    %10 = vector.shape_cast %9 : vector<1024x32xf32> to vector<1x1024x32xf32>
    %cst = arith.constant dense<0.000000e+00> : vector<1xf32>
    %11 = vector.multi_reduction <add>, %10, %cst [1, 2] : vector<1x1024x32xf32> to vector<1xf32>
    %12 = vector.shape_cast %11 : vector<1xf32> to vector<1x1x1xf32>
    %13 = vector.extract %12[0, 0, 0] : f32 from vector<1x1x1xf32>
    %14 = arith.mulf %3, %3 : vector<1024x32xf32>
    %15 = vector.shape_cast %14 : vector<1024x32xf32> to vector<1x1024x32xf32>
    %cst_2 = arith.constant dense<0.000000e+00> : vector<1xf32>
    %16 = vector.multi_reduction <add>, %15, %cst_2 [1, 2] : vector<1x1024x32xf32> to vector<1xf32>
    %17 = vector.shape_cast %16 : vector<1xf32> to vector<1x1x1xf32>
    %18 = vector.extract %17[0, 0, 0] : f32 from vector<1x1x1xf32>
    %19 = arith.mulf %3, %5 : vector<1024x32xf32>
    %20 = vector.shape_cast %19 : vector<1024x32xf32> to vector<1x1024x32xf32>
    %cst_3 = arith.constant dense<0.000000e+00> : vector<1xf32>
    %21 = vector.multi_reduction <add>, %20, %cst_3 [1, 2] : vector<1x1024x32xf32> to vector<1xf32>
    %22 = vector.shape_cast %21 : vector<1xf32> to vector<1x1x1xf32>
    %23 = vector.extract %22[0, 0, 0] : f32 from vector<1x1x1xf32>
    %24 = arith.mulf %3, %7 : vector<1024x32xf32>
    %25 = vector.shape_cast %24 : vector<1024x32xf32> to vector<1x1024x32xf32>
    %cst_4 = arith.constant dense<0.000000e+00> : vector<1xf32>
    %26 = vector.multi_reduction <add>, %25, %cst_4 [1, 2] : vector<1x1024x32xf32> to vector<1xf32>
    %27 = vector.shape_cast %26 : vector<1xf32> to vector<1x1x1xf32>
    %28 = vector.extract %27[0, 0, 0] : f32 from vector<1x1x1xf32>
    %29 = arith.mulf %5, %5 : vector<1024x32xf32>
    %30 = vector.shape_cast %29 : vector<1024x32xf32> to vector<1x1024x32xf32>
    %cst_5 = arith.constant dense<0.000000e+00> : vector<1xf32>
    %31 = vector.multi_reduction <add>, %30, %cst_5 [1, 2] : vector<1x1024x32xf32> to vector<1xf32>
    %32 = vector.shape_cast %31 : vector<1xf32> to vector<1x1x1xf32>
    %33 = vector.extract %32[0, 0, 0] : f32 from vector<1x1x1xf32>
    %34 = arith.mulf %5, %7 : vector<1024x32xf32>
    %35 = vector.shape_cast %34 : vector<1024x32xf32> to vector<1x1024x32xf32>
    %cst_6 = arith.constant dense<0.000000e+00> : vector<1xf32>
    %36 = vector.multi_reduction <add>, %35, %cst_6 [1, 2] : vector<1x1024x32xf32> to vector<1xf32>
    %37 = vector.shape_cast %36 : vector<1xf32> to vector<1x1x1xf32>
    %38 = vector.extract %37[0, 0, 0] : f32 from vector<1x1x1xf32>
    %39 = arith.mulf %7, %7 : vector<1024x32xf32>
    %40 = vector.shape_cast %39 : vector<1024x32xf32> to vector<1x1024x32xf32>
    %cst_7 = arith.constant dense<0.000000e+00> : vector<1xf32>
    %41 = vector.multi_reduction <add>, %40, %cst_7 [1, 2] : vector<1x1024x32xf32> to vector<1xf32>
    %42 = vector.shape_cast %41 : vector<1xf32> to vector<1x1x1xf32>
    %43 = vector.extract %42[0, 0, 0] : f32 from vector<1x1x1xf32>
    %cst_8 = arith.constant 0.000000e+00 : f32
    %44 = vector.broadcast %cst_8 : f32 to vector<1x128xf32>
    %c0_i32 = arith.constant 0 : i32
    %45 = vector.broadcast %c0_i32 : i32 to vector<1x128xi32>
    %46 = arith.cmpi eq, %0, %45 : vector<1x128xi32>
    %47 = vector.broadcast %13 : f32 to vector<1x128xf32>
    %48 = arith.select %46, %47, %44 : vector<1x128xi1>, vector<1x128xf32>
    %c1_i32 = arith.constant 1 : i32
    %49 = vector.broadcast %c1_i32 : i32 to vector<1x128xi32>
    %50 = arith.cmpi eq, %0, %49 : vector<1x128xi32>
    %51 = vector.broadcast %18 : f32 to vector<1x128xf32>
    %52 = arith.select %50, %51, %48 : vector<1x128xi1>, vector<1x128xf32>
    %c2_i32 = arith.constant 2 : i32
    %53 = vector.broadcast %c2_i32 : i32 to vector<1x128xi32>
    %54 = arith.cmpi eq, %0, %53 : vector<1x128xi32>
    %55 = vector.broadcast %23 : f32 to vector<1x128xf32>
    %56 = arith.select %54, %55, %52 : vector<1x128xi1>, vector<1x128xf32>
    %c3_i32 = arith.constant 3 : i32
    %57 = vector.broadcast %c3_i32 : i32 to vector<1x128xi32>
    %58 = arith.cmpi eq, %0, %57 : vector<1x128xi32>
    %59 = vector.broadcast %28 : f32 to vector<1x128xf32>
    %60 = arith.select %58, %59, %56 : vector<1x128xi1>, vector<1x128xf32>
    %c4_i32 = arith.constant 4 : i32
    %61 = vector.broadcast %c4_i32 : i32 to vector<1x128xi32>
    %62 = arith.cmpi eq, %0, %61 : vector<1x128xi32>
    %63 = vector.broadcast %33 : f32 to vector<1x128xf32>
    %64 = arith.select %62, %63, %60 : vector<1x128xi1>, vector<1x128xf32>
    %c5_i32 = arith.constant 5 : i32
    %65 = vector.broadcast %c5_i32 : i32 to vector<1x128xi32>
    %66 = arith.cmpi eq, %0, %65 : vector<1x128xi32>
    %67 = vector.broadcast %38 : f32 to vector<1x128xf32>
    %68 = arith.select %66, %67, %64 : vector<1x128xi1>, vector<1x128xf32>
    %c6_i32 = arith.constant 6 : i32
    %69 = vector.broadcast %c6_i32 : i32 to vector<1x128xi32>
    %70 = arith.cmpi eq, %0, %69 : vector<1x128xi32>
    %71 = vector.broadcast %43 : f32 to vector<1x128xf32>
    %72 = arith.select %70, %71, %68 : vector<1x128xi1>, vector<1x128xf32>
    %c0_9 = arith.constant 0 : index
    %c0_10 = arith.constant 0 : index
    %73 = vector.load %arg4[%c0_9, %c0_10] : memref<4x128xf32, #tpu.memory_space<vmem>>, vector<1x128xf32>
    tpu.vector_store %arg4[%c0_9, %c0_10], %72 {strides = array<i32>} : memref<4x128xf32, #tpu.memory_space<vmem>>, vector<1x128xf32>,
    %c0_11 = arith.constant 0 : index
    %c0_12 = arith.constant 0 : index
    %c0_13 = arith.constant 0 : index
    %74 = vector.load %arg1[%c0_11, %c0_12, %c0_13] : memref<4x1x32xf32, #tpu.memory_space<vmem>>, vector<4x1x32xf32>
    %75 = vector.extract_strided_slice %74 {offsets = [1, 0, 0], sizes = [1, 1, 32], strides = [1, 1, 1]} : vector<4x1x32xf32> to vector<1x1x32xf32>
    %76 = vector.shape_cast %75 : vector<1x1x32xf32> to vector<1x32xf32>
    %77 = vector.extract_strided_slice %74 {offsets = [2, 0, 0], sizes = [1, 1, 32], strides = [1, 1, 1]} : vector<4x1x32xf32> to vector<1x1x32xf32>
    %78 = vector.shape_cast %77 : vector<1x1x32xf32> to vector<1x32xf32>
    %79 = vector.extract_strided_slice %74 {offsets = [3, 0, 0], sizes = [1, 1, 32], strides = [1, 1, 1]} : vector<4x1x32xf32> to vector<1x1x32xf32>
    %80 = vector.shape_cast %79 : vector<1x1x32xf32> to vector<1x32xf32>
    %81 = arith.addf %76, %78 : vector<1x32xf32>
    %82 = arith.addf %81, %80 : vector<1x32xf32>
    %83 = vector.shape_cast %82 : vector<1x32xf32> to vector<1x1x32xf32>
    %cst_14 = arith.constant dense<0.000000e+00> : vector<1xf32>
    %84 = vector.multi_reduction <add>, %83, %cst_14 [1, 2] : vector<1x1x32xf32> to vector<1xf32>
    %85 = vector.shape_cast %84 : vector<1xf32> to vector<1x1x1xf32>
    %86 = vector.extract %85[0, 0, 0] : f32 from vector<1x1x1xf32>
    %87 = arith.mulf %76, %76 : vector<1x32xf32>
    %88 = vector.shape_cast %87 : vector<1x32xf32> to vector<1x1x32xf32>
    %cst_15 = arith.constant dense<0.000000e+00> : vector<1xf32>
    %89 = vector.multi_reduction <add>, %88, %cst_15 [1, 2] : vector<1x1x32xf32> to vector<1xf32>
    %90 = vector.shape_cast %89 : vector<1xf32> to vector<1x1x1xf32>
    %91 = vector.extract %90[0, 0, 0] : f32 from vector<1x1x1xf32>
    %92 = arith.mulf %76, %78 : vector<1x32xf32>
    %93 = vector.shape_cast %92 : vector<1x32xf32> to vector<1x1x32xf32>
    %cst_16 = arith.constant dense<0.000000e+00> : vector<1xf32>
    %94 = vector.multi_reduction <add>, %93, %cst_16 [1, 2] : vector<1x1x32xf32> to vector<1xf32>
    %95 = vector.shape_cast %94 : vector<1xf32> to vector<1x1x1xf32>
    %96 = vector.extract %95[0, 0, 0] : f32 from vector<1x1x1xf32>
    %97 = arith.mulf %76, %80 : vector<1x32xf32>
    %98 = vector.shape_cast %97 : vector<1x32xf32> to vector<1x1x32xf32>
    %cst_17 = arith.constant dense<0.000000e+00> : vector<1xf32>
    %99 = vector.multi_reduction <add>, %98, %cst_17 [1, 2] : vector<1x1x32xf32> to vector<1xf32>
    %100 = vector.shape_cast %99 : vector<1xf32> to vector<1x1x1xf32>
    %101 = vector.extract %100[0, 0, 0] : f32 from vector<1x1x1xf32>
    %102 = arith.mulf %78, %78 : vector<1x32xf32>
    %103 = vector.shape_cast %102 : vector<1x32xf32> to vector<1x1x32xf32>
    %cst_18 = arith.constant dense<0.000000e+00> : vector<1xf32>
    %104 = vector.multi_reduction <add>, %103, %cst_18 [1, 2] : vector<1x1x32xf32> to vector<1xf32>
    %105 = vector.shape_cast %104 : vector<1xf32> to vector<1x1x1xf32>
    %106 = vector.extract %105[0, 0, 0] : f32 from vector<1x1x1xf32>
    %107 = arith.mulf %78, %80 : vector<1x32xf32>
    %108 = vector.shape_cast %107 : vector<1x32xf32> to vector<1x1x32xf32>
    %cst_19 = arith.constant dense<0.000000e+00> : vector<1xf32>
    %109 = vector.multi_reduction <add>, %108, %cst_19 [1, 2] : vector<1x1x32xf32> to vector<1xf32>
    %110 = vector.shape_cast %109 : vector<1xf32> to vector<1x1x1xf32>
    %111 = vector.extract %110[0, 0, 0] : f32 from vector<1x1x1xf32>
    %112 = arith.mulf %80, %80 : vector<1x32xf32>
    %113 = vector.shape_cast %112 : vector<1x32xf32> to vector<1x1x32xf32>
    %cst_20 = arith.constant dense<0.000000e+00> : vector<1xf32>
    %114 = vector.multi_reduction <add>, %113, %cst_20 [1, 2] : vector<1x1x32xf32> to vector<1xf32>
    %115 = vector.shape_cast %114 : vector<1xf32> to vector<1x1x1xf32>
    %116 = vector.extract %115[0, 0, 0] : f32 from vector<1x1x1xf32>
    %cst_21 = arith.constant 0.000000e+00 : f32
    %117 = vector.broadcast %cst_21 : f32 to vector<1x128xf32>
    %c0_i32_22 = arith.constant 0 : i32
    %118 = vector.broadcast %c0_i32_22 : i32 to vector<1x128xi32>
    %119 = arith.cmpi eq, %0, %118 : vector<1x128xi32>
    %120 = vector.broadcast %86 : f32 to vector<1x128xf32>
    %121 = arith.select %119, %120, %117 : vector<1x128xi1>, vector<1x128xf32>
    %c1_i32_23 = arith.constant 1 : i32
    %122 = vector.broadcast %c1_i32_23 : i32 to vector<1x128xi32>
    %123 = arith.cmpi eq, %0, %122 : vector<1x128xi32>
    %124 = vector.broadcast %91 : f32 to vector<1x128xf32>
    %125 = arith.select %123, %124, %121 : vector<1x128xi1>, vector<1x128xf32>
    %c2_i32_24 = arith.constant 2 : i32
    %126 = vector.broadcast %c2_i32_24 : i32 to vector<1x128xi32>
    %127 = arith.cmpi eq, %0, %126 : vector<1x128xi32>
    %128 = vector.broadcast %96 : f32 to vector<1x128xf32>
    %129 = arith.select %127, %128, %125 : vector<1x128xi1>, vector<1x128xf32>
    %c3_i32_25 = arith.constant 3 : i32
    %130 = vector.broadcast %c3_i32_25 : i32 to vector<1x128xi32>
    %131 = arith.cmpi eq, %0, %130 : vector<1x128xi32>
    %132 = vector.broadcast %101 : f32 to vector<1x128xf32>
    %133 = arith.select %131, %132, %129 : vector<1x128xi1>, vector<1x128xf32>
    %c4_i32_26 = arith.constant 4 : i32
    %134 = vector.broadcast %c4_i32_26 : i32 to vector<1x128xi32>
    %135 = arith.cmpi eq, %0, %134 : vector<1x128xi32>
    %136 = vector.broadcast %106 : f32 to vector<1x128xf32>
    %137 = arith.select %135, %136, %133 : vector<1x128xi1>, vector<1x128xf32>
    %c5_i32_27 = arith.constant 5 : i32
    %138 = vector.broadcast %c5_i32_27 : i32 to vector<1x128xi32>
    %139 = arith.cmpi eq, %0, %138 : vector<1x128xi32>
    %140 = vector.broadcast %111 : f32 to vector<1x128xf32>
    %141 = arith.select %139, %140, %137 : vector<1x128xi1>, vector<1x128xf32>
    %c6_i32_28 = arith.constant 6 : i32
    %142 = vector.broadcast %c6_i32_28 : i32 to vector<1x128xi32>
    %143 = arith.cmpi eq, %0, %142 : vector<1x128xi32>
    %144 = vector.broadcast %116 : f32 to vector<1x128xf32>
    %145 = arith.select %143, %144, %141 : vector<1x128xi1>, vector<1x128xf32>
    %c1 = arith.constant 1 : index
    %c0_29 = arith.constant 0 : index
    %146 = vector.load %arg4[%c1, %c0_29] : memref<4x128xf32, #tpu.memory_space<vmem>>, vector<1x128xf32>
    tpu.vector_store %arg4[%c1, %c0_29], %145 {strides = array<i32>} : memref<4x128xf32, #tpu.memory_space<vmem>>, vector<1x128xf32>,
    %c0_30 = arith.constant 0 : index
    %c0_31 = arith.constant 0 : index
    %c0_32 = arith.constant 0 : index
    %147 = vector.load %arg2[%c0_30, %c0_31, %c0_32] : memref<4x32x32xf32, #tpu.memory_space<vmem>>, vector<4x32x32xf32>
    %148 = vector.extract_strided_slice %147 {offsets = [1, 0, 0], sizes = [1, 32, 32], strides = [1, 1, 1]} : vector<4x32x32xf32> to vector<1x32x32xf32>
    %149 = vector.shape_cast %148 : vector<1x32x32xf32> to vector<32x32xf32>
    %150 = vector.extract_strided_slice %147 {offsets = [2, 0, 0], sizes = [1, 32, 32], strides = [1, 1, 1]} : vector<4x32x32xf32> to vector<1x32x32xf32>
    %151 = vector.shape_cast %150 : vector<1x32x32xf32> to vector<32x32xf32>
    %152 = vector.extract_strided_slice %147 {offsets = [3, 0, 0], sizes = [1, 32, 32], strides = [1, 1, 1]} : vector<4x32x32xf32> to vector<1x32x32xf32>
    %153 = vector.shape_cast %152 : vector<1x32x32xf32> to vector<32x32xf32>
    %154 = arith.addf %149, %151 : vector<32x32xf32>
    %155 = arith.addf %154, %153 : vector<32x32xf32>
    %156 = vector.shape_cast %155 : vector<32x32xf32> to vector<1x32x32xf32>
    %cst_33 = arith.constant dense<0.000000e+00> : vector<1xf32>
    %157 = vector.multi_reduction <add>, %156, %cst_33 [1, 2] : vector<1x32x32xf32> to vector<1xf32>
    %158 = vector.shape_cast %157 : vector<1xf32> to vector<1x1x1xf32>
    %159 = vector.extract %158[0, 0, 0] : f32 from vector<1x1x1xf32>
    %160 = arith.mulf %149, %149 : vector<32x32xf32>
    %161 = vector.shape_cast %160 : vector<32x32xf32> to vector<1x32x32xf32>
    %cst_34 = arith.constant dense<0.000000e+00> : vector<1xf32>
    %162 = vector.multi_reduction <add>, %161, %cst_34 [1, 2] : vector<1x32x32xf32> to vector<1xf32>
    %163 = vector.shape_cast %162 : vector<1xf32> to vector<1x1x1xf32>
    %164 = vector.extract %163[0, 0, 0] : f32 from vector<1x1x1xf32>
    %165 = arith.mulf %149, %151 : vector<32x32xf32>
    %166 = vector.shape_cast %165 : vector<32x32xf32> to vector<1x32x32xf32>
    %cst_35 = arith.constant dense<0.000000e+00> : vector<1xf32>
    %167 = vector.multi_reduction <add>, %166, %cst_35 [1, 2] : vector<1x32x32xf32> to vector<1xf32>
    %168 = vector.shape_cast %167 : vector<1xf32> to vector<1x1x1xf32>
    %169 = vector.extract %168[0, 0, 0] : f32 from vector<1x1x1xf32>
    %170 = arith.mulf %149, %153 : vector<32x32xf32>
    %171 = vector.shape_cast %170 : vector<32x32xf32> to vector<1x32x32xf32>
    %cst_36 = arith.constant dense<0.000000e+00> : vector<1xf32>
    %172 = vector.multi_reduction <add>, %171, %cst_36 [1, 2] : vector<1x32x32xf32> to vector<1xf32>
    %173 = vector.shape_cast %172 : vector<1xf32> to vector<1x1x1xf32>
    %174 = vector.extract %173[0, 0, 0] : f32 from vector<1x1x1xf32>
    %175 = arith.mulf %151, %151 : vector<32x32xf32>
    %176 = vector.shape_cast %175 : vector<32x32xf32> to vector<1x32x32xf32>
    %cst_37 = arith.constant dense<0.000000e+00> : vector<1xf32>
    %177 = vector.multi_reduction <add>, %176, %cst_37 [1, 2] : vector<1x32x32xf32> to vector<1xf32>
    %178 = vector.shape_cast %177 : vector<1xf32> to vector<1x1x1xf32>
    %179 = vector.extract %178[0, 0, 0] : f32 from vector<1x1x1xf32>
    %180 = arith.mulf %151, %153 : vector<32x32xf32>
    %181 = vector.shape_cast %180 : vector<32x32xf32> to vector<1x32x32xf32>
    %cst_38 = arith.constant dense<0.000000e+00> : vector<1xf32>
    %182 = vector.multi_reduction <add>, %181, %cst_38 [1, 2] : vector<1x32x32xf32> to vector<1xf32>
    %183 = vector.shape_cast %182 : vector<1xf32> to vector<1x1x1xf32>
    %184 = vector.extract %183[0, 0, 0] : f32 from vector<1x1x1xf32>
    %185 = arith.mulf %153, %153 : vector<32x32xf32>
    %186 = vector.shape_cast %185 : vector<32x32xf32> to vector<1x32x32xf32>
    %cst_39 = arith.constant dense<0.000000e+00> : vector<1xf32>
    %187 = vector.multi_reduction <add>, %186, %cst_39 [1, 2] : vector<1x32x32xf32> to vector<1xf32>
    %188 = vector.shape_cast %187 : vector<1xf32> to vector<1x1x1xf32>
    %189 = vector.extract %188[0, 0, 0] : f32 from vector<1x1x1xf32>
    %cst_40 = arith.constant 0.000000e+00 : f32
    %190 = vector.broadcast %cst_40 : f32 to vector<1x128xf32>
    %c0_i32_41 = arith.constant 0 : i32
    %191 = vector.broadcast %c0_i32_41 : i32 to vector<1x128xi32>
    %192 = arith.cmpi eq, %0, %191 : vector<1x128xi32>
    %193 = vector.broadcast %159 : f32 to vector<1x128xf32>
    %194 = arith.select %192, %193, %190 : vector<1x128xi1>, vector<1x128xf32>
    %c1_i32_42 = arith.constant 1 : i32
    %195 = vector.broadcast %c1_i32_42 : i32 to vector<1x128xi32>
    %196 = arith.cmpi eq, %0, %195 : vector<1x128xi32>
    %197 = vector.broadcast %164 : f32 to vector<1x128xf32>
    %198 = arith.select %196, %197, %194 : vector<1x128xi1>, vector<1x128xf32>
    %c2_i32_43 = arith.constant 2 : i32
    %199 = vector.broadcast %c2_i32_43 : i32 to vector<1x128xi32>
    %200 = arith.cmpi eq, %0, %199 : vector<1x128xi32>
    %201 = vector.broadcast %169 : f32 to vector<1x128xf32>
    %202 = arith.select %200, %201, %198 : vector<1x128xi1>, vector<1x128xf32>
    %c3_i32_44 = arith.constant 3 : i32
    %203 = vector.broadcast %c3_i32_44 : i32 to vector<1x128xi32>
    %204 = arith.cmpi eq, %0, %203 : vector<1x128xi32>
    %205 = vector.broadcast %174 : f32 to vector<1x128xf32>
    %206 = arith.select %204, %205, %202 : vector<1x128xi1>, vector<1x128xf32>
    %c4_i32_45 = arith.constant 4 : i32
    %207 = vector.broadcast %c4_i32_45 : i32 to vector<1x128xi32>
    %208 = arith.cmpi eq, %0, %207 : vector<1x128xi32>
    %209 = vector.broadcast %179 : f32 to vector<1x128xf32>
    %210 = arith.select %208, %209, %206 : vector<1x128xi1>, vector<1x128xf32>
    %c5_i32_46 = arith.constant 5 : i32
    %211 = vector.broadcast %c5_i32_46 : i32 to vector<1x128xi32>
    %212 = arith.cmpi eq, %0, %211 : vector<1x128xi32>
    %213 = vector.broadcast %184 : f32 to vector<1x128xf32>
    %214 = arith.select %212, %213, %210 : vector<1x128xi1>, vector<1x128xf32>
    %c6_i32_47 = arith.constant 6 : i32
    %215 = vector.broadcast %c6_i32_47 : i32 to vector<1x128xi32>
    %216 = arith.cmpi eq, %0, %215 : vector<1x128xi32>
    %217 = vector.broadcast %189 : f32 to vector<1x128xf32>
    %218 = arith.select %216, %217, %214 : vector<1x128xi1>, vector<1x128xf32>
    %c2 = arith.constant 2 : index
    %c0_48 = arith.constant 0 : index
    %219 = vector.load %arg4[%c2, %c0_48] : memref<4x128xf32, #tpu.memory_space<vmem>>, vector<1x128xf32>
    tpu.vector_store %arg4[%c2, %c0_48], %218 {strides = array<i32>} : memref<4x128xf32, #tpu.memory_space<vmem>>, vector<1x128xf32>,
    %c0_49 = arith.constant 0 : index
    %c0_50 = arith.constant 0 : index
    %c0_51 = arith.constant 0 : index
    %220 = vector.load %arg3[%c0_49, %c0_50, %c0_51] : memref<4x1x32xf32, #tpu.memory_space<vmem>>, vector<4x1x32xf32>
    %221 = vector.extract_strided_slice %220 {offsets = [1, 0, 0], sizes = [1, 1, 32], strides = [1, 1, 1]} : vector<4x1x32xf32> to vector<1x1x32xf32>
    %222 = vector.shape_cast %221 : vector<1x1x32xf32> to vector<1x32xf32>
    %223 = vector.extract_strided_slice %220 {offsets = [2, 0, 0], sizes = [1, 1, 32], strides = [1, 1, 1]} : vector<4x1x32xf32> to vector<1x1x32xf32>
    %224 = vector.shape_cast %223 : vector<1x1x32xf32> to vector<1x32xf32>
    %225 = vector.extract_strided_slice %220 {offsets = [3, 0, 0], sizes = [1, 1, 32], strides = [1, 1, 1]} : vector<4x1x32xf32> to vector<1x1x32xf32>
    %226 = vector.shape_cast %225 : vector<1x1x32xf32> to vector<1x32xf32>
    %227 = arith.addf %222, %224 : vector<1x32xf32>
    %228 = arith.addf %227, %226 : vector<1x32xf32>
    %229 = vector.shape_cast %228 : vector<1x32xf32> to vector<1x1x32xf32>
    %cst_52 = arith.constant dense<0.000000e+00> : vector<1xf32>
    %230 = vector.multi_reduction <add>, %229, %cst_52 [1, 2] : vector<1x1x32xf32> to vector<1xf32>
    %231 = vector.shape_cast %230 : vector<1xf32> to vector<1x1x1xf32>
    %232 = vector.extract %231[0, 0, 0] : f32 from vector<1x1x1xf32>
    %233 = arith.mulf %222, %222 : vector<1x32xf32>
    %234 = vector.shape_cast %233 : vector<1x32xf32> to vector<1x1x32xf32>
    %cst_53 = arith.constant dense<0.000000e+00> : vector<1xf32>
    %235 = vector.multi_reduction <add>, %234, %cst_53 [1, 2] : vector<1x1x32xf32> to vector<1xf32>
    %236 = vector.shape_cast %235 : vector<1xf32> to vector<1x1x1xf32>
    %237 = vector.extract %236[0, 0, 0] : f32 from vector<1x1x1xf32>
    %238 = arith.mulf %222, %224 : vector<1x32xf32>
    %239 = vector.shape_cast %238 : vector<1x32xf32> to vector<1x1x32xf32>
    %cst_54 = arith.constant dense<0.000000e+00> : vector<1xf32>
    %240 = vector.multi_reduction <add>, %239, %cst_54 [1, 2] : vector<1x1x32xf32> to vector<1xf32>
    %241 = vector.shape_cast %240 : vector<1xf32> to vector<1x1x1xf32>
    %242 = vector.extract %241[0, 0, 0] : f32 from vector<1x1x1xf32>
    %243 = arith.mulf %222, %226 : vector<1x32xf32>
    %244 = vector.shape_cast %243 : vector<1x32xf32> to vector<1x1x32xf32>
    %cst_55 = arith.constant dense<0.000000e+00> : vector<1xf32>
    %245 = vector.multi_reduction <add>, %244, %cst_55 [1, 2] : vector<1x1x32xf32> to vector<1xf32>
    %246 = vector.shape_cast %245 : vector<1xf32> to vector<1x1x1xf32>
    %247 = vector.extract %246[0, 0, 0] : f32 from vector<1x1x1xf32>
    %248 = arith.mulf %224, %224 : vector<1x32xf32>
    %249 = vector.shape_cast %248 : vector<1x32xf32> to vector<1x1x32xf32>
    %cst_56 = arith.constant dense<0.000000e+00> : vector<1xf32>
    %250 = vector.multi_reduction <add>, %249, %cst_56 [1, 2] : vector<1x1x32xf32> to vector<1xf32>
    %251 = vector.shape_cast %250 : vector<1xf32> to vector<1x1x1xf32>
    %252 = vector.extract %251[0, 0, 0] : f32 from vector<1x1x1xf32>
    %253 = arith.mulf %224, %226 : vector<1x32xf32>
    %254 = vector.shape_cast %253 : vector<1x32xf32> to vector<1x1x32xf32>
    %cst_57 = arith.constant dense<0.000000e+00> : vector<1xf32>
    %255 = vector.multi_reduction <add>, %254, %cst_57 [1, 2] : vector<1x1x32xf32> to vector<1xf32>
    %256 = vector.shape_cast %255 : vector<1xf32> to vector<1x1x1xf32>
    %257 = vector.extract %256[0, 0, 0] : f32 from vector<1x1x1xf32>
    %258 = arith.mulf %226, %226 : vector<1x32xf32>
    %259 = vector.shape_cast %258 : vector<1x32xf32> to vector<1x1x32xf32>
    %cst_58 = arith.constant dense<0.000000e+00> : vector<1xf32>
    %260 = vector.multi_reduction <add>, %259, %cst_58 [1, 2] : vector<1x1x32xf32> to vector<1xf32>
    %261 = vector.shape_cast %260 : vector<1xf32> to vector<1x1x1xf32>
    %262 = vector.extract %261[0, 0, 0] : f32 from vector<1x1x1xf32>
    %cst_59 = arith.constant 0.000000e+00 : f32
    %263 = vector.broadcast %cst_59 : f32 to vector<1x128xf32>
    %c0_i32_60 = arith.constant 0 : i32
    %264 = vector.broadcast %c0_i32_60 : i32 to vector<1x128xi32>
    %265 = arith.cmpi eq, %0, %264 : vector<1x128xi32>
    %266 = vector.broadcast %232 : f32 to vector<1x128xf32>
    %267 = arith.select %265, %266, %263 : vector<1x128xi1>, vector<1x128xf32>
    %c1_i32_61 = arith.constant 1 : i32
    %268 = vector.broadcast %c1_i32_61 : i32 to vector<1x128xi32>
    %269 = arith.cmpi eq, %0, %268 : vector<1x128xi32>
    %270 = vector.broadcast %237 : f32 to vector<1x128xf32>
    %271 = arith.select %269, %270, %267 : vector<1x128xi1>, vector<1x128xf32>
    %c2_i32_62 = arith.constant 2 : i32
    %272 = vector.broadcast %c2_i32_62 : i32 to vector<1x128xi32>
    %273 = arith.cmpi eq, %0, %272 : vector<1x128xi32>
    %274 = vector.broadcast %242 : f32 to vector<1x128xf32>
    %275 = arith.select %273, %274, %271 : vector<1x128xi1>, vector<1x128xf32>
    %c3_i32_63 = arith.constant 3 : i32
    %276 = vector.broadcast %c3_i32_63 : i32 to vector<1x128xi32>
    %277 = arith.cmpi eq, %0, %276 : vector<1x128xi32>
    %278 = vector.broadcast %247 : f32 to vector<1x128xf32>
    %279 = arith.select %277, %278, %275 : vector<1x128xi1>, vector<1x128xf32>
    %c4_i32_64 = arith.constant 4 : i32
    %280 = vector.broadcast %c4_i32_64 : i32 to vector<1x128xi32>
    %281 = arith.cmpi eq, %0, %280 : vector<1x128xi32>
    %282 = vector.broadcast %252 : f32 to vector<1x128xf32>
    %283 = arith.select %281, %282, %279 : vector<1x128xi1>, vector<1x128xf32>
    %c5_i32_65 = arith.constant 5 : i32
    %284 = vector.broadcast %c5_i32_65 : i32 to vector<1x128xi32>
    %285 = arith.cmpi eq, %0, %284 : vector<1x128xi32>
    %286 = vector.broadcast %257 : f32 to vector<1x128xf32>
    %287 = arith.select %285, %286, %283 : vector<1x128xi1>, vector<1x128xf32>
    %c6_i32_66 = arith.constant 6 : i32
    %288 = vector.broadcast %c6_i32_66 : i32 to vector<1x128xi32>
    %289 = arith.cmpi eq, %0, %288 : vector<1x128xi32>
    %290 = vector.broadcast %262 : f32 to vector<1x128xf32>
    %291 = arith.select %289, %290, %287 : vector<1x128xi1>, vector<1x128xf32>
    %c3 = arith.constant 3 : index
    %c0_67 = arith.constant 0 : index
    %292 = vector.load %arg4[%c3, %c0_67] : memref<4x128xf32, #tpu.memory_space<vmem>>, vector<1x128xf32>
    tpu.vector_store %arg4[%c3, %c0_67], %291 {strides = array<i32>} : memref<4x128xf32, #tpu.memory_space<vmem>>, vector<1x128xf32>,
    return
  }
}

module attributes {stable_mosaic.version = 11 : i64} {
  func.func @_fused_forward_kernel(%arg0: memref<4x1x6xf32, #tpu.memory_space<vmem>>, %arg1: memref<4x6x256xf32, #tpu.memory_space<vmem>>, %arg2: memref<4x1x256xf32, #tpu.memory_space<vmem>>, %arg3: memref<4x256x256xf32, #tpu.memory_space<vmem>>, %arg4: memref<4x1x256xf32, #tpu.memory_space<vmem>>, %arg5: memref<4x256x3xf32, #tpu.memory_space<vmem>>, %arg6: memref<4x1x3xf32, #tpu.memory_space<vmem>>, %arg7: memref<2x1024xf32, #tpu.memory_space<vmem>>, %arg8: memref<4x1024x32xf32, #tpu.memory_space<vmem>>, %arg9: memref<4x1x32xf32, #tpu.memory_space<vmem>>, %arg10: memref<4x32x32xf32, #tpu.memory_space<vmem>>, %arg11: memref<4x1x32xf32, #tpu.memory_space<vmem>>, %arg12: memref<32x10xf32, #tpu.memory_space<vmem>>, %arg13: memref<1x10xf32, #tpu.memory_space<vmem>>, %arg14: memref<2x10xf32, #tpu.memory_space<vmem>>) attributes {dimension_semantics = [], scalar_prefetch = 0 : i64, scratch_operands = 0 : i64, tpu.core_type = #tpu.core_type<tc>} {
    %c0 = arith.constant 0 : index
    %c0_0 = arith.constant 0 : index
    %c0_1 = arith.constant 0 : index
    %0 = vector.load %arg0[%c0, %c0_0, %c0_1] : memref<4x1x6xf32, #tpu.memory_space<vmem>>, vector<4x1x6xf32>
    %c0_2 = arith.constant 0 : index
    %c0_3 = arith.constant 0 : index
    %c0_4 = arith.constant 0 : index
    %1 = vector.load %arg1[%c0_2, %c0_3, %c0_4] : memref<4x6x256xf32, #tpu.memory_space<vmem>>, vector<4x6x256xf32>
    "tpu.trace_start"() <{level = 10 : i32, message = "lqk,lkh->lqh"}> : () -> ()
    %cst = arith.constant dense<0.000000e+00> : vector<4x1x256xf32>
    %2 = tpu.matmul %0, %1, %cst {dimension_numbers = #tpu.dot_dimension_numbers<[2], [1], [1], [2], [0, 0, 0, 1, 1, 2], [0], [0]>} : vector<4x1x6xf32>, vector<4x6x256xf32>, vector<4x1x256xf32> -> vector<4x1x256xf32>
    "tpu.trace_stop"() : () -> ()
    %c0_5 = arith.constant 0 : index
    %c0_6 = arith.constant 0 : index
    %c0_7 = arith.constant 0 : index
    %3 = vector.load %arg2[%c0_5, %c0_6, %c0_7] : memref<4x1x256xf32, #tpu.memory_space<vmem>>, vector<4x1x256xf32>
    %4 = arith.addf %2, %3 : vector<4x1x256xf32>
    %cst_8 = arith.constant 0.000000e+00 : f32
    %5 = vector.broadcast %cst_8 : f32 to vector<4x1x256xf32>
    %6 = arith.maximumf %4, %5 : vector<4x1x256xf32>
    %c0_9 = arith.constant 0 : index
    %c0_10 = arith.constant 0 : index
    %c0_11 = arith.constant 0 : index
    %7 = vector.load %arg3[%c0_9, %c0_10, %c0_11] : memref<4x256x256xf32, #tpu.memory_space<vmem>>, vector<4x256x256xf32>
    "tpu.trace_start"() <{level = 10 : i32, message = "lqk,lkh->lqh"}> : () -> ()
    %cst_12 = arith.constant dense<0.000000e+00> : vector<4x1x256xf32>
    %8 = tpu.matmul %6, %7, %cst_12 {dimension_numbers = #tpu.dot_dimension_numbers<[2], [1], [1], [2], [0, 0, 0, 1, 1, 2], [0], [0]>} : vector<4x1x256xf32>, vector<4x256x256xf32>, vector<4x1x256xf32> -> vector<4x1x256xf32>
    "tpu.trace_stop"() : () -> ()
    %c0_13 = arith.constant 0 : index
    %c0_14 = arith.constant 0 : index
    %c0_15 = arith.constant 0 : index
    %9 = vector.load %arg4[%c0_13, %c0_14, %c0_15] : memref<4x1x256xf32, #tpu.memory_space<vmem>>, vector<4x1x256xf32>
    %10 = arith.addf %8, %9 : vector<4x1x256xf32>
    %cst_16 = arith.constant 0.000000e+00 : f32
    %11 = vector.broadcast %cst_16 : f32 to vector<4x1x256xf32>
    %12 = arith.maximumf %10, %11 : vector<4x1x256xf32>
    %c0_17 = arith.constant 0 : index
    %c0_18 = arith.constant 0 : index
    %c0_19 = arith.constant 0 : index
    %13 = vector.load %arg5[%c0_17, %c0_18, %c0_19] : memref<4x256x3xf32, #tpu.memory_space<vmem>>, vector<4x256x3xf32>
    "tpu.trace_start"() <{level = 10 : i32, message = "lqk,lkh->lqh"}> : () -> ()
    %cst_20 = arith.constant dense<0.000000e+00> : vector<4x1x3xf32>
    %14 = tpu.matmul %12, %13, %cst_20 {dimension_numbers = #tpu.dot_dimension_numbers<[2], [1], [1], [2], [0, 0, 0, 1, 1, 2], [0], [0]>} : vector<4x1x256xf32>, vector<4x256x3xf32>, vector<4x1x3xf32> -> vector<4x1x3xf32>
    "tpu.trace_stop"() : () -> ()
    %c0_21 = arith.constant 0 : index
    %c0_22 = arith.constant 0 : index
    %c0_23 = arith.constant 0 : index
    %15 = vector.load %arg6[%c0_21, %c0_22, %c0_23] : memref<4x1x3xf32, #tpu.memory_space<vmem>>, vector<4x1x3xf32>
    %16 = arith.addf %14, %15 : vector<4x1x3xf32>
    %cst_24 = arith.constant dense<0xFF800000> : vector<4x1xf32>
    %17 = vector.multi_reduction <maximumf>, %16, %cst_24 [2] : vector<4x1x3xf32> to vector<4x1xf32>
    %18 = vector.shape_cast %17 : vector<4x1xf32> to vector<4x1x1xf32>
    %19 = vector.broadcast %18 : vector<4x1x1xf32> to vector<4x1x3xf32>
    %20 = arith.subf %16, %19 : vector<4x1x3xf32>
    %21 = math.exp %20 : vector<4x1x3xf32>
    %cst_25 = arith.constant dense<0.000000e+00> : vector<4x1xf32>
    %22 = vector.multi_reduction <add>, %21, %cst_25 [2] : vector<4x1x3xf32> to vector<4x1xf32>
    %23 = vector.shape_cast %22 : vector<4x1xf32> to vector<4x1x1xf32>
    %24 = tpu.reciprocal %23 {approx = true} : vector<4x1x1xf32> -> vector<4x1x1xf32>
    %25 = vector.broadcast %24 : vector<4x1x1xf32> to vector<4x1x3xf32>
    %26 = arith.mulf %21, %25 : vector<4x1x3xf32>
    %c0_26 = arith.constant 0 : index
    %c0_27 = arith.constant 0 : index
    %c0_28 = arith.constant 0 : index
    %27 = vector.load %arg8[%c0_26, %c0_27, %c0_28] : memref<4x1024x32xf32, #tpu.memory_space<vmem>>, vector<4x1024x32xf32>
    %28 = vector.extract_strided_slice %27 {offsets = [0, 0, 0], sizes = [1, 1024, 32], strides = [1, 1, 1]} : vector<4x1024x32xf32> to vector<1x1024x32xf32>
    %29 = vector.shape_cast %28 : vector<1x1024x32xf32> to vector<1024x32xf32>
    %30 = vector.extract_strided_slice %26 {offsets = [0, 0, 0], sizes = [1, 1, 1], strides = [1, 1, 1]} : vector<4x1x3xf32> to vector<1x1x1xf32>
    %31 = vector.shape_cast %30 : vector<1x1x1xf32> to vector<1x1xf32>
    %32 = vector.extract_strided_slice %27 {offsets = [1, 0, 0], sizes = [1, 1024, 32], strides = [1, 1, 1]} : vector<4x1024x32xf32> to vector<1x1024x32xf32>
    %33 = vector.shape_cast %32 : vector<1x1024x32xf32> to vector<1024x32xf32>
    %34 = vector.broadcast %31 : vector<1x1xf32> to vector<1024x32xf32>
    %35 = arith.mulf %34, %33 : vector<1024x32xf32>
    %36 = arith.addf %29, %35 : vector<1024x32xf32>
    %37 = vector.extract_strided_slice %26 {offsets = [0, 0, 1], sizes = [1, 1, 1], strides = [1, 1, 1]} : vector<4x1x3xf32> to vector<1x1x1xf32>
    %38 = vector.shape_cast %37 : vector<1x1x1xf32> to vector<1x1xf32>
    %39 = vector.extract_strided_slice %27 {offsets = [2, 0, 0], sizes = [1, 1024, 32], strides = [1, 1, 1]} : vector<4x1024x32xf32> to vector<1x1024x32xf32>
    %40 = vector.shape_cast %39 : vector<1x1024x32xf32> to vector<1024x32xf32>
    %41 = vector.broadcast %38 : vector<1x1xf32> to vector<1024x32xf32>
    %42 = arith.mulf %41, %40 : vector<1024x32xf32>
    %43 = arith.addf %36, %42 : vector<1024x32xf32>
    %44 = vector.extract_strided_slice %26 {offsets = [0, 0, 2], sizes = [1, 1, 1], strides = [1, 1, 1]} : vector<4x1x3xf32> to vector<1x1x1xf32>
    %45 = vector.shape_cast %44 : vector<1x1x1xf32> to vector<1x1xf32>
    %46 = vector.extract_strided_slice %27 {offsets = [3, 0, 0], sizes = [1, 1024, 32], strides = [1, 1, 1]} : vector<4x1024x32xf32> to vector<1x1024x32xf32>
    %47 = vector.shape_cast %46 : vector<1x1024x32xf32> to vector<1024x32xf32>
    %48 = vector.broadcast %45 : vector<1x1xf32> to vector<1024x32xf32>
    %49 = arith.mulf %48, %47 : vector<1024x32xf32>
    %50 = arith.addf %43, %49 : vector<1024x32xf32>
    %c0_29 = arith.constant 0 : index
    %c0_30 = arith.constant 0 : index
    %c0_31 = arith.constant 0 : index
    %51 = vector.load %arg9[%c0_29, %c0_30, %c0_31] : memref<4x1x32xf32, #tpu.memory_space<vmem>>, vector<4x1x32xf32>
    %52 = vector.extract_strided_slice %51 {offsets = [0, 0, 0], sizes = [1, 1, 32], strides = [1, 1, 1]} : vector<4x1x32xf32> to vector<1x1x32xf32>
    %53 = vector.shape_cast %52 : vector<1x1x32xf32> to vector<1x32xf32>
    %54 = vector.extract_strided_slice %26 {offsets = [1, 0, 0], sizes = [1, 1, 1], strides = [1, 1, 1]} : vector<4x1x3xf32> to vector<1x1x1xf32>
    %55 = vector.shape_cast %54 : vector<1x1x1xf32> to vector<1x1xf32>
    %56 = vector.extract_strided_slice %51 {offsets = [1, 0, 0], sizes = [1, 1, 32], strides = [1, 1, 1]} : vector<4x1x32xf32> to vector<1x1x32xf32>
    %57 = vector.shape_cast %56 : vector<1x1x32xf32> to vector<1x32xf32>
    %58 = vector.broadcast %55 : vector<1x1xf32> to vector<1x32xf32>
    %59 = arith.mulf %58, %57 : vector<1x32xf32>
    %60 = arith.addf %53, %59 : vector<1x32xf32>
    %61 = vector.extract_strided_slice %26 {offsets = [1, 0, 1], sizes = [1, 1, 1], strides = [1, 1, 1]} : vector<4x1x3xf32> to vector<1x1x1xf32>
    %62 = vector.shape_cast %61 : vector<1x1x1xf32> to vector<1x1xf32>
    %63 = vector.extract_strided_slice %51 {offsets = [2, 0, 0], sizes = [1, 1, 32], strides = [1, 1, 1]} : vector<4x1x32xf32> to vector<1x1x32xf32>
    %64 = vector.shape_cast %63 : vector<1x1x32xf32> to vector<1x32xf32>
    %65 = vector.broadcast %62 : vector<1x1xf32> to vector<1x32xf32>
    %66 = arith.mulf %65, %64 : vector<1x32xf32>
    %67 = arith.addf %60, %66 : vector<1x32xf32>
    %68 = vector.extract_strided_slice %26 {offsets = [1, 0, 2], sizes = [1, 1, 1], strides = [1, 1, 1]} : vector<4x1x3xf32> to vector<1x1x1xf32>
    %69 = vector.shape_cast %68 : vector<1x1x1xf32> to vector<1x1xf32>
    %70 = vector.extract_strided_slice %51 {offsets = [3, 0, 0], sizes = [1, 1, 32], strides = [1, 1, 1]} : vector<4x1x32xf32> to vector<1x1x32xf32>
    %71 = vector.shape_cast %70 : vector<1x1x32xf32> to vector<1x32xf32>
    %72 = vector.broadcast %69 : vector<1x1xf32> to vector<1x32xf32>
    %73 = arith.mulf %72, %71 : vector<1x32xf32>
    %74 = arith.addf %67, %73 : vector<1x32xf32>
    %c0_32 = arith.constant 0 : index
    %c0_33 = arith.constant 0 : index
    %c0_34 = arith.constant 0 : index
    %75 = vector.load %arg10[%c0_32, %c0_33, %c0_34] : memref<4x32x32xf32, #tpu.memory_space<vmem>>, vector<4x32x32xf32>
    %76 = vector.extract_strided_slice %75 {offsets = [0, 0, 0], sizes = [1, 32, 32], strides = [1, 1, 1]} : vector<4x32x32xf32> to vector<1x32x32xf32>
    %77 = vector.shape_cast %76 : vector<1x32x32xf32> to vector<32x32xf32>
    %78 = vector.extract_strided_slice %26 {offsets = [2, 0, 0], sizes = [1, 1, 1], strides = [1, 1, 1]} : vector<4x1x3xf32> to vector<1x1x1xf32>
    %79 = vector.shape_cast %78 : vector<1x1x1xf32> to vector<1x1xf32>
    %80 = vector.extract_strided_slice %75 {offsets = [1, 0, 0], sizes = [1, 32, 32], strides = [1, 1, 1]} : vector<4x32x32xf32> to vector<1x32x32xf32>
    %81 = vector.shape_cast %80 : vector<1x32x32xf32> to vector<32x32xf32>
    %82 = vector.broadcast %79 : vector<1x1xf32> to vector<32x32xf32>
    %83 = arith.mulf %82, %81 : vector<32x32xf32>
    %84 = arith.addf %77, %83 : vector<32x32xf32>
    %85 = vector.extract_strided_slice %26 {offsets = [2, 0, 1], sizes = [1, 1, 1], strides = [1, 1, 1]} : vector<4x1x3xf32> to vector<1x1x1xf32>
    %86 = vector.shape_cast %85 : vector<1x1x1xf32> to vector<1x1xf32>
    %87 = vector.extract_strided_slice %75 {offsets = [2, 0, 0], sizes = [1, 32, 32], strides = [1, 1, 1]} : vector<4x32x32xf32> to vector<1x32x32xf32>
    %88 = vector.shape_cast %87 : vector<1x32x32xf32> to vector<32x32xf32>
    %89 = vector.broadcast %86 : vector<1x1xf32> to vector<32x32xf32>
    %90 = arith.mulf %89, %88 : vector<32x32xf32>
    %91 = arith.addf %84, %90 : vector<32x32xf32>
    %92 = vector.extract_strided_slice %26 {offsets = [2, 0, 2], sizes = [1, 1, 1], strides = [1, 1, 1]} : vector<4x1x3xf32> to vector<1x1x1xf32>
    %93 = vector.shape_cast %92 : vector<1x1x1xf32> to vector<1x1xf32>
    %94 = vector.extract_strided_slice %75 {offsets = [3, 0, 0], sizes = [1, 32, 32], strides = [1, 1, 1]} : vector<4x32x32xf32> to vector<1x32x32xf32>
    %95 = vector.shape_cast %94 : vector<1x32x32xf32> to vector<32x32xf32>
    %96 = vector.broadcast %93 : vector<1x1xf32> to vector<32x32xf32>
    %97 = arith.mulf %96, %95 : vector<32x32xf32>
    %98 = arith.addf %91, %97 : vector<32x32xf32>
    %c0_35 = arith.constant 0 : index
    %c0_36 = arith.constant 0 : index
    %c0_37 = arith.constant 0 : index
    %99 = vector.load %arg11[%c0_35, %c0_36, %c0_37] : memref<4x1x32xf32, #tpu.memory_space<vmem>>, vector<4x1x32xf32>
    %100 = vector.extract_strided_slice %99 {offsets = [0, 0, 0], sizes = [1, 1, 32], strides = [1, 1, 1]} : vector<4x1x32xf32> to vector<1x1x32xf32>
    %101 = vector.shape_cast %100 : vector<1x1x32xf32> to vector<1x32xf32>
    %102 = vector.extract_strided_slice %26 {offsets = [3, 0, 0], sizes = [1, 1, 1], strides = [1, 1, 1]} : vector<4x1x3xf32> to vector<1x1x1xf32>
    %103 = vector.shape_cast %102 : vector<1x1x1xf32> to vector<1x1xf32>
    %104 = vector.extract_strided_slice %99 {offsets = [1, 0, 0], sizes = [1, 1, 32], strides = [1, 1, 1]} : vector<4x1x32xf32> to vector<1x1x32xf32>
    %105 = vector.shape_cast %104 : vector<1x1x32xf32> to vector<1x32xf32>
    %106 = vector.broadcast %103 : vector<1x1xf32> to vector<1x32xf32>
    %107 = arith.mulf %106, %105 : vector<1x32xf32>
    %108 = arith.addf %101, %107 : vector<1x32xf32>
    %109 = vector.extract_strided_slice %26 {offsets = [3, 0, 1], sizes = [1, 1, 1], strides = [1, 1, 1]} : vector<4x1x3xf32> to vector<1x1x1xf32>
    %110 = vector.shape_cast %109 : vector<1x1x1xf32> to vector<1x1xf32>
    %111 = vector.extract_strided_slice %99 {offsets = [2, 0, 0], sizes = [1, 1, 32], strides = [1, 1, 1]} : vector<4x1x32xf32> to vector<1x1x32xf32>
    %112 = vector.shape_cast %111 : vector<1x1x32xf32> to vector<1x32xf32>
    %113 = vector.broadcast %110 : vector<1x1xf32> to vector<1x32xf32>
    %114 = arith.mulf %113, %112 : vector<1x32xf32>
    %115 = arith.addf %108, %114 : vector<1x32xf32>
    %116 = vector.extract_strided_slice %26 {offsets = [3, 0, 2], sizes = [1, 1, 1], strides = [1, 1, 1]} : vector<4x1x3xf32> to vector<1x1x1xf32>
    %117 = vector.shape_cast %116 : vector<1x1x1xf32> to vector<1x1xf32>
    %118 = vector.extract_strided_slice %99 {offsets = [3, 0, 0], sizes = [1, 1, 32], strides = [1, 1, 1]} : vector<4x1x32xf32> to vector<1x1x32xf32>
    %119 = vector.shape_cast %118 : vector<1x1x32xf32> to vector<1x32xf32>
    %120 = vector.broadcast %117 : vector<1x1xf32> to vector<1x32xf32>
    %121 = arith.mulf %120, %119 : vector<1x32xf32>
    %122 = arith.addf %115, %121 : vector<1x32xf32>
    %c0_38 = arith.constant 0 : index
    %c0_39 = arith.constant 0 : index
    %123 = vector.load %arg7[%c0_38, %c0_39] : memref<2x1024xf32, #tpu.memory_space<vmem>>, vector<2x1024xf32>
    %cst_40 = arith.constant dense<0.000000e+00> : vector<2x32xf32>
    %124 = tpu.matmul %123, %50, %cst_40 {dimension_numbers = #tpu.dot_dimension_numbers<[1], [0], [0], [1], [0, 0, 1, 1], [], []>} : vector<2x1024xf32>, vector<1024x32xf32>, vector<2x32xf32> -> vector<2x32xf32>
    %125 = vector.broadcast %74 : vector<1x32xf32> to vector<2x32xf32>
    %126 = arith.addf %124, %125 : vector<2x32xf32>
    %cst_41 = arith.constant 0.000000e+00 : f32
    %127 = vector.broadcast %cst_41 : f32 to vector<2x32xf32>
    %128 = arith.maximumf %126, %127 : vector<2x32xf32>
    %cst_42 = arith.constant dense<0.000000e+00> : vector<2x32xf32>
    %129 = tpu.matmul %128, %98, %cst_42 {dimension_numbers = #tpu.dot_dimension_numbers<[1], [0], [0], [1], [0, 0, 1, 1], [], []>} : vector<2x32xf32>, vector<32x32xf32>, vector<2x32xf32> -> vector<2x32xf32>
    %130 = vector.broadcast %122 : vector<1x32xf32> to vector<2x32xf32>
    %131 = arith.addf %129, %130 : vector<2x32xf32>
    %c0_43 = arith.constant 0 : index
    %c0_44 = arith.constant 0 : index
    %132 = vector.load %arg12[%c0_43, %c0_44] : memref<32x10xf32, #tpu.memory_space<vmem>>, vector<32x10xf32>
    %cst_45 = arith.constant dense<0.000000e+00> : vector<2x10xf32>
    %133 = tpu.matmul %131, %132, %cst_45 {dimension_numbers = #tpu.dot_dimension_numbers<[1], [0], [0], [1], [0, 0, 1, 1], [], []>} : vector<2x32xf32>, vector<32x10xf32>, vector<2x10xf32> -> vector<2x10xf32>
    %c0_46 = arith.constant 0 : index
    %c0_47 = arith.constant 0 : index
    %134 = vector.load %arg13[%c0_46, %c0_47] : memref<1x10xf32, #tpu.memory_space<vmem>>, vector<1x10xf32>
    %135 = vector.broadcast %134 : vector<1x10xf32> to vector<2x10xf32>
    %136 = arith.addf %133, %135 : vector<2x10xf32>
    %c0_48 = arith.constant 0 : index
    %c0_49 = arith.constant 0 : index
    %137 = vector.load %arg14[%c0_48, %c0_49] : memref<2x10xf32, #tpu.memory_space<vmem>>, vector<2x10xf32>
    tpu.vector_store %arg14[%c0_48, %c0_49], %136 {strides = array<i32>} : memref<2x10xf32, #tpu.memory_space<vmem>>, vector<2x10xf32>,
    return
  }
}

</mosaic_0001>

<llo_original>
// kernel: adamerging_forward.3
$region0: #{adamerging_forward.3}
  #allocation0 [shape = 'u32[]', space=smem, size = 0x4, offset = 0x4, fixed_abs, tag = 'smem constant byte address 0x4 - core index']
  #allocation1 [shape = 'u32[144,128]{1,0:T(1,128)}', space=vmem, size = 0x12000, scoped, tag = 'internal scratch']
  %s0 = inlined_call_operand.vmem [shape: f32[4,1,6], index: 0, kind: input, shape index: {}]
  %s1 = inlined_call_operand.vmem [shape: f32[4,6,256], index: 1, kind: input, shape index: {}]
  %s2 = inlined_call_operand.vmem [shape: f32[4,1,256], index: 2, kind: input, shape index: {}]
  %s3 = inlined_call_operand.vmem [shape: f32[4,256,256], index: 3, kind: input, shape index: {}]
  %s4 = inlined_call_operand.vmem [shape: f32[4,1,256], index: 4, kind: input, shape index: {}]
  %s5 = inlined_call_operand.vmem [shape: f32[4,256,3], index: 5, kind: input, shape index: {}]
  %s6 = inlined_call_operand.vmem [shape: f32[4,1,3], index: 6, kind: input, shape index: {}]
  %s7 = inlined_call_operand.vmem [shape: f32[2,1024], index: 7, kind: input, shape index: {}]
  %s8 = inlined_call_operand.vmem [shape: f32[4,1024,32], index: 8, kind: input, shape index: {}]
  %s9 = inlined_call_operand.vmem [shape: f32[4,1,32], index: 9, kind: input, shape index: {}]
  %s10 = inlined_call_operand.vmem [shape: f32[4,32,32], index: 10, kind: input, shape index: {}]
  %s11 = inlined_call_operand.vmem [shape: f32[4,1,32], index: 11, kind: input, shape index: {}]
  %s12 = inlined_call_operand.vmem [shape: f32[32,10], index: 12, kind: input, shape index: {}]
  %s13 = inlined_call_operand.vmem [shape: f32[1,10], index: 13, kind: input, shape index: {}]
  %s14 = inlined_call_operand.hbm [shape: f32[2,10], index: 14, kind: output, shape index: {}]
  %s15 = sld [smem:[#allocation0]]
  $region66: #{adamerging_forward.3} parent=0
    _
  %s17 = ssub.s32 1, %s15
  %s18 = scalar_select 0, %s17, %s15
  $region1: #{adamerging_forward.3} parent=0
    #allocation2 [shape = 'u8[1024]{0}', space=vmem, size = 0x400, scoped, tag = 'output window, operand 0, single buffered']
    #allocation3 [shape = 's32[1]{0}', space=sflag, size = 0x4, scoped, tag = 'scoped memory for adamerging_forward.3']
    %19 = vsyncpa [#allocation3], 0
    // Predicated region
    $region2: #{adamerging_forward.3} parent=1 // pred_check
      _
    $region3: #{adamerging_forward.3} parent=1 // pred_check_branch
      %21 = sbr.rel (0) target = $region5
    $region4: #{adamerging_forward.3} parent=1 // pred_region
      _
    $region5: #{adamerging_forward.3} parent=1 // pred_fallthru
      _
    // Predicated region
    $region6: #{adamerging_forward.3} parent=1 // pred_check
      _
    $region7: #{adamerging_forward.3} parent=1 // pred_check_branch
      %23 = sbr.rel (0) target = $region9
    $region8: #{adamerging_forward.3} parent=1 // pred_region
      _
    $region9: #{adamerging_forward.3} parent=1 // pred_fallthru
      _
    // Predicated region
    $region10: #{adamerging_forward.3} parent=1 // pred_check
      _
    $region11: #{adamerging_forward.3} parent=1 // pred_check_branch
      %25 = sbr.rel (0) target = $region13
    $region12: #{adamerging_forward.3} parent=1 // pred_region
      _
    $region13: #{adamerging_forward.3} parent=1 // pred_fallthru
      _
    // Predicated region
    $region14: #{adamerging_forward.3} parent=1 // pred_check
      _
    $region15: #{adamerging_forward.3} parent=1 // pred_check_branch
      %27 = sbr.rel (0) target = $region17
    $region16: #{adamerging_forward.3} parent=1 // pred_region
      _
    $region17: #{adamerging_forward.3} parent=1 // pred_fallthru
      _
    // Predicated region
    $region18: #{adamerging_forward.3} parent=1 // pred_check
      _
    $region19: #{adamerging_forward.3} parent=1 // pred_check_branch
      %29 = sbr.rel (0) target = $region21
    $region20: #{adamerging_forward.3} parent=1 // pred_region
      _
    $region21: #{adamerging_forward.3} parent=1 // pred_fallthru
      _
    // Predicated region
    $region22: #{adamerging_forward.3} parent=1 // pred_check
      _
    $region23: #{adamerging_forward.3} parent=1 // pred_check_branch
      %31 = sbr.rel (0) target = $region25
    $region24: #{adamerging_forward.3} parent=1 // pred_region
      _
    $region25: #{adamerging_forward.3} parent=1 // pred_fallthru
      _
    // Predicated region
    $region26: #{adamerging_forward.3} parent=1 // pred_check
      _
    $region27: #{adamerging_forward.3} parent=1 // pred_check_branch
      %33 = sbr.rel (0) target = $region29
    $region28: #{adamerging_forward.3} parent=1 // pred_region
      _
    $region29: #{adamerging_forward.3} parent=1 // pred_fallthru
      _
    // Predicated region
    $region30: #{adamerging_forward.3} parent=1 // pred_check
      _
    $region31: #{adamerging_forward.3} parent=1 // pred_check_branch
      %35 = sbr.rel (0) target = $region33
    $region32: #{adamerging_forward.3} parent=1 // pred_region
      _
    $region33: #{adamerging_forward.3} parent=1 // pred_fallthru
      _
    // Predicated region
    $region34: #{adamerging_forward.3} parent=1 // pred_check
      _
    $region35: #{adamerging_forward.3} parent=1 // pred_check_branch
      %37 = sbr.rel (0) target = $region37
    $region36: #{adamerging_forward.3} parent=1 // pred_region
      _
    $region37: #{adamerging_forward.3} parent=1 // pred_fallthru
      _
    // Predicated region
    $region38: #{adamerging_forward.3} parent=1 // pred_check
      _
    $region39: #{adamerging_forward.3} parent=1 // pred_check_branch
      %39 = sbr.rel (0) target = $region41
    $region40: #{adamerging_forward.3} parent=1 // pred_region
      _
    $region41: #{adamerging_forward.3} parent=1 // pred_fallthru
      _
    // Predicated region
    $region42: #{adamerging_forward.3} parent=1 // pred_check
      _
    $region43: #{adamerging_forward.3} parent=1 // pred_check_branch
      %41 = sbr.rel (0) target = $region45
    $region44: #{adamerging_forward.3} parent=1 // pred_region
      _
    $region45: #{adamerging_forward.3} parent=1 // pred_fallthru
      _
    // Predicated region
    $region46: #{adamerging_forward.3} parent=1 // pred_check
      _
    $region47: #{adamerging_forward.3} parent=1 // pred_check_branch
      %43 = sbr.rel (0) target = $region49
    $region48: #{adamerging_forward.3} parent=1 // pred_region
      _
    $region49: #{adamerging_forward.3} parent=1 // pred_fallthru
      _
    // Predicated region
    $region50: #{adamerging_forward.3} parent=1 // pred_check
      _
    $region51: #{adamerging_forward.3} parent=1 // pred_check_branch
      %45 = sbr.rel (0) target = $region53
    $region52: #{adamerging_forward.3} parent=1 // pred_region
      _
    $region53: #{adamerging_forward.3} parent=1 // pred_fallthru
      _
    // Predicated region
    $region54: #{adamerging_forward.3} parent=1 // pred_check
      _
    $region55: #{adamerging_forward.3} parent=1 // pred_check_branch
      %47 = sbr.rel (0) target = $region57
    $region56: #{adamerging_forward.3} parent=1 // pred_region
      _
    $region57: #{adamerging_forward.3} parent=1 // pred_fallthru
      _
    %v48 = vld [vmem:[%s0] sm:$0x1]
    %v49 = vld [vmem:[%s0 + $0x1] sm:$0x1]
    %v50 = vld [vmem:[%s0 + $0x2] sm:$0x1]
    %v51 = vld [vmem:[%s0 + $0x3] sm:$0x1]
    %v52 = vld [vmem:[%s1] sm:$0x3f]
    %v53 = vld [vmem:[%s1 + $0x8] sm:$0x3f]
    %v54 = vld [vmem:[%s1 + $0x10] sm:$0x3f]
    %v55 = vld [vmem:[%s1 + $0x18] sm:$0x3f]
    %v56 = vld [vmem:[%s1 + $0x20] sm:$0x3f]
    %v57 = vld [vmem:[%s1 + $0x28] sm:$0x3f]
    %v58 = vld [vmem:[%s1 + $0x30] sm:$0x3f]
    %v59 = vld [vmem:[%s1 + $0x38] sm:$0x3f]
    %v60 = vld [vmem:[%s2] sm:$0x3]
    %v61 = vld [vmem:[%s2 + $0x2] sm:$0x3]
    %v62 = vld [vmem:[%s2 + $0x4] sm:$0x3]
    %v63 = vld [vmem:[%s2 + $0x6] sm:$0x3]
    %v65 = vlaneseq
    %v66 = vshrl.u32 %v65, 7
    %v67 = vsub.s32 0, %v66
    %v68 = vrot.slane %v60, %v67
    %v69 = vlaneseq
    %v70 = vshrl.u32 %v69, 7
    %v71 = vsub.s32 1, %v70
    %v72 = vrot.slane %v60, %v71
    %vm75 = vcmask 48128
    %v77 = vsel %vm75, %v48, 0
    %vm79 = vcmask 1045504
    %v81 = vsel %vm79, %v52, 0
    %v84 = vsel %vm79, %v53, 0
    %86 = vmatprep.subr.mxu0 %v84
    %87 = vmatpush1.msra.mxu0 %v81
    %88 = vmatprep.subr.mxu0 0.0
    %89 = vmatpush1.msra.mxu0 0.0
    %90 = vmatprep.subr.mxu0 0.0
    %91 = vmatpush1.msra.mxu0 0.0
    %92 = vmatprep.subr.mxu0 0.0
    %93 = vmatpush1.msra.mxu0 0.0
    %94 = vmatprep.subr.mxu0 0.0
    %95 = vmatpush1.msra.mxu0 0.0
    %96 = vmatprep.subr.mxu0 0.0
    %97 = vmatpush1.msra.mxu0 0.0
    %98 = vmatprep.subr.mxu0 0.0
    %99 = vmatpush1.msra.mxu0 0.0
    %100 = vmatprep.subr.mxu0 0.0
    %101 = vmatpush1.msra.mxu0 0.0
    %102 = vmatprep.subr.mxu0 0.0
    %103 = vmatpush1.msra.mxu0 0.0
    %104 = vmatprep.subr.mxu0 0.0
    %105 = vmatpush1.msra.mxu0 0.0
    %106 = vmatprep.subr.mxu0 0.0
    %107 = vmatpush1.msra.mxu0 0.0
    %108 = vmatprep.subr.mxu0 0.0
    %109 = vmatpush1.msra.mxu0 0.0
    %110 = vmatprep.subr.mxu0 0.0
    %111 = vmatpush1.msra.mxu0 0.0
    %112 = vmatprep.subr.mxu0 0.0
    %113 = vmatpush1.msra.mxu0 0.0
    %114 = vmatprep.subr.mxu0 0.0
    %115 = vmatpush1.msra.mxu0 0.0
    %116 = vmatprep.subr.mxu0 0.0
    %117 = vmatpush1.msra.mxu0 0.0
    %118 = vmatprep.subr.mxu0 0.0
    %119 = vmatpush1.msra.mxu0 0.0
    %120 = vmatprep.subr.mxu0 0.0
    %121 = vmatpush1.msra.mxu0 0.0
    %122 = vmatprep.subr.mxu0 0.0
    %123 = vmatpush1.msra.mxu0 0.0
    %124 = vmatprep.subr.mxu0 0.0
    %125 = vmatpush1.msra.mxu0 0.0
    %126 = vmatprep.subr.mxu0 0.0
    %127 = vmatpush1.msra.mxu0 0.0
    %128 = vmatprep.subr.mxu0 0.0
    %129 = vmatpush1.msra.mxu0 0.0
    %130 = vmatprep.subr.mxu0 0.0
    %131 = vmatpush1.msra.mxu0 0.0
    %132 = vmatprep.subr.mxu0 0.0
    %133 = vmatpush1.msra.mxu0 0.0
    %134 = vmatprep.subr.mxu0 0.0
    %135 = vmatpush1.msra.mxu0 0.0
    %136 = vmatprep.subr.mxu0 0.0
    %137 = vmatpush1.msra.mxu0 0.0
    %138 = vmatprep.subr.mxu0 0.0
    %139 = vmatpush1.msra.mxu0 0.0
    %140 = vmatprep.subr.mxu0 0.0
    %141 = vmatpush1.msra.mxu0 0.0
    %142 = vmatprep.subr.mxu0 0.0
    %143 = vmatpush1.msra.mxu0 0.0
    %144 = vmatprep.subr.mxu0 0.0
    %145 = vmatpush1.msra.mxu0 0.0
    %146 = vmatprep.subr.mxu0 0.0
    %147 = vmatpush1.msra.mxu0 0.0
    %148 = vmatprep.subr.mxu0 0.0
    %149 = vmatpush1.msra.mxu0 0.0
    %150 = vmatprep.mubr.f32.mxu0 0.0
    %151 = vmatmul.mubr.f32.gmra.mrb[0].mxu0 %v77
    %v152 = vpop.f32.mrb[0].mxu0
    %v153 = vadd.f32 %v68, %v152
    %v154 = vpop.f32.mrb[0].mxu0
    %v155 = vadd.f32 %v72, %v154
    %156 = vdwg.mxu0
    %v158 = vlaneseq
    %v159 = vshrl.u32 %v158, 7
    %v160 = vsub.s32 0, %v159
    %v161 = vrot.slane %v61, %v160
    %v162 = vlaneseq
    %v163 = vshrl.u32 %v162, 7
    %v164 = vsub.s32 1, %v163
    %v165 = vrot.slane %v61, %v164
    %v169 = vsel %vm75, %v49, 0
    %v172 = vsel %vm79, %v54, 0
    %v175 = vsel %vm79, %v55, 0
    %177 = vmatprep.subr.mxu0 %v175
    %178 = vmatpush1.msra.mxu0 %v172
    %179 = vmatprep.subr.mxu0 0.0
    %180 = vmatpush1.msra.mxu0 0.0
    %181 = vmatprep.subr.mxu0 0.0
    %182 = vmatpush1.msra.mxu0 0.0
    %183 = vmatprep.subr.mxu0 0.0
    %184 = vmatpush1.msra.mxu0 0.0
    %185 = vmatprep.subr.mxu0 0.0
    %186 = vmatpush1.msra.mxu0 0.0
    %187 = vmatprep.subr.mxu0 0.0
    %188 = vmatpush1.msra.mxu0 0.0
    %189 = vmatprep.subr.mxu0 0.0
    %190 = vmatpush1.msra.mxu0 0.0
    %191 = vmatprep.subr.mxu0 0.0
    %192 = vmatpush1.msra.mxu0 0.0
    %193 = vmatprep.subr.mxu0 0.0
    %194 = vmatpush1.msra.mxu0 0.0
    %195 = vmatprep.subr.mxu0 0.0
    %196 = vmatpush1.msra.mxu0 0.0
    %197 = vmatprep.subr.mxu0 0.0
    %198 = vmatpush1.msra.mxu0 0.0
    %199 = vmatprep.subr.mxu0 0.0
    %200 = vmatpush1.msra.mxu0 0.0
    %201 = vmatprep.subr.mxu0 0.0
    %202 = vmatpush1.msra.mxu0 0.0
    %203 = vmatprep.subr.mxu0 0.0
    %204 = vmatpush1.msra.mxu0 0.0
    %205 = vmatprep.subr.mxu0 0.0
    %206 = vmatpush1.msra.mxu0 0.0
    %207 = vmatprep.subr.mxu0 0.0
    %208 = vmatpush1.msra.mxu0 0.0
    %209 = vmatprep.subr.mxu0 0.0
    %210 = vmatpush1.msra.mxu0 0.0
    %211 = vmatprep.subr.mxu0 0.0
    %212 = vmatpush1.msra.mxu0 0.0
    %213 = vmatprep.subr.mxu0 0.0
    %214 = vmatpush1.msra.mxu0 0.0
    %215 = vmatprep.subr.mxu0 0.0
    %216 = vmatpush1.msra.mxu0 0.0
    %217 = vmatprep.subr.mxu0 0.0
    %218 = vmatpush1.msra.mxu0 0.0
    %219 = vmatprep.subr.mxu0 0.0
    %220 = vmatpush1.msra.mxu0 0.0
    %221 = vmatprep.subr.mxu0 0.0
    %222 = vmatpush1.msra.mxu0 0.0
    %223 = vmatprep.subr.mxu0 0.0
    %224 = vmatpush1.msra.mxu0 0.0
    %225 = vmatprep.subr.mxu0 0.0
    %226 = vmatpush1.msra.mxu0 0.0
    %227 = vmatprep.subr.mxu0 0.0
    %228 = vmatpush1.msra.mxu0 0.0
    %229 = vmatprep.subr.mxu0 0.0
    %230 = vmatpush1.msra.mxu0 0.0
    %231 = vmatprep.subr.mxu0 0.0
    %232 = vmatpush1.msra.mxu0 0.0
    %233 = vmatprep.subr.mxu0 0.0
    %234 = vmatpush1.msra.mxu0 0.0
    %235 = vmatprep.subr.mxu0 0.0
    %236 = vmatpush1.msra.mxu0 0.0
    %237 = vmatprep.subr.mxu0 0.0
    %238 = vmatpush1.msra.mxu0 0.0
    %239 = vmatprep.subr.mxu0 0.0
    %240 = vmatpush1.msra.mxu0 0.0
    %241 = vmatprep.mubr.f32.mxu0 0.0
    %242 = vmatmul.mubr.f32.gmra.mrb[0].mxu0 %v169
    %v243 = vpop.f32.mrb[0].mxu0
    %v244 = vadd.f32 %v161, %v243
    %v245 = vpop.f32.mrb[0].mxu0
    %v246 = vadd.f32 %v165, %v245
    %247 = vdwg.mxu0
    %v249 = vlaneseq
    %v250 = vshrl.u32 %v249, 7
    %v251 = vsub.s32 0, %v250
    %v252 = vrot.slane %v62, %v251
    %v253 = vlaneseq
    %v254 = vshrl.u32 %v253, 7
    %v255 = vsub.s32 1, %v254
    %v256 = vrot.slane %v62, %v255
    %v260 = vsel %vm75, %v50, 0
    %v263 = vsel %vm79, %v56, 0
    %v266 = vsel %vm79, %v57, 0
    %268 = vmatprep.subr.mxu0 %v266
    %269 = vmatpush1.msra.mxu0 %v263
    %270 = vmatprep.subr.mxu0 0.0
    %271 = vmatpush1.msra.mxu0 0.0
    %272 = vmatprep.subr.mxu0 0.0
    %273 = vmatpush1.msra.mxu0 0.0
    %274 = vmatprep.subr.mxu0 0.0
    %275 = vmatpush1.msra.mxu0 0.0
    %276 = vmatprep.subr.mxu0 0.0
    %277 = vmatpush1.msra.mxu0 0.0
    %278 = vmatprep.subr.mxu0 0.0
    %279 = vmatpush1.msra.mxu0 0.0
    %280 = vmatprep.subr.mxu0 0.0
    %281 = vmatpush1.msra.mxu0 0.0
    %282 = vmatprep.subr.mxu0 0.0
    %283 = vmatpush1.msra.mxu0 0.0
    %284 = vmatprep.subr.mxu0 0.0
    %285 = vmatpush1.msra.mxu0 0.0
    %286 = vmatprep.subr.mxu0 0.0
    %287 = vmatpush1.msra.mxu0 0.0
    %288 = vmatprep.subr.mxu0 0.0
    %289 = vmatpush1.msra.mxu0 0.0
    %290 = vmatprep.subr.mxu0 0.0
    %291 = vmatpush1.msra.mxu0 0.0
    %292 = vmatprep.subr.mxu0 0.0
    %293 = vmatpush1.msra.mxu0 0.0
    %294 = vmatprep.subr.mxu0 0.0
    %295 = vmatpush1.msra.mxu0 0.0
    %296 = vmatprep.subr.mxu0 0.0
    %297 = vmatpush1.msra.mxu0 0.0
    %298 = vmatprep.subr.mxu0 0.0
    %299 = vmatpush1.msra.mxu0 0.0
    %300 = vmatprep.subr.mxu0 0.0
    %301 = vmatpush1.msra.mxu0 0.0
    %302 = vmatprep.subr.mxu0 0.0
    %303 = vmatpush1.msra.mxu0 0.0
    %304 = vmatprep.subr.mxu0 0.0
    %305 = vmatpush1.msra.mxu0 0.0
    %306 = vmatprep.subr.mxu0 0.0
    %307 = vmatpush1.msra.mxu0 0.0
    %308 = vmatprep.subr.mxu0 0.0
    %309 = vmatpush1.msra.mxu0 0.0
    %310 = vmatprep.subr.mxu0 0.0
    %311 = vmatpush1.msra.mxu0 0.0
    %312 = vmatprep.subr.mxu0 0.0
    %313 = vmatpush1.msra.mxu0 0.0
    %314 = vmatprep.subr.mxu0 0.0
    %315 = vmatpush1.msra.mxu0 0.0
    %316 = vmatprep.subr.mxu0 0.0
    %317 = vmatpush1.msra.mxu0 0.0
    %318 = vmatprep.subr.mxu0 0.0
    %319 = vmatpush1.msra.mxu0 0.0
    %320 = vmatprep.subr.mxu0 0.0
    %321 = vmatpush1.msra.mxu0 0.0
    %322 = vmatprep.subr.mxu0 0.0
    %323 = vmatpush1.msra.mxu0 0.0
    %324 = vmatprep.subr.mxu0 0.0
    %325 = vmatpush1.msra.mxu0 0.0
    %326 = vmatprep.subr.mxu0 0.0
    %327 = vmatpush1.msra.mxu0 0.0
    %328 = vmatprep.subr.mxu0 0.0
    %329 = vmatpush1.msra.mxu0 0.0
    %330 = vmatprep.subr.mxu0 0.0
    %331 = vmatpush1.msra.mxu0 0.0
    %332 = vmatprep.mubr.f32.mxu0 0.0
    %333 = vmatmul.mubr.f32.gmra.mrb[0].mxu0 %v260
    %v334 = vpop.f32.mrb[0].mxu0
    %v335 = vadd.f32 %v252, %v334
    %v336 = vpop.f32.mrb[0].mxu0
    %v337 = vadd.f32 %v256, %v336
    %338 = vdwg.mxu0
    %v340 = vlaneseq
    %v341 = vshrl.u32 %v340, 7
    %v342 = vsub.s32 0, %v341
    %v343 = vrot.slane %v63, %v342
    %v344 = vlaneseq
    %v345 = vshrl.u32 %v344, 7
    %v346 = vsub.s32 1, %v345
    %v347 = vrot.slane %v63, %v346
    %v351 = vsel %vm75, %v51, 0
    %v354 = vsel %vm79, %v58, 0
    %v357 = vsel %vm79, %v59, 0
    %359 = vmatprep.subr.mxu0 %v357
    %360 = vmatpush1.msra.mxu0 %v354
    %361 = vmatprep.subr.mxu0 0.0
    %362 = vmatpush1.msra.mxu0 0.0
    %363 = vmatprep.subr.mxu0 0.0
    %364 = vmatpush1.msra.mxu0 0.0
    %365 = vmatprep.subr.mxu0 0.0
    %366 = vmatpush1.msra.mxu0 0.0
    %367 = vmatprep.subr.mxu0 0.0
    %368 = vmatpush1.msra.mxu0 0.0
    %369 = vmatprep.subr.mxu0 0.0
    %370 = vmatpush1.msra.mxu0 0.0
    %371 = vmatprep.subr.mxu0 0.0
    %372 = vmatpush1.msra.mxu0 0.0
    %373 = vmatprep.subr.mxu0 0.0
    %374 = vmatpush1.msra.mxu0 0.0
    %375 = vmatprep.subr.mxu0 0.0
    %376 = vmatpush1.msra.mxu0 0.0
    %377 = vmatprep.subr.mxu0 0.0
    %378 = vmatpush1.msra.mxu0 0.0
    %379 = vmatprep.subr.mxu0 0.0
    %380 = vmatpush1.msra.mxu0 0.0
    %381 = vmatprep.subr.mxu0 0.0
    %382 = vmatpush1.msra.mxu0 0.0
    %383 = vmatprep.subr.mxu0 0.0
    %384 = vmatpush1.msra.mxu0 0.0
    %385 = vmatprep.subr.mxu0 0.0
    %386 = vmatpush1.msra.mxu0 0.0
    %387 = vmatprep.subr.mxu0 0.0
    %388 = vmatpush1.msra.mxu0 0.0
    %389 = vmatprep.subr.mxu0 0.0
    %390 = vmatpush1.msra.mxu0 0.0
    %391 = vmatprep.subr.mxu0 0.0
    %392 = vmatpush1.msra.mxu0 0.0
    %393 = vmatprep.subr.mxu0 0.0
    %394 = vmatpush1.msra.mxu0 0.0
    %395 = vmatprep.subr.mxu0 0.0
    %396 = vmatpush1.msra.mxu0 0.0
    %397 = vmatprep.subr.mxu0 0.0
    %398 = vmatpush1.msra.mxu0 0.0
    %399 = vmatprep.subr.mxu0 0.0
    %400 = vmatpush1.msra.mxu0 0.0
    %401 = vmatprep.subr.mxu0 0.0
    %402 = vmatpush1.msra.mxu0 0.0
    %403 = vmatprep.subr.mxu0 0.0
    %404 = vmatpush1.msra.mxu0 0.0
    %405 = vmatprep.subr.mxu0 0.0
    %406 = vmatpush1.msra.mxu0 0.0
    %407 = vmatprep.subr.mxu0 0.0
    %408 = vmatpush1.msra.mxu0 0.0
    %409 = vmatprep.subr.mxu0 0.0
    %410 = vmatpush1.msra.mxu0 0.0
    %411 = vmatprep.subr.mxu0 0.0
    %412 = vmatpush1.msra.mxu0 0.0
    %413 = vmatprep.subr.mxu0 0.0
    %414 = vmatpush1.msra.mxu0 0.0
    %415 = vmatprep.subr.mxu0 0.0
    %416 = vmatpush1.msra.mxu0 0.0
    %417 = vmatprep.subr.mxu0 0.0
    %418 = vmatpush1.msra.mxu0 0.0
    %419 = vmatprep.subr.mxu0 0.0
    %420 = vmatpush1.msra.mxu0 0.0
    %421 = vmatprep.subr.mxu0 0.0
    %422 = vmatpush1.msra.mxu0 0.0
    %423 = vmatprep.mubr.f32.mxu0 0.0
    %424 = vmatmul.mubr.f32.gmra.mrb[0].mxu0 %v351
    %v425 = vpop.f32.mrb[0].mxu0
    %v426 = vadd.f32 %v343, %v425
    %v427 = vpop.f32.mrb[0].mxu0
    %v428 = vadd.f32 %v347, %v427
    %429 = vdwg.mxu0
    %v430 = vmax.f32 %v153, 0.0
    %v431 = vmax.f32 %v155, 0.0
    %v432 = vmax.f32 %v244, 0.0
    %v433 = vmax.f32 %v246, 0.0
    %v434 = vmax.f32 %v335, 0.0
    %v435 = vmax.f32 %v337, 0.0
    %v436 = vmax.f32 %v426, 0.0
    %v437 = vmax.f32 %v428, 0.0
    %v438 = vld [vmem:[%s3] sm:$0xff]
    %v439 = vld [vmem:[%s3 + $0x8] sm:$0xff]
    %v440 = vld [vmem:[%s3 + $0x10] sm:$0xff]
    %v441 = vld [vmem:[%s3 + $0x18] sm:$0xff]
    %v442 = vld [vmem:[%s3 + $0x20] sm:$0xff]
    %v443 = vld [vmem:[%s3 + $0x28] sm:$0xff]
    %v444 = vld [vmem:[%s3 + $0x30] sm:$0xff]
    %v445 = vld [vmem:[%s3 + $0x38] sm:$0xff]
    %v446 = vld [vmem:[%s3 + $0x40] sm:$0xff]
    %v447 = vld [vmem:[%s3 + $0x48] sm:$0xff]
    %v448 = vld [vmem:[%s3 + $0x50] sm:$0xff]
    %v449 = vld [vmem:[%s3 + $0x58] sm:$0xff]
    %v450 = vld [vmem:[%s3 + $0x60] sm:$0xff]
    %v451 = vld [vmem:[%s3 + $0x68] sm:$0xff]
    %v452 = vld [vmem:[%s3 + $0x70] sm:$0xff]
    %v453 = vld [vmem:[%s3 + $0x78] sm:$0xff]
    %v454 = vld [vmem:[%s3 + $0x80] sm:$0xff]
    %v455 = vld [vmem:[%s3 + $0x88] sm:$0xff]
    %v456 = vld [vmem:[%s3 + $0x90] sm:$0xff]
    %v457 = vld [vmem:[%s3 + $0x98] sm:$0xff]
    %v458 = vld [vmem:[%s3 + $0xa0] sm:$0xff]
    %v459 = vld [vmem:[%s3 + $0xa8] sm:$0xff]
    %v460 = vld [vmem:[%s3 + $0xb0] sm:$0xff]
    %v461 = vld [vmem:[%s3 + $0xb8] sm:$0xff]
    %v462 = vld [vmem:[%s3 + $0xc0] sm:$0xff]
    %v463 = vld [vmem:[%s3 + $0xc8] sm:$0xff]
    %v464 = vld [vmem:[%s3 + $0xd0] sm:$0xff]
    %v465 = vld [vmem:[%s3 + $0xd8] sm:$0xff]
    %v466 = vld [vmem:[%s3 + $0xe0] sm:$0xff]
    %v467 = vld [vmem:[%s3 + $0xe8] sm:$0xff]
    %v468 = vld [vmem:[%s3 + $0xf0] sm:$0xff]
    %v469 = vld [vmem:[%s3 + $0xf8] sm:$0xff]
    %v470 = vld [vmem:[%s3 + $0x100] sm:$0xff]
    %v471 = vld [vmem:[%s3 + $0x108] sm:$0xff]
    %v472 = vld [vmem:[%s3 + $0x110] sm:$0xff]
    %v473 = vld [vmem:[%s3 + $0x118] sm:$0xff]
    %v474 = vld [vmem:[%s3 + $0x120] sm:$0xff]
    %v475 = vld [vmem:[%s3 + $0x128] sm:$0xff]
    %v476 = vld [vmem:[%s3 + $0x130] sm:$0xff]
    %v477 = vld [vmem:[%s3 + $0x138] sm:$0xff]
    %v478 = vld [vmem:[%s3 + $0x140] sm:$0xff]
    %v479 = vld [vmem:[%s3 + $0x148] sm:$0xff]
    %v480 = vld [vmem:[%s3 + $0x150] sm:$0xff]
    %v481 = vld [vmem:[%s3 + $0x158] sm:$0xff]
    %v482 = vld [vmem:[%s3 + $0x160] sm:$0xff]
    %v483 = vld [vmem:[%s3 + $0x168] sm:$0xff]
    %v484 = vld [vmem:[%s3 + $0x170] sm:$0xff]
    %v485 = vld [vmem:[%s3 + $0x178] sm:$0xff]
    %v486 = vld [vmem:[%s3 + $0x180] sm:$0xff]
    %v487 = vld [vmem:[%s3 + $0x188] sm:$0xff]
    %v488 = vld [vmem:[%s3 + $0x190] sm:$0xff]
    %v489 = vld [vmem:[%s3 + $0x198] sm:$0xff]
    %v490 = vld [vmem:[%s3 + $0x1a0] sm:$0xff]
    %v491 = vld [vmem:[%s3 + $0x1a8] sm:$0xff]
    %v492 = vld [vmem:[%s3 + $0x1b0] sm:$0xff]
    %v493 = vld [vmem:[%s3 + $0x1b8] sm:$0xff]
    %v494 = vld [vmem:[%s3 + $0x1c0] sm:$0xff]
    %v495 = vld [vmem:[%s3 + $0x1c8] sm:$0xff]
    %v496 = vld [vmem:[%s3 + $0x1d0] sm:$0xff]
    %v497 = vld [vmem:[%s3 + $0x1d8] sm:$0xff]
    %v498 = vld [vmem:[%s3 + $0x1e0] sm:$0xff]
    %v499 = vld [vmem:[%s3 + $0x1e8] sm:$0xff]
    %v500 = vld [vmem:[%s3 + $0x1f0] sm:$0xff]
    %v501 = vld [vmem:[%s3 + $0x1f8] sm:$0xff]
    %v502 = vld [vmem:[%s3 + $0x200] sm:$0xff]
    %v503 = vld [vmem:[%s3 + $0x208] sm:$0xff]
    %v504 = vld [vmem:[%s3 + $0x210] sm:$0xff]
    %v505 = vld [vmem:[%s3 + $0x218] sm:$0xff]
    %v506 = vld [vmem:[%s3 + $0x220] sm:$0xff]
    %v507 = vld [vmem:[%s3 + $0x228] sm:$0xff]
    %v508 = vld [vmem:[%s3 + $0x230] sm:$0xff]
    %v509 = vld [vmem:[%s3 + $0x238] sm:$0xff]
    %v510 = vld [vmem:[%s3 + $0x240] sm:$0xff]
    %v511 = vld [vmem:[%s3 + $0x248] sm:$0xff]
    %v512 = vld [vmem:[%s3 + $0x250] sm:$0xff]
    %v513 = vld [vmem:[%s3 + $0x258] sm:$0xff]
    %v514 = vld [vmem:[%s3 + $0x260] sm:$0xff]
    %v515 = vld [vmem:[%s3 + $0x268] sm:$0xff]
    %v516 = vld [vmem:[%s3 + $0x270] sm:$0xff]
    %v517 = vld [vmem:[%s3 + $0x278] sm:$0xff]
    %v518 = vld [vmem:[%s3 + $0x280] sm:$0xff]
    %v519 = vld [vmem:[%s3 + $0x288] sm:$0xff]
    %v520 = vld [vmem:[%s3 + $0x290] sm:$0xff]
    %v521 = vld [vmem:[%s3 + $0x298] sm:$0xff]
    %v522 = vld [vmem:[%s3 + $0x2a0] sm:$0xff]
    %v523 = vld [vmem:[%s3 + $0x2a8] sm:$0xff]
    %v524 = vld [vmem:[%s3 + $0x2b0] sm:$0xff]
    %v525 = vld [vmem:[%s3 + $0x2b8] sm:$0xff]
    %v526 = vld [vmem:[%s3 + $0x2c0] sm:$0xff]
    %v527 = vld [vmem:[%s3 + $0x2c8] sm:$0xff]
    %v528 = vld [vmem:[%s3 + $0x2d0] sm:$0xff]
    %v529 = vld [vmem:[%s3 + $0x2d8] sm:$0xff]
    %v530 = vld [vmem:[%s3 + $0x2e0] sm:$0xff]
    %v531 = vld [vmem:[%s3 + $0x2e8] sm:$0xff]
    %v532 = vld [vmem:[%s3 + $0x2f0] sm:$0xff]
    %v533 = vld [vmem:[%s3 + $0x2f8] sm:$0xff]
    %v534 = vld [vmem:[%s3 + $0x300] sm:$0xff]
    %v535 = vld [vmem:[%s3 + $0x308] sm:$0xff]
    %v536 = vld [vmem:[%s3 + $0x310] sm:$0xff]
    %v537 = vld [vmem:[%s3 + $0x318] sm:$0xff]
    %v538 = vld [vmem:[%s3 + $0x320] sm:$0xff]
    %v539 = vld [vmem:[%s3 + $0x328] sm:$0xff]
    %v540 = vld [vmem:[%s3 + $0x330] sm:$0xff]
    %v541 = vld [vmem:[%s3 + $0x338] sm:$0xff]
    %v542 = vld [vmem:[%s3 + $0x340] sm:$0xff]
    %v543 = vld [vmem:[%s3 + $0x348] sm:$0xff]
    %v544 = vld [vmem:[%s3 + $0x350] sm:$0xff]
    %v545 = vld [vmem:[%s3 + $0x358] sm:$0xff]
    %v546 = vld [vmem:[%s3 + $0x360] sm:$0xff]
    %v547 = vld [vmem:[%s3 + $0x368] sm:$0xff]
    %v548 = vld [vmem:[%s3 + $0x370] sm:$0xff]
    %v549 = vld [vmem:[%s3 + $0x378] sm:$0xff]
    %v550 = vld [vmem:[%s3 + $0x380] sm:$0xff]
    %v551 = vld [vmem:[%s3 + $0x388] sm:$0xff]
    %v552 = vld [vmem:[%s3 + $0x390] sm:$0xff]
    %v553 = vld [vmem:[%s3 + $0x398] sm:$0xff]
    %v554 = vld [vmem:[%s3 + $0x3a0] sm:$0xff]
    %v555 = vld [vmem:[%s3 + $0x3a8] sm:$0xff]
    %v556 = vld [vmem:[%s3 + $0x3b0] sm:$0xff]
    %v557 = vld [vmem:[%s3 + $0x3b8] sm:$0xff]
    %v558 = vld [vmem:[%s3 + $0x3c0] sm:$0xff]
    %v559 = vld [vmem:[%s3 + $0x3c8] sm:$0xff]
    %v560 = vld [vmem:[%s3 + $0x3d0] sm:$0xff]
    %v561 = vld [vmem:[%s3 + $0x3d8] sm:$0xff]
    %v562 = vld [vmem:[%s3 + $0x3e0] sm:$0xff]
    %v563 = vld [vmem:[%s3 + $0x3e8] sm:$0xff]
    %v564 = vld [vmem:[%s3 + $0x3f0] sm:$0xff]
    %v565 = vld [vmem:[%s3 + $0x3f8] sm:$0xff]
    %v566 = vld [vmem:[%s3 + $0x400] sm:$0xff]
    %v567 = vld [vmem:[%s3 + $0x408] sm:$0xff]
    %v568 = vld [vmem:[%s3 + $0x410] sm:$0xff]
    %v569 = vld [vmem:[%s3 + $0x418] sm:$0xff]
    %v570 = vld [vmem:[%s3 + $0x420] sm:$0xff]
    %v571 = vld [vmem:[%s3 + $0x428] sm:$0xff]
    %v572 = vld [vmem:[%s3 + $0x430] sm:$0xff]
    %v573 = vld [vmem:[%s3 + $0x438] sm:$0xff]
    %v574 = vld [vmem:[%s3 + $0x440] sm:$0xff]
    %v575 = vld [vmem:[%s3 + $0x448] sm:$0xff]
    %v576 = vld [vmem:[%s3 + $0x450] sm:$0xff]
    %v577 = vld [vmem:[%s3 + $0x458] sm:$0xff]
    %v578 = vld [vmem:[%s3 + $0x460] sm:$0xff]
    %v579 = vld [vmem:[%s3 + $0x468] sm:$0xff]
    %v580 = vld [vmem:[%s3 + $0x470] sm:$0xff]
    %v581 = vld [vmem:[%s3 + $0x478] sm:$0xff]
    %v582 = vld [vmem:[%s3 + $0x480] sm:$0xff]
    %v583 = vld [vmem:[%s3 + $0x488] sm:$0xff]
    %v584 = vld [vmem:[%s3 + $0x490] sm:$0xff]
    %v585 = vld [vmem:[%s3 + $0x498] sm:$0xff]
    %v586 = vld [vmem:[%s3 + $0x4a0] sm:$0xff]
    %v587 = vld [vmem:[%s3 + $0x4a8] sm:$0xff]
    %v588 = vld [vmem:[%s3 + $0x4b0] sm:$0xff]
    %v589 = vld [vmem:[%s3 + $0x4b8] sm:$0xff]
    %v590 = vld [vmem:[%s3 + $0x4c0] sm:$0xff]
    %v591 = vld [vmem:[%s3 + $0x4c8] sm:$0xff]
    %v592 = vld [vmem:[%s3 + $0x4d0] sm:$0xff]
    %v593 = vld [vmem:[%s3 + $0x4d8] sm:$0xff]
    %v594 = vld [vmem:[%s3 + $0x4e0] sm:$0xff]
    %v595 = vld [vmem:[%s3 + $0x4e8] sm:$0xff]
    %v596 = vld [vmem:[%s3 + $0x4f0] sm:$0xff]
    %v597 = vld [vmem:[%s3 + $0x4f8] sm:$0xff]
    %v598 = vld [vmem:[%s3 + $0x500] sm:$0xff]
    %v599 = vld [vmem:[%s3 + $0x508] sm:$0xff]
    %v600 = vld [vmem:[%s3 + $0x510] sm:$0xff]
    %v601 = vld [vmem:[%s3 + $0x518] sm:$0xff]
    %v602 = vld [vmem:[%s3 + $0x520] sm:$0xff]
    %v603 = vld [vmem:[%s3 + $0x528] sm:$0xff]
    %v604 = vld [vmem:[%s3 + $0x530] sm:$0xff]
    %v605 = vld [vmem:[%s3 + $0x538] sm:$0xff]
    %v606 = vld [vmem:[%s3 + $0x540] sm:$0xff]
    %v607 = vld [vmem:[%s3 + $0x548] sm:$0xff]
    %v608 = vld [vmem:[%s3 + $0x550] sm:$0xff]
    %v609 = vld [vmem:[%s3 + $0x558] sm:$0xff]
    %v610 = vld [vmem:[%s3 + $0x560] sm:$0xff]
    %v611 = vld [vmem:[%s3 + $0x568] sm:$0xff]
    %v612 = vld [vmem:[%s3 + $0x570] sm:$0xff]
    %v613 = vld [vmem:[%s3 + $0x578] sm:$0xff]
    %v614 = vld [vmem:[%s3 + $0x580] sm:$0xff]
    %v615 = vld [vmem:[%s3 + $0x588] sm:$0xff]
    %v616 = vld [vmem:[%s3 + $0x590] sm:$0xff]
    %v617 = vld [vmem:[%s3 + $0x598] sm:$0xff]
    %v618 = vld [vmem:[%s3 + $0x5a0] sm:$0xff]
    %v619 = vld [vmem:[%s3 + $0x5a8] sm:$0xff]
    %v620 = vld [vmem:[%s3 + $0x5b0] sm:$0xff]
    %v621 = vld [vmem:[%s3 + $0x5b8] sm:$0xff]
    %v622 = vld [vmem:[%s3 + $0x5c0] sm:$0xff]
    %v623 = vld [vmem:[%s3 + $0x5c8] sm:$0xff]
    %v624 = vld [vmem:[%s3 + $0x5d0] sm:$0xff]
    %v625 = vld [vmem:[%s3 + $0x5d8] sm:$0xff]
    %v626 = vld [vmem:[%s3 + $0x5e0] sm:$0xff]
    %v627 = vld [vmem:[%s3 + $0x5e8] sm:$0xff]
    %v628 = vld [vmem:[%s3 + $0x5f0] sm:$0xff]
    %v629 = vld [vmem:[%s3 + $0x5f8] sm:$0xff]
    %v630 = vld [vmem:[%s3 + $0x600] sm:$0xff]
    %v631 = vld [vmem:[%s3 + $0x608] sm:$0xff]
    %v632 = vld [vmem:[%s3 + $0x610] sm:$0xff]
    %v633 = vld [vmem:[%s3 + $0x618] sm:$0xff]
    %v634 = vld [vmem:[%s3 + $0x620] sm:$0xff]
    %v635 = vld [vmem:[%s3 + $0x628] sm:$0xff]
    %v636 = vld [vmem:[%s3 + $0x630] sm:$0xff]
    %v637 = vld [vmem:[%s3 + $0x638] sm:$0xff]
    %v638 = vld [vmem:[%s3 + $0x640] sm:$0xff]
    %v639 = vld [vmem:[%s3 + $0x648] sm:$0xff]
    %v640 = vld [vmem:[%s3 + $0x650] sm:$0xff]
    %v641 = vld [vmem:[%s3 + $0x658] sm:$0xff]
    %v642 = vld [vmem:[%s3 + $0x660] sm:$0xff]
    %v643 = vld [vmem:[%s3 + $0x668] sm:$0xff]
    %v644 = vld [vmem:[%s3 + $0x670] sm:$0xff]
    %v645 = vld [vmem:[%s3 + $0x678] sm:$0xff]
    %v646 = vld [vmem:[%s3 + $0x680] sm:$0xff]
    %v647 = vld [vmem:[%s3 + $0x688] sm:$0xff]
    %v648 = vld [vmem:[%s3 + $0x690] sm:$0xff]
    %v649 = vld [vmem:[%s3 + $0x698] sm:$0xff]
    %v650 = vld [vmem:[%s3 + $0x6a0] sm:$0xff]
    %v651 = vld [vmem:[%s3 + $0x6a8] sm:$0xff]
    %v652 = vld [vmem:[%s3 + $0x6b0] sm:$0xff]
    %v653 = vld [vmem:[%s3 + $0x6b8] sm:$0xff]
    %v654 = vld [vmem:[%s3 + $0x6c0] sm:$0xff]
    %v655 = vld [vmem:[%s3 + $0x6c8] sm:$0xff]
    %v656 = vld [vmem:[%s3 + $0x6d0] sm:$0xff]
    %v657 = vld [vmem:[%s3 + $0x6d8] sm:$0xff]
    %v658 = vld [vmem:[%s3 + $0x6e0] sm:$0xff]
    %v659 = vld [vmem:[%s3 + $0x6e8] sm:$0xff]
    %v660 = vld [vmem:[%s3 + $0x6f0] sm:$0xff]
    %v661 = vld [vmem:[%s3 + $0x6f8] sm:$0xff]
    %v662 = vld [vmem:[%s3 + $0x700] sm:$0xff]
    %v663 = vld [vmem:[%s3 + $0x708] sm:$0xff]
    %v664 = vld [vmem:[%s3 + $0x710] sm:$0xff]
    %v665 = vld [vmem:[%s3 + $0x718] sm:$0xff]
    %v666 = vld [vmem:[%s3 + $0x720] sm:$0xff]
    %v667 = vld [vmem:[%s3 + $0x728] sm:$0xff]
    %v668 = vld [vmem:[%s3 + $0x730] sm:$0xff]
    %v669 = vld [vmem:[%s3 + $0x738] sm:$0xff]
    %v670 = vld [vmem:[%s3 + $0x740] sm:$0xff]
    %v671 = vld [vmem:[%s3 + $0x748] sm:$0xff]
    %v672 = vld [vmem:[%s3 + $0x750] sm:$0xff]
    %v673 = vld [vmem:[%s3 + $0x758] sm:$0xff]
    %v674 = vld [vmem:[%s3 + $0x760] sm:$0xff]
    %v675 = vld [vmem:[%s3 + $0x768] sm:$0xff]
    %v676 = vld [vmem:[%s3 + $0x770] sm:$0xff]
    %v677 = vld [vmem:[%s3 + $0x778] sm:$0xff]
    %v678 = vld [vmem:[%s3 + $0x780] sm:$0xff]
    %v679 = vld [vmem:[%s3 + $0x788] sm:$0xff]
    %v680 = vld [vmem:[%s3 + $0x790] sm:$0xff]
    %v681 = vld [vmem:[%s3 + $0x798] sm:$0xff]
    %v682 = vld [vmem:[%s3 + $0x7a0] sm:$0xff]
    %v683 = vld [vmem:[%s3 + $0x7a8] sm:$0xff]
    %v684 = vld [vmem:[%s3 + $0x7b0] sm:$0xff]
    %v685 = vld [vmem:[%s3 + $0x7b8] sm:$0xff]
    %v686 = vld [vmem:[%s3 + $0x7c0] sm:$0xff]
    %v687 = vld [vmem:[%s3 + $0x7c8] sm:$0xff]
    %v688 = vld [vmem:[%s3 + $0x7d0] sm:$0xff]
    %v689 = vld [vmem:[%s3 + $0x7d8] sm:$0xff]
    %v690 = vld [vmem:[%s3 + $0x7e0] sm:$0xff]
    %v691 = vld [vmem:[%s3 + $0x7e8] sm:$0xff]
    %v692 = vld [vmem:[%s3 + $0x7f0] sm:$0xff]
    %v693 = vld [vmem:[%s3 + $0x7f8] sm:$0xff]
    %v694 = vld [vmem:[%s4] sm:$0x3]
    %v695 = vld [vmem:[%s4 + $0x2] sm:$0x3]
    %v696 = vld [vmem:[%s4 + $0x4] sm:$0x3]
    %v697 = vld [vmem:[%s4 + $0x6] sm:$0x3]
    %v699 = vlaneseq
    %v700 = vshrl.u32 %v699, 7
    %v701 = vsub.s32 0, %v700
    %v702 = vrot.slane %v694, %v701
    %v703 = vlaneseq
    %v704 = vshrl.u32 %v703, 7
    %v705 = vsub.s32 1, %v704
    %v706 = vrot.slane %v694, %v705
    %709 = vmatprep.subr.mxu0 %v439
    %710 = vmatpush1.msra.mxu0 %v438
    %711 = vmatprep.subr.mxu0 %v441
    %712 = vmatpush1.msra.mxu0 %v440
    %713 = vmatprep.subr.mxu0 %v443
    %714 = vmatpush1.msra.mxu0 %v442
    %715 = vmatprep.subr.mxu0 %v445
    %716 = vmatpush1.msra.mxu0 %v444
    %717 = vmatprep.subr.mxu0 %v447
    %718 = vmatpush1.msra.mxu0 %v446
    %719 = vmatprep.subr.mxu0 %v449
    %720 = vmatpush1.msra.mxu0 %v448
    %721 = vmatprep.subr.mxu0 %v451
    %722 = vmatpush1.msra.mxu0 %v450
    %723 = vmatprep.subr.mxu0 %v453
    %724 = vmatpush1.msra.mxu0 %v452
    %725 = vmatprep.subr.mxu0 %v455
    %726 = vmatpush1.msra.mxu0 %v454
    %727 = vmatprep.subr.mxu0 %v457
    %728 = vmatpush1.msra.mxu0 %v456
    %729 = vmatprep.subr.mxu0 %v459
    %730 = vmatpush1.msra.mxu0 %v458
    %731 = vmatprep.subr.mxu0 %v461
    %732 = vmatpush1.msra.mxu0 %v460
    %733 = vmatprep.subr.mxu0 %v463
    %734 = vmatpush1.msra.mxu0 %v462
    %735 = vmatprep.subr.mxu0 %v465
    %736 = vmatpush1.msra.mxu0 %v464
    %737 = vmatprep.subr.mxu0 %v467
    %738 = vmatpush1.msra.mxu0 %v466
    %739 = vmatprep.subr.mxu0 %v469
    %740 = vmatpush1.msra.mxu0 %v468
    %741 = vmatprep.subr.mxu0 %v471
    %742 = vmatpush1.msra.mxu0 %v470
    %743 = vmatprep.subr.mxu0 %v473
    %744 = vmatpush1.msra.mxu0 %v472
    %745 = vmatprep.subr.mxu0 %v475
    %746 = vmatpush1.msra.mxu0 %v474
    %747 = vmatprep.subr.mxu0 %v477
    %748 = vmatpush1.msra.mxu0 %v476
    %749 = vmatprep.subr.mxu0 %v479
    %750 = vmatpush1.msra.mxu0 %v478
    %751 = vmatprep.subr.mxu0 %v481
    %752 = vmatpush1.msra.mxu0 %v480
    %753 = vmatprep.subr.mxu0 %v483
    %754 = vmatpush1.msra.mxu0 %v482
    %755 = vmatprep.subr.mxu0 %v485
    %756 = vmatpush1.msra.mxu0 %v484
    %757 = vmatprep.subr.mxu0 %v487
    %758 = vmatpush1.msra.mxu0 %v486
    %759 = vmatprep.subr.mxu0 %v489
    %760 = vmatpush1.msra.mxu0 %v488
    %761 = vmatprep.subr.mxu0 %v491
    %762 = vmatpush1.msra.mxu0 %v490
    %763 = vmatprep.subr.mxu0 %v493
    %764 = vmatpush1.msra.mxu0 %v492
    %765 = vmatprep.subr.mxu0 %v495
    %766 = vmatpush1.msra.mxu0 %v494
    %767 = vmatprep.subr.mxu0 %v497
    %768 = vmatpush1.msra.mxu0 %v496
    %769 = vmatprep.subr.mxu0 %v499
    %770 = vmatpush1.msra.mxu0 %v498
    %771 = vmatprep.subr.mxu0 %v501
    %772 = vmatpush1.msra.mxu0 %v500
    %773 = vmatprep.mubr.f32.mxu0 %v431
    %774 = vmatmul.mubr.f32.gmra.mrb[0].mxu0 %v430
    %v775 = vpop.f32.mrb[0].mxu0
    %v776 = vadd.f32 %v702, %v775
    %v777 = vpop.f32.mrb[0].mxu0
    %v778 = vadd.f32 %v706, %v777
    %779 = vdwg.mxu0
    %v781 = vlaneseq
    %v782 = vshrl.u32 %v781, 7
    %v783 = vsub.s32 0, %v782
    %v784 = vrot.slane %v695, %v783
    %v785 = vlaneseq
    %v786 = vshrl.u32 %v785, 7
    %v787 = vsub.s32 1, %v786
    %v788 = vrot.slane %v695, %v787
    %791 = vmatprep.subr.mxu0 %v503
    %792 = vmatpush1.msra.mxu0 %v502
    %793 = vmatprep.subr.mxu0 %v505
    %794 = vmatpush1.msra.mxu0 %v504
    %795 = vmatprep.subr.mxu0 %v507
    %796 = vmatpush1.msra.mxu0 %v506
    %797 = vmatprep.subr.mxu0 %v509
    %798 = vmatpush1.msra.mxu0 %v508
    %799 = vmatprep.subr.mxu0 %v511
    %800 = vmatpush1.msra.mxu0 %v510
    %801 = vmatprep.subr.mxu0 %v513
    %802 = vmatpush1.msra.mxu0 %v512
    %803 = vmatprep.subr.mxu0 %v515
    %804 = vmatpush1.msra.mxu0 %v514
    %805 = vmatprep.subr.mxu0 %v517
    %806 = vmatpush1.msra.mxu0 %v516
    %807 = vmatprep.subr.mxu0 %v519
    %808 = vmatpush1.msra.mxu0 %v518
    %809 = vmatprep.subr.mxu0 %v521
    %810 = vmatpush1.msra.mxu0 %v520
    %811 = vmatprep.subr.mxu0 %v523
    %812 = vmatpush1.msra.mxu0 %v522
    %813 = vmatprep.subr.mxu0 %v525
    %814 = vmatpush1.msra.mxu0 %v524
    %815 = vmatprep.subr.mxu0 %v527
    %816 = vmatpush1.msra.mxu0 %v526
    %817 = vmatprep.subr.mxu0 %v529
    %818 = vmatpush1.msra.mxu0 %v528
    %819 = vmatprep.subr.mxu0 %v531
    %820 = vmatpush1.msra.mxu0 %v530
    %821 = vmatprep.subr.mxu0 %v533
    %822 = vmatpush1.msra.mxu0 %v532
    %823 = vmatprep.subr.mxu0 %v535
    %824 = vmatpush1.msra.mxu0 %v534
    %825 = vmatprep.subr.mxu0 %v537
    %826 = vmatpush1.msra.mxu0 %v536
    %827 = vmatprep.subr.mxu0 %v539
    %828 = vmatpush1.msra.mxu0 %v538
    %829 = vmatprep.subr.mxu0 %v541
    %830 = vmatpush1.msra.mxu0 %v540
    %831 = vmatprep.subr.mxu0 %v543
    %832 = vmatpush1.msra.mxu0 %v542
    %833 = vmatprep.subr.mxu0 %v545
    %834 = vmatpush1.msra.mxu0 %v544
    %835 = vmatprep.subr.mxu0 %v547
    %836 = vmatpush1.msra.mxu0 %v546
    %837 = vmatprep.subr.mxu0 %v549
    %838 = vmatpush1.msra.mxu0 %v548
    %839 = vmatprep.subr.mxu0 %v551
    %840 = vmatpush1.msra.mxu0 %v550
    %841 = vmatprep.subr.mxu0 %v553
    %842 = vmatpush1.msra.mxu0 %v552
    %843 = vmatprep.subr.mxu0 %v555
    %844 = vmatpush1.msra.mxu0 %v554
    %845 = vmatprep.subr.mxu0 %v557
    %846 = vmatpush1.msra.mxu0 %v556
    %847 = vmatprep.subr.mxu0 %v559
    %848 = vmatpush1.msra.mxu0 %v558
    %849 = vmatprep.subr.mxu0 %v561
    %850 = vmatpush1.msra.mxu0 %v560
    %851 = vmatprep.subr.mxu0 %v563
    %852 = vmatpush1.msra.mxu0 %v562
    %853 = vmatprep.subr.mxu0 %v565
    %854 = vmatpush1.msra.mxu0 %v564
    %855 = vmatprep.mubr.f32.mxu0 %v433
    %856 = vmatmul.mubr.f32.gmra.mrb[0].mxu0 %v432
    %v857 = vpop.f32.mrb[0].mxu0
    %v858 = vadd.f32 %v784, %v857
    %v859 = vpop.f32.mrb[0].mxu0
    %v860 = vadd.f32 %v788, %v859
    %861 = vdwg.mxu0
    %v863 = vlaneseq
    %v864 = vshrl.u32 %v863, 7
    %v865 = vsub.s32 0, %v864
    %v866 = vrot.slane %v696, %v865
    %v867 = vlaneseq
    %v868 = vshrl.u32 %v867, 7
    %v869 = vsub.s32 1, %v868
    %v870 = vrot.slane %v696, %v869
    %873 = vmatprep.subr.mxu0 %v567
    %874 = vmatpush1.msra.mxu0 %v566
    %875 = vmatprep.subr.mxu0 %v569
    %876 = vmatpush1.msra.mxu0 %v568
    %877 = vmatprep.subr.mxu0 %v571
    %878 = vmatpush1.msra.mxu0 %v570
    %879 = vmatprep.subr.mxu0 %v573
    %880 = vmatpush1.msra.mxu0 %v572
    %881 = vmatprep.subr.mxu0 %v575
    %882 = vmatpush1.msra.mxu0 %v574
    %883 = vmatprep.subr.mxu0 %v577
    %884 = vmatpush1.msra.mxu0 %v576
    %885 = vmatprep.subr.mxu0 %v579
    %886 = vmatpush1.msra.mxu0 %v578
    %887 = vmatprep.subr.mxu0 %v581
    %888 = vmatpush1.msra.mxu0 %v580
    %889 = vmatprep.subr.mxu0 %v583
    %890 = vmatpush1.msra.mxu0 %v582
    %891 = vmatprep.subr.mxu0 %v585
    %892 = vmatpush1.msra.mxu0 %v584
    %893 = vmatprep.subr.mxu0 %v587
    %894 = vmatpush1.msra.mxu0 %v586
    %895 = vmatprep.subr.mxu0 %v589
    %896 = vmatpush1.msra.mxu0 %v588
    %897 = vmatprep.subr.mxu0 %v591
    %898 = vmatpush1.msra.mxu0 %v590
    %899 = vmatprep.subr.mxu0 %v593
    %900 = vmatpush1.msra.mxu0 %v592
    %901 = vmatprep.subr.mxu0 %v595
    %902 = vmatpush1.msra.mxu0 %v594
    %903 = vmatprep.subr.mxu0 %v597
    %904 = vmatpush1.msra.mxu0 %v596
    %905 = vmatprep.subr.mxu0 %v599
    %906 = vmatpush1.msra.mxu0 %v598
    %907 = vmatprep.subr.mxu0 %v601
    %908 = vmatpush1.msra.mxu0 %v600
    %909 = vmatprep.subr.mxu0 %v603
    %910 = vmatpush1.msra.mxu0 %v602
    %911 = vmatprep.subr.mxu0 %v605
    %912 = vmatpush1.msra.mxu0 %v604
    %913 = vmatprep.subr.mxu0 %v607
    %914 = vmatpush1.msra.mxu0 %v606
    %915 = vmatprep.subr.mxu0 %v609
    %916 = vmatpush1.msra.mxu0 %v608
    %917 = vmatprep.subr.mxu0 %v611
    %918 = vmatpush1.msra.mxu0 %v610
    %919 = vmatprep.subr.mxu0 %v613
    %920 = vmatpush1.msra.mxu0 %v612
    %921 = vmatprep.subr.mxu0 %v615
    %922 = vmatpush1.msra.mxu0 %v614
    %923 = vmatprep.subr.mxu0 %v617
    %924 = vmatpush1.msra.mxu0 %v616
    %925 = vmatprep.subr.mxu0 %v619
    %926 = vmatpush1.msra.mxu0 %v618
    %927 = vmatprep.subr.mxu0 %v621
    %928 = vmatpush1.msra.mxu0 %v620
    %929 = vmatprep.subr.mxu0 %v623
    %930 = vmatpush1.msra.mxu0 %v622
    %931 = vmatprep.subr.mxu0 %v625
    %932 = vmatpush1.msra.mxu0 %v624
    %933 = vmatprep.subr.mxu0 %v627
    %934 = vmatpush1.msra.mxu0 %v626
    %935 = vmatprep.subr.mxu0 %v629
    %936 = vmatpush1.msra.mxu0 %v628
    %937 = vmatprep.mubr.f32.mxu0 %v435
    %938 = vmatmul.mubr.f32.gmra.mrb[0].mxu0 %v434
    %v939 = vpop.f32.mrb[0].mxu0
    %v940 = vadd.f32 %v866, %v939
    %v941 = vpop.f32.mrb[0].mxu0
    %v942 = vadd.f32 %v870, %v941
    %943 = vdwg.mxu0
    %v945 = vlaneseq
    %v946 = vshrl.u32 %v945, 7
    %v947 = vsub.s32 0, %v946
    %v948 = vrot.slane %v697, %v947
    %v949 = vlaneseq
    %v950 = vshrl.u32 %v949, 7
    %v951 = vsub.s32 1, %v950
    %v952 = vrot.slane %v697, %v951
    %955 = vmatprep.subr.mxu0 %v631
    %956 = vmatpush1.msra.mxu0 %v630
    %957 = vmatprep.subr.mxu0 %v633
    %958 = vmatpush1.msra.mxu0 %v632
    %959 = vmatprep.subr.mxu0 %v635
    %960 = vmatpush1.msra.mxu0 %v634
    %961 = vmatprep.subr.mxu0 %v637
    %962 = vmatpush1.msra.mxu0 %v636
    %963 = vmatprep.subr.mxu0 %v639
    %964 = vmatpush1.msra.mxu0 %v638
    %965 = vmatprep.subr.mxu0 %v641
    %966 = vmatpush1.msra.mxu0 %v640
    %967 = vmatprep.subr.mxu0 %v643
    %968 = vmatpush1.msra.mxu0 %v642
    %969 = vmatprep.subr.mxu0 %v645
    %970 = vmatpush1.msra.mxu0 %v644
    %971 = vmatprep.subr.mxu0 %v647
    %972 = vmatpush1.msra.mxu0 %v646
    %973 = vmatprep.subr.mxu0 %v649
    %974 = vmatpush1.msra.mxu0 %v648
    %975 = vmatprep.subr.mxu0 %v651
    %976 = vmatpush1.msra.mxu0 %v650
    %977 = vmatprep.subr.mxu0 %v653
    %978 = vmatpush1.msra.mxu0 %v652
    %979 = vmatprep.subr.mxu0 %v655
    %980 = vmatpush1.msra.mxu0 %v654
    %981 = vmatprep.subr.mxu0 %v657
    %982 = vmatpush1.msra.mxu0 %v656
    %983 = vmatprep.subr.mxu0 %v659
    %984 = vmatpush1.msra.mxu0 %v658
    %985 = vmatprep.subr.mxu0 %v661
    %986 = vmatpush1.msra.mxu0 %v660
    %987 = vmatprep.subr.mxu0 %v663
    %988 = vmatpush1.msra.mxu0 %v662
    %989 = vmatprep.subr.mxu0 %v665
    %990 = vmatpush1.msra.mxu0 %v664
    %991 = vmatprep.subr.mxu0 %v667
    %992 = vmatpush1.msra.mxu0 %v666
    %993 = vmatprep.subr.mxu0 %v669
    %994 = vmatpush1.msra.mxu0 %v668
    %995 = vmatprep.subr.mxu0 %v671
    %996 = vmatpush1.msra.mxu0 %v670
    %997 = vmatprep.subr.mxu0 %v673
    %998 = vmatpush1.msra.mxu0 %v672
    %999 = vmatprep.subr.mxu0 %v675
    %1000 = vmatpush1.msra.mxu0 %v674
    %1001 = vmatprep.subr.mxu0 %v677
    %1002 = vmatpush1.msra.mxu0 %v676
    %1003 = vmatprep.subr.mxu0 %v679
    %1004 = vmatpush1.msra.mxu0 %v678
    %1005 = vmatprep.subr.mxu0 %v681
    %1006 = vmatpush1.msra.mxu0 %v680
    %1007 = vmatprep.subr.mxu0 %v683
    %1008 = vmatpush1.msra.mxu0 %v682
    %1009 = vmatprep.subr.mxu0 %v685
    %1010 = vmatpush1.msra.mxu0 %v684
    %1011 = vmatprep.subr.mxu0 %v687
    %1012 = vmatpush1.msra.mxu0 %v686
    %1013 = vmatprep.subr.mxu0 %v689
    %1014 = vmatpush1.msra.mxu0 %v688
    %1015 = vmatprep.subr.mxu0 %v691
    %1016 = vmatpush1.msra.mxu0 %v690
    %1017 = vmatprep.subr.mxu0 %v693
    %1018 = vmatpush1.msra.mxu0 %v692
    %1019 = vmatprep.mubr.f32.mxu0 %v437
    %1020 = vmatmul.mubr.f32.gmra.mrb[0].mxu0 %v436
    %v1021 = vpop.f32.mrb[0].mxu0
    %v1022 = vadd.f32 %v948, %v1021
    %v1023 = vpop.f32.mrb[0].mxu0
    %v1024 = vadd.f32 %v952, %v1023
    %1025 = vdwg.mxu0
    %v1026 = vmax.f32 %v776, 0.0
    %v1027 = vmax.f32 %v778, 0.0
    %v1028 = vmax.f32 %v858, 0.0
    %v1029 = vmax.f32 %v860, 0.0
    %v1030 = vmax.f32 %v940, 0.0
    %v1031 = vmax.f32 %v942, 0.0
    %v1032 = vmax.f32 %v1022, 0.0
    %v1033 = vmax.f32 %v1024, 0.0
    %v1034 = vld [vmem:[%s5] sm:$0xff]
    %v1035 = vld [vmem:[%s5 + $0x8] sm:$0xff]
    %v1036 = vld [vmem:[%s5 + $0x10] sm:$0xff]
    %v1037 = vld [vmem:[%s5 + $0x18] sm:$0xff]
    %v1038 = vld [vmem:[%s5 + $0x20] sm:$0xff]
    %v1039 = vld [vmem:[%s5 + $0x28] sm:$0xff]
    %v1040 = vld [vmem:[%s5 + $0x30] sm:$0xff]
    %v1041 = vld [vmem:[%s5 + $0x38] sm:$0xff]
    %v1042 = vld [vmem:[%s5 + $0x40] sm:$0xff]
    %v1043 = vld [vmem:[%s5 + $0x48] sm:$0xff]
    %v1044 = vld [vmem:[%s5 + $0x50] sm:$0xff]
    %v1045 = vld [vmem:[%s5 + $0x58] sm:$0xff]
    %v1046 = vld [vmem:[%s5 + $0x60] sm:$0xff]
    %v1047 = vld [vmem:[%s5 + $0x68] sm:$0xff]
    %v1048 = vld [vmem:[%s5 + $0x70] sm:$0xff]
    %v1049 = vld [vmem:[%s5 + $0x78] sm:$0xff]
    %v1050 = vld [vmem:[%s5 + $0x80] sm:$0xff]
    %v1051 = vld [vmem:[%s5 + $0x88] sm:$0xff]
    %v1052 = vld [vmem:[%s5 + $0x90] sm:$0xff]
    %v1053 = vld [vmem:[%s5 + $0x98] sm:$0xff]
    %v1054 = vld [vmem:[%s5 + $0xa0] sm:$0xff]
    %v1055 = vld [vmem:[%s5 + $0xa8] sm:$0xff]
    %v1056 = vld [vmem:[%s5 + $0xb0] sm:$0xff]
    %v1057 = vld [vmem:[%s5 + $0xb8] sm:$0xff]
    %v1058 = vld [vmem:[%s5 + $0xc0] sm:$0xff]
    %v1059 = vld [vmem:[%s5 + $0xc8] sm:$0xff]
    %v1060 = vld [vmem:[%s5 + $0xd0] sm:$0xff]
    %v1061 = vld [vmem:[%s5 + $0xd8] sm:$0xff]
    %v1062 = vld [vmem:[%s5 + $0xe0] sm:$0xff]
    %v1063 = vld [vmem:[%s5 + $0xe8] sm:$0xff]
    %v1064 = vld [vmem:[%s5 + $0xf0] sm:$0xff]
    %v1065 = vld [vmem:[%s5 + $0xf8] sm:$0xff]
    %v1066 = vld [vmem:[%s5 + $0x100] sm:$0xff]
    %v1067 = vld [vmem:[%s5 + $0x108] sm:$0xff]
    %v1068 = vld [vmem:[%s5 + $0x110] sm:$0xff]
    %v1069 = vld [vmem:[%s5 + $0x118] sm:$0xff]
    %v1070 = vld [vmem:[%s5 + $0x120] sm:$0xff]
    %v1071 = vld [vmem:[%s5 + $0x128] sm:$0xff]
    %v1072 = vld [vmem:[%s5 + $0x130] sm:$0xff]
    %v1073 = vld [vmem:[%s5 + $0x138] sm:$0xff]
    %v1074 = vld [vmem:[%s5 + $0x140] sm:$0xff]
    %v1075 = vld [vmem:[%s5 + $0x148] sm:$0xff]
    %v1076 = vld [vmem:[%s5 + $0x150] sm:$0xff]
    %v1077 = vld [vmem:[%s5 + $0x158] sm:$0xff]
    %v1078 = vld [vmem:[%s5 + $0x160] sm:$0xff]
    %v1079 = vld [vmem:[%s5 + $0x168] sm:$0xff]
    %v1080 = vld [vmem:[%s5 + $0x170] sm:$0xff]
    %v1081 = vld [vmem:[%s5 + $0x178] sm:$0xff]
    %v1082 = vld [vmem:[%s5 + $0x180] sm:$0xff]
    %v1083 = vld [vmem:[%s5 + $0x188] sm:$0xff]
    %v1084 = vld [vmem:[%s5 + $0x190] sm:$0xff]
    %v1085 = vld [vmem:[%s5 + $0x198] sm:$0xff]
    %v1086 = vld [vmem:[%s5 + $0x1a0] sm:$0xff]
    %v1087 = vld [vmem:[%s5 + $0x1a8] sm:$0xff]
    %v1088 = vld [vmem:[%s5 + $0x1b0] sm:$0xff]
    %v1089 = vld [vmem:[%s5 + $0x1b8] sm:$0xff]
    %v1090 = vld [vmem:[%s5 + $0x1c0] sm:$0xff]
    %v1091 = vld [vmem:[%s5 + $0x1c8] sm:$0xff]
    %v1092 = vld [vmem:[%s5 + $0x1d0] sm:$0xff]
    %v1093 = vld [vmem:[%s5 + $0x1d8] sm:$0xff]
    %v1094 = vld [vmem:[%s5 + $0x1e0] sm:$0xff]
    %v1095 = vld [vmem:[%s5 + $0x1e8] sm:$0xff]
    %v1096 = vld [vmem:[%s5 + $0x1f0] sm:$0xff]
    %v1097 = vld [vmem:[%s5 + $0x1f8] sm:$0xff]
    %v1098 = vld [vmem:[%s5 + $0x200] sm:$0xff]
    %v1099 = vld [vmem:[%s5 + $0x208] sm:$0xff]
    %v1100 = vld [vmem:[%s5 + $0x210] sm:$0xff]
    %v1101 = vld [vmem:[%s5 + $0x218] sm:$0xff]
    %v1102 = vld [vmem:[%s5 + $0x220] sm:$0xff]
    %v1103 = vld [vmem:[%s5 + $0x228] sm:$0xff]
    %v1104 = vld [vmem:[%s5 + $0x230] sm:$0xff]
    %v1105 = vld [vmem:[%s5 + $0x238] sm:$0xff]
    %v1106 = vld [vmem:[%s5 + $0x240] sm:$0xff]
    %v1107 = vld [vmem:[%s5 + $0x248] sm:$0xff]
    %v1108 = vld [vmem:[%s5 + $0x250] sm:$0xff]
    %v1109 = vld [vmem:[%s5 + $0x258] sm:$0xff]
    %v1110 = vld [vmem:[%s5 + $0x260] sm:$0xff]
    %v1111 = vld [vmem:[%s5 + $0x268] sm:$0xff]
    %v1112 = vld [vmem:[%s5 + $0x270] sm:$0xff]
    %v1113 = vld [vmem:[%s5 + $0x278] sm:$0xff]
    %v1114 = vld [vmem:[%s5 + $0x280] sm:$0xff]
    %v1115 = vld [vmem:[%s5 + $0x288] sm:$0xff]
    %v1116 = vld [vmem:[%s5 + $0x290] sm:$0xff]
    %v1117 = vld [vmem:[%s5 + $0x298] sm:$0xff]
    %v1118 = vld [vmem:[%s5 + $0x2a0] sm:$0xff]
    %v1119 = vld [vmem:[%s5 + $0x2a8] sm:$0xff]
    %v1120 = vld [vmem:[%s5 + $0x2b0] sm:$0xff]
    %v1121 = vld [vmem:[%s5 + $0x2b8] sm:$0xff]
    %v1122 = vld [vmem:[%s5 + $0x2c0] sm:$0xff]
    %v1123 = vld [vmem:[%s5 + $0x2c8] sm:$0xff]
    %v1124 = vld [vmem:[%s5 + $0x2d0] sm:$0xff]
    %v1125 = vld [vmem:[%s5 + $0x2d8] sm:$0xff]
    %v1126 = vld [vmem:[%s5 + $0x2e0] sm:$0xff]
    %v1127 = vld [vmem:[%s5 + $0x2e8] sm:$0xff]
    %v1128 = vld [vmem:[%s5 + $0x2f0] sm:$0xff]
    %v1129 = vld [vmem:[%s5 + $0x2f8] sm:$0xff]
    %v1130 = vld [vmem:[%s5 + $0x300] sm:$0xff]
    %v1131 = vld [vmem:[%s5 + $0x308] sm:$0xff]
    %v1132 = vld [vmem:[%s5 + $0x310] sm:$0xff]
    %v1133 = vld [vmem:[%s5 + $0x318] sm:$0xff]
    %v1134 = vld [vmem:[%s5 + $0x320] sm:$0xff]
    %v1135 = vld [vmem:[%s5 + $0x328] sm:$0xff]
    %v1136 = vld [vmem:[%s5 + $0x330] sm:$0xff]
    %v1137 = vld [vmem:[%s5 + $0x338] sm:$0xff]
    %v1138 = vld [vmem:[%s5 + $0x340] sm:$0xff]
    %v1139 = vld [vmem:[%s5 + $0x348] sm:$0xff]
    %v1140 = vld [vmem:[%s5 + $0x350] sm:$0xff]
    %v1141 = vld [vmem:[%s5 + $0x358] sm:$0xff]
    %v1142 = vld [vmem:[%s5 + $0x360] sm:$0xff]
    %v1143 = vld [vmem:[%s5 + $0x368] sm:$0xff]
    %v1144 = vld [vmem:[%s5 + $0x370] sm:$0xff]
    %v1145 = vld [vmem:[%s5 + $0x378] sm:$0xff]
    %v1146 = vld [vmem:[%s5 + $0x380] sm:$0xff]
    %v1147 = vld [vmem:[%s5 + $0x388] sm:$0xff]
    %v1148 = vld [vmem:[%s5 + $0x390] sm:$0xff]
    %v1149 = vld [vmem:[%s5 + $0x398] sm:$0xff]
    %v1150 = vld [vmem:[%s5 + $0x3a0] sm:$0xff]
    %v1151 = vld [vmem:[%s5 + $0x3a8] sm:$0xff]
    %v1152 = vld [vmem:[%s5 + $0x3b0] sm:$0xff]
    %v1153 = vld [vmem:[%s5 + $0x3b8] sm:$0xff]
    %v1154 = vld [vmem:[%s5 + $0x3c0] sm:$0xff]
    %v1155 = vld [vmem:[%s5 + $0x3c8] sm:$0xff]
    %v1156 = vld [vmem:[%s5 + $0x3d0] sm:$0xff]
    %v1157 = vld [vmem:[%s5 + $0x3d8] sm:$0xff]
    %v1158 = vld [vmem:[%s5 + $0x3e0] sm:$0xff]
    %v1159 = vld [vmem:[%s5 + $0x3e8] sm:$0xff]
    %v1160 = vld [vmem:[%s5 + $0x3f0] sm:$0xff]
    %v1161 = vld [vmem:[%s5 + $0x3f8] sm:$0xff]
    %v1162 = vld [vmem:[%s6] sm:$0x1]
    %v1163 = vld [vmem:[%s6 + $0x1] sm:$0x1]
    %v1164 = vld [vmem:[%s6 + $0x2] sm:$0x1]
    %v1165 = vld [vmem:[%s6 + $0x3] sm:$0x1]
    %1166 = vmatprep.subr.mxu0 0.0
    %1167 = vmatpush1.msra.mxu0 %v1034
    %1168 = vmatprep.subr.mxu0 0.0
    %1169 = vmatpush1.msra.mxu0 %v1035
    %1170 = vmatprep.subr.mxu0 0.0
    %1171 = vmatpush1.msra.mxu0 %v1036
    %1172 = vmatprep.subr.mxu0 0.0
    %1173 = vmatpush1.msra.mxu0 %v1037
    %1174 = vmatprep.subr.mxu0 0.0
    %1175 = vmatpush1.msra.mxu0 %v1038
    %1176 = vmatprep.subr.mxu0 0.0
    %1177 = vmatpush1.msra.mxu0 %v1039
    %1178 = vmatprep.subr.mxu0 0.0
    %1179 = vmatpush1.msra.mxu0 %v1040
    %1180 = vmatprep.subr.mxu0 0.0
    %1181 = vmatpush1.msra.mxu0 %v1041
    %1182 = vmatprep.subr.mxu0 0.0
    %1183 = vmatpush1.msra.mxu0 %v1042
    %1184 = vmatprep.subr.mxu0 0.0
    %1185 = vmatpush1.msra.mxu0 %v1043
    %1186 = vmatprep.subr.mxu0 0.0
    %1187 = vmatpush1.msra.mxu0 %v1044
    %1188 = vmatprep.subr.mxu0 0.0
    %1189 = vmatpush1.msra.mxu0 %v1045
    %1190 = vmatprep.subr.mxu0 0.0
    %1191 = vmatpush1.msra.mxu0 %v1046
    %1192 = vmatprep.subr.mxu0 0.0
    %1193 = vmatpush1.msra.mxu0 %v1047
    %1194 = vmatprep.subr.mxu0 0.0
    %1195 = vmatpush1.msra.mxu0 %v1048
    %1196 = vmatprep.subr.mxu0 0.0
    %1197 = vmatpush1.msra.mxu0 %v1049
    %1198 = vmatprep.subr.mxu0 0.0
    %1199 = vmatpush1.msra.mxu0 %v1050
    %1200 = vmatprep.subr.mxu0 0.0
    %1201 = vmatpush1.msra.mxu0 %v1051
    %1202 = vmatprep.subr.mxu0 0.0
    %1203 = vmatpush1.msra.mxu0 %v1052
    %1204 = vmatprep.subr.mxu0 0.0
    %1205 = vmatpush1.msra.mxu0 %v1053
    %1206 = vmatprep.subr.mxu0 0.0
    %1207 = vmatpush1.msra.mxu0 %v1054
    %1208 = vmatprep.subr.mxu0 0.0
    %1209 = vmatpush1.msra.mxu0 %v1055
    %1210 = vmatprep.subr.mxu0 0.0
    %1211 = vmatpush1.msra.mxu0 %v1056
    %1212 = vmatprep.subr.mxu0 0.0
    %1213 = vmatpush1.msra.mxu0 %v1057
    %1214 = vmatprep.subr.mxu0 0.0
    %1215 = vmatpush1.msra.mxu0 %v1058
    %1216 = vmatprep.subr.mxu0 0.0
    %1217 = vmatpush1.msra.mxu0 %v1059
    %1218 = vmatprep.subr.mxu0 0.0
    %1219 = vmatpush1.msra.mxu0 %v1060
    %1220 = vmatprep.subr.mxu0 0.0
    %1221 = vmatpush1.msra.mxu0 %v1061
    %1222 = vmatprep.subr.mxu0 0.0
    %1223 = vmatpush1.msra.mxu0 %v1062
    %1224 = vmatprep.subr.mxu0 0.0
    %1225 = vmatpush1.msra.mxu0 %v1063
    %1226 = vmatprep.subr.mxu0 0.0
    %1227 = vmatpush1.msra.mxu0 %v1064
    %1228 = vmatprep.subr.mxu0 0.0
    %1229 = vmatpush1.msra.mxu0 %v1065
    %1230 = vmatprep.mubr.f32.mxu0 %v1027
    %1231 = vmatmul.mubr.f32.gmra.mrb[0].mxu0 %v1026
    %v1232 = vpop.f32.mrb[0].mxu0
    %v1233 = vadd.f32 %v1162, %v1232
    %v1234 = vpop.f32.mrb[0].mxu0
    %1235 = vdwg.mxu0
    %1236 = vmatprep.subr.mxu0 0.0
    %1237 = vmatpush1.msra.mxu0 %v1066
    %1238 = vmatprep.subr.mxu0 0.0
    %1239 = vmatpush1.msra.mxu0 %v1067
    %1240 = vmatprep.subr.mxu0 0.0
    %1241 = vmatpush1.msra.mxu0 %v1068
    %1242 = vmatprep.subr.mxu0 0.0
    %1243 = vmatpush1.msra.mxu0 %v1069
    %1244 = vmatprep.subr.mxu0 0.0
    %1245 = vmatpush1.msra.mxu0 %v1070
    %1246 = vmatprep.subr.mxu0 0.0
    %1247 = vmatpush1.msra.mxu0 %v1071
    %1248 = vmatprep.subr.mxu0 0.0
    %1249 = vmatpush1.msra.mxu0 %v1072
    %1250 = vmatprep.subr.mxu0 0.0
    %1251 = vmatpush1.msra.mxu0 %v1073
    %1252 = vmatprep.subr.mxu0 0.0
    %1253 = vmatpush1.msra.mxu0 %v1074
    %1254 = vmatprep.subr.mxu0 0.0
    %1255 = vmatpush1.msra.mxu0 %v1075
    %1256 = vmatprep.subr.mxu0 0.0
    %1257 = vmatpush1.msra.mxu0 %v1076
    %1258 = vmatprep.subr.mxu0 0.0
    %1259 = vmatpush1.msra.mxu0 %v1077
    %1260 = vmatprep.subr.mxu0 0.0
    %1261 = vmatpush1.msra.mxu0 %v1078
    %1262 = vmatprep.subr.mxu0 0.0
    %1263 = vmatpush1.msra.mxu0 %v1079
    %1264 = vmatprep.subr.mxu0 0.0
    %1265 = vmatpush1.msra.mxu0 %v1080
    %1266 = vmatprep.subr.mxu0 0.0
    %1267 = vmatpush1.msra.mxu0 %v1081
    %1268 = vmatprep.subr.mxu0 0.0
    %1269 = vmatpush1.msra.mxu0 %v1082
    %1270 = vmatprep.subr.mxu0 0.0
    %1271 = vmatpush1.msra.mxu0 %v1083
    %1272 = vmatprep.subr.mxu0 0.0
    %1273 = vmatpush1.msra.mxu0 %v1084
    %1274 = vmatprep.subr.mxu0 0.0
    %1275 = vmatpush1.msra.mxu0 %v1085
    %1276 = vmatprep.subr.mxu0 0.0
    %1277 = vmatpush1.msra.mxu0 %v1086
    %1278 = vmatprep.subr.mxu0 0.0
    %1279 = vmatpush1.msra.mxu0 %v1087
    %1280 = vmatprep.subr.mxu0 0.0
    %1281 = vmatpush1.msra.mxu0 %v1088
    %1282 = vmatprep.subr.mxu0 0.0
    %1283 = vmatpush1.msra.mxu0 %v1089
    %1284 = vmatprep.subr.mxu0 0.0
    %1285 = vmatpush1.msra.mxu0 %v1090
    %1286 = vmatprep.subr.mxu0 0.0
    %1287 = vmatpush1.msra.mxu0 %v1091
    %1288 = vmatprep.subr.mxu0 0.0
    %1289 = vmatpush1.msra.mxu0 %v1092
    %1290 = vmatprep.subr.mxu0 0.0
    %1291 = vmatpush1.msra.mxu0 %v1093
    %1292 = vmatprep.subr.mxu0 0.0
    %1293 = vmatpush1.msra.mxu0 %v1094
    %1294 = vmatprep.subr.mxu0 0.0
    %1295 = vmatpush1.msra.mxu0 %v1095
    %1296 = vmatprep.subr.mxu0 0.0
    %1297 = vmatpush1.msra.mxu0 %v1096
    %1298 = vmatprep.subr.mxu0 0.0
    %1299 = vmatpush1.msra.mxu0 %v1097
    %1300 = vmatprep.mubr.f32.mxu0 %v1029
    %1301 = vmatmul.mubr.f32.gmra.mrb[0].mxu0 %v1028
    %v1302 = vpop.f32.mrb[0].mxu0
    %v1303 = vadd.f32 %v1163, %v1302
    %v1304 = vpop.f32.mrb[0].mxu0
    %1305 = vdwg.mxu0
    %1306 = vmatprep.subr.mxu0 0.0
    %1307 = vmatpush1.msra.mxu0 %v1098
    %1308 = vmatprep.subr.mxu0 0.0
    %1309 = vmatpush1.msra.mxu0 %v1099
    %1310 = vmatprep.subr.mxu0 0.0
    %1311 = vmatpush1.msra.mxu0 %v1100
    %1312 = vmatprep.subr.mxu0 0.0
    %1313 = vmatpush1.msra.mxu0 %v1101
    %1314 = vmatprep.subr.mxu0 0.0
    %1315 = vmatpush1.msra.mxu0 %v1102
    %1316 = vmatprep.subr.mxu0 0.0
    %1317 = vmatpush1.msra.mxu0 %v1103
    %1318 = vmatprep.subr.mxu0 0.0
    %1319 = vmatpush1.msra.mxu0 %v1104
    %1320 = vmatprep.subr.mxu0 0.0
    %1321 = vmatpush1.msra.mxu0 %v1105
    %1322 = vmatprep.subr.mxu0 0.0
    %1323 = vmatpush1.msra.mxu0 %v1106
    %1324 = vmatprep.subr.mxu0 0.0
    %1325 = vmatpush1.msra.mxu0 %v1107
    %1326 = vmatprep.subr.mxu0 0.0
    %1327 = vmatpush1.msra.mxu0 %v1108
    %1328 = vmatprep.subr.mxu0 0.0
    %1329 = vmatpush1.msra.mxu0 %v1109
    %1330 = vmatprep.subr.mxu0 0.0
    %1331 = vmatpush1.msra.mxu0 %v1110
    %1332 = vmatprep.subr.mxu0 0.0
    %1333 = vmatpush1.msra.mxu0 %v1111
    %1334 = vmatprep.subr.mxu0 0.0
    %1335 = vmatpush1.msra.mxu0 %v1112
    %1336 = vmatprep.subr.mxu0 0.0
    %1337 = vmatpush1.msra.mxu0 %v1113
    %1338 = vmatprep.subr.mxu0 0.0
    %1339 = vmatpush1.msra.mxu0 %v1114
    %1340 = vmatprep.subr.mxu0 0.0
    %1341 = vmatpush1.msra.mxu0 %v1115
    %1342 = vmatprep.subr.mxu0 0.0
    %1343 = vmatpush1.msra.mxu0 %v1116
    %1344 = vmatprep.subr.mxu0 0.0
    %1345 = vmatpush1.msra.mxu0 %v1117
    %1346 = vmatprep.subr.mxu0 0.0
    %1347 = vmatpush1.msra.mxu0 %v1118
    %1348 = vmatprep.subr.mxu0 0.0
    %1349 = vmatpush1.msra.mxu0 %v1119
    %1350 = vmatprep.subr.mxu0 0.0
    %1351 = vmatpush1.msra.mxu0 %v1120
    %1352 = vmatprep.subr.mxu0 0.0
    %1353 = vmatpush1.msra.mxu0 %v1121
    %1354 = vmatprep.subr.mxu0 0.0
    %1355 = vmatpush1.msra.mxu0 %v1122
    %1356 = vmatprep.subr.mxu0 0.0
    %1357 = vmatpush1.msra.mxu0 %v1123
    %1358 = vmatprep.subr.mxu0 0.0
    %1359 = vmatpush1.msra.mxu0 %v1124
    %1360 = vmatprep.subr.mxu0 0.0
    %1361 = vmatpush1.msra.mxu0 %v1125
    %1362 = vmatprep.subr.mxu0 0.0
    %1363 = vmatpush1.msra.mxu0 %v1126
    %1364 = vmatprep.subr.mxu0 0.0
    %1365 = vmatpush1.msra.mxu0 %v1127
    %1366 = vmatprep.subr.mxu0 0.0
    %1367 = vmatpush1.msra.mxu0 %v1128
    %1368 = vmatprep.subr.mxu0 0.0
    %1369 = vmatpush1.msra.mxu0 %v1129
    %1370 = vmatprep.mubr.f32.mxu0 %v1031
    %1371 = vmatmul.mubr.f32.gmra.mrb[0].mxu0 %v1030
    %v1372 = vpop.f32.mrb[0].mxu0
    %v1373 = vadd.f32 %v1164, %v1372
    %v1374 = vpop.f32.mrb[0].mxu0
    %1375 = vdwg.mxu0
    %1376 = vmatprep.subr.mxu0 0.0
    %1377 = vmatpush1.msra.mxu0 %v1130
    %1378 = vmatprep.subr.mxu0 0.0
    %1379 = vmatpush1.msra.mxu0 %v1131
    %1380 = vmatprep.subr.mxu0 0.0
    %1381 = vmatpush1.msra.mxu0 %v1132
    %1382 = vmatprep.subr.mxu0 0.0
    %1383 = vmatpush1.msra.mxu0 %v1133
    %1384 = vmatprep.subr.mxu0 0.0
    %1385 = vmatpush1.msra.mxu0 %v1134
    %1386 = vmatprep.subr.mxu0 0.0
    %1387 = vmatpush1.msra.mxu0 %v1135
    %1388 = vmatprep.subr.mxu0 0.0
    %1389 = vmatpush1.msra.mxu0 %v1136
    %1390 = vmatprep.subr.mxu0 0.0
    %1391 = vmatpush1.msra.mxu0 %v1137
    %1392 = vmatprep.subr.mxu0 0.0
    %1393 = vmatpush1.msra.mxu0 %v1138
    %1394 = vmatprep.subr.mxu0 0.0
    %1395 = vmatpush1.msra.mxu0 %v1139
    %1396 = vmatprep.subr.mxu0 0.0
    %1397 = vmatpush1.msra.mxu0 %v1140
    %1398 = vmatprep.subr.mxu0 0.0
    %1399 = vmatpush1.msra.mxu0 %v1141
    %1400 = vmatprep.subr.mxu0 0.0
    %1401 = vmatpush1.msra.mxu0 %v1142
    %1402 = vmatprep.subr.mxu0 0.0
    %1403 = vmatpush1.msra.mxu0 %v1143
    %1404 = vmatprep.subr.mxu0 0.0
    %1405 = vmatpush1.msra.mxu0 %v1144
    %1406 = vmatprep.subr.mxu0 0.0
    %1407 = vmatpush1.msra.mxu0 %v1145
    %1408 = vmatprep.subr.mxu0 0.0
    %1409 = vmatpush1.msra.mxu0 %v1146
    %1410 = vmatprep.subr.mxu0 0.0
    %1411 = vmatpush1.msra.mxu0 %v1147
    %1412 = vmatprep.subr.mxu0 0.0
    %1413 = vmatpush1.msra.mxu0 %v1148
    %1414 = vmatprep.subr.mxu0 0.0
    %1415 = vmatpush1.msra.mxu0 %v1149
    %1416 = vmatprep.subr.mxu0 0.0
    %1417 = vmatpush1.msra.mxu0 %v1150
    %1418 = vmatprep.subr.mxu0 0.0
    %1419 = vmatpush1.msra.mxu0 %v1151
    %1420 = vmatprep.subr.mxu0 0.0
    %1421 = vmatpush1.msra.mxu0 %v1152
    %1422 = vmatprep.subr.mxu0 0.0
    %1423 = vmatpush1.msra.mxu0 %v1153
    %1424 = vmatprep.subr.mxu0 0.0
    %1425 = vmatpush1.msra.mxu0 %v1154
    %1426 = vmatprep.subr.mxu0 0.0
    %1427 = vmatpush1.msra.mxu0 %v1155
    %1428 = vmatprep.subr.mxu0 0.0
    %1429 = vmatpush1.msra.mxu0 %v1156
    %1430 = vmatprep.subr.mxu0 0.0
    %1431 = vmatpush1.msra.mxu0 %v1157
    %1432 = vmatprep.subr.mxu0 0.0
    %1433 = vmatpush1.msra.mxu0 %v1158
    %1434 = vmatprep.subr.mxu0 0.0
    %1435 = vmatpush1.msra.mxu0 %v1159
    %1436 = vmatprep.subr.mxu0 0.0
    %1437 = vmatpush1.msra.mxu0 %v1160
    %1438 = vmatprep.subr.mxu0 0.0
    %1439 = vmatpush1.msra.mxu0 %v1161
    %1440 = vmatprep.mubr.f32.mxu0 %v1033
    %1441 = vmatmul.mubr.f32.gmra.mrb[0].mxu0 %v1032
    %v1442 = vpop.f32.mrb[0].mxu0
    %v1443 = vadd.f32 %v1165, %v1442
    %v1444 = vpop.f32.mrb[0].mxu0
    %1445 = vdwg.mxu0
    %vm1446 = vcmask 16384
    %v1447 = vsel %vm1446, %v1233, -inf
    %1448 = vmax.xlane.f32.xlu0 %v1447
    %v1449 = vpop.xlane.xlu0 %1448
    %v1450 = vsel %vm1446, %v1303, -inf
    %1451 = vmax.xlane.f32.xlu0 %v1450
    %v1452 = vpop.xlane.xlu0 %1451
    %v1453 = vsel %vm1446, %v1373, -inf
    %1454 = vmax.xlane.f32.xlu0 %v1453
    %v1455 = vpop.xlane.xlu0 %1454
    %v1456 = vsel %vm1446, %v1443, -inf
    %1457 = vmax.xlane.f32.xlu0 %v1456
    %v1458 = vpop.xlane.xlu0 %1457
    %v1459 = vsub.f32 %v1233, %v1449
    %v1460 = vsub.f32 %v1303, %v1452
    %v1461 = vsub.f32 %v1373, %v1455
    %v1462 = vsub.f32 %v1443, %v1458
    %v1463 = vmul.f32 %v1459, 1.442695
    %v1464 = vpow.pop %v1463
    %v1465 = vmul.f32 %v1460, 1.442695
    %v1466 = vpow.pop %v1465
    %v1467 = vmul.f32 %v1461, 1.442695
    %v1468 = vpow.pop %v1467
    %v1469 = vmul.f32 %v1462, 1.442695
    %v1470 = vpow.pop %v1469
    %v1471 = vsel %vm1446, %v1464, 0.0
    %1472 = vadd.xlane.f32.xlu0 %v1471
    %v1473 = vpop.xlane.xlu0 %1472
    %v1474 = vsel %vm1446, %v1466, 0.0
    %1475 = vadd.xlane.f32.xlu0 %v1474
    %v1476 = vpop.xlane.xlu0 %1475
    %v1477 = vsel %vm1446, %v1468, 0.0
    %1478 = vadd.xlane.f32.xlu0 %v1477
    %v1479 = vpop.xlane.xlu0 %1478
    %v1480 = vsel %vm1446, %v1470, 0.0
    %1481 = vadd.xlane.f32.xlu0 %v1480
    %v1482 = vpop.xlane.xlu0 %1481
    %v1483 = vrcp.pop %v1473
    %v1484 = vrcp.pop %v1476
    %v1485 = vrcp.pop %v1479
    %v1486 = vrcp.pop %v1482
    %v1487 = vmul.f32 %v1464, %v1483
    %v1488 = vmul.f32 %v1466, %v1484
    %v1489 = vmul.f32 %v1468, %v1485
    %v1490 = vmul.f32 %v1470, %v1486
    %v1491 = vld [vmem:[%s8] sm:$0xff]
    %v1492 = vld [vmem:[%s8 + $0x8] sm:$0xff]
    %v1493 = vld [vmem:[%s8 + $0x10] sm:$0xff]
    %v1494 = vld [vmem:[%s8 + $0x18] sm:$0xff]
    %v1495 = vld [vmem:[%s8 + $0x20] sm:$0xff]
    %v1496 = vld [vmem:[%s8 + $0x28] sm:$0xff]
    %v1497 = vld [vmem:[%s8 + $0x30] sm:$0xff]
    %v1498 = vld [vmem:[%s8 + $0x38] sm:$0xff]
    %v1499 = vld [vmem:[%s8 + $0x40] sm:$0xff]
    %v1500 = vld [vmem:[%s8 + $0x48] sm:$0xff]
    %v1501 = vld [vmem:[%s8 + $0x50] sm:$0xff]
    %v1502 = vld [vmem:[%s8 + $0x58] sm:$0xff]
    %v1503 = vld [vmem:[%s8 + $0x60] sm:$0xff]
    %v1504 = vld [vmem:[%s8 + $0x68] sm:$0xff]
    %v1505 = vld [vmem:[%s8 + $0x70] sm:$0xff]
    %v1506 = vld [vmem:[%s8 + $0x78] sm:$0xff]
    %v1507 = vld [vmem:[%s8 + $0x80] sm:$0xff]
    %v1508 = vld [vmem:[%s8 + $0x88] sm:$0xff]
    %v1509 = vld [vmem:[%s8 + $0x90] sm:$0xff]
    %v1510 = vld [vmem:[%s8 + $0x98] sm:$0xff]
    %v1511 = vld [vmem:[%s8 + $0xa0] sm:$0xff]
    %v1512 = vld [vmem:[%s8 + $0xa8] sm:$0xff]
    %v1513 = vld [vmem:[%s8 + $0xb0] sm:$0xff]
    %v1514 = vld [vmem:[%s8 + $0xb8] sm:$0xff]
    %v1515 = vld [vmem:[%s8 + $0xc0] sm:$0xff]
    %v1516 = vld [vmem:[%s8 + $0xc8] sm:$0xff]
    %v1517 = vld [vmem:[%s8 + $0xd0] sm:$0xff]
    %v1518 = vld [vmem:[%s8 + $0xd8] sm:$0xff]
    %v1519 = vld [vmem:[%s8 + $0xe0] sm:$0xff]
    %v1520 = vld [vmem:[%s8 + $0xe8] sm:$0xff]
    %v1521 = vld [vmem:[%s8 + $0xf0] sm:$0xff]
    %v1522 = vld [vmem:[%s8 + $0xf8] sm:$0xff]
    %v1523 = vld [vmem:[%s8 + $0x100] sm:$0xff]
    %v1524 = vld [vmem:[%s8 + $0x108] sm:$0xff]
    %v1525 = vld [vmem:[%s8 + $0x110] sm:$0xff]
    %v1526 = vld [vmem:[%s8 + $0x118] sm:$0xff]
    %v1527 = vld [vmem:[%s8 + $0x120] sm:$0xff]
    %v1528 = vld [vmem:[%s8 + $0x128] sm:$0xff]
    %v1529 = vld [vmem:[%s8 + $0x130] sm:$0xff]
    %v1530 = vld [vmem:[%s8 + $0x138] sm:$0xff]
    %v1531 = vld [vmem:[%s8 + $0x140] sm:$0xff]
    %v1532 = vld [vmem:[%s8 + $0x148] sm:$0xff]
    %v1533 = vld [vmem:[%s8 + $0x150] sm:$0xff]
    %v1534 = vld [vmem:[%s8 + $0x158] sm:$0xff]
    %v1535 = vld [vmem:[%s8 + $0x160] sm:$0xff]
    %v1536 = vld [vmem:[%s8 + $0x168] sm:$0xff]
    %v1537 = vld [vmem:[%s8 + $0x170] sm:$0xff]
    %v1538 = vld [vmem:[%s8 + $0x178] sm:$0xff]
    %v1539 = vld [vmem:[%s8 + $0x180] sm:$0xff]
    %v1540 = vld [vmem:[%s8 + $0x188] sm:$0xff]
    %v1541 = vld [vmem:[%s8 + $0x190] sm:$0xff]
    %v1542 = vld [vmem:[%s8 + $0x198] sm:$0xff]
    %v1543 = vld [vmem:[%s8 + $0x1a0] sm:$0xff]
    %v1544 = vld [vmem:[%s8 + $0x1a8] sm:$0xff]
    %v1545 = vld [vmem:[%s8 + $0x1b0] sm:$0xff]
    %v1546 = vld [vmem:[%s8 + $0x1b8] sm:$0xff]
    %v1547 = vld [vmem:[%s8 + $0x1c0] sm:$0xff]
    %v1548 = vld [vmem:[%s8 + $0x1c8] sm:$0xff]
    %v1549 = vld [vmem:[%s8 + $0x1d0] sm:$0xff]
    %v1550 = vld [vmem:[%s8 + $0x1d8] sm:$0xff]
    %v1551 = vld [vmem:[%s8 + $0x1e0] sm:$0xff]
    %v1552 = vld [vmem:[%s8 + $0x1e8] sm:$0xff]
    %v1553 = vld [vmem:[%s8 + $0x1f0] sm:$0xff]
    %v1554 = vld [vmem:[%s8 + $0x1f8] sm:$0xff]
    %v1555 = vld [vmem:[%s8 + $0x200] sm:$0xff]
    %v1556 = vld [vmem:[%s8 + $0x208] sm:$0xff]
    %v1557 = vld [vmem:[%s8 + $0x210] sm:$0xff]
    %v1558 = vld [vmem:[%s8 + $0x218] sm:$0xff]
    %v1559 = vld [vmem:[%s8 + $0x220] sm:$0xff]
    %v1560 = vld [vmem:[%s8 + $0x228] sm:$0xff]
    %v1561 = vld [vmem:[%s8 + $0x230] sm:$0xff]
    %v1562 = vld [vmem:[%s8 + $0x238] sm:$0xff]
    %v1563 = vld [vmem:[%s8 + $0x240] sm:$0xff]
    %v1564 = vld [vmem:[%s8 + $0x248] sm:$0xff]
    %v1565 = vld [vmem:[%s8 + $0x250] sm:$0xff]
    %v1566 = vld [vmem:[%s8 + $0x258] sm:$0xff]
    %v1567 = vld [vmem:[%s8 + $0x260] sm:$0xff]
    %v1568 = vld [vmem:[%s8 + $0x268] sm:$0xff]
    %v1569 = vld [vmem:[%s8 + $0x270] sm:$0xff]
    %v1570 = vld [vmem:[%s8 + $0x278] sm:$0xff]
    %v1571 = vld [vmem:[%s8 + $0x280] sm:$0xff]
    %v1572 = vld [vmem:[%s8 + $0x288] sm:$0xff]
    %v1573 = vld [vmem:[%s8 + $0x290] sm:$0xff]
    %v1574 = vld [vmem:[%s8 + $0x298] sm:$0xff]
    %v1575 = vld [vmem:[%s8 + $0x2a0] sm:$0xff]
    %v1576 = vld [vmem:[%s8 + $0x2a8] sm:$0xff]
    %v1577 = vld [vmem:[%s8 + $0x2b0] sm:$0xff]
    %v1578 = vld [vmem:[%s8 + $0x2b8] sm:$0xff]
    %v1579 = vld [vmem:[%s8 + $0x2c0] sm:$0xff]
    %v1580 = vld [vmem:[%s8 + $0x2c8] sm:$0xff]
    %v1581 = vld [vmem:[%s8 + $0x2d0] sm:$0xff]
    %v1582 = vld [vmem:[%s8 + $0x2d8] sm:$0xff]
    %v1583 = vld [vmem:[%s8 + $0x2e0] sm:$0xff]
    %v1584 = vld [vmem:[%s8 + $0x2e8] sm:$0xff]
    %v1585 = vld [vmem:[%s8 + $0x2f0] sm:$0xff]
    %v1586 = vld [vmem:[%s8 + $0x2f8] sm:$0xff]
    %v1587 = vld [vmem:[%s8 + $0x300] sm:$0xff]
    %v1588 = vld [vmem:[%s8 + $0x308] sm:$0xff]
    %v1589 = vld [vmem:[%s8 + $0x310] sm:$0xff]
    %v1590 = vld [vmem:[%s8 + $0x318] sm:$0xff]
    %v1591 = vld [vmem:[%s8 + $0x320] sm:$0xff]
    %v1592 = vld [vmem:[%s8 + $0x328] sm:$0xff]
    %v1593 = vld [vmem:[%s8 + $0x330] sm:$0xff]
    %v1594 = vld [vmem:[%s8 + $0x338] sm:$0xff]
    %v1595 = vld [vmem:[%s8 + $0x340] sm:$0xff]
    %v1596 = vld [vmem:[%s8 + $0x348] sm:$0xff]
    %v1597 = vld [vmem:[%s8 + $0x350] sm:$0xff]
    %v1598 = vld [vmem:[%s8 + $0x358] sm:$0xff]
    %v1599 = vld [vmem:[%s8 + $0x360] sm:$0xff]
    %v1600 = vld [vmem:[%s8 + $0x368] sm:$0xff]
    %v1601 = vld [vmem:[%s8 + $0x370] sm:$0xff]
    %v1602 = vld [vmem:[%s8 + $0x378] sm:$0xff]
    %v1603 = vld [vmem:[%s8 + $0x380] sm:$0xff]
    %v1604 = vld [vmem:[%s8 + $0x388] sm:$0xff]
    %v1605 = vld [vmem:[%s8 + $0x390] sm:$0xff]
    %v1606 = vld [vmem:[%s8 + $0x398] sm:$0xff]
    %v1607 = vld [vmem:[%s8 + $0x3a0] sm:$0xff]
    %v1608 = vld [vmem:[%s8 + $0x3a8] sm:$0xff]
    %v1609 = vld [vmem:[%s8 + $0x3b0] sm:$0xff]
    %v1610 = vld [vmem:[%s8 + $0x3b8] sm:$0xff]
    %v1611 = vld [vmem:[%s8 + $0x3c0] sm:$0xff]
    %v1612 = vld [vmem:[%s8 + $0x3c8] sm:$0xff]
    %v1613 = vld [vmem:[%s8 + $0x3d0] sm:$0xff]
    %v1614 = vld [vmem:[%s8 + $0x3d8] sm:$0xff]
    %v1615 = vld [vmem:[%s8 + $0x3e0] sm:$0xff]
    %v1616 = vld [vmem:[%s8 + $0x3e8] sm:$0xff]
    %v1617 = vld [vmem:[%s8 + $0x3f0] sm:$0xff]
    %v1618 = vld [vmem:[%s8 + $0x3f8] sm:$0xff]
    %v1619 = vld [vmem:[%s8 + $0x400] sm:$0xff]
    %v1620 = vld [vmem:[%s8 + $0x408] sm:$0xff]
    %v1621 = vld [vmem:[%s8 + $0x410] sm:$0xff]
    %v1622 = vld [vmem:[%s8 + $0x418] sm:$0xff]
    %v1623 = vld [vmem:[%s8 + $0x420] sm:$0xff]
    %v1624 = vld [vmem:[%s8 + $0x428] sm:$0xff]
    %v1625 = vld [vmem:[%s8 + $0x430] sm:$0xff]
    %v1626 = vld [vmem:[%s8 + $0x438] sm:$0xff]
    %v1627 = vld [vmem:[%s8 + $0x440] sm:$0xff]
    %v1628 = vld [vmem:[%s8 + $0x448] sm:$0xff]
    %v1629 = vld [vmem:[%s8 + $0x450] sm:$0xff]
    %v1630 = vld [vmem:[%s8 + $0x458] sm:$0xff]
    %v1631 = vld [vmem:[%s8 + $0x460] sm:$0xff]
    %v1632 = vld [vmem:[%s8 + $0x468] sm:$0xff]
    %v1633 = vld [vmem:[%s8 + $0x470] sm:$0xff]
    %v1634 = vld [vmem:[%s8 + $0x478] sm:$0xff]
    %v1635 = vld [vmem:[%s8 + $0x480] sm:$0xff]
    %v1636 = vld [vmem:[%s8 + $0x488] sm:$0xff]
    %v1637 = vld [vmem:[%s8 + $0x490] sm:$0xff]
    %v1638 = vld [vmem:[%s8 + $0x498] sm:$0xff]
    %v1639 = vld [vmem:[%s8 + $0x4a0] sm:$0xff]
    %v1640 = vld [vmem:[%s8 + $0x4a8] sm:$0xff]
    %v1641 = vld [vmem:[%s8 + $0x4b0] sm:$0xff]
    %v1642 = vld [vmem:[%s8 + $0x4b8] sm:$0xff]
    %v1643 = vld [vmem:[%s8 + $0x4c0] sm:$0xff]
    %v1644 = vld [vmem:[%s8 + $0x4c8] sm:$0xff]
    %v1645 = vld [vmem:[%s8 + $0x4d0] sm:$0xff]
    %v1646 = vld [vmem:[%s8 + $0x4d8] sm:$0xff]
    %v1647 = vld [vmem:[%s8 + $0x4e0] sm:$0xff]
    %v1648 = vld [vmem:[%s8 + $0x4e8] sm:$0xff]
    %v1649 = vld [vmem:[%s8 + $0x4f0] sm:$0xff]
    %v1650 = vld [vmem:[%s8 + $0x4f8] sm:$0xff]
    %v1651 = vld [vmem:[%s8 + $0x500] sm:$0xff]
    %v1652 = vld [vmem:[%s8 + $0x508] sm:$0xff]
    %v1653 = vld [vmem:[%s8 + $0x510] sm:$0xff]
    %v1654 = vld [vmem:[%s8 + $0x518] sm:$0xff]
    %v1655 = vld [vmem:[%s8 + $0x520] sm:$0xff]
    %v1656 = vld [vmem:[%s8 + $0x528] sm:$0xff]
    %v1657 = vld [vmem:[%s8 + $0x530] sm:$0xff]
    %v1658 = vld [vmem:[%s8 + $0x538] sm:$0xff]
    %v1659 = vld [vmem:[%s8 + $0x540] sm:$0xff]
    %v1660 = vld [vmem:[%s8 + $0x548] sm:$0xff]
    %v1661 = vld [vmem:[%s8 + $0x550] sm:$0xff]
    %v1662 = vld [vmem:[%s8 + $0x558] sm:$0xff]
    %v1663 = vld [vmem:[%s8 + $0x560] sm:$0xff]
    %v1664 = vld [vmem:[%s8 + $0x568] sm:$0xff]
    %v1665 = vld [vmem:[%s8 + $0x570] sm:$0xff]
    %v1666 = vld [vmem:[%s8 + $0x578] sm:$0xff]
    %v1667 = vld [vmem:[%s8 + $0x580] sm:$0xff]
    %v1668 = vld [vmem:[%s8 + $0x588] sm:$0xff]
    %v1669 = vld [vmem:[%s8 + $0x590] sm:$0xff]
    %v1670 = vld [vmem:[%s8 + $0x598] sm:$0xff]
    %v1671 = vld [vmem:[%s8 + $0x5a0] sm:$0xff]
    %v1672 = vld [vmem:[%s8 + $0x5a8] sm:$0xff]
    %v1673 = vld [vmem:[%s8 + $0x5b0] sm:$0xff]
    %v1674 = vld [vmem:[%s8 + $0x5b8] sm:$0xff]
    %v1675 = vld [vmem:[%s8 + $0x5c0] sm:$0xff]
    %v1676 = vld [vmem:[%s8 + $0x5c8] sm:$0xff]
    %v1677 = vld [vmem:[%s8 + $0x5d0] sm:$0xff]
    %v1678 = vld [vmem:[%s8 + $0x5d8] sm:$0xff]
    %v1679 = vld [vmem:[%s8 + $0x5e0] sm:$0xff]
    %v1680 = vld [vmem:[%s8 + $0x5e8] sm:$0xff]
    %v1681 = vld [vmem:[%s8 + $0x5f0] sm:$0xff]
    %v1682 = vld [vmem:[%s8 + $0x5f8] sm:$0xff]
    %v1683 = vld [vmem:[%s8 + $0x600] sm:$0xff]
    %v1684 = vld [vmem:[%s8 + $0x608] sm:$0xff]
    %v1685 = vld [vmem:[%s8 + $0x610] sm:$0xff]
    %v1686 = vld [vmem:[%s8 + $0x618] sm:$0xff]
    %v1687 = vld [vmem:[%s8 + $0x620] sm:$0xff]
    %v1688 = vld [vmem:[%s8 + $0x628] sm:$0xff]
    %v1689 = vld [vmem:[%s8 + $0x630] sm:$0xff]
    %v1690 = vld [vmem:[%s8 + $0x638] sm:$0xff]
    %v1691 = vld [vmem:[%s8 + $0x640] sm:$0xff]
    %v1692 = vld [vmem:[%s8 + $0x648] sm:$0xff]
    %v1693 = vld [vmem:[%s8 + $0x650] sm:$0xff]
    %v1694 = vld [vmem:[%s8 + $0x658] sm:$0xff]
    %v1695 = vld [vmem:[%s8 + $0x660] sm:$0xff]
    %v1696 = vld [vmem:[%s8 + $0x668] sm:$0xff]
    %v1697 = vld [vmem:[%s8 + $0x670] sm:$0xff]
    %v1698 = vld [vmem:[%s8 + $0x678] sm:$0xff]
    %v1699 = vld [vmem:[%s8 + $0x680] sm:$0xff]
    %v1700 = vld [vmem:[%s8 + $0x688] sm:$0xff]
    %v1701 = vld [vmem:[%s8 + $0x690] sm:$0xff]
    %v1702 = vld [vmem:[%s8 + $0x698] sm:$0xff]
    %v1703 = vld [vmem:[%s8 + $0x6a0] sm:$0xff]
    %v1704 = vld [vmem:[%s8 + $0x6a8] sm:$0xff]
    %v1705 = vld [vmem:[%s8 + $0x6b0] sm:$0xff]
    %v1706 = vld [vmem:[%s8 + $0x6b8] sm:$0xff]
    %v1707 = vld [vmem:[%s8 + $0x6c0] sm:$0xff]
    %v1708 = vld [vmem:[%s8 + $0x6c8] sm:$0xff]
    %v1709 = vld [vmem:[%s8 + $0x6d0] sm:$0xff]
    %v1710 = vld [vmem:[%s8 + $0x6d8] sm:$0xff]
    %v1711 = vld [vmem:[%s8 + $0x6e0] sm:$0xff]
    %v1712 = vld [vmem:[%s8 + $0x6e8] sm:$0xff]
    %v1713 = vld [vmem:[%s8 + $0x6f0] sm:$0xff]
    %v1714 = vld [vmem:[%s8 + $0x6f8] sm:$0xff]
    %v1715 = vld [vmem:[%s8 + $0x700] sm:$0xff]
    %v1716 = vld [vmem:[%s8 + $0x708] sm:$0xff]
    %v1717 = vld [vmem:[%s8 + $0x710] sm:$0xff]
    %v1718 = vld [vmem:[%s8 + $0x718] sm:$0xff]
    %v1719 = vld [vmem:[%s8 + $0x720] sm:$0xff]
    %v1720 = vld [vmem:[%s8 + $0x728] sm:$0xff]
    %v1721 = vld [vmem:[%s8 + $0x730] sm:$0xff]
    %v1722 = vld [vmem:[%s8 + $0x738] sm:$0xff]
    %v1723 = vld [vmem:[%s8 + $0x740] sm:$0xff]
    %v1724 = vld [vmem:[%s8 + $0x748] sm:$0xff]
    %v1725 = vld [vmem:[%s8 + $0x750] sm:$0xff]
    %v1726 = vld [vmem:[%s8 + $0x758] sm:$0xff]
    %v1727 = vld [vmem:[%s8 + $0x760] sm:$0xff]
    %v1728 = vld [vmem:[%s8 + $0x768] sm:$0xff]
    %v1729 = vld [vmem:[%s8 + $0x770] sm:$0xff]
    %v1730 = vld [vmem:[%s8 + $0x778] sm:$0xff]
    %v1731 = vld [vmem:[%s8 + $0x780] sm:$0xff]
    %v1732 = vld [vmem:[%s8 + $0x788] sm:$0xff]
    %v1733 = vld [vmem:[%s8 + $0x790] sm:$0xff]
    %v1734 = vld [vmem:[%s8 + $0x798] sm:$0xff]
    %v1735 = vld [vmem:[%s8 + $0x7a0] sm:$0xff]
    %v1736 = vld [vmem:[%s8 + $0x7a8] sm:$0xff]
    %v1737 = vld [vmem:[%s8 + $0x7b0] sm:$0xff]
    %v1738 = vld [vmem:[%s8 + $0x7b8] sm:$0xff]
    %v1739 = vld [vmem:[%s8 + $0x7c0] sm:$0xff]
    %v1740 = vld [vmem:[%s8 + $0x7c8] sm:$0xff]
    %v1741 = vld [vmem:[%s8 + $0x7d0] sm:$0xff]
    %v1742 = vld [vmem:[%s8 + $0x7d8] sm:$0xff]
    %v1743 = vld [vmem:[%s8 + $0x7e0] sm:$0xff]
    %v1744 = vld [vmem:[%s8 + $0x7e8] sm:$0xff]
    %v1745 = vld [vmem:[%s8 + $0x7f0] sm:$0xff]
    %v1746 = vld [vmem:[%s8 + $0x7f8] sm:$0xff]
    %v1747 = vld [vmem:[%s8 + $0x800] sm:$0xff]
    %v1748 = vld [vmem:[%s8 + $0x808] sm:$0xff]
    %v1749 = vld [vmem:[%s8 + $0x810] sm:$0xff]
    %v1750 = vld [vmem:[%s8 + $0x818] sm:$0xff]
    %v1751 = vld [vmem:[%s8 + $0x820] sm:$0xff]
    %v1752 = vld [vmem:[%s8 + $0x828] sm:$0xff]
    %v1753 = vld [vmem:[%s8 + $0x830] sm:$0xff]
    %v1754 = vld [vmem:[%s8 + $0x838] sm:$0xff]
    %v1755 = vld [vmem:[%s8 + $0x840] sm:$0xff]
    %v1756 = vld [vmem:[%s8 + $0x848] sm:$0xff]
    %v1757 = vld [vmem:[%s8 + $0x850] sm:$0xff]
    %v1758 = vld [vmem:[%s8 + $0x858] sm:$0xff]
    %v1759 = vld [vmem:[%s8 + $0x860] sm:$0xff]
    %v1760 = vld [vmem:[%s8 + $0x868] sm:$0xff]
    %v1761 = vld [vmem:[%s8 + $0x870] sm:$0xff]
    %v1762 = vld [vmem:[%s8 + $0x878] sm:$0xff]
    %v1763 = vld [vmem:[%s8 + $0x880] sm:$0xff]
    %v1764 = vld [vmem:[%s8 + $0x888] sm:$0xff]
    %v1765 = vld [vmem:[%s8 + $0x890] sm:$0xff]
    %v1766 = vld [vmem:[%s8 + $0x898] sm:$0xff]
    %v1767 = vld [vmem:[%s8 + $0x8a0] sm:$0xff]
    %v1768 = vld [vmem:[%s8 + $0x8a8] sm:$0xff]
    %v1769 = vld [vmem:[%s8 + $0x8b0] sm:$0xff]
    %v1770 = vld [vmem:[%s8 + $0x8b8] sm:$0xff]
    %v1771 = vld [vmem:[%s8 + $0x8c0] sm:$0xff]
    %v1772 = vld [vmem:[%s8 + $0x8c8] sm:$0xff]
    %v1773 = vld [vmem:[%s8 + $0x8d0] sm:$0xff]
    %v1774 = vld [vmem:[%s8 + $0x8d8] sm:$0xff]
    %v1775 = vld [vmem:[%s8 + $0x8e0] sm:$0xff]
    %v1776 = vld [vmem:[%s8 + $0x8e8] sm:$0xff]
    %v1777 = vld [vmem:[%s8 + $0x8f0] sm:$0xff]
    %v1778 = vld [vmem:[%s8 + $0x8f8] sm:$0xff]
    %v1779 = vld [vmem:[%s8 + $0x900] sm:$0xff]
    %v1780 = vld [vmem:[%s8 + $0x908] sm:$0xff]
    %v1781 = vld [vmem:[%s8 + $0x910] sm:$0xff]
    %v1782 = vld [vmem:[%s8 + $0x918] sm:$0xff]
    %v1783 = vld [vmem:[%s8 + $0x920] sm:$0xff]
    %v1784 = vld [vmem:[%s8 + $0x928] sm:$0xff]
    %v1785 = vld [vmem:[%s8 + $0x930] sm:$0xff]
    %v1786 = vld [vmem:[%s8 + $0x938] sm:$0xff]
    %v1787 = vld [vmem:[%s8 + $0x940] sm:$0xff]
    %v1788 = vld [vmem:[%s8 + $0x948] sm:$0xff]
    %v1789 = vld [vmem:[%s8 + $0x950] sm:$0xff]
    %v1790 = vld [vmem:[%s8 + $0x958] sm:$0xff]
    %v1791 = vld [vmem:[%s8 + $0x960] sm:$0xff]
    %v1792 = vld [vmem:[%s8 + $0x968] sm:$0xff]
    %v1793 = vld [vmem:[%s8 + $0x970] sm:$0xff]
    %v1794 = vld [vmem:[%s8 + $0x978] sm:$0xff]
    %v1795 = vld [vmem:[%s8 + $0x980] sm:$0xff]
    %v1796 = vld [vmem:[%s8 + $0x988] sm:$0xff]
    %v1797 = vld [vmem:[%s8 + $0x990] sm:$0xff]
    %v1798 = vld [vmem:[%s8 + $0x998] sm:$0xff]
    %v1799 = vld [vmem:[%s8 + $0x9a0] sm:$0xff]
    %v1800 = vld [vmem:[%s8 + $0x9a8] sm:$0xff]
    %v1801 = vld [vmem:[%s8 + $0x9b0] sm:$0xff]
    %v1802 = vld [vmem:[%s8 + $0x9b8] sm:$0xff]
    %v1803 = vld [vmem:[%s8 + $0x9c0] sm:$0xff]
    %v1804 = vld [vmem:[%s8 + $0x9c8] sm:$0xff]
    %v1805 = vld [vmem:[%s8 + $0x9d0] sm:$0xff]
    %v1806 = vld [vmem:[%s8 + $0x9d8] sm:$0xff]
    %v1807 = vld [vmem:[%s8 + $0x9e0] sm:$0xff]
    %v1808 = vld [vmem:[%s8 + $0x9e8] sm:$0xff]
    %v1809 = vld [vmem:[%s8 + $0x9f0] sm:$0xff]
    %v1810 = vld [vmem:[%s8 + $0x9f8] sm:$0xff]
    %v1811 = vld [vmem:[%s8 + $0xa00] sm:$0xff]
    %v1812 = vld [vmem:[%s8 + $0xa08] sm:$0xff]
    %v1813 = vld [vmem:[%s8 + $0xa10] sm:$0xff]
    %v1814 = vld [vmem:[%s8 + $0xa18] sm:$0xff]
    %v1815 = vld [vmem:[%s8 + $0xa20] sm:$0xff]
    %v1816 = vld [vmem:[%s8 + $0xa28] sm:$0xff]
    %v1817 = vld [vmem:[%s8 + $0xa30] sm:$0xff]
    %v1818 = vld [vmem:[%s8 + $0xa38] sm:$0xff]
    %v1819 = vld [vmem:[%s8 + $0xa40] sm:$0xff]
    %v1820 = vld [vmem:[%s8 + $0xa48] sm:$0xff]
    %v1821 = vld [vmem:[%s8 + $0xa50] sm:$0xff]
    %v1822 = vld [vmem:[%s8 + $0xa58] sm:$0xff]
    %v1823 = vld [vmem:[%s8 + $0xa60] sm:$0xff]
    %v1824 = vld [vmem:[%s8 + $0xa68] sm:$0xff]
    %v1825 = vld [vmem:[%s8 + $0xa70] sm:$0xff]
    %v1826 = vld [vmem:[%s8 + $0xa78] sm:$0xff]
    %v1827 = vld [vmem:[%s8 + $0xa80] sm:$0xff]
    %v1828 = vld [vmem:[%s8 + $0xa88] sm:$0xff]
    %v1829 = vld [vmem:[%s8 + $0xa90] sm:$0xff]
    %v1830 = vld [vmem:[%s8 + $0xa98] sm:$0xff]
    %v1831 = vld [vmem:[%s8 + $0xaa0] sm:$0xff]
    %v1832 = vld [vmem:[%s8 + $0xaa8] sm:$0xff]
    %v1833 = vld [vmem:[%s8 + $0xab0] sm:$0xff]
    %v1834 = vld [vmem:[%s8 + $0xab8] sm:$0xff]
    %v1835 = vld [vmem:[%s8 + $0xac0] sm:$0xff]
    %v1836 = vld [vmem:[%s8 + $0xac8] sm:$0xff]
    %v1837 = vld [vmem:[%s8 + $0xad0] sm:$0xff]
    %v1838 = vld [vmem:[%s8 + $0xad8] sm:$0xff]
    %v1839 = vld [vmem:[%s8 + $0xae0] sm:$0xff]
    %v1840 = vld [vmem:[%s8 + $0xae8] sm:$0xff]
    %v1841 = vld [vmem:[%s8 + $0xaf0] sm:$0xff]
    %v1842 = vld [vmem:[%s8 + $0xaf8] sm:$0xff]
    %v1843 = vld [vmem:[%s8 + $0xb00] sm:$0xff]
    %v1844 = vld [vmem:[%s8 + $0xb08] sm:$0xff]
    %v1845 = vld [vmem:[%s8 + $0xb10] sm:$0xff]
    %v1846 = vld [vmem:[%s8 + $0xb18] sm:$0xff]
    %v1847 = vld [vmem:[%s8 + $0xb20] sm:$0xff]
    %v1848 = vld [vmem:[%s8 + $0xb28] sm:$0xff]
    %v1849 = vld [vmem:[%s8 + $0xb30] sm:$0xff]
    %v1850 = vld [vmem:[%s8 + $0xb38] sm:$0xff]
    %v1851 = vld [vmem:[%s8 + $0xb40] sm:$0xff]
    %v1852 = vld [vmem:[%s8 + $0xb48] sm:$0xff]
    %v1853 = vld [vmem:[%s8 + $0xb50] sm:$0xff]
    %v1854 = vld [vmem:[%s8 + $0xb58] sm:$0xff]
    %v1855 = vld [vmem:[%s8 + $0xb60] sm:$0xff]
    %v1856 = vld [vmem:[%s8 + $0xb68] sm:$0xff]
    %v1857 = vld [vmem:[%s8 + $0xb70] sm:$0xff]
    %v1858 = vld [vmem:[%s8 + $0xb78] sm:$0xff]
    %v1859 = vld [vmem:[%s8 + $0xb80] sm:$0xff]
    %v1860 = vld [vmem:[%s8 + $0xb88] sm:$0xff]
    %v1861 = vld [vmem:[%s8 + $0xb90] sm:$0xff]
    %v1862 = vld [vmem:[%s8 + $0xb98] sm:$0xff]
    %v1863 = vld [vmem:[%s8 + $0xba0] sm:$0xff]
    %v1864 = vld [vmem:[%s8 + $0xba8] sm:$0xff]
    %v1865 = vld [vmem:[%s8 + $0xbb0] sm:$0xff]
    %v1866 = vld [vmem:[%s8 + $0xbb8] sm:$0xff]
    %v1867 = vld [vmem:[%s8 + $0xbc0] sm:$0xff]
    %v1868 = vld [vmem:[%s8 + $0xbc8] sm:$0xff]
    %v1869 = vld [vmem:[%s8 + $0xbd0] sm:$0xff]
    %v1870 = vld [vmem:[%s8 + $0xbd8] sm:$0xff]
    %v1871 = vld [vmem:[%s8 + $0xbe0] sm:$0xff]
    %v1872 = vld [vmem:[%s8 + $0xbe8] sm:$0xff]
    %v1873 = vld [vmem:[%s8 + $0xbf0] sm:$0xff]
    %v1874 = vld [vmem:[%s8 + $0xbf8] sm:$0xff]
    %v1875 = vld [vmem:[%s8 + $0xc00] sm:$0xff]
    %v1876 = vld [vmem:[%s8 + $0xc08] sm:$0xff]
    %v1877 = vld [vmem:[%s8 + $0xc10] sm:$0xff]
    %v1878 = vld [vmem:[%s8 + $0xc18] sm:$0xff]
    %v1879 = vld [vmem:[%s8 + $0xc20] sm:$0xff]
    %v1880 = vld [vmem:[%s8 + $0xc28] sm:$0xff]
    %v1881 = vld [vmem:[%s8 + $0xc30] sm:$0xff]
    %v1882 = vld [vmem:[%s8 + $0xc38] sm:$0xff]
    %v1883 = vld [vmem:[%s8 + $0xc40] sm:$0xff]
    %v1884 = vld [vmem:[%s8 + $0xc48] sm:$0xff]
    %v1885 = vld [vmem:[%s8 + $0xc50] sm:$0xff]
    %v1886 = vld [vmem:[%s8 + $0xc58] sm:$0xff]
    %v1887 = vld [vmem:[%s8 + $0xc60] sm:$0xff]
    %v1888 = vld [vmem:[%s8 + $0xc68] sm:$0xff]
    %v1889 = vld [vmem:[%s8 + $0xc70] sm:$0xff]
    %v1890 = vld [vmem:[%s8 + $0xc78] sm:$0xff]
    %v1891 = vld [vmem:[%s8 + $0xc80] sm:$0xff]
    %v1892 = vld [vmem:[%s8 + $0xc88] sm:$0xff]
    %v1893 = vld [vmem:[%s8 + $0xc90] sm:$0xff]
    %v1894 = vld [vmem:[%s8 + $0xc98] sm:$0xff]
    %v1895 = vld [vmem:[%s8 + $0xca0] sm:$0xff]
    %v1896 = vld [vmem:[%s8 + $0xca8] sm:$0xff]
    %v1897 = vld [vmem:[%s8 + $0xcb0] sm:$0xff]
    %v1898 = vld [vmem:[%s8 + $0xcb8] sm:$0xff]
    %v1899 = vld [vmem:[%s8 + $0xcc0] sm:$0xff]
    %v1900 = vld [vmem:[%s8 + $0xcc8] sm:$0xff]
    %v1901 = vld [vmem:[%s8 + $0xcd0] sm:$0xff]
    %v1902 = vld [vmem:[%s8 + $0xcd8] sm:$0xff]
    %v1903 = vld [vmem:[%s8 + $0xce0] sm:$0xff]
    %v1904 = vld [vmem:[%s8 + $0xce8] sm:$0xff]
    %v1905 = vld [vmem:[%s8 + $0xcf0] sm:$0xff]
    %v1906 = vld [vmem:[%s8 + $0xcf8] sm:$0xff]
    %v1907 = vld [vmem:[%s8 + $0xd00] sm:$0xff]
    %v1908 = vld [vmem:[%s8 + $0xd08] sm:$0xff]
    %v1909 = vld [vmem:[%s8 + $0xd10] sm:$0xff]
    %v1910 = vld [vmem:[%s8 + $0xd18] sm:$0xff]
    %v1911 = vld [vmem:[%s8 + $0xd20] sm:$0xff]
    %v1912 = vld [vmem:[%s8 + $0xd28] sm:$0xff]
    %v1913 = vld [vmem:[%s8 + $0xd30] sm:$0xff]
    %v1914 = vld [vmem:[%s8 + $0xd38] sm:$0xff]
    %v1915 = vld [vmem:[%s8 + $0xd40] sm:$0xff]
    %v1916 = vld [vmem:[%s8 + $0xd48] sm:$0xff]
    %v1917 = vld [vmem:[%s8 + $0xd50] sm:$0xff]
    %v1918 = vld [vmem:[%s8 + $0xd58] sm:$0xff]
    %v1919 = vld [vmem:[%s8 + $0xd60] sm:$0xff]
    %v1920 = vld [vmem:[%s8 + $0xd68] sm:$0xff]
    %v1921 = vld [vmem:[%s8 + $0xd70] sm:$0xff]
    %v1922 = vld [vmem:[%s8 + $0xd78] sm:$0xff]
    %v1923 = vld [vmem:[%s8 + $0xd80] sm:$0xff]
    %v1924 = vld [vmem:[%s8 + $0xd88] sm:$0xff]
    %v1925 = vld [vmem:[%s8 + $0xd90] sm:$0xff]
    %v1926 = vld [vmem:[%s8 + $0xd98] sm:$0xff]
    %v1927 = vld [vmem:[%s8 + $0xda0] sm:$0xff]
    %v1928 = vld [vmem:[%s8 + $0xda8] sm:$0xff]
    %v1929 = vld [vmem:[%s8 + $0xdb0] sm:$0xff]
    %v1930 = vld [vmem:[%s8 + $0xdb8] sm:$0xff]
    %v1931 = vld [vmem:[%s8 + $0xdc0] sm:$0xff]
    %v1932 = vld [vmem:[%s8 + $0xdc8] sm:$0xff]
    %v1933 = vld [vmem:[%s8 + $0xdd0] sm:$0xff]
    %v1934 = vld [vmem:[%s8 + $0xdd8] sm:$0xff]
    %v1935 = vld [vmem:[%s8 + $0xde0] sm:$0xff]
    %v1936 = vld [vmem:[%s8 + $0xde8] sm:$0xff]
    %v1937 = vld [vmem:[%s8 + $0xdf0] sm:$0xff]
    %v1938 = vld [vmem:[%s8 + $0xdf8] sm:$0xff]
    %v1939 = vld [vmem:[%s8 + $0xe00] sm:$0xff]
    %v1940 = vld [vmem:[%s8 + $0xe08] sm:$0xff]
    %v1941 = vld [vmem:[%s8 + $0xe10] sm:$0xff]
    %v1942 = vld [vmem:[%s8 + $0xe18] sm:$0xff]
    %v1943 = vld [vmem:[%s8 + $0xe20] sm:$0xff]
    %v1944 = vld [vmem:[%s8 + $0xe28] sm:$0xff]
    %v1945 = vld [vmem:[%s8 + $0xe30] sm:$0xff]
    %v1946 = vld [vmem:[%s8 + $0xe38] sm:$0xff]
    %v1947 = vld [vmem:[%s8 + $0xe40] sm:$0xff]
    %v1948 = vld [vmem:[%s8 + $0xe48] sm:$0xff]
    %v1949 = vld [vmem:[%s8 + $0xe50] sm:$0xff]
    %v1950 = vld [vmem:[%s8 + $0xe58] sm:$0xff]
    %v1951 = vld [vmem:[%s8 + $0xe60] sm:$0xff]
    %v1952 = vld [vmem:[%s8 + $0xe68] sm:$0xff]
    %v1953 = vld [vmem:[%s8 + $0xe70] sm:$0xff]
    %v1954 = vld [vmem:[%s8 + $0xe78] sm:$0xff]
    %v1955 = vld [vmem:[%s8 + $0xe80] sm:$0xff]
    %v1956 = vld [vmem:[%s8 + $0xe88] sm:$0xff]
    %v1957 = vld [vmem:[%s8 + $0xe90] sm:$0xff]
    %v1958 = vld [vmem:[%s8 + $0xe98] sm:$0xff]
    %v1959 = vld [vmem:[%s8 + $0xea0] sm:$0xff]
    %v1960 = vld [vmem:[%s8 + $0xea8] sm:$0xff]
    %v1961 = vld [vmem:[%s8 + $0xeb0] sm:$0xff]
    %v1962 = vld [vmem:[%s8 + $0xeb8] sm:$0xff]
    %v1963 = vld [vmem:[%s8 + $0xec0] sm:$0xff]
    %v1964 = vld [vmem:[%s8 + $0xec8] sm:$0xff]
    %v1965 = vld [vmem:[%s8 + $0xed0] sm:$0xff]
    %v1966 = vld [vmem:[%s8 + $0xed8] sm:$0xff]
    %v1967 = vld [vmem:[%s8 + $0xee0] sm:$0xff]
    %v1968 = vld [vmem:[%s8 + $0xee8] sm:$0xff]
    %v1969 = vld [vmem:[%s8 + $0xef0] sm:$0xff]
    %v1970 = vld [vmem:[%s8 + $0xef8] sm:$0xff]
    %v1971 = vld [vmem:[%s8 + $0xf00] sm:$0xff]
    %v1972 = vld [vmem:[%s8 + $0xf08] sm:$0xff]
    %v1973 = vld [vmem:[%s8 + $0xf10] sm:$0xff]
    %v1974 = vld [vmem:[%s8 + $0xf18] sm:$0xff]
    %v1975 = vld [vmem:[%s8 + $0xf20] sm:$0xff]
    %v1976 = vld [vmem:[%s8 + $0xf28] sm:$0xff]
    %v1977 = vld [vmem:[%s8 + $0xf30] sm:$0xff]
    %v1978 = vld [vmem:[%s8 + $0xf38] sm:$0xff]
    %v1979 = vld [vmem:[%s8 + $0xf40] sm:$0xff]
    %v1980 = vld [vmem:[%s8 + $0xf48] sm:$0xff]
    %v1981 = vld [vmem:[%s8 + $0xf50] sm:$0xff]
    %v1982 = vld [vmem:[%s8 + $0xf58] sm:$0xff]
    %v1983 = vld [vmem:[%s8 + $0xf60] sm:$0xff]
    %v1984 = vld [vmem:[%s8 + $0xf68] sm:$0xff]
    %v1985 = vld [vmem:[%s8 + $0xf70] sm:$0xff]
    %v1986 = vld [vmem:[%s8 + $0xf78] sm:$0xff]
    %v1987 = vld [vmem:[%s8 + $0xf80] sm:$0xff]
    %v1988 = vld [vmem:[%s8 + $0xf88] sm:$0xff]
    %v1989 = vld [vmem:[%s8 + $0xf90] sm:$0xff]
    %v1990 = vld [vmem:[%s8 + $0xf98] sm:$0xff]
    %v1991 = vld [vmem:[%s8 + $0xfa0] sm:$0xff]
    %v1992 = vld [vmem:[%s8 + $0xfa8] sm:$0xff]
    %v1993 = vld [vmem:[%s8 + $0xfb0] sm:$0xff]
    %v1994 = vld [vmem:[%s8 + $0xfb8] sm:$0xff]
    %v1995 = vld [vmem:[%s8 + $0xfc0] sm:$0xff]
    %v1996 = vld [vmem:[%s8 + $0xfc8] sm:$0xff]
    %v1997 = vld [vmem:[%s8 + $0xfd0] sm:$0xff]
    %v1998 = vld [vmem:[%s8 + $0xfd8] sm:$0xff]
    %v1999 = vld [vmem:[%s8 + $0xfe0] sm:$0xff]
    %v2000 = vld [vmem:[%s8 + $0xfe8] sm:$0xff]
    %v2001 = vld [vmem:[%s8 + $0xff0] sm:$0xff]
    %v2002 = vld [vmem:[%s8 + $0xff8] sm:$0xff]
    %s2004 = vtos %v1487
    %v2005 = vstv %s2004
    %v2007 = vmul.f32 %v2005, %v1619
    %v2008 = vmul.f32 %v2005, %v1620
    %v2009 = vmul.f32 %v2005, %v1621
    %v2010 = vmul.f32 %v2005, %v1622
    %v2011 = vmul.f32 %v2005, %v1623
    %v2012 = vmul.f32 %v2005, %v1624
    %v2013 = vmul.f32 %v2005, %v1625
    %v2014 = vmul.f32 %v2005, %v1626
    %v2015 = vmul.f32 %v2005, %v1627
    %v2016 = vmul.f32 %v2005, %v1628
    %v2017 = vmul.f32 %v2005, %v1629
    %v2018 = vmul.f32 %v2005, %v1630
    %v2019 = vmul.f32 %v2005, %v1631
    %v2020 = vmul.f32 %v2005, %v1632
    %v2021 = vmul.f32 %v2005, %v1633
    %v2022 = vmul.f32 %v2005, %v1634
    %v2023 = vmul.f32 %v2005, %v1635
    %v2024 = vmul.f32 %v2005, %v1636
    %v2025 = vmul.f32 %v2005, %v1637
    %v2026 = vmul.f32 %v2005, %v1638
    %v2027 = vmul.f32 %v2005, %v1639
    %v2028 = vmul.f32 %v2005, %v1640
    %v2029 = vmul.f32 %v2005, %v1641
    %v2030 = vmul.f32 %v2005, %v1642
    %v2031 = vmul.f32 %v2005, %v1643
    %v2032 = vmul.f32 %v2005, %v1644
    %v2033 = vmul.f32 %v2005, %v1645
    %v2034 = vmul.f32 %v2005, %v1646
    %v2035 = vmul.f32 %v2005, %v1647
    %v2036 = vmul.f32 %v2005, %v1648
    %v2037 = vmul.f32 %v2005, %v1649
    %v2038 = vmul.f32 %v2005, %v1650
    %v2039 = vmul.f32 %v2005, %v1651
    %v2040 = vmul.f32 %v2005, %v1652
    %v2041 = vmul.f32 %v2005, %v1653
    %v2042 = vmul.f32 %v2005, %v1654
    %v2043 = vmul.f32 %v2005, %v1655
    %v2044 = vmul.f32 %v2005, %v1656
    %v2045 = vmul.f32 %v2005, %v1657
    %v2046 = vmul.f32 %v2005, %v1658
    %v2047 = vmul.f32 %v2005, %v1659
    %v2048 = vmul.f32 %v2005, %v1660
    %v2049 = vmul.f32 %v2005, %v1661
    %v2050 = vmul.f32 %v2005, %v1662
    %v2051 = vmul.f32 %v2005, %v1663
    %v2052 = vmul.f32 %v2005, %v1664
    %v2053 = vmul.f32 %v2005, %v1665
    %v2054 = vmul.f32 %v2005, %v1666
    %v2055 = vmul.f32 %v2005, %v1667
    %v2056 = vmul.f32 %v2005, %v1668
    %v2057 = vmul.f32 %v2005, %v1669
    %v2058 = vmul.f32 %v2005, %v1670
    %v2059 = vmul.f32 %v2005, %v1671
    %v2060 = vmul.f32 %v2005, %v1672
    %v2061 = vmul.f32 %v2005, %v1673
    %v2062 = vmul.f32 %v2005, %v1674
    %v2063 = vmul.f32 %v2005, %v1675
    %v2064 = vmul.f32 %v2005, %v1676
    %v2065 = vmul.f32 %v2005, %v1677
    %v2066 = vmul.f32 %v2005, %v1678
    %v2067 = vmul.f32 %v2005, %v1679
    %v2068 = vmul.f32 %v2005, %v1680
    %v2069 = vmul.f32 %v2005, %v1681
    %v2070 = vmul.f32 %v2005, %v1682
    %v2071 = vmul.f32 %v2005, %v1683
    %v2072 = vmul.f32 %v2005, %v1684
    %v2073 = vmul.f32 %v2005, %v1685
    %v2074 = vmul.f32 %v2005, %v1686
    %v2075 = vmul.f32 %v2005, %v1687
    %v2076 = vmul.f32 %v2005, %v1688
    %v2077 = vmul.f32 %v2005, %v1689
    %v2078 = vmul.f32 %v2005, %v1690
    %v2079 = vmul.f32 %v2005, %v1691
    %v2080 = vmul.f32 %v2005, %v1692
    %v2081 = vmul.f32 %v2005, %v1693
    %v2082 = vmul.f32 %v2005, %v1694
    %v2083 = vmul.f32 %v2005, %v1695
    %v2084 = vmul.f32 %v2005, %v1696
    %v2085 = vmul.f32 %v2005, %v1697
    %v2086 = vmul.f32 %v2005, %v1698
    %v2087 = vmul.f32 %v2005, %v1699
    %v2088 = vmul.f32 %v2005, %v1700
    %v2089 = vmul.f32 %v2005, %v1701
    %v2090 = vmul.f32 %v2005, %v1702
    %v2091 = vmul.f32 %v2005, %v1703
    %v2092 = vmul.f32 %v2005, %v1704
    %v2093 = vmul.f32 %v2005, %v1705
    %v2094 = vmul.f32 %v2005, %v1706
    %v2095 = vmul.f32 %v2005, %v1707
    %v2096 = vmul.f32 %v2005, %v1708
    %v2097 = vmul.f32 %v2005, %v1709
    %v2098 = vmul.f32 %v2005, %v1710
    %v2099 = vmul.f32 %v2005, %v1711
    %v2100 = vmul.f32 %v2005, %v1712
    %v2101 = vmul.f32 %v2005, %v1713
    %v2102 = vmul.f32 %v2005, %v1714
    %v2103 = vmul.f32 %v2005, %v1715
    %v2104 = vmul.f32 %v2005, %v1716
    %v2105 = vmul.f32 %v2005, %v1717
    %v2106 = vmul.f32 %v2005, %v1718
    %v2107 = vmul.f32 %v2005, %v1719
    %v2108 = vmul.f32 %v2005, %v1720
    %v2109 = vmul.f32 %v2005, %v1721
    %v2110 = vmul.f32 %v2005, %v1722
    %v2111 = vmul.f32 %v2005, %v1723
    %v2112 = vmul.f32 %v2005, %v1724
    %v2113 = vmul.f32 %v2005, %v1725
    %v2114 = vmul.f32 %v2005, %v1726
    %v2115 = vmul.f32 %v2005, %v1727
    %v2116 = vmul.f32 %v2005, %v1728
    %v2117 = vmul.f32 %v2005, %v1729
    %v2118 = vmul.f32 %v2005, %v1730
    %v2119 = vmul.f32 %v2005, %v1731
    %v2120 = vmul.f32 %v2005, %v1732
    %v2121 = vmul.f32 %v2005, %v1733
    %v2122 = vmul.f32 %v2005, %v1734
    %v2123 = vmul.f32 %v2005, %v1735
    %v2124 = vmul.f32 %v2005, %v1736
    %v2125 = vmul.f32 %v2005, %v1737
    %v2126 = vmul.f32 %v2005, %v1738
    %v2127 = vmul.f32 %v2005, %v1739
    %v2128 = vmul.f32 %v2005, %v1740
    %v2129 = vmul.f32 %v2005, %v1741
    %v2130 = vmul.f32 %v2005, %v1742
    %v2131 = vmul.f32 %v2005, %v1743
    %v2132 = vmul.f32 %v2005, %v1744
    %v2133 = vmul.f32 %v2005, %v1745
    %v2134 = vmul.f32 %v2005, %v1746
    %v2135 = vadd.f32 %v1491, %v2007
    %v2136 = vadd.f32 %v1492, %v2008
    %v2137 = vadd.f32 %v1493, %v2009
    %v2138 = vadd.f32 %v1494, %v2010
    %v2139 = vadd.f32 %v1495, %v2011
    %v2140 = vadd.f32 %v1496, %v2012
    %v2141 = vadd.f32 %v1497, %v2013
    %v2142 = vadd.f32 %v1498, %v2014
    %v2143 = vadd.f32 %v1499, %v2015
    %v2144 = vadd.f32 %v1500, %v2016
    %v2145 = vadd.f32 %v1501, %v2017
    %v2146 = vadd.f32 %v1502, %v2018
    %v2147 = vadd.f32 %v1503, %v2019
    %v2148 = vadd.f32 %v1504, %v2020
    %v2149 = vadd.f32 %v1505, %v2021
    %v2150 = vadd.f32 %v1506, %v2022
    %v2151 = vadd.f32 %v1507, %v2023
    %v2152 = vadd.f32 %v1508, %v2024
    %v2153 = vadd.f32 %v1509, %v2025
    %v2154 = vadd.f32 %v1510, %v2026
    %v2155 = vadd.f32 %v1511, %v2027
    %v2156 = vadd.f32 %v1512, %v2028
    %v2157 = vadd.f32 %v1513, %v2029
    %v2158 = vadd.f32 %v1514, %v2030
    %v2159 = vadd.f32 %v1515, %v2031
    %v2160 = vadd.f32 %v1516, %v2032
    %v2161 = vadd.f32 %v1517, %v2033
    %v2162 = vadd.f32 %v1518, %v2034
    %v2163 = vadd.f32 %v1519, %v2035
    %v2164 = vadd.f32 %v1520, %v2036
    %v2165 = vadd.f32 %v1521, %v2037
    %v2166 = vadd.f32 %v1522, %v2038
    %v2167 = vadd.f32 %v1523, %v2039
    %v2168 = vadd.f32 %v1524, %v2040
    %v2169 = vadd.f32 %v1525, %v2041
    %v2170 = vadd.f32 %v1526, %v2042
    %v2171 = vadd.f32 %v1527, %v2043
    %v2172 = vadd.f32 %v1528, %v2044
    %v2173 = vadd.f32 %v1529, %v2045
    %v2174 = vadd.f32 %v1530, %v2046
    %v2175 = vadd.f32 %v1531, %v2047
    %v2176 = vadd.f32 %v1532, %v2048
    %v2177 = vadd.f32 %v1533, %v2049
    %v2178 = vadd.f32 %v1534, %v2050
    %v2179 = vadd.f32 %v1535, %v2051
    %v2180 = vadd.f32 %v1536, %v2052
    %v2181 = vadd.f32 %v1537, %v2053
    %v2182 = vadd.f32 %v1538, %v2054
    %v2183 = vadd.f32 %v1539, %v2055
    %v2184 = vadd.f32 %v1540, %v2056
    %v2185 = vadd.f32 %v1541, %v2057
    %v2186 = vadd.f32 %v1542, %v2058
    %v2187 = vadd.f32 %v1543, %v2059
    %v2188 = vadd.f32 %v1544, %v2060
    %v2189 = vadd.f32 %v1545, %v2061
    %v2190 = vadd.f32 %v1546, %v2062
    %v2191 = vadd.f32 %v1547, %v2063
    %v2192 = vadd.f32 %v1548, %v2064
    %v2193 = vadd.f32 %v1549, %v2065
    %v2194 = vadd.f32 %v1550, %v2066
    %v2195 = vadd.f32 %v1551, %v2067
    %v2196 = vadd.f32 %v1552, %v2068
    %v2197 = vadd.f32 %v1553, %v2069
    %v2198 = vadd.f32 %v1554, %v2070
    %v2199 = vadd.f32 %v1555, %v2071
    %v2200 = vadd.f32 %v1556, %v2072
    %v2201 = vadd.f32 %v1557, %v2073
    %v2202 = vadd.f32 %v1558, %v2074
    %v2203 = vadd.f32 %v1559, %v2075
    %v2204 = vadd.f32 %v1560, %v2076
    %v2205 = vadd.f32 %v1561, %v2077
    %v2206 = vadd.f32 %v1562, %v2078
    %v2207 = vadd.f32 %v1563, %v2079
    %v2208 = vadd.f32 %v1564, %v2080
    %v2209 = vadd.f32 %v1565, %v2081
    %v2210 = vadd.f32 %v1566, %v2082
    %v2211 = vadd.f32 %v1567, %v2083
    %v2212 = vadd.f32 %v1568, %v2084
    %v2213 = vadd.f32 %v1569, %v2085
    %v2214 = vadd.f32 %v1570, %v2086
    %v2215 = vadd.f32 %v1571, %v2087
    %v2216 = vadd.f32 %v1572, %v2088
    %v2217 = vadd.f32 %v1573, %v2089
    %v2218 = vadd.f32 %v1574, %v2090
    %v2219 = vadd.f32 %v1575, %v2091
    %v2220 = vadd.f32 %v1576, %v2092
    %v2221 = vadd.f32 %v1577, %v2093
    %v2222 = vadd.f32 %v1578, %v2094
    %v2223 = vadd.f32 %v1579, %v2095
    %v2224 = vadd.f32 %v1580, %v2096
    %v2225 = vadd.f32 %v1581, %v2097
    %v2226 = vadd.f32 %v1582, %v2098
    %v2227 = vadd.f32 %v1583, %v2099
    %v2228 = vadd.f32 %v1584, %v2100
    %v2229 = vadd.f32 %v1585, %v2101
    %v2230 = vadd.f32 %v1586, %v2102
    %v2231 = vadd.f32 %v1587, %v2103
    %v2232 = vadd.f32 %v1588, %v2104
    %v2233 = vadd.f32 %v1589, %v2105
    %v2234 = vadd.f32 %v1590, %v2106
    %v2235 = vadd.f32 %v1591, %v2107
    %v2236 = vadd.f32 %v1592, %v2108
    %v2237 = vadd.f32 %v1593, %v2109
    %v2238 = vadd.f32 %v1594, %v2110
    %v2239 = vadd.f32 %v1595, %v2111
    %v2240 = vadd.f32 %v1596, %v2112
    %v2241 = vadd.f32 %v1597, %v2113
    %v2242 = vadd.f32 %v1598, %v2114
    %v2243 = vadd.f32 %v1599, %v2115
    %v2244 = vadd.f32 %v1600, %v2116
    %v2245 = vadd.f32 %v1601, %v2117
    %v2246 = vadd.f32 %v1602, %v2118
    %v2247 = vadd.f32 %v1603, %v2119
    %v2248 = vadd.f32 %v1604, %v2120
    %v2249 = vadd.f32 %v1605, %v2121
    %v2250 = vadd.f32 %v1606, %v2122
    %v2251 = vadd.f32 %v1607, %v2123
    %v2252 = vadd.f32 %v1608, %v2124
    %v2253 = vadd.f32 %v1609, %v2125
    %v2254 = vadd.f32 %v1610, %v2126
    %v2255 = vadd.f32 %v1611, %v2127
    %v2256 = vadd.f32 %v1612, %v2128
    %v2257 = vadd.f32 %v1613, %v2129
    %v2258 = vadd.f32 %v1614, %v2130
    %v2259 = vadd.f32 %v1615, %v2131
    %v2260 = vadd.f32 %v1616, %v2132
    %v2261 = vadd.f32 %v1617, %v2133
    %v2262 = vadd.f32 %v1618, %v2134
    %2263 = vrot.lane.b32.xlu0 %v1487, 127
    %v2264 = vpop.permute.xlu0 %2263
    %s2265 = vtos %v2264
    %v2266 = vstv %s2265
    %v2268 = vmul.f32 %v2266, %v1747
    %v2269 = vmul.f32 %v2266, %v1748
    %v2270 = vmul.f32 %v2266, %v1749
    %v2271 = vmul.f32 %v2266, %v1750
    %v2272 = vmul.f32 %v2266, %v1751
    %v2273 = vmul.f32 %v2266, %v1752
    %v2274 = vmul.f32 %v2266, %v1753
    %v2275 = vmul.f32 %v2266, %v1754
    %v2276 = vmul.f32 %v2266, %v1755
    %v2277 = vmul.f32 %v2266, %v1756
    %v2278 = vmul.f32 %v2266, %v1757
    %v2279 = vmul.f32 %v2266, %v1758
    %v2280 = vmul.f32 %v2266, %v1759
    %v2281 = vmul.f32 %v2266, %v1760
    %v2282 = vmul.f32 %v2266, %v1761
    %v2283 = vmul.f32 %v2266, %v1762
    %v2284 = vmul.f32 %v2266, %v1763
    %v2285 = vmul.f32 %v2266, %v1764
    %v2286 = vmul.f32 %v2266, %v1765
    %v2287 = vmul.f32 %v2266, %v1766
    %v2288 = vmul.f32 %v2266, %v1767
    %v2289 = vmul.f32 %v2266, %v1768
    %v2290 = vmul.f32 %v2266, %v1769
    %v2291 = vmul.f32 %v2266, %v1770
    %v2292 = vmul.f32 %v2266, %v1771
    %v2293 = vmul.f32 %v2266, %v1772
    %v2294 = vmul.f32 %v2266, %v1773
    %v2295 = vmul.f32 %v2266, %v1774
    %v2296 = vmul.f32 %v2266, %v1775
    %v2297 = vmul.f32 %v2266, %v1776
    %v2298 = vmul.f32 %v2266, %v1777
    %v2299 = vmul.f32 %v2266, %v1778
    %v2300 = vmul.f32 %v2266, %v1779
    %v2301 = vmul.f32 %v2266, %v1780
    %v2302 = vmul.f32 %v2266, %v1781
    %v2303 = vmul.f32 %v2266, %v1782
    %v2304 = vmul.f32 %v2266, %v1783
    %v2305 = vmul.f32 %v2266, %v1784
    %v2306 = vmul.f32 %v2266, %v1785
    %v2307 = vmul.f32 %v2266, %v1786
    %v2308 = vmul.f32 %v2266, %v1787
    %v2309 = vmul.f32 %v2266, %v1788
    %v2310 = vmul.f32 %v2266, %v1789
    %v2311 = vmul.f32 %v2266, %v1790
    %v2312 = vmul.f32 %v2266, %v1791
    %v2313 = vmul.f32 %v2266, %v1792
    %v2314 = vmul.f32 %v2266, %v1793
    %v2315 = vmul.f32 %v2266, %v1794
    %v2316 = vmul.f32 %v2266, %v1795
    %v2317 = vmul.f32 %v2266, %v1796
    %v2318 = vmul.f32 %v2266, %v1797
    %v2319 = vmul.f32 %v2266, %v1798
    %v2320 = vmul.f32 %v2266, %v1799
    %v2321 = vmul.f32 %v2266, %v1800
    %v2322 = vmul.f32 %v2266, %v1801
    %v2323 = vmul.f32 %v2266, %v1802
    %v2324 = vmul.f32 %v2266, %v1803
    %v2325 = vmul.f32 %v2266, %v1804
    %v2326 = vmul.f32 %v2266, %v1805
    %v2327 = vmul.f32 %v2266, %v1806
    %v2328 = vmul.f32 %v2266, %v1807
    %v2329 = vmul.f32 %v2266, %v1808
    %v2330 = vmul.f32 %v2266, %v1809
    %v2331 = vmul.f32 %v2266, %v1810
    %v2332 = vmul.f32 %v2266, %v1811
    %v2333 = vmul.f32 %v2266, %v1812
    %v2334 = vmul.f32 %v2266, %v1813
    %v2335 = vmul.f32 %v2266, %v1814
    %v2336 = vmul.f32 %v2266, %v1815
    %v2337 = vmul.f32 %v2266, %v1816
    %v2338 = vmul.f32 %v2266, %v1817
    %v2339 = vmul.f32 %v2266, %v1818
    %v2340 = vmul.f32 %v2266, %v1819
    %v2341 = vmul.f32 %v2266, %v1820
    %v2342 = vmul.f32 %v2266, %v1821
    %v2343 = vmul.f32 %v2266, %v1822
    %v2344 = vmul.f32 %v2266, %v1823
    %v2345 = vmul.f32 %v2266, %v1824
    %v2346 = vmul.f32 %v2266, %v1825
    %v2347 = vmul.f32 %v2266, %v1826
    %v2348 = vmul.f32 %v2266, %v1827
    %v2349 = vmul.f32 %v2266, %v1828
    %v2350 = vmul.f32 %v2266, %v1829
    %v2351 = vmul.f32 %v2266, %v1830
    %v2352 = vmul.f32 %v2266, %v1831
    %v2353 = vmul.f32 %v2266, %v1832
    %v2354 = vmul.f32 %v2266, %v1833
    %v2355 = vmul.f32 %v2266, %v1834
    %v2356 = vmul.f32 %v2266, %v1835
    %v2357 = vmul.f32 %v2266, %v1836
    %v2358 = vmul.f32 %v2266, %v1837
    %v2359 = vmul.f32 %v2266, %v1838
    %v2360 = vmul.f32 %v2266, %v1839
    %v2361 = vmul.f32 %v2266, %v1840
    %v2362 = vmul.f32 %v2266, %v1841
    %v2363 = vmul.f32 %v2266, %v1842
    %v2364 = vmul.f32 %v2266, %v1843
    %v2365 = vmul.f32 %v2266, %v1844
    %v2366 = vmul.f32 %v2266, %v1845
    %v2367 = vmul.f32 %v2266, %v1846
    %v2368 = vmul.f32 %v2266, %v1847
    %v2369 = vmul.f32 %v2266, %v1848
    %v2370 = vmul.f32 %v2266, %v1849
    %v2371 = vmul.f32 %v2266, %v1850
    %v2372 = vmul.f32 %v2266, %v1851
    %v2373 = vmul.f32 %v2266, %v1852
    %v2374 = vmul.f32 %v2266, %v1853
    %v2375 = vmul.f32 %v2266, %v1854
    %v2376 = vmul.f32 %v2266, %v1855
    %v2377 = vmul.f32 %v2266, %v1856
    %v2378 = vmul.f32 %v2266, %v1857
    %v2379 = vmul.f32 %v2266, %v1858
    %v2380 = vmul.f32 %v2266, %v1859
    %v2381 = vmul.f32 %v2266, %v1860
    %v2382 = vmul.f32 %v2266, %v1861
    %v2383 = vmul.f32 %v2266, %v1862
    %v2384 = vmul.f32 %v2266, %v1863
    %v2385 = vmul.f32 %v2266, %v1864
    %v2386 = vmul.f32 %v2266, %v1865
    %v2387 = vmul.f32 %v2266, %v1866
    %v2388 = vmul.f32 %v2266, %v1867
    %v2389 = vmul.f32 %v2266, %v1868
    %v2390 = vmul.f32 %v2266, %v1869
    %v2391 = vmul.f32 %v2266, %v1870
    %v2392 = vmul.f32 %v2266, %v1871
    %v2393 = vmul.f32 %v2266, %v1872
    %v2394 = vmul.f32 %v2266, %v1873
    %v2395 = vmul.f32 %v2266, %v1874
    %v2396 = vadd.f32 %v2135, %v2268
    %v2397 = vadd.f32 %v2136, %v2269
    %v2398 = vadd.f32 %v2137, %v2270
    %v2399 = vadd.f32 %v2138, %v2271
    %v2400 = vadd.f32 %v2139, %v2272
    %v2401 = vadd.f32 %v2140, %v2273
    %v2402 = vadd.f32 %v2141, %v2274
    %v2403 = vadd.f32 %v2142, %v2275
    %v2404 = vadd.f32 %v2143, %v2276
    %v2405 = vadd.f32 %v2144, %v2277
    %v2406 = vadd.f32 %v2145, %v2278
    %v2407 = vadd.f32 %v2146, %v2279
    %v2408 = vadd.f32 %v2147, %v2280
    %v2409 = vadd.f32 %v2148, %v2281
    %v2410 = vadd.f32 %v2149, %v2282
    %v2411 = vadd.f32 %v2150, %v2283
    %v2412 = vadd.f32 %v2151, %v2284
    %v2413 = vadd.f32 %v2152, %v2285
    %v2414 = vadd.f32 %v2153, %v2286
    %v2415 = vadd.f32 %v2154, %v2287
    %v2416 = vadd.f32 %v2155, %v2288
    %v2417 = vadd.f32 %v2156, %v2289
    %v2418 = vadd.f32 %v2157, %v2290
    %v2419 = vadd.f32 %v2158, %v2291
    %v2420 = vadd.f32 %v2159, %v2292
    %v2421 = vadd.f32 %v2160, %v2293
    %v2422 = vadd.f32 %v2161, %v2294
    %v2423 = vadd.f32 %v2162, %v2295
    %v2424 = vadd.f32 %v2163, %v2296
    %v2425 = vadd.f32 %v2164, %v2297
    %v2426 = vadd.f32 %v2165, %v2298
    %v2427 = vadd.f32 %v2166, %v2299
    %v2428 = vadd.f32 %v2167, %v2300
    %v2429 = vadd.f32 %v2168, %v2301
    %v2430 = vadd.f32 %v2169, %v2302
    %v2431 = vadd.f32 %v2170, %v2303
    %v2432 = vadd.f32 %v2171, %v2304
    %v2433 = vadd.f32 %v2172, %v2305
    %v2434 = vadd.f32 %v2173, %v2306
    %v2435 = vadd.f32 %v2174, %v2307
    %v2436 = vadd.f32 %v2175, %v2308
    %v2437 = vadd.f32 %v2176, %v2309
    %v2438 = vadd.f32 %v2177, %v2310
    %v2439 = vadd.f32 %v2178, %v2311
    %v2440 = vadd.f32 %v2179, %v2312
    %v2441 = vadd.f32 %v2180, %v2313
    %v2442 = vadd.f32 %v2181, %v2314
    %v2443 = vadd.f32 %v2182, %v2315
    %v2444 = vadd.f32 %v2183, %v2316
    %v2445 = vadd.f32 %v2184, %v2317
    %v2446 = vadd.f32 %v2185, %v2318
    %v2447 = vadd.f32 %v2186, %v2319
    %v2448 = vadd.f32 %v2187, %v2320
    %v2449 = vadd.f32 %v2188, %v2321
    %v2450 = vadd.f32 %v2189, %v2322
    %v2451 = vadd.f32 %v2190, %v2323
    %v2452 = vadd.f32 %v2191, %v2324
    %v2453 = vadd.f32 %v2192, %v2325
    %v2454 = vadd.f32 %v2193, %v2326
    %v2455 = vadd.f32 %v2194, %v2327
    %v2456 = vadd.f32 %v2195, %v2328
    %v2457 = vadd.f32 %v2196, %v2329
    %v2458 = vadd.f32 %v2197, %v2330
    %v2459 = vadd.f32 %v2198, %v2331
    %v2460 = vadd.f32 %v2199, %v2332
    %v2461 = vadd.f32 %v2200, %v2333
    %v2462 = vadd.f32 %v2201, %v2334
    %v2463 = vadd.f32 %v2202, %v2335
    %v2464 = vadd.f32 %v2203, %v2336
    %v2465 = vadd.f32 %v2204, %v2337
    %v2466 = vadd.f32 %v2205, %v2338
    %v2467 = vadd.f32 %v2206, %v2339
    %v2468 = vadd.f32 %v2207, %v2340
    %v2469 = vadd.f32 %v2208, %v2341
    %v2470 = vadd.f32 %v2209, %v2342
    %v2471 = vadd.f32 %v2210, %v2343
    %v2472 = vadd.f32 %v2211, %v2344
    %v2473 = vadd.f32 %v2212, %v2345
    %v2474 = vadd.f32 %v2213, %v2346
    %v2475 = vadd.f32 %v2214, %v2347
    %v2476 = vadd.f32 %v2215, %v2348
    %v2477 = vadd.f32 %v2216, %v2349
    %v2478 = vadd.f32 %v2217, %v2350
    %v2479 = vadd.f32 %v2218, %v2351
    %v2480 = vadd.f32 %v2219, %v2352
    %v2481 = vadd.f32 %v2220, %v2353
    %v2482 = vadd.f32 %v2221, %v2354
    %v2483 = vadd.f32 %v2222, %v2355
    %v2484 = vadd.f32 %v2223, %v2356
    %v2485 = vadd.f32 %v2224, %v2357
    %v2486 = vadd.f32 %v2225, %v2358
    %v2487 = vadd.f32 %v2226, %v2359
    %v2488 = vadd.f32 %v2227, %v2360
    %v2489 = vadd.f32 %v2228, %v2361
    %v2490 = vadd.f32 %v2229, %v2362
    %v2491 = vadd.f32 %v2230, %v2363
    %v2492 = vadd.f32 %v2231, %v2364
    %v2493 = vadd.f32 %v2232, %v2365
    %v2494 = vadd.f32 %v2233, %v2366
    %v2495 = vadd.f32 %v2234, %v2367
    %v2496 = vadd.f32 %v2235, %v2368
    %v2497 = vadd.f32 %v2236, %v2369
    %v2498 = vadd.f32 %v2237, %v2370
    %v2499 = vadd.f32 %v2238, %v2371
    %v2500 = vadd.f32 %v2239, %v2372
    %v2501 = vadd.f32 %v2240, %v2373
    %v2502 = vadd.f32 %v2241, %v2374
    %v2503 = vadd.f32 %v2242, %v2375
    %v2504 = vadd.f32 %v2243, %v2376
    %v2505 = vadd.f32 %v2244, %v2377
    %v2506 = vadd.f32 %v2245, %v2378
    %v2507 = vadd.f32 %v2246, %v2379
    %v2508 = vadd.f32 %v2247, %v2380
    %v2509 = vadd.f32 %v2248, %v2381
    %v2510 = vadd.f32 %v2249, %v2382
    %v2511 = vadd.f32 %v2250, %v2383
    %v2512 = vadd.f32 %v2251, %v2384
    %v2513 = vadd.f32 %v2252, %v2385
    %v2514 = vadd.f32 %v2253, %v2386
    %v2515 = vadd.f32 %v2254, %v2387
    %v2516 = vadd.f32 %v2255, %v2388
    %v2517 = vadd.f32 %v2256, %v2389
    %v2518 = vadd.f32 %v2257, %v2390
    %v2519 = vadd.f32 %v2258, %v2391
    %v2520 = vadd.f32 %v2259, %v2392
    %v2521 = vadd.f32 %v2260, %v2393
    %v2522 = vadd.f32 %v2261, %v2394
    %v2523 = vadd.f32 %v2262, %v2395
    %2524 = vrot.lane.b32.xlu0 %v1487, 126
    %v2525 = vpop.permute.xlu0 %2524
    %s2526 = vtos %v2525
    %v2527 = vstv %s2526
    %v2529 = vmul.f32 %v2527, %v1875
    %v2530 = vmul.f32 %v2527, %v1876
    %v2531 = vmul.f32 %v2527, %v1877
    %v2532 = vmul.f32 %v2527, %v1878
    %v2533 = vmul.f32 %v2527, %v1879
    %v2534 = vmul.f32 %v2527, %v1880
    %v2535 = vmul.f32 %v2527, %v1881
    %v2536 = vmul.f32 %v2527, %v1882
    %v2537 = vmul.f32 %v2527, %v1883
    %v2538 = vmul.f32 %v2527, %v1884
    %v2539 = vmul.f32 %v2527, %v1885
    %v2540 = vmul.f32 %v2527, %v1886
    %v2541 = vmul.f32 %v2527, %v1887
    %v2542 = vmul.f32 %v2527, %v1888
    %v2543 = vmul.f32 %v2527, %v1889
    %v2544 = vmul.f32 %v2527, %v1890
    %v2545 = vmul.f32 %v2527, %v1891
    %v2546 = vmul.f32 %v2527, %v1892
    %v2547 = vmul.f32 %v2527, %v1893
    %v2548 = vmul.f32 %v2527, %v1894
    %v2549 = vmul.f32 %v2527, %v1895
    %v2550 = vmul.f32 %v2527, %v1896
    %v2551 = vmul.f32 %v2527, %v1897
    %v2552 = vmul.f32 %v2527, %v1898
    %v2553 = vmul.f32 %v2527, %v1899
    %v2554 = vmul.f32 %v2527, %v1900
    %v2555 = vmul.f32 %v2527, %v1901
    %v2556 = vmul.f32 %v2527, %v1902
    %v2557 = vmul.f32 %v2527, %v1903
    %v2558 = vmul.f32 %v2527, %v1904
    %v2559 = vmul.f32 %v2527, %v1905
    %v2560 = vmul.f32 %v2527, %v1906
    %v2561 = vmul.f32 %v2527, %v1907
    %v2562 = vmul.f32 %v2527, %v1908
    %v2563 = vmul.f32 %v2527, %v1909
    %v2564 = vmul.f32 %v2527, %v1910
    %v2565 = vmul.f32 %v2527, %v1911
    %v2566 = vmul.f32 %v2527, %v1912
    %v2567 = vmul.f32 %v2527, %v1913
    %v2568 = vmul.f32 %v2527, %v1914
    %v2569 = vmul.f32 %v2527, %v1915
    %v2570 = vmul.f32 %v2527, %v1916
    %v2571 = vmul.f32 %v2527, %v1917
    %v2572 = vmul.f32 %v2527, %v1918
    %v2573 = vmul.f32 %v2527, %v1919
    %v2574 = vmul.f32 %v2527, %v1920
    %v2575 = vmul.f32 %v2527, %v1921
    %v2576 = vmul.f32 %v2527, %v1922
    %v2577 = vmul.f32 %v2527, %v1923
    %v2578 = vmul.f32 %v2527, %v1924
    %v2579 = vmul.f32 %v2527, %v1925
    %v2580 = vmul.f32 %v2527, %v1926
    %v2581 = vmul.f32 %v2527, %v1927
    %v2582 = vmul.f32 %v2527, %v1928
    %v2583 = vmul.f32 %v2527, %v1929
    %v2584 = vmul.f32 %v2527, %v1930
    %v2585 = vmul.f32 %v2527, %v1931
    %v2586 = vmul.f32 %v2527, %v1932
    %v2587 = vmul.f32 %v2527, %v1933
    %v2588 = vmul.f32 %v2527, %v1934
    %v2589 = vmul.f32 %v2527, %v1935
    %v2590 = vmul.f32 %v2527, %v1936
    %v2591 = vmul.f32 %v2527, %v1937
    %v2592 = vmul.f32 %v2527, %v1938
    %v2593 = vmul.f32 %v2527, %v1939
    %v2594 = vmul.f32 %v2527, %v1940
    %v2595 = vmul.f32 %v2527, %v1941
    %v2596 = vmul.f32 %v2527, %v1942
    %v2597 = vmul.f32 %v2527, %v1943
    %v2598 = vmul.f32 %v2527, %v1944
    %v2599 = vmul.f32 %v2527, %v1945
    %v2600 = vmul.f32 %v2527, %v1946
    %v2601 = vmul.f32 %v2527, %v1947
    %v2602 = vmul.f32 %v2527, %v1948
    %v2603 = vmul.f32 %v2527, %v1949
    %v2604 = vmul.f32 %v2527, %v1950
    %v2605 = vmul.f32 %v2527, %v1951
    %v2606 = vmul.f32 %v2527, %v1952
    %v2607 = vmul.f32 %v2527, %v1953
    %v2608 = vmul.f32 %v2527, %v1954
    %v2609 = vmul.f32 %v2527, %v1955
    %v2610 = vmul.f32 %v2527, %v1956
    %v2611 = vmul.f32 %v2527, %v1957
    %v2612 = vmul.f32 %v2527, %v1958
    %v2613 = vmul.f32 %v2527, %v1959
    %v2614 = vmul.f32 %v2527, %v1960
    %v2615 = vmul.f32 %v2527, %v1961
    %v2616 = vmul.f32 %v2527, %v1962
    %v2617 = vmul.f32 %v2527, %v1963
    %v2618 = vmul.f32 %v2527, %v1964
    %v2619 = vmul.f32 %v2527, %v1965
    %v2620 = vmul.f32 %v2527, %v1966
    %v2621 = vmul.f32 %v2527, %v1967
    %v2622 = vmul.f32 %v2527, %v1968
    %v2623 = vmul.f32 %v2527, %v1969
    %v2624 = vmul.f32 %v2527, %v1970
    %v2625 = vmul.f32 %v2527, %v1971
    %v2626 = vmul.f32 %v2527, %v1972
    %v2627 = vmul.f32 %v2527, %v1973
    %v2628 = vmul.f32 %v2527, %v1974
    %v2629 = vmul.f32 %v2527, %v1975
    %v2630 = vmul.f32 %v2527, %v1976
    %v2631 = vmul.f32 %v2527, %v1977
    %v2632 = vmul.f32 %v2527, %v1978
    %v2633 = vmul.f32 %v2527, %v1979
    %v2634 = vmul.f32 %v2527, %v1980
    %v2635 = vmul.f32 %v2527, %v1981
    %v2636 = vmul.f32 %v2527, %v1982
    %v2637 = vmul.f32 %v2527, %v1983
    %v2638 = vmul.f32 %v2527, %v1984
    %v2639 = vmul.f32 %v2527, %v1985
    %v2640 = vmul.f32 %v2527, %v1986
    %v2641 = vmul.f32 %v2527, %v1987
    %v2642 = vmul.f32 %v2527, %v1988
    %v2643 = vmul.f32 %v2527, %v1989
    %v2644 = vmul.f32 %v2527, %v1990
    %v2645 = vmul.f32 %v2527, %v1991
    %v2646 = vmul.f32 %v2527, %v1992
    %v2647 = vmul.f32 %v2527, %v1993
    %v2648 = vmul.f32 %v2527, %v1994
    %v2649 = vmul.f32 %v2527, %v1995
    %v2650 = vmul.f32 %v2527, %v1996
    %v2651 = vmul.f32 %v2527, %v1997
    %v2652 = vmul.f32 %v2527, %v1998
    %v2653 = vmul.f32 %v2527, %v1999
    %v2654 = vmul.f32 %v2527, %v2000
    %v2655 = vmul.f32 %v2527, %v2001
    %v2656 = vmul.f32 %v2527, %v2002
    %v2657 = vadd.f32 %v2396, %v2529
    %v2658 = vadd.f32 %v2397, %v2530
    %v2659 = vadd.f32 %v2398, %v2531
    %v2660 = vadd.f32 %v2399, %v2532
    %v2661 = vadd.f32 %v2400, %v2533
    %v2662 = vadd.f32 %v2401, %v2534
    %v2663 = vadd.f32 %v2402, %v2535
    %v2664 = vadd.f32 %v2403, %v2536
    %v2665 = vadd.f32 %v2404, %v2537
    %v2666 = vadd.f32 %v2405, %v2538
    %v2667 = vadd.f32 %v2406, %v2539
    %v2668 = vadd.f32 %v2407, %v2540
    %v2669 = vadd.f32 %v2408, %v2541
    %v2670 = vadd.f32 %v2409, %v2542
    %v2671 = vadd.f32 %v2410, %v2543
    %v2672 = vadd.f32 %v2411, %v2544
    %v2673 = vadd.f32 %v2412, %v2545
    %v2674 = vadd.f32 %v2413, %v2546
    %v2675 = vadd.f32 %v2414, %v2547
    %v2676 = vadd.f32 %v2415, %v2548
    %v2677 = vadd.f32 %v2416, %v2549
    %v2678 = vadd.f32 %v2417, %v2550
    %v2679 = vadd.f32 %v2418, %v2551
    %v2680 = vadd.f32 %v2419, %v2552
    %v2681 = vadd.f32 %v2420, %v2553
    %v2682 = vadd.f32 %v2421, %v2554
    %v2683 = vadd.f32 %v2422, %v2555
    %v2684 = vadd.f32 %v2423, %v2556
    %v2685 = vadd.f32 %v2424, %v2557
    %v2686 = vadd.f32 %v2425, %v2558
    %v2687 = vadd.f32 %v2426, %v2559
    %v2688 = vadd.f32 %v2427, %v2560
    %v2689 = vadd.f32 %v2428, %v2561
    %v2690 = vadd.f32 %v2429, %v2562
    %v2691 = vadd.f32 %v2430, %v2563
    %v2692 = vadd.f32 %v2431, %v2564
    %v2693 = vadd.f32 %v2432, %v2565
    %v2694 = vadd.f32 %v2433, %v2566
    %v2695 = vadd.f32 %v2434, %v2567
    %v2696 = vadd.f32 %v2435, %v2568
    %v2697 = vadd.f32 %v2436, %v2569
    %v2698 = vadd.f32 %v2437, %v2570
    %v2699 = vadd.f32 %v2438, %v2571
    %v2700 = vadd.f32 %v2439, %v2572
    %v2701 = vadd.f32 %v2440, %v2573
    %v2702 = vadd.f32 %v2441, %v2574
    %v2703 = vadd.f32 %v2442, %v2575
    %v2704 = vadd.f32 %v2443, %v2576
    %v2705 = vadd.f32 %v2444, %v2577
    %v2706 = vadd.f32 %v2445, %v2578
    %v2707 = vadd.f32 %v2446, %v2579
    %v2708 = vadd.f32 %v2447, %v2580
    %v2709 = vadd.f32 %v2448, %v2581
    %v2710 = vadd.f32 %v2449, %v2582
    %v2711 = vadd.f32 %v2450, %v2583
    %v2712 = vadd.f32 %v2451, %v2584
    %v2713 = vadd.f32 %v2452, %v2585
    %v2714 = vadd.f32 %v2453, %v2586
    %v2715 = vadd.f32 %v2454, %v2587
    %v2716 = vadd.f32 %v2455, %v2588
    %v2717 = vadd.f32 %v2456, %v2589
    %v2718 = vadd.f32 %v2457, %v2590
    %v2719 = vadd.f32 %v2458, %v2591
    %v2720 = vadd.f32 %v2459, %v2592
    %v2721 = vadd.f32 %v2460, %v2593
    %v2722 = vadd.f32 %v2461, %v2594
    %v2723 = vadd.f32 %v2462, %v2595
    %v2724 = vadd.f32 %v2463, %v2596
    %v2725 = vadd.f32 %v2464, %v2597
    %v2726 = vadd.f32 %v2465, %v2598
    %v2727 = vadd.f32 %v2466, %v2599
    %v2728 = vadd.f32 %v2467, %v2600
    %v2729 = vadd.f32 %v2468, %v2601
    %v2730 = vadd.f32 %v2469, %v2602
    %v2731 = vadd.f32 %v2470, %v2603
    %v2732 = vadd.f32 %v2471, %v2604
    %v2733 = vadd.f32 %v2472, %v2605
    %v2734 = vadd.f32 %v2473, %v2606
    %v2735 = vadd.f32 %v2474, %v2607
    %v2736 = vadd.f32 %v2475, %v2608
    %v2737 = vadd.f32 %v2476, %v2609
    %v2738 = vadd.f32 %v2477, %v2610
    %v2739 = vadd.f32 %v2478, %v2611
    %v2740 = vadd.f32 %v2479, %v2612
    %v2741 = vadd.f32 %v2480, %v2613
    %v2742 = vadd.f32 %v2481, %v2614
    %v2743 = vadd.f32 %v2482, %v2615
    %v2744 = vadd.f32 %v2483, %v2616
    %v2745 = vadd.f32 %v2484, %v2617
    %v2746 = vadd.f32 %v2485, %v2618
    %v2747 = vadd.f32 %v2486, %v2619
    %v2748 = vadd.f32 %v2487, %v2620
    %v2749 = vadd.f32 %v2488, %v2621
    %v2750 = vadd.f32 %v2489, %v2622
    %v2751 = vadd.f32 %v2490, %v2623
    %v2752 = vadd.f32 %v2491, %v2624
    %v2753 = vadd.f32 %v2492, %v2625
    %v2754 = vadd.f32 %v2493, %v2626
    %v2755 = vadd.f32 %v2494, %v2627
    %v2756 = vadd.f32 %v2495, %v2628
    %v2757 = vadd.f32 %v2496, %v2629
    %v2758 = vadd.f32 %v2497, %v2630
    %v2759 = vadd.f32 %v2498, %v2631
    %v2760 = vadd.f32 %v2499, %v2632
    %v2761 = vadd.f32 %v2500, %v2633
    %v2762 = vadd.f32 %v2501, %v2634
    %v2763 = vadd.f32 %v2502, %v2635
    %v2764 = vadd.f32 %v2503, %v2636
    %v2765 = vadd.f32 %v2504, %v2637
    %v2766 = vadd.f32 %v2505, %v2638
    %v2767 = vadd.f32 %v2506, %v2639
    %v2768 = vadd.f32 %v2507, %v2640
    %v2769 = vadd.f32 %v2508, %v2641
    %v2770 = vadd.f32 %v2509, %v2642
    %v2771 = vadd.f32 %v2510, %v2643
    %v2772 = vadd.f32 %v2511, %v2644
    %v2773 = vadd.f32 %v2512, %v2645
    %v2774 = vadd.f32 %v2513, %v2646
    %v2775 = vadd.f32 %v2514, %v2647
    %v2776 = vadd.f32 %v2515, %v2648
    %v2777 = vadd.f32 %v2516, %v2649
    %v2778 = vadd.f32 %v2517, %v2650
    %v2779 = vadd.f32 %v2518, %v2651
    %v2780 = vadd.f32 %v2519, %v2652
    %v2781 = vadd.f32 %v2520, %v2653
    %v2782 = vadd.f32 %v2521, %v2654
    %v2783 = vadd.f32 %v2522, %v2655
    %v2784 = vadd.f32 %v2523, %v2656
    %v2785 = vld [vmem:[%s9] sm:$0x1]
    %v2786 = vld [vmem:[%s9 + $0x1] sm:$0x1]
    %v2787 = vld [vmem:[%s9 + $0x2] sm:$0x1]
    %v2788 = vld [vmem:[%s9 + $0x3] sm:$0x1]
    %2790 = vset.pattern.permute.xlu0 0
    %2791 = vperm.xlu0 %2790, %v1488
    %v2792 = vpop.permute.xlu0 %2791
    %v2794 = vmul.f32 %v2792, %v2786
    %v2795 = vadd.f32 %v2785, %v2794
    %2796 = vset.pattern.permute.xlu0 1
    %2797 = vperm.xlu0 %2796, %v1488
    %v2798 = vpop.permute.xlu0 %2797
    %v2800 = vmul.f32 %v2798, %v2787
    %v2801 = vadd.f32 %v2795, %v2800
    %2802 = vset.pattern.permute.xlu0 2
    %2803 = vperm.xlu0 %2802, %v1488
    %v2804 = vpop.permute.xlu0 %2803
    %v2806 = vmul.f32 %v2804, %v2788
    %v2807 = vadd.f32 %v2801, %v2806
    %v2808 = vld [vmem:[%s10] sm:$0xff]
    %v2809 = vld [vmem:[%s10 + $0x8] sm:$0xff]
    %v2810 = vld [vmem:[%s10 + $0x10] sm:$0xff]
    %v2811 = vld [vmem:[%s10 + $0x18] sm:$0xff]
    %v2812 = vld [vmem:[%s10 + $0x20] sm:$0xff]
    %v2813 = vld [vmem:[%s10 + $0x28] sm:$0xff]
    %v2814 = vld [vmem:[%s10 + $0x30] sm:$0xff]
    %v2815 = vld [vmem:[%s10 + $0x38] sm:$0xff]
    %v2816 = vld [vmem:[%s10 + $0x40] sm:$0xff]
    %v2817 = vld [vmem:[%s10 + $0x48] sm:$0xff]
    %v2818 = vld [vmem:[%s10 + $0x50] sm:$0xff]
    %v2819 = vld [vmem:[%s10 + $0x58] sm:$0xff]
    %v2820 = vld [vmem:[%s10 + $0x60] sm:$0xff]
    %v2821 = vld [vmem:[%s10 + $0x68] sm:$0xff]
    %v2822 = vld [vmem:[%s10 + $0x70] sm:$0xff]
    %v2823 = vld [vmem:[%s10 + $0x78] sm:$0xff]
    %s2825 = vtos %v1489
    %v2826 = vstv %s2825
    %v2828 = vmul.f32 %v2826, %v2812
    %v2829 = vmul.f32 %v2826, %v2813
    %v2830 = vmul.f32 %v2826, %v2814
    %v2831 = vmul.f32 %v2826, %v2815
    %v2832 = vadd.f32 %v2808, %v2828
    %v2833 = vadd.f32 %v2809, %v2829
    %v2834 = vadd.f32 %v2810, %v2830
    %v2835 = vadd.f32 %v2811, %v2831
    %2836 = vrot.lane.b32.xlu0 %v1489, 127
    %v2837 = vpop.permute.xlu0 %2836
    %s2838 = vtos %v2837
    %v2839 = vstv %s2838
    %v2841 = vmul.f32 %v2839, %v2816
    %v2842 = vmul.f32 %v2839, %v2817
    %v2843 = vmul.f32 %v2839, %v2818
    %v2844 = vmul.f32 %v2839, %v2819
    %v2845 = vadd.f32 %v2832, %v2841
    %v2846 = vadd.f32 %v2833, %v2842
    %v2847 = vadd.f32 %v2834, %v2843
    %v2848 = vadd.f32 %v2835, %v2844
    %2849 = vrot.lane.b32.xlu0 %v1489, 126
    %v2850 = vpop.permute.xlu0 %2849
    %s2851 = vtos %v2850
    %v2852 = vstv %s2851
    %v2854 = vmul.f32 %v2852, %v2820
    %v2855 = vmul.f32 %v2852, %v2821
    %v2856 = vmul.f32 %v2852, %v2822
    %v2857 = vmul.f32 %v2852, %v2823
    %v2858 = vadd.f32 %v2845, %v2854
    %v2859 = vadd.f32 %v2846, %v2855
    %v2860 = vadd.f32 %v2847, %v2856
    %v2861 = vadd.f32 %v2848, %v2857
    %v2862 = vld [vmem:[%s11] sm:$0x1]
    %v2863 = vld [vmem:[%s11 + $0x1] sm:$0x1]
    %v2864 = vld [vmem:[%s11 + $0x2] sm:$0x1]
    %v2865 = vld [vmem:[%s11 + $0x3] sm:$0x1]
    %2867 = vset.pattern.permute.xlu0 0
    %2868 = vperm.xlu0 %2867, %v1490
    %v2869 = vpop.permute.xlu0 %2868
    %v2871 = vmul.f32 %v2869, %v2863
    %v2872 = vadd.f32 %v2862, %v2871
    %2873 = vset.pattern.permute.xlu0 1
    %2874 = vperm.xlu0 %2873, %v1490
    %v2875 = vpop.permute.xlu0 %2874
    %v2877 = vmul.f32 %v2875, %v2864
    %v2878 = vadd.f32 %v2872, %v2877
    %2879 = vset.pattern.permute.xlu0 2
    %2880 = vperm.xlu0 %2879, %v1490
    %v2881 = vpop.permute.xlu0 %2880
    %v2883 = vmul.f32 %v2881, %v2865
    %v2884 = vadd.f32 %v2878, %v2883
    %v2885 = vld [vmem:[%s7] sm:$0xff]
    %v2886 = vld [vmem:[%s7 + $0x8] sm:$0xff]
    %v2888 = vlaneseq
    %v2889 = vshrl.u32 %v2888, 7
    %v2890 = vsub.s32 0, %v2889
    %v2891 = vrot.slane %v2807, %v2890
    %v2895 = vcombine.high %v2885, %v2885
    %v2897 = vunpack.c.l.s4 1983009808
    %v2898 = vunpack.c.0.s8 %v2897
    %v2899 = vlaneseq
    %v2900 = vshrl.u32 %v2899, 7
    %v2901 = vsub.s32 %v2898, %v2900
    %v2902 = vrot.slane %v2885, %v2901
    %v2904 = vunpack.c.l.s4 1983009808
    %v2905 = vunpack.c.0.s8 %v2904
    %v2906 = vlaneseq
    %v2907 = vshrl.u32 %v2906, 7
    %v2908 = vsub.s32 %v2905, %v2907
    %v2909 = vrot.slane %v2895, %v2908
    %v2910 = vcombine.high %v2902, %v2902
    %v2911 = vcombine.high %v2909, %v2909
    %v2912 = vcombine.high %v2886, %v2886
    %v2914 = vunpack.c.l.s4 1983009808
    %v2915 = vunpack.c.0.s8 %v2914
    %v2916 = vlaneseq
    %v2917 = vshrl.u32 %v2916, 7
    %v2918 = vsub.s32 %v2915, %v2917
    %v2919 = vrot.slane %v2886, %v2918
    %v2921 = vunpack.c.l.s4 1983009808
    %v2922 = vunpack.c.0.s8 %v2921
    %v2923 = vlaneseq
    %v2924 = vshrl.u32 %v2923, 7
    %v2925 = vsub.s32 %v2922, %v2924
    %v2926 = vrot.slane %v2912, %v2925
    %v2927 = vcombine.high %v2919, %v2919
    %v2928 = vcombine.high %v2926, %v2926
    %2937 = vmatprep.subr.mxu0 0.0
    %2938 = vmatpush1.msra.mxu0 %v2657
    %2939 = vmatprep.subr.mxu0 0.0
    %2940 = vmatpush1.msra.mxu0 %v2658
    %2941 = vmatprep.subr.mxu0 0.0
    %2942 = vmatpush1.msra.mxu0 %v2659
    %2943 = vmatprep.subr.mxu0 0.0
    %2944 = vmatpush1.msra.mxu0 %v2660
    %2945 = vmatprep.subr.mxu0 0.0
    %2946 = vmatpush1.msra.mxu0 %v2661
    %2947 = vmatprep.subr.mxu0 0.0
    %2948 = vmatpush1.msra.mxu0 %v2662
    %2949 = vmatprep.subr.mxu0 0.0
    %2950 = vmatpush1.msra.mxu0 %v2663
    %2951 = vmatprep.subr.mxu0 0.0
    %2952 = vmatpush1.msra.mxu0 %v2664
    %2953 = vmatprep.subr.mxu0 0.0
    %2954 = vmatpush1.msra.mxu0 %v2665
    %2955 = vmatprep.subr.mxu0 0.0
    %2956 = vmatpush1.msra.mxu0 %v2666
    %2957 = vmatprep.subr.mxu0 0.0
    %2958 = vmatpush1.msra.mxu0 %v2667
    %2959 = vmatprep.subr.mxu0 0.0
    %2960 = vmatpush1.msra.mxu0 %v2668
    %2961 = vmatprep.subr.mxu0 0.0
    %2962 = vmatpush1.msra.mxu0 %v2669
    %2963 = vmatprep.subr.mxu0 0.0
    %2964 = vmatpush1.msra.mxu0 %v2670
    %2965 = vmatprep.subr.mxu0 0.0
    %2966 = vmatpush1.msra.mxu0 %v2671
    %2967 = vmatprep.subr.mxu0 0.0
    %2968 = vmatpush1.msra.mxu0 %v2672
    %2969 = vmatprep.subr.mxu0 0.0
    %2970 = vmatpush1.msra.mxu0 %v2673
    %2971 = vmatprep.subr.mxu0 0.0
    %2972 = vmatpush1.msra.mxu0 %v2674
    %2973 = vmatprep.subr.mxu0 0.0
    %2974 = vmatpush1.msra.mxu0 %v2675
    %2975 = vmatprep.subr.mxu0 0.0
    %2976 = vmatpush1.msra.mxu0 %v2676
    %2977 = vmatprep.subr.mxu0 0.0
    %2978 = vmatpush1.msra.mxu0 %v2677
    %2979 = vmatprep.subr.mxu0 0.0
    %2980 = vmatpush1.msra.mxu0 %v2678
    %2981 = vmatprep.subr.mxu0 0.0
    %2982 = vmatpush1.msra.mxu0 %v2679
    %2983 = vmatprep.subr.mxu0 0.0
    %2984 = vmatpush1.msra.mxu0 %v2680
    %2985 = vmatprep.subr.mxu0 0.0
    %2986 = vmatpush1.msra.mxu0 %v2681
    %2987 = vmatprep.subr.mxu0 0.0
    %2988 = vmatpush1.msra.mxu0 %v2682
    %2989 = vmatprep.subr.mxu0 0.0
    %2990 = vmatpush1.msra.mxu0 %v2683
    %2991 = vmatprep.subr.mxu0 0.0
    %2992 = vmatpush1.msra.mxu0 %v2684
    %2993 = vmatprep.subr.mxu0 0.0
    %2994 = vmatpush1.msra.mxu0 %v2685
    %2995 = vmatprep.subr.mxu0 0.0
    %2996 = vmatpush1.msra.mxu0 %v2686
    %2997 = vmatprep.subr.mxu0 0.0
    %2998 = vmatpush1.msra.mxu0 %v2687
    %2999 = vmatprep.subr.mxu0 0.0
    %3000 = vmatpush1.msra.mxu0 %v2688
    %3001 = vmatprep.mubr.f32.mxu0 %v2910
    %3002 = vmatmul.mubr.f32.gmra.mrb[0].mxu0 %v2902
    %v3003 = vpop.f32.mrb[0].mxu0
    %v3004 = vadd.f32 %v2891, %v3003
    %v3005 = vpop.f32.mrb[0].mxu0
    %3006 = vdwg.mxu0
    %3007 = vmatprep.subr.mxu0 0.0
    %3008 = vmatpush1.msra.mxu0 %v2689
    %3009 = vmatprep.subr.mxu0 0.0
    %3010 = vmatpush1.msra.mxu0 %v2690
    %3011 = vmatprep.subr.mxu0 0.0
    %3012 = vmatpush1.msra.mxu0 %v2691
    %3013 = vmatprep.subr.mxu0 0.0
    %3014 = vmatpush1.msra.mxu0 %v2692
    %3015 = vmatprep.subr.mxu0 0.0
    %3016 = vmatpush1.msra.mxu0 %v2693
    %3017 = vmatprep.subr.mxu0 0.0
    %3018 = vmatpush1.msra.mxu0 %v2694
    %3019 = vmatprep.subr.mxu0 0.0
    %3020 = vmatpush1.msra.mxu0 %v2695
    %3021 = vmatprep.subr.mxu0 0.0
    %3022 = vmatpush1.msra.mxu0 %v2696
    %3023 = vmatprep.subr.mxu0 0.0
    %3024 = vmatpush1.msra.mxu0 %v2697
    %3025 = vmatprep.subr.mxu0 0.0
    %3026 = vmatpush1.msra.mxu0 %v2698
    %3027 = vmatprep.subr.mxu0 0.0
    %3028 = vmatpush1.msra.mxu0 %v2699
    %3029 = vmatprep.subr.mxu0 0.0
    %3030 = vmatpush1.msra.mxu0 %v2700
    %3031 = vmatprep.subr.mxu0 0.0
    %3032 = vmatpush1.msra.mxu0 %v2701
    %3033 = vmatprep.subr.mxu0 0.0
    %3034 = vmatpush1.msra.mxu0 %v2702
    %3035 = vmatprep.subr.mxu0 0.0
    %3036 = vmatpush1.msra.mxu0 %v2703
    %3037 = vmatprep.subr.mxu0 0.0
    %3038 = vmatpush1.msra.mxu0 %v2704
    %3039 = vmatprep.subr.mxu0 0.0
    %3040 = vmatpush1.msra.mxu0 %v2705
    %3041 = vmatprep.subr.mxu0 0.0
    %3042 = vmatpush1.msra.mxu0 %v2706
    %3043 = vmatprep.subr.mxu0 0.0
    %3044 = vmatpush1.msra.mxu0 %v2707
    %3045 = vmatprep.subr.mxu0 0.0
    %3046 = vmatpush1.msra.mxu0 %v2708
    %3047 = vmatprep.subr.mxu0 0.0
    %3048 = vmatpush1.msra.mxu0 %v2709
    %3049 = vmatprep.subr.mxu0 0.0
    %3050 = vmatpush1.msra.mxu0 %v2710
    %3051 = vmatprep.subr.mxu0 0.0
    %3052 = vmatpush1.msra.mxu0 %v2711
    %3053 = vmatprep.subr.mxu0 0.0
    %3054 = vmatpush1.msra.mxu0 %v2712
    %3055 = vmatprep.subr.mxu0 0.0
    %3056 = vmatpush1.msra.mxu0 %v2713
    %3057 = vmatprep.subr.mxu0 0.0
    %3058 = vmatpush1.msra.mxu0 %v2714
    %3059 = vmatprep.subr.mxu0 0.0
    %3060 = vmatpush1.msra.mxu0 %v2715
    %3061 = vmatprep.subr.mxu0 0.0
    %3062 = vmatpush1.msra.mxu0 %v2716
    %3063 = vmatprep.subr.mxu0 0.0
    %3064 = vmatpush1.msra.mxu0 %v2717
    %3065 = vmatprep.subr.mxu0 0.0
    %3066 = vmatpush1.msra.mxu0 %v2718
    %3067 = vmatprep.subr.mxu0 0.0
    %3068 = vmatpush1.msra.mxu0 %v2719
    %3069 = vmatprep.subr.mxu0 0.0
    %3070 = vmatpush1.msra.mxu0 %v2720
    %3071 = vmatprep.mubr.f32.mxu0 %v2911
    %3072 = vmatmul.mubr.f32.gmra.mrb[0].mxu0 %v2909
    %v3073 = vpop.f32.mrb[0].mxu0
    %v3074 = vadd.f32 %v3004, %v3073
    %v3075 = vpop.f32.mrb[0].mxu0
    %3076 = vdwg.mxu0
    %3077 = vmatprep.subr.mxu0 0.0
    %3078 = vmatpush1.msra.mxu0 %v2721
    %3079 = vmatprep.subr.mxu0 0.0
    %3080 = vmatpush1.msra.mxu0 %v2722
    %3081 = vmatprep.subr.mxu0 0.0
    %3082 = vmatpush1.msra.mxu0 %v2723
    %3083 = vmatprep.subr.mxu0 0.0
    %3084 = vmatpush1.msra.mxu0 %v2724
    %3085 = vmatprep.subr.mxu0 0.0
    %3086 = vmatpush1.msra.mxu0 %v2725
    %3087 = vmatprep.subr.mxu0 0.0
    %3088 = vmatpush1.msra.mxu0 %v2726
    %3089 = vmatprep.subr.mxu0 0.0
    %3090 = vmatpush1.msra.mxu0 %v2727
    %3091 = vmatprep.subr.mxu0 0.0
    %3092 = vmatpush1.msra.mxu0 %v2728
    %3093 = vmatprep.subr.mxu0 0.0
    %3094 = vmatpush1.msra.mxu0 %v2729
    %3095 = vmatprep.subr.mxu0 0.0
    %3096 = vmatpush1.msra.mxu0 %v2730
    %3097 = vmatprep.subr.mxu0 0.0
    %3098 = vmatpush1.msra.mxu0 %v2731
    %3099 = vmatprep.subr.mxu0 0.0
    %3100 = vmatpush1.msra.mxu0 %v2732
    %3101 = vmatprep.subr.mxu0 0.0
    %3102 = vmatpush1.msra.mxu0 %v2733
    %3103 = vmatprep.subr.mxu0 0.0
    %3104 = vmatpush1.msra.mxu0 %v2734
    %3105 = vmatprep.subr.mxu0 0.0
    %3106 = vmatpush1.msra.mxu0 %v2735
    %3107 = vmatprep.subr.mxu0 0.0
    %3108 = vmatpush1.msra.mxu0 %v2736
    %3109 = vmatprep.subr.mxu0 0.0
    %3110 = vmatpush1.msra.mxu0 %v2737
    %3111 = vmatprep.subr.mxu0 0.0
    %3112 = vmatpush1.msra.mxu0 %v2738
    %3113 = vmatprep.subr.mxu0 0.0
    %3114 = vmatpush1.msra.mxu0 %v2739
    %3115 = vmatprep.subr.mxu0 0.0
    %3116 = vmatpush1.msra.mxu0 %v2740
    %3117 = vmatprep.subr.mxu0 0.0
    %3118 = vmatpush1.msra.mxu0 %v2741
    %3119 = vmatprep.subr.mxu0 0.0
    %3120 = vmatpush1.msra.mxu0 %v2742
    %3121 = vmatprep.subr.mxu0 0.0
    %3122 = vmatpush1.msra.mxu0 %v2743
    %3123 = vmatprep.subr.mxu0 0.0
    %3124 = vmatpush1.msra.mxu0 %v2744
    %3125 = vmatprep.subr.mxu0 0.0
    %3126 = vmatpush1.msra.mxu0 %v2745
    %3127 = vmatprep.subr.mxu0 0.0
    %3128 = vmatpush1.msra.mxu0 %v2746
    %3129 = vmatprep.subr.mxu0 0.0
    %3130 = vmatpush1.msra.mxu0 %v2747
    %3131 = vmatprep.subr.mxu0 0.0
    %3132 = vmatpush1.msra.mxu0 %v2748
    %3133 = vmatprep.subr.mxu0 0.0
    %3134 = vmatpush1.msra.mxu0 %v2749
    %3135 = vmatprep.subr.mxu0 0.0
    %3136 = vmatpush1.msra.mxu0 %v2750
    %3137 = vmatprep.subr.mxu0 0.0
    %3138 = vmatpush1.msra.mxu0 %v2751
    %3139 = vmatprep.subr.mxu0 0.0
    %3140 = vmatpush1.msra.mxu0 %v2752
    %3141 = vmatprep.mubr.f32.mxu0 %v2927
    %3142 = vmatmul.mubr.f32.gmra.mrb[0].mxu0 %v2919
    %v3143 = vpop.f32.mrb[0].mxu0
    %v3144 = vadd.f32 %v3074, %v3143
    %v3145 = vpop.f32.mrb[0].mxu0
    %3146 = vdwg.mxu0
    %3147 = vmatprep.subr.mxu0 0.0
    %3148 = vmatpush1.msra.mxu0 %v2753
    %3149 = vmatprep.subr.mxu0 0.0
    %3150 = vmatpush1.msra.mxu0 %v2754
    %3151 = vmatprep.subr.mxu0 0.0
    %3152 = vmatpush1.msra.mxu0 %v2755
    %3153 = vmatprep.subr.mxu0 0.0
    %3154 = vmatpush1.msra.mxu0 %v2756
    %3155 = vmatprep.subr.mxu0 0.0
    %3156 = vmatpush1.msra.mxu0 %v2757
    %3157 = vmatprep.subr.mxu0 0.0
    %3158 = vmatpush1.msra.mxu0 %v2758
    %3159 = vmatprep.subr.mxu0 0.0
    %3160 = vmatpush1.msra.mxu0 %v2759
    %3161 = vmatprep.subr.mxu0 0.0
    %3162 = vmatpush1.msra.mxu0 %v2760
    %3163 = vmatprep.subr.mxu0 0.0
    %3164 = vmatpush1.msra.mxu0 %v2761
    %3165 = vmatprep.subr.mxu0 0.0
    %3166 = vmatpush1.msra.mxu0 %v2762
    %3167 = vmatprep.subr.mxu0 0.0
    %3168 = vmatpush1.msra.mxu0 %v2763
    %3169 = vmatprep.subr.mxu0 0.0
    %3170 = vmatpush1.msra.mxu0 %v2764
    %3171 = vmatprep.subr.mxu0 0.0
    %3172 = vmatpush1.msra.mxu0 %v2765
    %3173 = vmatprep.subr.mxu0 0.0
    %3174 = vmatpush1.msra.mxu0 %v2766
    %3175 = vmatprep.subr.mxu0 0.0
    %3176 = vmatpush1.msra.mxu0 %v2767
    %3177 = vmatprep.subr.mxu0 0.0
    %3178 = vmatpush1.msra.mxu0 %v2768
    %3179 = vmatprep.subr.mxu0 0.0
    %3180 = vmatpush1.msra.mxu0 %v2769
    %3181 = vmatprep.subr.mxu0 0.0
    %3182 = vmatpush1.msra.mxu0 %v2770
    %3183 = vmatprep.subr.mxu0 0.0
    %3184 = vmatpush1.msra.mxu0 %v2771
    %3185 = vmatprep.subr.mxu0 0.0
    %3186 = vmatpush1.msra.mxu0 %v2772
    %3187 = vmatprep.subr.mxu0 0.0
    %3188 = vmatpush1.msra.mxu0 %v2773
    %3189 = vmatprep.subr.mxu0 0.0
    %3190 = vmatpush1.msra.mxu0 %v2774
    %3191 = vmatprep.subr.mxu0 0.0
    %3192 = vmatpush1.msra.mxu0 %v2775
    %3193 = vmatprep.subr.mxu0 0.0
    %3194 = vmatpush1.msra.mxu0 %v2776
    %3195 = vmatprep.subr.mxu0 0.0
    %3196 = vmatpush1.msra.mxu0 %v2777
    %3197 = vmatprep.subr.mxu0 0.0
    %3198 = vmatpush1.msra.mxu0 %v2778
    %3199 = vmatprep.subr.mxu0 0.0
    %3200 = vmatpush1.msra.mxu0 %v2779
    %3201 = vmatprep.subr.mxu0 0.0
    %3202 = vmatpush1.msra.mxu0 %v2780
    %3203 = vmatprep.subr.mxu0 0.0
    %3204 = vmatpush1.msra.mxu0 %v2781
    %3205 = vmatprep.subr.mxu0 0.0
    %3206 = vmatpush1.msra.mxu0 %v2782
    %3207 = vmatprep.subr.mxu0 0.0
    %3208 = vmatpush1.msra.mxu0 %v2783
    %3209 = vmatprep.subr.mxu0 0.0
    %3210 = vmatpush1.msra.mxu0 %v2784
    %3211 = vmatprep.mubr.f32.mxu0 %v2928
    %3212 = vmatmul.mubr.f32.gmra.mrb[0].mxu0 %v2926
    %v3213 = vpop.f32.mrb[0].mxu0
    %v3214 = vadd.f32 %v3144, %v3213
    %v3215 = vpop.f32.mrb[0].mxu0
    %3216 = vdwg.mxu0
    %v3217 = vmax.f32 %v3214, 0.0
    %v3219 = vlaneseq
    %v3220 = vshrl.u32 %v3219, 7
    %v3221 = vsub.s32 0, %v3220
    %v3222 = vrot.slane %v2884, %v3221
    %vm3224 = vcmask 261120
    %v3226 = vsel %vm3224, %v3217, 0
    %3228 = vmatprep.subr.mxu0 0.0
    %3229 = vmatpush1.msra.mxu0 %v2858
    %3230 = vmatprep.subr.mxu0 0.0
    %3231 = vmatpush1.msra.mxu0 %v2859
    %3232 = vmatprep.subr.mxu0 0.0
    %3233 = vmatpush1.msra.mxu0 %v2860
    %3234 = vmatprep.subr.mxu0 0.0
    %3235 = vmatpush1.msra.mxu0 %v2861
    %3236 = vmatprep.subr.mxu0 0.0
    %3237 = vmatpush1.msra.mxu0 0.0
    %3238 = vmatprep.subr.mxu0 0.0
    %3239 = vmatpush1.msra.mxu0 0.0
    %3240 = vmatprep.subr.mxu0 0.0
    %3241 = vmatpush1.msra.mxu0 0.0
    %3242 = vmatprep.subr.mxu0 0.0
    %3243 = vmatpush1.msra.mxu0 0.0
    %3244 = vmatprep.subr.mxu0 0.0
    %3245 = vmatpush1.msra.mxu0 0.0
    %3246 = vmatprep.subr.mxu0 0.0
    %3247 = vmatpush1.msra.mxu0 0.0
    %3248 = vmatprep.subr.mxu0 0.0
    %3249 = vmatpush1.msra.mxu0 0.0
    %3250 = vmatprep.subr.mxu0 0.0
    %3251 = vmatpush1.msra.mxu0 0.0
    %3252 = vmatprep.subr.mxu0 0.0
    %3253 = vmatpush1.msra.mxu0 0.0
    %3254 = vmatprep.subr.mxu0 0.0
    %3255 = vmatpush1.msra.mxu0 0.0
    %3256 = vmatprep.subr.mxu0 0.0
    %3257 = vmatpush1.msra.mxu0 0.0
    %3258 = vmatprep.subr.mxu0 0.0
    %3259 = vmatpush1.msra.mxu0 0.0
    %3260 = vmatprep.subr.mxu0 0.0
    %3261 = vmatpush1.msra.mxu0 0.0
    %3262 = vmatprep.subr.mxu0 0.0
    %3263 = vmatpush1.msra.mxu0 0.0
    %3264 = vmatprep.subr.mxu0 0.0
    %3265 = vmatpush1.msra.mxu0 0.0
    %3266 = vmatprep.subr.mxu0 0.0
    %3267 = vmatpush1.msra.mxu0 0.0
    %3268 = vmatprep.subr.mxu0 0.0
    %3269 = vmatpush1.msra.mxu0 0.0
    %3270 = vmatprep.subr.mxu0 0.0
    %3271 = vmatpush1.msra.mxu0 0.0
    %3272 = vmatprep.subr.mxu0 0.0
    %3273 = vmatpush1.msra.mxu0 0.0
    %3274 = vmatprep.subr.mxu0 0.0
    %3275 = vmatpush1.msra.mxu0 0.0
    %3276 = vmatprep.subr.mxu0 0.0
    %3277 = vmatpush1.msra.mxu0 0.0
    %3278 = vmatprep.subr.mxu0 0.0
    %3279 = vmatpush1.msra.mxu0 0.0
    %3280 = vmatprep.subr.mxu0 0.0
    %3281 = vmatpush1.msra.mxu0 0.0
    %3282 = vmatprep.subr.mxu0 0.0
    %3283 = vmatpush1.msra.mxu0 0.0
    %3284 = vmatprep.subr.mxu0 0.0
    %3285 = vmatpush1.msra.mxu0 0.0
    %3286 = vmatprep.subr.mxu0 0.0
    %3287 = vmatpush1.msra.mxu0 0.0
    %3288 = vmatprep.subr.mxu0 0.0
    %3289 = vmatpush1.msra.mxu0 0.0
    %3290 = vmatprep.subr.mxu0 0.0
    %3291 = vmatpush1.msra.mxu0 0.0
    %3292 = vmatprep.mubr.f32.mxu0 0.0
    %3293 = vmatmul.mubr.f32.gmra.mrb[0].mxu0 %v3226
    %v3294 = vpop.f32.mrb[0].mxu0
    %v3295 = vadd.f32 %v3222, %v3294
    %v3296 = vpop.f32.mrb[0].mxu0
    %3297 = vdwg.mxu0
    %v3298 = vld [vmem:[%s12] sm:$0xff]
    %v3299 = vld [vmem:[%s12 + $0x8] sm:$0xff]
    %v3300 = vld [vmem:[%s12 + $0x10] sm:$0xff]
    %v3301 = vld [vmem:[%s12 + $0x18] sm:$0xff]
    %v3302 = vld [vmem:[%s13] sm:$0x1]
    %v3304 = vlaneseq
    %v3305 = vshrl.u32 %v3304, 7
    %v3306 = vsub.s32 0, %v3305
    %v3307 = vrot.slane %v3302, %v3306
    %v3310 = vsel %vm3224, %v3295, 0
    %3312 = vmatprep.subr.mxu0 0.0
    %3313 = vmatpush1.msra.mxu0 %v3298
    %3314 = vmatprep.subr.mxu0 0.0
    %3315 = vmatpush1.msra.mxu0 %v3299
    %3316 = vmatprep.subr.mxu0 0.0
    %3317 = vmatpush1.msra.mxu0 %v3300
    %3318 = vmatprep.subr.mxu0 0.0
    %3319 = vmatpush1.msra.mxu0 %v3301
    %3320 = vmatprep.subr.mxu0 0.0
    %3321 = vmatpush1.msra.mxu0 0.0
    %3322 = vmatprep.subr.mxu0 0.0
    %3323 = vmatpush1.msra.mxu0 0.0
    %3324 = vmatprep.subr.mxu0 0.0
    %3325 = vmatpush1.msra.mxu0 0.0
    %3326 = vmatprep.subr.mxu0 0.0
    %3327 = vmatpush1.msra.mxu0 0.0
    %3328 = vmatprep.subr.mxu0 0.0
    %3329 = vmatpush1.msra.mxu0 0.0
    %3330 = vmatprep.subr.mxu0 0.0
    %3331 = vmatpush1.msra.mxu0 0.0
    %3332 = vmatprep.subr.mxu0 0.0
    %3333 = vmatpush1.msra.mxu0 0.0
    %3334 = vmatprep.subr.mxu0 0.0
    %3335 = vmatpush1.msra.mxu0 0.0
    %3336 = vmatprep.subr.mxu0 0.0
    %3337 = vmatpush1.msra.mxu0 0.0
    %3338 = vmatprep.subr.mxu0 0.0
    %3339 = vmatpush1.msra.mxu0 0.0
    %3340 = vmatprep.subr.mxu0 0.0
    %3341 = vmatpush1.msra.mxu0 0.0
    %3342 = vmatprep.subr.mxu0 0.0
    %3343 = vmatpush1.msra.mxu0 0.0
    %3344 = vmatprep.subr.mxu0 0.0
    %3345 = vmatpush1.msra.mxu0 0.0
    %3346 = vmatprep.subr.mxu0 0.0
    %3347 = vmatpush1.msra.mxu0 0.0
    %3348 = vmatprep.subr.mxu0 0.0
    %3349 = vmatpush1.msra.mxu0 0.0
    %3350 = vmatprep.subr.mxu0 0.0
    %3351 = vmatpush1.msra.mxu0 0.0
    %3352 = vmatprep.subr.mxu0 0.0
    %3353 = vmatpush1.msra.mxu0 0.0
    %3354 = vmatprep.subr.mxu0 0.0
    %3355 = vmatpush1.msra.mxu0 0.0
    %3356 = vmatprep.subr.mxu0 0.0
    %3357 = vmatpush1.msra.mxu0 0.0
    %3358 = vmatprep.subr.mxu0 0.0
    %3359 = vmatpush1.msra.mxu0 0.0
    %3360 = vmatprep.subr.mxu0 0.0
    %3361 = vmatpush1.msra.mxu0 0.0
    %3362 = vmatprep.subr.mxu0 0.0
    %3363 = vmatpush1.msra.mxu0 0.0
    %3364 = vmatprep.subr.mxu0 0.0
    %3365 = vmatpush1.msra.mxu0 0.0
    %3366 = vmatprep.subr.mxu0 0.0
    %3367 = vmatpush1.msra.mxu0 0.0
    %3368 = vmatprep.subr.mxu0 0.0
    %3369 = vmatpush1.msra.mxu0 0.0
    %3370 = vmatprep.subr.mxu0 0.0
    %3371 = vmatpush1.msra.mxu0 0.0
    %3372 = vmatprep.subr.mxu0 0.0
    %3373 = vmatpush1.msra.mxu0 0.0
    %3374 = vmatprep.subr.mxu0 0.0
    %3375 = vmatpush1.msra.mxu0 0.0
    %3376 = vmatprep.mubr.f32.mxu0 0.0
    %3377 = vmatmul.mubr.f32.gmra.mrb[0].mxu0 %v3310
    %v3378 = vpop.f32.mrb[0].mxu0
    %v3379 = vadd.f32 %v3307, %v3378
    %v3380 = vpop.f32.mrb[0].mxu0
    %3381 = vdwg.mxu0
    %vm3382 = vcmask 74752
    %3383 = vst.msk [vmem:[#allocation2] sm:$0x3] %vm3382, %v3379
    // Predicated region
    $region58: #{adamerging_forward.3} parent=1 // pred_check
      _
    $region59: #{adamerging_forward.3} parent=1 // pred_check_branch
      %3385 = sbr.rel (0) target = $region61
    $region60: #{adamerging_forward.3} parent=1 // pred_region
      %s3387 = ssub.s32 32, 32
      %3388 = vsyncadd [#allocation3], %s3387
      %s3390 = sshll.u32 [#allocation2], 4
      %s3391 = int_to_ptr.vmem [resolvable:$true] %s3390
      %3393 = dma.vmem_to_hbm [thread:$0]  %s3391, 32, %s14, [#allocation3]
    $region61: #{adamerging_forward.3} parent=1 // pred_fallthru
      _
    // Predicated region
    $region62: #{adamerging_forward.3} parent=1 // pred_check
      _
    $region63: #{adamerging_forward.3} parent=1 // pred_check_branch
      %3395 = sbr.rel (0) target = $region65
    $region64: #{adamerging_forward.3} parent=1 // pred_region
      %3396 = dma.done [#allocation3], 32
    $region65: #{adamerging_forward.3} parent=1 // pred_fallthru
      _
    %3397 = vsyncpa [#allocation3], 1

// kernel: adamerging_forward.2
$region0: #{adamerging_forward.2}
  #allocation0 [shape = 'u32[]', space=smem, size = 0x4, offset = 0x4, fixed_abs, tag = 'smem constant byte address 0x4 - core index']
  #allocation1 [shape = 'u32[144,128]{1,0:T(1,128)}', space=vmem, size = 0x12000, scoped, tag = 'internal scratch']
  %s0 = inlined_call_operand.vmem [shape: f32[4,1024,32], index: 0, kind: input, shape index: {}]
  %s1 = inlined_call_operand.vmem [shape: f32[4,1,32], index: 1, kind: input, shape index: {}]
  %s2 = inlined_call_operand.vmem [shape: f32[4,32,32], index: 2, kind: input, shape index: {}]
  %s3 = inlined_call_operand.vmem [shape: f32[4,1,32], index: 3, kind: input, shape index: {}]
  %s4 = inlined_call_operand.vmem [shape: f32[4,128], index: 4, kind: output, shape index: {}]
  %s5 = sld [smem:[#allocation0]]
  $region26: #{adamerging_forward.2} parent=0
    _
  %s7 = ssub.s32 1, %s5
  %s8 = scalar_select 0, %s7, %s5
  // Predicated region
  $region2: #{adamerging_forward.2} parent=0 // pred_check
    _
  $region3: #{adamerging_forward.2} parent=0 // pred_check_branch
    %10 = sbr.rel (0) target = $region5
  $region4: #{adamerging_forward.2} parent=0 // pred_region
    _
  $region5: #{adamerging_forward.2} parent=0 // pred_fallthru
    _
  // Predicated region
  $region6: #{adamerging_forward.2} parent=0 // pred_check
    _
  $region7: #{adamerging_forward.2} parent=0 // pred_check_branch
    %12 = sbr.rel (0) target = $region9
  $region8: #{adamerging_forward.2} parent=0 // pred_region
    _
  $region9: #{adamerging_forward.2} parent=0 // pred_fallthru
    _
  // Predicated region
  $region10: #{adamerging_forward.2} parent=0 // pred_check
    _
  $region11: #{adamerging_forward.2} parent=0 // pred_check_branch
    %14 = sbr.rel (0) target = $region13
  $region12: #{adamerging_forward.2} parent=0 // pred_region
    _
  $region13: #{adamerging_forward.2} parent=0 // pred_fallthru
    _
  // Predicated region
  $region14: #{adamerging_forward.2} parent=0 // pred_check
    _
  $region15: #{adamerging_forward.2} parent=0 // pred_check_branch
    %16 = sbr.rel (0) target = $region17
  $region16: #{adamerging_forward.2} parent=0 // pred_region
    _
  $region17: #{adamerging_forward.2} parent=0 // pred_fallthru
    _
  %v17 = vlaneseq
  %v18 = vand.u32 %v17, 127
  %v19 = vld [vmem:[%s0 + $0x400] sm:$0xff]
  %v20 = vld [vmem:[%s0 + $0x408] sm:$0xff]
  %v21 = vld [vmem:[%s0 + $0x410] sm:$0xff]
  %v22 = vld [vmem:[%s0 + $0x418] sm:$0xff]
  %v23 = vld [vmem:[%s0 + $0x420] sm:$0xff]
  %v24 = vld [vmem:[%s0 + $0x428] sm:$0xff]
  %v25 = vld [vmem:[%s0 + $0x430] sm:$0xff]
  %v26 = vld [vmem:[%s0 + $0x438] sm:$0xff]
  %v27 = vld [vmem:[%s0 + $0x440] sm:$0xff]
  %v28 = vld [vmem:[%s0 + $0x448] sm:$0xff]
  %v29 = vld [vmem:[%s0 + $0x450] sm:$0xff]
  %v30 = vld [vmem:[%s0 + $0x458] sm:$0xff]
  %v31 = vld [vmem:[%s0 + $0x460] sm:$0xff]
  %v32 = vld [vmem:[%s0 + $0x468] sm:$0xff]
  %v33 = vld [vmem:[%s0 + $0x470] sm:$0xff]
  %v34 = vld [vmem:[%s0 + $0x478] sm:$0xff]
  %v35 = vld [vmem:[%s0 + $0x480] sm:$0xff]
  %v36 = vld [vmem:[%s0 + $0x488] sm:$0xff]
  %v37 = vld [vmem:[%s0 + $0x490] sm:$0xff]
  %v38 = vld [vmem:[%s0 + $0x498] sm:$0xff]
  %v39 = vld [vmem:[%s0 + $0x4a0] sm:$0xff]
  %v40 = vld [vmem:[%s0 + $0x4a8] sm:$0xff]
  %v41 = vld [vmem:[%s0 + $0x4b0] sm:$0xff]
  %v42 = vld [vmem:[%s0 + $0x4b8] sm:$0xff]
  %v43 = vld [vmem:[%s0 + $0x4c0] sm:$0xff]
  %v44 = vld [vmem:[%s0 + $0x4c8] sm:$0xff]
  %v45 = vld [vmem:[%s0 + $0x4d0] sm:$0xff]
  %v46 = vld [vmem:[%s0 + $0x4d8] sm:$0xff]
  %v47 = vld [vmem:[%s0 + $0x4e0] sm:$0xff]
  %v48 = vld [vmem:[%s0 + $0x4e8] sm:$0xff]
  %v49 = vld [vmem:[%s0 + $0x4f0] sm:$0xff]
  %v50 = vld [vmem:[%s0 + $0x4f8] sm:$0xff]
  %v51 = vld [vmem:[%s0 + $0x500] sm:$0xff]
  %v52 = vld [vmem:[%s0 + $0x508] sm:$0xff]
  %v53 = vld [vmem:[%s0 + $0x510] sm:$0xff]
  %v54 = vld [vmem:[%s0 + $0x518] sm:$0xff]
  %v55 = vld [vmem:[%s0 + $0x520] sm:$0xff]
  %v56 = vld [vmem:[%s0 + $0x528] sm:$0xff]
  %v57 = vld [vmem:[%s0 + $0x530] sm:$0xff]
  %v58 = vld [vmem:[%s0 + $0x538] sm:$0xff]
  %v59 = vld [vmem:[%s0 + $0x540] sm:$0xff]
  %v60 = vld [vmem:[%s0 + $0x548] sm:$0xff]
  %v61 = vld [vmem:[%s0 + $0x550] sm:$0xff]
  %v62 = vld [vmem:[%s0 + $0x558] sm:$0xff]
  %v63 = vld [vmem:[%s0 + $0x560] sm:$0xff]
  %v64 = vld [vmem:[%s0 + $0x568] sm:$0xff]
  %v65 = vld [vmem:[%s0 + $0x570] sm:$0xff]
  %v66 = vld [vmem:[%s0 + $0x578] sm:$0xff]
  %v67 = vld [vmem:[%s0 + $0x580] sm:$0xff]
  %v68 = vld [vmem:[%s0 + $0x588] sm:$0xff]
  %v69 = vld [vmem:[%s0 + $0x590] sm:$0xff]
  %v70 = vld [vmem:[%s0 + $0x598] sm:$0xff]
  %v71 = vld [vmem:[%s0 + $0x5a0] sm:$0xff]
  %v72 = vld [vmem:[%s0 + $0x5a8] sm:$0xff]
  %v73 = vld [vmem:[%s0 + $0x5b0] sm:$0xff]
  %v74 = vld [vmem:[%s0 + $0x5b8] sm:$0xff]
  %v75 = vld [vmem:[%s0 + $0x5c0] sm:$0xff]
  %v76 = vld [vmem:[%s0 + $0x5c8] sm:$0xff]
  %v77 = vld [vmem:[%s0 + $0x5d0] sm:$0xff]
  %v78 = vld [vmem:[%s0 + $0x5d8] sm:$0xff]
  %v79 = vld [vmem:[%s0 + $0x5e0] sm:$0xff]
  %v80 = vld [vmem:[%s0 + $0x5e8] sm:$0xff]
  %v81 = vld [vmem:[%s0 + $0x5f0] sm:$0xff]
  %v82 = vld [vmem:[%s0 + $0x5f8] sm:$0xff]
  %v83 = vld [vmem:[%s0 + $0x600] sm:$0xff]
  %v84 = vld [vmem:[%s0 + $0x608] sm:$0xff]
  %v85 = vld [vmem:[%s0 + $0x610] sm:$0xff]
  %v86 = vld [vmem:[%s0 + $0x618] sm:$0xff]
  %v87 = vld [vmem:[%s0 + $0x620] sm:$0xff]
  %v88 = vld [vmem:[%s0 + $0x628] sm:$0xff]
  %v89 = vld [vmem:[%s0 + $0x630] sm:$0xff]
  %v90 = vld [vmem:[%s0 + $0x638] sm:$0xff]
  %v91 = vld [vmem:[%s0 + $0x640] sm:$0xff]
  %v92 = vld [vmem:[%s0 + $0x648] sm:$0xff]
  %v93 = vld [vmem:[%s0 + $0x650] sm:$0xff]
  %v94 = vld [vmem:[%s0 + $0x658] sm:$0xff]
  %v95 = vld [vmem:[%s0 + $0x660] sm:$0xff]
  %v96 = vld [vmem:[%s0 + $0x668] sm:$0xff]
  %v97 = vld [vmem:[%s0 + $0x670] sm:$0xff]
  %v98 = vld [vmem:[%s0 + $0x678] sm:$0xff]
  %v99 = vld [vmem:[%s0 + $0x680] sm:$0xff]
  %v100 = vld [vmem:[%s0 + $0x688] sm:$0xff]
  %v101 = vld [vmem:[%s0 + $0x690] sm:$0xff]
  %v102 = vld [vmem:[%s0 + $0x698] sm:$0xff]
  %v103 = vld [vmem:[%s0 + $0x6a0] sm:$0xff]
  %v104 = vld [vmem:[%s0 + $0x6a8] sm:$0xff]
  %v105 = vld [vmem:[%s0 + $0x6b0] sm:$0xff]
  %v106 = vld [vmem:[%s0 + $0x6b8] sm:$0xff]
  %v107 = vld [vmem:[%s0 + $0x6c0] sm:$0xff]
  %v108 = vld [vmem:[%s0 + $0x6c8] sm:$0xff]
  %v109 = vld [vmem:[%s0 + $0x6d0] sm:$0xff]
  %v110 = vld [vmem:[%s0 + $0x6d8] sm:$0xff]
  %v111 = vld [vmem:[%s0 + $0x6e0] sm:$0xff]
  %v112 = vld [vmem:[%s0 + $0x6e8] sm:$0xff]
  %v113 = vld [vmem:[%s0 + $0x6f0] sm:$0xff]
  %v114 = vld [vmem:[%s0 + $0x6f8] sm:$0xff]
  %v115 = vld [vmem:[%s0 + $0x700] sm:$0xff]
  %v116 = vld [vmem:[%s0 + $0x708] sm:$0xff]
  %v117 = vld [vmem:[%s0 + $0x710] sm:$0xff]
  %v118 = vld [vmem:[%s0 + $0x718] sm:$0xff]
  %v119 = vld [vmem:[%s0 + $0x720] sm:$0xff]
  %v120 = vld [vmem:[%s0 + $0x728] sm:$0xff]
  %v121 = vld [vmem:[%s0 + $0x730] sm:$0xff]
  %v122 = vld [vmem:[%s0 + $0x738] sm:$0xff]
  %v123 = vld [vmem:[%s0 + $0x740] sm:$0xff]
  %v124 = vld [vmem:[%s0 + $0x748] sm:$0xff]
  %v125 = vld [vmem:[%s0 + $0x750] sm:$0xff]
  %v126 = vld [vmem:[%s0 + $0x758] sm:$0xff]
  %v127 = vld [vmem:[%s0 + $0x760] sm:$0xff]
  %v128 = vld [vmem:[%s0 + $0x768] sm:$0xff]
  %v129 = vld [vmem:[%s0 + $0x770] sm:$0xff]
  %v130 = vld [vmem:[%s0 + $0x778] sm:$0xff]
  %v131 = vld [vmem:[%s0 + $0x780] sm:$0xff]
  %v132 = vld [vmem:[%s0 + $0x788] sm:$0xff]
  %v133 = vld [vmem:[%s0 + $0x790] sm:$0xff]
  %v134 = vld [vmem:[%s0 + $0x798] sm:$0xff]
  %v135 = vld [vmem:[%s0 + $0x7a0] sm:$0xff]
  %v136 = vld [vmem:[%s0 + $0x7a8] sm:$0xff]
  %v137 = vld [vmem:[%s0 + $0x7b0] sm:$0xff]
  %v138 = vld [vmem:[%s0 + $0x7b8] sm:$0xff]
  %v139 = vld [vmem:[%s0 + $0x7c0] sm:$0xff]
  %v140 = vld [vmem:[%s0 + $0x7c8] sm:$0xff]
  %v141 = vld [vmem:[%s0 + $0x7d0] sm:$0xff]
  %v142 = vld [vmem:[%s0 + $0x7d8] sm:$0xff]
  %v143 = vld [vmem:[%s0 + $0x7e0] sm:$0xff]
  %v144 = vld [vmem:[%s0 + $0x7e8] sm:$0xff]
  %v145 = vld [vmem:[%s0 + $0x7f0] sm:$0xff]
  %v146 = vld [vmem:[%s0 + $0x7f8] sm:$0xff]
  %v147 = vld [vmem:[%s0 + $0x800] sm:$0xff]
  %v148 = vld [vmem:[%s0 + $0x808] sm:$0xff]
  %v149 = vld [vmem:[%s0 + $0x810] sm:$0xff]
  %v150 = vld [vmem:[%s0 + $0x818] sm:$0xff]
  %v151 = vld [vmem:[%s0 + $0x820] sm:$0xff]
  %v152 = vld [vmem:[%s0 + $0x828] sm:$0xff]
  %v153 = vld [vmem:[%s0 + $0x830] sm:$0xff]
  %v154 = vld [vmem:[%s0 + $0x838] sm:$0xff]
  %v155 = vld [vmem:[%s0 + $0x840] sm:$0xff]
  %v156 = vld [vmem:[%s0 + $0x848] sm:$0xff]
  %v157 = vld [vmem:[%s0 + $0x850] sm:$0xff]
  %v158 = vld [vmem:[%s0 + $0x858] sm:$0xff]
  %v159 = vld [vmem:[%s0 + $0x860] sm:$0xff]
  %v160 = vld [vmem:[%s0 + $0x868] sm:$0xff]
  %v161 = vld [vmem:[%s0 + $0x870] sm:$0xff]
  %v162 = vld [vmem:[%s0 + $0x878] sm:$0xff]
  %v163 = vld [vmem:[%s0 + $0x880] sm:$0xff]
  %v164 = vld [vmem:[%s0 + $0x888] sm:$0xff]
  %v165 = vld [vmem:[%s0 + $0x890] sm:$0xff]
  %v166 = vld [vmem:[%s0 + $0x898] sm:$0xff]
  %v167 = vld [vmem:[%s0 + $0x8a0] sm:$0xff]
  %v168 = vld [vmem:[%s0 + $0x8a8] sm:$0xff]
  %v169 = vld [vmem:[%s0 + $0x8b0] sm:$0xff]
  %v170 = vld [vmem:[%s0 + $0x8b8] sm:$0xff]
  %v171 = vld [vmem:[%s0 + $0x8c0] sm:$0xff]
  %v172 = vld [vmem:[%s0 + $0x8c8] sm:$0xff]
  %v173 = vld [vmem:[%s0 + $0x8d0] sm:$0xff]
  %v174 = vld [vmem:[%s0 + $0x8d8] sm:$0xff]
  %v175 = vld [vmem:[%s0 + $0x8e0] sm:$0xff]
  %v176 = vld [vmem:[%s0 + $0x8e8] sm:$0xff]
  %v177 = vld [vmem:[%s0 + $0x8f0] sm:$0xff]
  %v178 = vld [vmem:[%s0 + $0x8f8] sm:$0xff]
  %v179 = vld [vmem:[%s0 + $0x900] sm:$0xff]
  %v180 = vld [vmem:[%s0 + $0x908] sm:$0xff]
  %v181 = vld [vmem:[%s0 + $0x910] sm:$0xff]
  %v182 = vld [vmem:[%s0 + $0x918] sm:$0xff]
  %v183 = vld [vmem:[%s0 + $0x920] sm:$0xff]
  %v184 = vld [vmem:[%s0 + $0x928] sm:$0xff]
  %v185 = vld [vmem:[%s0 + $0x930] sm:$0xff]
  %v186 = vld [vmem:[%s0 + $0x938] sm:$0xff]
  %v187 = vld [vmem:[%s0 + $0x940] sm:$0xff]
  %v188 = vld [vmem:[%s0 + $0x948] sm:$0xff]
  %v189 = vld [vmem:[%s0 + $0x950] sm:$0xff]
  %v190 = vld [vmem:[%s0 + $0x958] sm:$0xff]
  %v191 = vld [vmem:[%s0 + $0x960] sm:$0xff]
  %v192 = vld [vmem:[%s0 + $0x968] sm:$0xff]
  %v193 = vld [vmem:[%s0 + $0x970] sm:$0xff]
  %v194 = vld [vmem:[%s0 + $0x978] sm:$0xff]
  %v195 = vld [vmem:[%s0 + $0x980] sm:$0xff]
  %v196 = vld [vmem:[%s0 + $0x988] sm:$0xff]
  %v197 = vld [vmem:[%s0 + $0x990] sm:$0xff]
  %v198 = vld [vmem:[%s0 + $0x998] sm:$0xff]
  %v199 = vld [vmem:[%s0 + $0x9a0] sm:$0xff]
  %v200 = vld [vmem:[%s0 + $0x9a8] sm:$0xff]
  %v201 = vld [vmem:[%s0 + $0x9b0] sm:$0xff]
  %v202 = vld [vmem:[%s0 + $0x9b8] sm:$0xff]
  %v203 = vld [vmem:[%s0 + $0x9c0] sm:$0xff]
  %v204 = vld [vmem:[%s0 + $0x9c8] sm:$0xff]
  %v205 = vld [vmem:[%s0 + $0x9d0] sm:$0xff]
  %v206 = vld [vmem:[%s0 + $0x9d8] sm:$0xff]
  %v207 = vld [vmem:[%s0 + $0x9e0] sm:$0xff]
  %v208 = vld [vmem:[%s0 + $0x9e8] sm:$0xff]
  %v209 = vld [vmem:[%s0 + $0x9f0] sm:$0xff]
  %v210 = vld [vmem:[%s0 + $0x9f8] sm:$0xff]
  %v211 = vld [vmem:[%s0 + $0xa00] sm:$0xff]
  %v212 = vld [vmem:[%s0 + $0xa08] sm:$0xff]
  %v213 = vld [vmem:[%s0 + $0xa10] sm:$0xff]
  %v214 = vld [vmem:[%s0 + $0xa18] sm:$0xff]
  %v215 = vld [vmem:[%s0 + $0xa20] sm:$0xff]
  %v216 = vld [vmem:[%s0 + $0xa28] sm:$0xff]
  %v217 = vld [vmem:[%s0 + $0xa30] sm:$0xff]
  %v218 = vld [vmem:[%s0 + $0xa38] sm:$0xff]
  %v219 = vld [vmem:[%s0 + $0xa40] sm:$0xff]
  %v220 = vld [vmem:[%s0 + $0xa48] sm:$0xff]
  %v221 = vld [vmem:[%s0 + $0xa50] sm:$0xff]
  %v222 = vld [vmem:[%s0 + $0xa58] sm:$0xff]
  %v223 = vld [vmem:[%s0 + $0xa60] sm:$0xff]
  %v224 = vld [vmem:[%s0 + $0xa68] sm:$0xff]
  %v225 = vld [vmem:[%s0 + $0xa70] sm:$0xff]
  %v226 = vld [vmem:[%s0 + $0xa78] sm:$0xff]
  %v227 = vld [vmem:[%s0 + $0xa80] sm:$0xff]
  %v228 = vld [vmem:[%s0 + $0xa88] sm:$0xff]
  %v229 = vld [vmem:[%s0 + $0xa90] sm:$0xff]
  %v230 = vld [vmem:[%s0 + $0xa98] sm:$0xff]
  %v231 = vld [vmem:[%s0 + $0xaa0] sm:$0xff]
  %v232 = vld [vmem:[%s0 + $0xaa8] sm:$0xff]
  %v233 = vld [vmem:[%s0 + $0xab0] sm:$0xff]
  %v234 = vld [vmem:[%s0 + $0xab8] sm:$0xff]
  %v235 = vld [vmem:[%s0 + $0xac0] sm:$0xff]
  %v236 = vld [vmem:[%s0 + $0xac8] sm:$0xff]
  %v237 = vld [vmem:[%s0 + $0xad0] sm:$0xff]
  %v238 = vld [vmem:[%s0 + $0xad8] sm:$0xff]
  %v239 = vld [vmem:[%s0 + $0xae0] sm:$0xff]
  %v240 = vld [vmem:[%s0 + $0xae8] sm:$0xff]
  %v241 = vld [vmem:[%s0 + $0xaf0] sm:$0xff]
  %v242 = vld [vmem:[%s0 + $0xaf8] sm:$0xff]
  %v243 = vld [vmem:[%s0 + $0xb00] sm:$0xff]
  %v244 = vld [vmem:[%s0 + $0xb08] sm:$0xff]
  %v245 = vld [vmem:[%s0 + $0xb10] sm:$0xff]
  %v246 = vld [vmem:[%s0 + $0xb18] sm:$0xff]
  %v247 = vld [vmem:[%s0 + $0xb20] sm:$0xff]
  %v248 = vld [vmem:[%s0 + $0xb28] sm:$0xff]
  %v249 = vld [vmem:[%s0 + $0xb30] sm:$0xff]
  %v250 = vld [vmem:[%s0 + $0xb38] sm:$0xff]
  %v251 = vld [vmem:[%s0 + $0xb40] sm:$0xff]
  %v252 = vld [vmem:[%s0 + $0xb48] sm:$0xff]
  %v253 = vld [vmem:[%s0 + $0xb50] sm:$0xff]
  %v254 = vld [vmem:[%s0 + $0xb58] sm:$0xff]
  %v255 = vld [vmem:[%s0 + $0xb60] sm:$0xff]
  %v256 = vld [vmem:[%s0 + $0xb68] sm:$0xff]
  %v257 = vld [vmem:[%s0 + $0xb70] sm:$0xff]
  %v258 = vld [vmem:[%s0 + $0xb78] sm:$0xff]
  %v259 = vld [vmem:[%s0 + $0xb80] sm:$0xff]
  %v260 = vld [vmem:[%s0 + $0xb88] sm:$0xff]
  %v261 = vld [vmem:[%s0 + $0xb90] sm:$0xff]
  %v262 = vld [vmem:[%s0 + $0xb98] sm:$0xff]
  %v263 = vld [vmem:[%s0 + $0xba0] sm:$0xff]
  %v264 = vld [vmem:[%s0 + $0xba8] sm:$0xff]
  %v265 = vld [vmem:[%s0 + $0xbb0] sm:$0xff]
  %v266 = vld [vmem:[%s0 + $0xbb8] sm:$0xff]
  %v267 = vld [vmem:[%s0 + $0xbc0] sm:$0xff]
  %v268 = vld [vmem:[%s0 + $0xbc8] sm:$0xff]
  %v269 = vld [vmem:[%s0 + $0xbd0] sm:$0xff]
  %v270 = vld [vmem:[%s0 + $0xbd8] sm:$0xff]
  %v271 = vld [vmem:[%s0 + $0xbe0] sm:$0xff]
  %v272 = vld [vmem:[%s0 + $0xbe8] sm:$0xff]
  %v273 = vld [vmem:[%s0 + $0xbf0] sm:$0xff]
  %v274 = vld [vmem:[%s0 + $0xbf8] sm:$0xff]
  %v275 = vld [vmem:[%s0 + $0xc00] sm:$0xff]
  %v276 = vld [vmem:[%s0 + $0xc08] sm:$0xff]
  %v277 = vld [vmem:[%s0 + $0xc10] sm:$0xff]
  %v278 = vld [vmem:[%s0 + $0xc18] sm:$0xff]
  %v279 = vld [vmem:[%s0 + $0xc20] sm:$0xff]
  %v280 = vld [vmem:[%s0 + $0xc28] sm:$0xff]
  %v281 = vld [vmem:[%s0 + $0xc30] sm:$0xff]
  %v282 = vld [vmem:[%s0 + $0xc38] sm:$0xff]
  %v283 = vld [vmem:[%s0 + $0xc40] sm:$0xff]
  %v284 = vld [vmem:[%s0 + $0xc48] sm:$0xff]
  %v285 = vld [vmem:[%s0 + $0xc50] sm:$0xff]
  %v286 = vld [vmem:[%s0 + $0xc58] sm:$0xff]
  %v287 = vld [vmem:[%s0 + $0xc60] sm:$0xff]
  %v288 = vld [vmem:[%s0 + $0xc68] sm:$0xff]
  %v289 = vld [vmem:[%s0 + $0xc70] sm:$0xff]
  %v290 = vld [vmem:[%s0 + $0xc78] sm:$0xff]
  %v291 = vld [vmem:[%s0 + $0xc80] sm:$0xff]
  %v292 = vld [vmem:[%s0 + $0xc88] sm:$0xff]
  %v293 = vld [vmem:[%s0 + $0xc90] sm:$0xff]
  %v294 = vld [vmem:[%s0 + $0xc98] sm:$0xff]
  %v295 = vld [vmem:[%s0 + $0xca0] sm:$0xff]
  %v296 = vld [vmem:[%s0 + $0xca8] sm:$0xff]
  %v297 = vld [vmem:[%s0 + $0xcb0] sm:$0xff]
  %v298 = vld [vmem:[%s0 + $0xcb8] sm:$0xff]
  %v299 = vld [vmem:[%s0 + $0xcc0] sm:$0xff]
  %v300 = vld [vmem:[%s0 + $0xcc8] sm:$0xff]
  %v301 = vld [vmem:[%s0 + $0xcd0] sm:$0xff]
  %v302 = vld [vmem:[%s0 + $0xcd8] sm:$0xff]
  %v303 = vld [vmem:[%s0 + $0xce0] sm:$0xff]
  %v304 = vld [vmem:[%s0 + $0xce8] sm:$0xff]
  %v305 = vld [vmem:[%s0 + $0xcf0] sm:$0xff]
  %v306 = vld [vmem:[%s0 + $0xcf8] sm:$0xff]
  %v307 = vld [vmem:[%s0 + $0xd00] sm:$0xff]
  %v308 = vld [vmem:[%s0 + $0xd08] sm:$0xff]
  %v309 = vld [vmem:[%s0 + $0xd10] sm:$0xff]
  %v310 = vld [vmem:[%s0 + $0xd18] sm:$0xff]
  %v311 = vld [vmem:[%s0 + $0xd20] sm:$0xff]
  %v312 = vld [vmem:[%s0 + $0xd28] sm:$0xff]
  %v313 = vld [vmem:[%s0 + $0xd30] sm:$0xff]
  %v314 = vld [vmem:[%s0 + $0xd38] sm:$0xff]
  %v315 = vld [vmem:[%s0 + $0xd40] sm:$0xff]
  %v316 = vld [vmem:[%s0 + $0xd48] sm:$0xff]
  %v317 = vld [vmem:[%s0 + $0xd50] sm:$0xff]
  %v318 = vld [vmem:[%s0 + $0xd58] sm:$0xff]
  %v319 = vld [vmem:[%s0 + $0xd60] sm:$0xff]
  %v320 = vld [vmem:[%s0 + $0xd68] sm:$0xff]
  %v321 = vld [vmem:[%s0 + $0xd70] sm:$0xff]
  %v322 = vld [vmem:[%s0 + $0xd78] sm:$0xff]
  %v323 = vld [vmem:[%s0 + $0xd80] sm:$0xff]
  %v324 = vld [vmem:[%s0 + $0xd88] sm:$0xff]
  %v325 = vld [vmem:[%s0 + $0xd90] sm:$0xff]
  %v326 = vld [vmem:[%s0 + $0xd98] sm:$0xff]
  %v327 = vld [vmem:[%s0 + $0xda0] sm:$0xff]
  %v328 = vld [vmem:[%s0 + $0xda8] sm:$0xff]
  %v329 = vld [vmem:[%s0 + $0xdb0] sm:$0xff]
  %v330 = vld [vmem:[%s0 + $0xdb8] sm:$0xff]
  %v331 = vld [vmem:[%s0 + $0xdc0] sm:$0xff]
  %v332 = vld [vmem:[%s0 + $0xdc8] sm:$0xff]
  %v333 = vld [vmem:[%s0 + $0xdd0] sm:$0xff]
  %v334 = vld [vmem:[%s0 + $0xdd8] sm:$0xff]
  %v335 = vld [vmem:[%s0 + $0xde0] sm:$0xff]
  %v336 = vld [vmem:[%s0 + $0xde8] sm:$0xff]
  %v337 = vld [vmem:[%s0 + $0xdf0] sm:$0xff]
  %v338 = vld [vmem:[%s0 + $0xdf8] sm:$0xff]
  %v339 = vld [vmem:[%s0 + $0xe00] sm:$0xff]
  %v340 = vld [vmem:[%s0 + $0xe08] sm:$0xff]
  %v341 = vld [vmem:[%s0 + $0xe10] sm:$0xff]
  %v342 = vld [vmem:[%s0 + $0xe18] sm:$0xff]
  %v343 = vld [vmem:[%s0 + $0xe20] sm:$0xff]
  %v344 = vld [vmem:[%s0 + $0xe28] sm:$0xff]
  %v345 = vld [vmem:[%s0 + $0xe30] sm:$0xff]
  %v346 = vld [vmem:[%s0 + $0xe38] sm:$0xff]
  %v347 = vld [vmem:[%s0 + $0xe40] sm:$0xff]
  %v348 = vld [vmem:[%s0 + $0xe48] sm:$0xff]
  %v349 = vld [vmem:[%s0 + $0xe50] sm:$0xff]
  %v350 = vld [vmem:[%s0 + $0xe58] sm:$0xff]
  %v351 = vld [vmem:[%s0 + $0xe60] sm:$0xff]
  %v352 = vld [vmem:[%s0 + $0xe68] sm:$0xff]
  %v353 = vld [vmem:[%s0 + $0xe70] sm:$0xff]
  %v354 = vld [vmem:[%s0 + $0xe78] sm:$0xff]
  %v355 = vld [vmem:[%s0 + $0xe80] sm:$0xff]
  %v356 = vld [vmem:[%s0 + $0xe88] sm:$0xff]
  %v357 = vld [vmem:[%s0 + $0xe90] sm:$0xff]
  %v358 = vld [vmem:[%s0 + $0xe98] sm:$0xff]
  %v359 = vld [vmem:[%s0 + $0xea0] sm:$0xff]
  %v360 = vld [vmem:[%s0 + $0xea8] sm:$0xff]
  %v361 = vld [vmem:[%s0 + $0xeb0] sm:$0xff]
  %v362 = vld [vmem:[%s0 + $0xeb8] sm:$0xff]
  %v363 = vld [vmem:[%s0 + $0xec0] sm:$0xff]
  %v364 = vld [vmem:[%s0 + $0xec8] sm:$0xff]
  %v365 = vld [vmem:[%s0 + $0xed0] sm:$0xff]
  %v366 = vld [vmem:[%s0 + $0xed8] sm:$0xff]
  %v367 = vld [vmem:[%s0 + $0xee0] sm:$0xff]
  %v368 = vld [vmem:[%s0 + $0xee8] sm:$0xff]
  %v369 = vld [vmem:[%s0 + $0xef0] sm:$0xff]
  %v370 = vld [vmem:[%s0 + $0xef8] sm:$0xff]
  %v371 = vld [vmem:[%s0 + $0xf00] sm:$0xff]
  %v372 = vld [vmem:[%s0 + $0xf08] sm:$0xff]
  %v373 = vld [vmem:[%s0 + $0xf10] sm:$0xff]
  %v374 = vld [vmem:[%s0 + $0xf18] sm:$0xff]
  %v375 = vld [vmem:[%s0 + $0xf20] sm:$0xff]
  %v376 = vld [vmem:[%s0 + $0xf28] sm:$0xff]
  %v377 = vld [vmem:[%s0 + $0xf30] sm:$0xff]
  %v378 = vld [vmem:[%s0 + $0xf38] sm:$0xff]
  %v379 = vld [vmem:[%s0 + $0xf40] sm:$0xff]
  %v380 = vld [vmem:[%s0 + $0xf48] sm:$0xff]
  %v381 = vld [vmem:[%s0 + $0xf50] sm:$0xff]
  %v382 = vld [vmem:[%s0 + $0xf58] sm:$0xff]
  %v383 = vld [vmem:[%s0 + $0xf60] sm:$0xff]
  %v384 = vld [vmem:[%s0 + $0xf68] sm:$0xff]
  %v385 = vld [vmem:[%s0 + $0xf70] sm:$0xff]
  %v386 = vld [vmem:[%s0 + $0xf78] sm:$0xff]
  %v387 = vld [vmem:[%s0 + $0xf80] sm:$0xff]
  %v388 = vld [vmem:[%s0 + $0xf88] sm:$0xff]
  %v389 = vld [vmem:[%s0 + $0xf90] sm:$0xff]
  %v390 = vld [vmem:[%s0 + $0xf98] sm:$0xff]
  %v391 = vld [vmem:[%s0 + $0xfa0] sm:$0xff]
  %v392 = vld [vmem:[%s0 + $0xfa8] sm:$0xff]
  %v393 = vld [vmem:[%s0 + $0xfb0] sm:$0xff]
  %v394 = vld [vmem:[%s0 + $0xfb8] sm:$0xff]
  %v395 = vld [vmem:[%s0 + $0xfc0] sm:$0xff]
  %v396 = vld [vmem:[%s0 + $0xfc8] sm:$0xff]
  %v397 = vld [vmem:[%s0 + $0xfd0] sm:$0xff]
  %v398 = vld [vmem:[%s0 + $0xfd8] sm:$0xff]
  %v399 = vld [vmem:[%s0 + $0xfe0] sm:$0xff]
  %v400 = vld [vmem:[%s0 + $0xfe8] sm:$0xff]
  %v401 = vld [vmem:[%s0 + $0xff0] sm:$0xff]
  %v402 = vld [vmem:[%s0 + $0xff8] sm:$0xff]
  %v403 = vadd.f32 %v19, %v147
  %v404 = vadd.f32 %v20, %v148
  %v405 = vadd.f32 %v21, %v149
  %v406 = vadd.f32 %v22, %v150
  %v407 = vadd.f32 %v23, %v151
  %v408 = vadd.f32 %v24, %v152
  %v409 = vadd.f32 %v25, %v153
  %v410 = vadd.f32 %v26, %v154
  %v411 = vadd.f32 %v27, %v155
  %v412 = vadd.f32 %v28, %v156
  %v413 = vadd.f32 %v29, %v157
  %v414 = vadd.f32 %v30, %v158
  %v415 = vadd.f32 %v31, %v159
  %v416 = vadd.f32 %v32, %v160
  %v417 = vadd.f32 %v33, %v161
  %v418 = vadd.f32 %v34, %v162
  %v419 = vadd.f32 %v35, %v163
  %v420 = vadd.f32 %v36, %v164
  %v421 = vadd.f32 %v37, %v165
  %v422 = vadd.f32 %v38, %v166
  %v423 = vadd.f32 %v39, %v167
  %v424 = vadd.f32 %v40, %v168
  %v425 = vadd.f32 %v41, %v169
  %v426 = vadd.f32 %v42, %v170
  %v427 = vadd.f32 %v43, %v171
  %v428 = vadd.f32 %v44, %v172
  %v429 = vadd.f32 %v45, %v173
  %v430 = vadd.f32 %v46, %v174
  %v431 = vadd.f32 %v47, %v175
  %v432 = vadd.f32 %v48, %v176
  %v433 = vadd.f32 %v49, %v177
  %v434 = vadd.f32 %v50, %v178
  %v435 = vadd.f32 %v51, %v179
  %v436 = vadd.f32 %v52, %v180
  %v437 = vadd.f32 %v53, %v181
  %v438 = vadd.f32 %v54, %v182
  %v439 = vadd.f32 %v55, %v183
  %v440 = vadd.f32 %v56, %v184
  %v441 = vadd.f32 %v57, %v185
  %v442 = vadd.f32 %v58, %v186
  %v443 = vadd.f32 %v59, %v187
  %v444 = vadd.f32 %v60, %v188
  %v445 = vadd.f32 %v61, %v189
  %v446 = vadd.f32 %v62, %v190
  %v447 = vadd.f32 %v63, %v191
  %v448 = vadd.f32 %v64, %v192
  %v449 = vadd.f32 %v65, %v193
  %v450 = vadd.f32 %v66, %v194
  %v451 = vadd.f32 %v67, %v195
  %v452 = vadd.f32 %v68, %v196
  %v453 = vadd.f32 %v69, %v197
  %v454 = vadd.f32 %v70, %v198
  %v455 = vadd.f32 %v71, %v199
  %v456 = vadd.f32 %v72, %v200
  %v457 = vadd.f32 %v73, %v201
  %v458 = vadd.f32 %v74, %v202
  %v459 = vadd.f32 %v75, %v203
  %v460 = vadd.f32 %v76, %v204
  %v461 = vadd.f32 %v77, %v205
  %v462 = vadd.f32 %v78, %v206
  %v463 = vadd.f32 %v79, %v207
  %v464 = vadd.f32 %v80, %v208
  %v465 = vadd.f32 %v81, %v209
  %v466 = vadd.f32 %v82, %v210
  %v467 = vadd.f32 %v83, %v211
  %v468 = vadd.f32 %v84, %v212
  %v469 = vadd.f32 %v85, %v213
  %v470 = vadd.f32 %v86, %v214
  %v471 = vadd.f32 %v87, %v215
  %v472 = vadd.f32 %v88, %v216
  %v473 = vadd.f32 %v89, %v217
  %v474 = vadd.f32 %v90, %v218
  %v475 = vadd.f32 %v91, %v219
  %v476 = vadd.f32 %v92, %v220
  %v477 = vadd.f32 %v93, %v221
  %v478 = vadd.f32 %v94, %v222
  %v479 = vadd.f32 %v95, %v223
  %v480 = vadd.f32 %v96, %v224
  %v481 = vadd.f32 %v97, %v225
  %v482 = vadd.f32 %v98, %v226
  %v483 = vadd.f32 %v99, %v227
  %v484 = vadd.f32 %v100, %v228
  %v485 = vadd.f32 %v101, %v229
  %v486 = vadd.f32 %v102, %v230
  %v487 = vadd.f32 %v103, %v231
  %v488 = vadd.f32 %v104, %v232
  %v489 = vadd.f32 %v105, %v233
  %v490 = vadd.f32 %v106, %v234
  %v491 = vadd.f32 %v107, %v235
  %v492 = vadd.f32 %v108, %v236
  %v493 = vadd.f32 %v109, %v237
  %v494 = vadd.f32 %v110, %v238
  %v495 = vadd.f32 %v111, %v239
  %v496 = vadd.f32 %v112, %v240
  %v497 = vadd.f32 %v113, %v241
  %v498 = vadd.f32 %v114, %v242
  %v499 = vadd.f32 %v115, %v243
  %v500 = vadd.f32 %v116, %v244
  %v501 = vadd.f32 %v117, %v245
  %v502 = vadd.f32 %v118, %v246
  %v503 = vadd.f32 %v119, %v247
  %v504 = vadd.f32 %v120, %v248
  %v505 = vadd.f32 %v121, %v249
  %v506 = vadd.f32 %v122, %v250
  %v507 = vadd.f32 %v123, %v251
  %v508 = vadd.f32 %v124, %v252
  %v509 = vadd.f32 %v125, %v253
  %v510 = vadd.f32 %v126, %v254
  %v511 = vadd.f32 %v127, %v255
  %v512 = vadd.f32 %v128, %v256
  %v513 = vadd.f32 %v129, %v257
  %v514 = vadd.f32 %v130, %v258
  %v515 = vadd.f32 %v131, %v259
  %v516 = vadd.f32 %v132, %v260
  %v517 = vadd.f32 %v133, %v261
  %v518 = vadd.f32 %v134, %v262
  %v519 = vadd.f32 %v135, %v263
  %v520 = vadd.f32 %v136, %v264
  %v521 = vadd.f32 %v137, %v265
  %v522 = vadd.f32 %v138, %v266
  %v523 = vadd.f32 %v139, %v267
  %v524 = vadd.f32 %v140, %v268
  %v525 = vadd.f32 %v141, %v269
  %v526 = vadd.f32 %v142, %v270
  %v527 = vadd.f32 %v143, %v271
  %v528 = vadd.f32 %v144, %v272
  %v529 = vadd.f32 %v145, %v273
  %v530 = vadd.f32 %v146, %v274
  %v531 = vadd.f32 %v403, %v275
  %v532 = vadd.f32 %v404, %v276
  %v533 = vadd.f32 %v405, %v277
  %v534 = vadd.f32 %v406, %v278
  %v535 = vadd.f32 %v407, %v279
  %v536 = vadd.f32 %v408, %v280
  %v537 = vadd.f32 %v409, %v281
  %v538 = vadd.f32 %v410, %v282
  %v539 = vadd.f32 %v411, %v283
  %v540 = vadd.f32 %v412, %v284
  %v541 = vadd.f32 %v413, %v285
  %v542 = vadd.f32 %v414, %v286
  %v543 = vadd.f32 %v415, %v287
  %v544 = vadd.f32 %v416, %v288
  %v545 = vadd.f32 %v417, %v289
  %v546 = vadd.f32 %v418, %v290
  %v547 = vadd.f32 %v419, %v291
  %v548 = vadd.f32 %v420, %v292
  %v549 = vadd.f32 %v421, %v293
  %v550 = vadd.f32 %v422, %v294
  %v551 = vadd.f32 %v423, %v295
  %v552 = vadd.f32 %v424, %v296
  %v553 = vadd.f32 %v425, %v297
  %v554 = vadd.f32 %v426, %v298
  %v555 = vadd.f32 %v427, %v299
  %v556 = vadd.f32 %v428, %v300
  %v557 = vadd.f32 %v429, %v301
  %v558 = vadd.f32 %v430, %v302
  %v559 = vadd.f32 %v431, %v303
  %v560 = vadd.f32 %v432, %v304
  %v561 = vadd.f32 %v433, %v305
  %v562 = vadd.f32 %v434, %v306
  %v563 = vadd.f32 %v435, %v307
  %v564 = vadd.f32 %v436, %v308
  %v565 = vadd.f32 %v437, %v309
  %v566 = vadd.f32 %v438, %v310
  %v567 = vadd.f32 %v439, %v311
  %v568 = vadd.f32 %v440, %v312
  %v569 = vadd.f32 %v441, %v313
  %v570 = vadd.f32 %v442, %v314
  %v571 = vadd.f32 %v443, %v315
  %v572 = vadd.f32 %v444, %v316
  %v573 = vadd.f32 %v445, %v317
  %v574 = vadd.f32 %v446, %v318
  %v575 = vadd.f32 %v447, %v319
  %v576 = vadd.f32 %v448, %v320
  %v577 = vadd.f32 %v449, %v321
  %v578 = vadd.f32 %v450, %v322
  %v579 = vadd.f32 %v451, %v323
  %v580 = vadd.f32 %v452, %v324
  %v581 = vadd.f32 %v453, %v325
  %v582 = vadd.f32 %v454, %v326
  %v583 = vadd.f32 %v455, %v327
  %v584 = vadd.f32 %v456, %v328
  %v585 = vadd.f32 %v457, %v329
  %v586 = vadd.f32 %v458, %v330
  %v587 = vadd.f32 %v459, %v331
  %v588 = vadd.f32 %v460, %v332
  %v589 = vadd.f32 %v461, %v333
  %v590 = vadd.f32 %v462, %v334
  %v591 = vadd.f32 %v463, %v335
  %v592 = vadd.f32 %v464, %v336
  %v593 = vadd.f32 %v465, %v337
  %v594 = vadd.f32 %v466, %v338
  %v595 = vadd.f32 %v467, %v339
  %v596 = vadd.f32 %v468, %v340
  %v597 = vadd.f32 %v469, %v341
  %v598 = vadd.f32 %v470, %v342
  %v599 = vadd.f32 %v471, %v343
  %v600 = vadd.f32 %v472, %v344
  %v601 = vadd.f32 %v473, %v345
  %v602 = vadd.f32 %v474, %v346
  %v603 = vadd.f32 %v475, %v347
  %v604 = vadd.f32 %v476, %v348
  %v605 = vadd.f32 %v477, %v349
  %v606 = vadd.f32 %v478, %v350
  %v607 = vadd.f32 %v479, %v351
  %v608 = vadd.f32 %v480, %v352
  %v609 = vadd.f32 %v481, %v353
  %v610 = vadd.f32 %v482, %v354
  %v611 = vadd.f32 %v483, %v355
  %v612 = vadd.f32 %v484, %v356
  %v613 = vadd.f32 %v485, %v357
  %v614 = vadd.f32 %v486, %v358
  %v615 = vadd.f32 %v487, %v359
  %v616 = vadd.f32 %v488, %v360
  %v617 = vadd.f32 %v489, %v361
  %v618 = vadd.f32 %v490, %v362
  %v619 = vadd.f32 %v491, %v363
  %v620 = vadd.f32 %v492, %v364
  %v621 = vadd.f32 %v493, %v365
  %v622 = vadd.f32 %v494, %v366
  %v623 = vadd.f32 %v495, %v367
  %v624 = vadd.f32 %v496, %v368
  %v625 = vadd.f32 %v497, %v369
  %v626 = vadd.f32 %v498, %v370
  %v627 = vadd.f32 %v499, %v371
  %v628 = vadd.f32 %v500, %v372
  %v629 = vadd.f32 %v501, %v373
  %v630 = vadd.f32 %v502, %v374
  %v631 = vadd.f32 %v503, %v375
  %v632 = vadd.f32 %v504, %v376
  %v633 = vadd.f32 %v505, %v377
  %v634 = vadd.f32 %v506, %v378
  %v635 = vadd.f32 %v507, %v379
  %v636 = vadd.f32 %v508, %v380
  %v637 = vadd.f32 %v509, %v381
  %v638 = vadd.f32 %v510, %v382
  %v639 = vadd.f32 %v511, %v383
  %v640 = vadd.f32 %v512, %v384
  %v641 = vadd.f32 %v513, %v385
  %v642 = vadd.f32 %v514, %v386
  %v643 = vadd.f32 %v515, %v387
  %v644 = vadd.f32 %v516, %v388
  %v645 = vadd.f32 %v517, %v389
  %v646 = vadd.f32 %v518, %v390
  %v647 = vadd.f32 %v519, %v391
  %v648 = vadd.f32 %v520, %v392
  %v649 = vadd.f32 %v521, %v393
  %v650 = vadd.f32 %v522, %v394
  %v651 = vadd.f32 %v523, %v395
  %v652 = vadd.f32 %v524, %v396
  %v653 = vadd.f32 %v525, %v397
  %v654 = vadd.f32 %v526, %v398
  %v655 = vadd.f32 %v527, %v399
  %v656 = vadd.f32 %v528, %v400
  %v657 = vadd.f32 %v529, %v401
  %v658 = vadd.f32 %v530, %v402
  %vm659 = vcmask 261120
  %v660 = vsel %vm659, %v531, 0.0
  %v661 = vsel %vm659, %v532, 0.0
  %v662 = vadd.f32 %v660, %v661
  %v663 = vsel %vm659, %v533, 0.0
  %v664 = vadd.f32 %v662, %v663
  %v665 = vsel %vm659, %v534, 0.0
  %v666 = vadd.f32 %v664, %v665
  %v667 = vsel %vm659, %v535, 0.0
  %v668 = vadd.f32 %v666, %v667
  %v669 = vsel %vm659, %v536, 0.0
  %v670 = vadd.f32 %v668, %v669
  %v671 = vsel %vm659, %v537, 0.0
  %v672 = vadd.f32 %v670, %v671
  %v673 = vsel %vm659, %v538, 0.0
  %v674 = vadd.f32 %v672, %v673
  %v675 = vsel %vm659, %v539, 0.0
  %v676 = vadd.f32 %v674, %v675
  %v677 = vsel %vm659, %v540, 0.0
  %v678 = vadd.f32 %v676, %v677
  %v679 = vsel %vm659, %v541, 0.0
  %v680 = vadd.f32 %v678, %v679
  %v681 = vsel %vm659, %v542, 0.0
  %v682 = vadd.f32 %v680, %v681
  %v683 = vsel %vm659, %v543, 0.0
  %v684 = vadd.f32 %v682, %v683
  %v685 = vsel %vm659, %v544, 0.0
  %v686 = vadd.f32 %v684, %v685
  %v687 = vsel %vm659, %v545, 0.0
  %v688 = vadd.f32 %v686, %v687
  %v689 = vsel %vm659, %v546, 0.0
  %v690 = vadd.f32 %v688, %v689
  %v691 = vsel %vm659, %v547, 0.0
  %v692 = vadd.f32 %v690, %v691
  %v693 = vsel %vm659, %v548, 0.0
  %v694 = vadd.f32 %v692, %v693
  %v695 = vsel %vm659, %v549, 0.0
  %v696 = vadd.f32 %v694, %v695
  %v697 = vsel %vm659, %v550, 0.0
  %v698 = vadd.f32 %v696, %v697
  %v699 = vsel %vm659, %v551, 0.0
  %v700 = vadd.f32 %v698, %v699
  %v701 = vsel %vm659, %v552, 0.0
  %v702 = vadd.f32 %v700, %v701
  %v703 = vsel %vm659, %v553, 0.0
  %v704 = vadd.f32 %v702, %v703
  %v705 = vsel %vm659, %v554, 0.0
  %v706 = vadd.f32 %v704, %v705
  %v707 = vsel %vm659, %v555, 0.0
  %v708 = vadd.f32 %v706, %v707
  %v709 = vsel %vm659, %v556, 0.0
  %v710 = vadd.f32 %v708, %v709
  %v711 = vsel %vm659, %v557, 0.0
  %v712 = vadd.f32 %v710, %v711
  %v713 = vsel %vm659, %v558, 0.0
  %v714 = vadd.f32 %v712, %v713
  %v715 = vsel %vm659, %v559, 0.0
  %v716 = vadd.f32 %v714, %v715
  %v717 = vsel %vm659, %v560, 0.0
  %v718 = vadd.f32 %v716, %v717
  %v719 = vsel %vm659, %v561, 0.0
  %v720 = vadd.f32 %v718, %v719
  %v721 = vsel %vm659, %v562, 0.0
  %v722 = vadd.f32 %v720, %v721
  %v723 = vsel %vm659, %v563, 0.0
  %v724 = vadd.f32 %v722, %v723
  %v725 = vsel %vm659, %v564, 0.0
  %v726 = vadd.f32 %v724, %v725
  %v727 = vsel %vm659, %v565, 0.0
  %v728 = vadd.f32 %v726, %v727
  %v729 = vsel %vm659, %v566, 0.0
  %v730 = vadd.f32 %v728, %v729
  %v731 = vsel %vm659, %v567, 0.0
  %v732 = vadd.f32 %v730, %v731
  %v733 = vsel %vm659, %v568, 0.0
  %v734 = vadd.f32 %v732, %v733
  %v735 = vsel %vm659, %v569, 0.0
  %v736 = vadd.f32 %v734, %v735
  %v737 = vsel %vm659, %v570, 0.0
  %v738 = vadd.f32 %v736, %v737
  %v739 = vsel %vm659, %v571, 0.0
  %v740 = vadd.f32 %v738, %v739
  %v741 = vsel %vm659, %v572, 0.0
  %v742 = vadd.f32 %v740, %v741
  %v743 = vsel %vm659, %v573, 0.0
  %v744 = vadd.f32 %v742, %v743
  %v745 = vsel %vm659, %v574, 0.0
  %v746 = vadd.f32 %v744, %v745
  %v747 = vsel %vm659, %v575, 0.0
  %v748 = vadd.f32 %v746, %v747
  %v749 = vsel %vm659, %v576, 0.0
  %v750 = vadd.f32 %v748, %v749
  %v751 = vsel %vm659, %v577, 0.0
  %v752 = vadd.f32 %v750, %v751
  %v753 = vsel %vm659, %v578, 0.0
  %v754 = vadd.f32 %v752, %v753
  %v755 = vsel %vm659, %v579, 0.0
  %v756 = vadd.f32 %v754, %v755
  %v757 = vsel %vm659, %v580, 0.0
  %v758 = vadd.f32 %v756, %v757
  %v759 = vsel %vm659, %v581, 0.0
  %v760 = vadd.f32 %v758, %v759
  %v761 = vsel %vm659, %v582, 0.0
  %v762 = vadd.f32 %v760, %v761
  %v763 = vsel %vm659, %v583, 0.0
  %v764 = vadd.f32 %v762, %v763
  %v765 = vsel %vm659, %v584, 0.0
  %v766 = vadd.f32 %v764, %v765
  %v767 = vsel %vm659, %v585, 0.0
  %v768 = vadd.f32 %v766, %v767
  %v769 = vsel %vm659, %v586, 0.0
  %v770 = vadd.f32 %v768, %v769
  %v771 = vsel %vm659, %v587, 0.0
  %v772 = vadd.f32 %v770, %v771
  %v773 = vsel %vm659, %v588, 0.0
  %v774 = vadd.f32 %v772, %v773
  %v775 = vsel %vm659, %v589, 0.0
  %v776 = vadd.f32 %v774, %v775
  %v777 = vsel %vm659, %v590, 0.0
  %v778 = vadd.f32 %v776, %v777
  %v779 = vsel %vm659, %v591, 0.0
  %v780 = vadd.f32 %v778, %v779
  %v781 = vsel %vm659, %v592, 0.0
  %v782 = vadd.f32 %v780, %v781
  %v783 = vsel %vm659, %v593, 0.0
  %v784 = vadd.f32 %v782, %v783
  %v785 = vsel %vm659, %v594, 0.0
  %v786 = vadd.f32 %v784, %v785
  %v787 = vsel %vm659, %v595, 0.0
  %v788 = vadd.f32 %v786, %v787
  %v789 = vsel %vm659, %v596, 0.0
  %v790 = vadd.f32 %v788, %v789
  %v791 = vsel %vm659, %v597, 0.0
  %v792 = vadd.f32 %v790, %v791
  %v793 = vsel %vm659, %v598, 0.0
  %v794 = vadd.f32 %v792, %v793
  %v795 = vsel %vm659, %v599, 0.0
  %v796 = vadd.f32 %v794, %v795
  %v797 = vsel %vm659, %v600, 0.0
  %v798 = vadd.f32 %v796, %v797
  %v799 = vsel %vm659, %v601, 0.0
  %v800 = vadd.f32 %v798, %v799
  %v801 = vsel %vm659, %v602, 0.0
  %v802 = vadd.f32 %v800, %v801
  %v803 = vsel %vm659, %v603, 0.0
  %v804 = vadd.f32 %v802, %v803
  %v805 = vsel %vm659, %v604, 0.0
  %v806 = vadd.f32 %v804, %v805
  %v807 = vsel %vm659, %v605, 0.0
  %v808 = vadd.f32 %v806, %v807
  %v809 = vsel %vm659, %v606, 0.0
  %v810 = vadd.f32 %v808, %v809
  %v811 = vsel %vm659, %v607, 0.0
  %v812 = vadd.f32 %v810, %v811
  %v813 = vsel %vm659, %v608, 0.0
  %v814 = vadd.f32 %v812, %v813
  %v815 = vsel %vm659, %v609, 0.0
  %v816 = vadd.f32 %v814, %v815
  %v817 = vsel %vm659, %v610, 0.0
  %v818 = vadd.f32 %v816, %v817
  %v819 = vsel %vm659, %v611, 0.0
  %v820 = vadd.f32 %v818, %v819
  %v821 = vsel %vm659, %v612, 0.0
  %v822 = vadd.f32 %v820, %v821
  %v823 = vsel %vm659, %v613, 0.0
  %v824 = vadd.f32 %v822, %v823
  %v825 = vsel %vm659, %v614, 0.0
  %v826 = vadd.f32 %v824, %v825
  %v827 = vsel %vm659, %v615, 0.0
  %v828 = vadd.f32 %v826, %v827
  %v829 = vsel %vm659, %v616, 0.0
  %v830 = vadd.f32 %v828, %v829
  %v831 = vsel %vm659, %v617, 0.0
  %v832 = vadd.f32 %v830, %v831
  %v833 = vsel %vm659, %v618, 0.0
  %v834 = vadd.f32 %v832, %v833
  %v835 = vsel %vm659, %v619, 0.0
  %v836 = vadd.f32 %v834, %v835
  %v837 = vsel %vm659, %v620, 0.0
  %v838 = vadd.f32 %v836, %v837
  %v839 = vsel %vm659, %v621, 0.0
  %v840 = vadd.f32 %v838, %v839
  %v841 = vsel %vm659, %v622, 0.0
  %v842 = vadd.f32 %v840, %v841
  %v843 = vsel %vm659, %v623, 0.0
  %v844 = vadd.f32 %v842, %v843
  %v845 = vsel %vm659, %v624, 0.0
  %v846 = vadd.f32 %v844, %v845
  %v847 = vsel %vm659, %v625, 0.0
  %v848 = vadd.f32 %v846, %v847
  %v849 = vsel %vm659, %v626, 0.0
  %v850 = vadd.f32 %v848, %v849
  %v851 = vsel %vm659, %v627, 0.0
  %v852 = vadd.f32 %v850, %v851
  %v853 = vsel %vm659, %v628, 0.0
  %v854 = vadd.f32 %v852, %v853
  %v855 = vsel %vm659, %v629, 0.0
  %v856 = vadd.f32 %v854, %v855
  %v857 = vsel %vm659, %v630, 0.0
  %v858 = vadd.f32 %v856, %v857
  %v859 = vsel %vm659, %v631, 0.0
  %v860 = vadd.f32 %v858, %v859
  %v861 = vsel %vm659, %v632, 0.0
  %v862 = vadd.f32 %v860, %v861
  %v863 = vsel %vm659, %v633, 0.0
  %v864 = vadd.f32 %v862, %v863
  %v865 = vsel %vm659, %v634, 0.0
  %v866 = vadd.f32 %v864, %v865
  %v867 = vsel %vm659, %v635, 0.0
  %v868 = vadd.f32 %v866, %v867
  %v869 = vsel %vm659, %v636, 0.0
  %v870 = vadd.f32 %v868, %v869
  %v871 = vsel %vm659, %v637, 0.0
  %v872 = vadd.f32 %v870, %v871
  %v873 = vsel %vm659, %v638, 0.0
  %v874 = vadd.f32 %v872, %v873
  %v875 = vsel %vm659, %v639, 0.0
  %v876 = vadd.f32 %v874, %v875
  %v877 = vsel %vm659, %v640, 0.0
  %v878 = vadd.f32 %v876, %v877
  %v879 = vsel %vm659, %v641, 0.0
  %v880 = vadd.f32 %v878, %v879
  %v881 = vsel %vm659, %v642, 0.0
  %v882 = vadd.f32 %v880, %v881
  %v883 = vsel %vm659, %v643, 0.0
  %v884 = vadd.f32 %v882, %v883
  %v885 = vsel %vm659, %v644, 0.0
  %v886 = vadd.f32 %v884, %v885
  %v887 = vsel %vm659, %v645, 0.0
  %v888 = vadd.f32 %v886, %v887
  %v889 = vsel %vm659, %v646, 0.0
  %v890 = vadd.f32 %v888, %v889
  %v891 = vsel %vm659, %v647, 0.0
  %v892 = vadd.f32 %v890, %v891
  %v893 = vsel %vm659, %v648, 0.0
  %v894 = vadd.f32 %v892, %v893
  %v895 = vsel %vm659, %v649, 0.0
  %v896 = vadd.f32 %v894, %v895
  %v897 = vsel %vm659, %v650, 0.0
  %v898 = vadd.f32 %v896, %v897
  %v899 = vsel %vm659, %v651, 0.0
  %v900 = vadd.f32 %v898, %v899
  %v901 = vsel %vm659, %v652, 0.0
  %v902 = vadd.f32 %v900, %v901
  %v903 = vsel %vm659, %v653, 0.0
  %v904 = vadd.f32 %v902, %v903
  %v905 = vsel %vm659, %v654, 0.0
  %v906 = vadd.f32 %v904, %v905
  %v907 = vsel %vm659, %v655, 0.0
  %v908 = vadd.f32 %v906, %v907
  %v909 = vsel %vm659, %v656, 0.0
  %v910 = vadd.f32 %v908, %v909
  %v911 = vsel %vm659, %v657, 0.0
  %v912 = vadd.f32 %v910, %v911
  %v913 = vsel %vm659, %v658, 0.0
  %v914 = vadd.f32 %v912, %v913
  %915 = vadd.xlane.f32.xlu0 %v914
  %v916 = vpop.xlane.xlu0 %915
  %v917 = vrot.slane %v916, 4
  %v918 = vadd.f32 %v916, %v917
  %v919 = vrot.slane %v918, 2
  %v920 = vadd.f32 %v918, %v919
  %v921 = vrot.slane %v920, 1
  %v922 = vadd.f32 %v920, %v921
  %s923 = vtos %v922
  %v924 = vmul.f32 %v19, %v19
  %v925 = vmul.f32 %v20, %v20
  %v926 = vmul.f32 %v21, %v21
  %v927 = vmul.f32 %v22, %v22
  %v928 = vmul.f32 %v23, %v23
  %v929 = vmul.f32 %v24, %v24
  %v930 = vmul.f32 %v25, %v25
  %v931 = vmul.f32 %v26, %v26
  %v932 = vmul.f32 %v27, %v27
  %v933 = vmul.f32 %v28, %v28
  %v934 = vmul.f32 %v29, %v29
  %v935 = vmul.f32 %v30, %v30
  %v936 = vmul.f32 %v31, %v31
  %v937 = vmul.f32 %v32, %v32
  %v938 = vmul.f32 %v33, %v33
  %v939 = vmul.f32 %v34, %v34
  %v940 = vmul.f32 %v35, %v35
  %v941 = vmul.f32 %v36, %v36
  %v942 = vmul.f32 %v37, %v37
  %v943 = vmul.f32 %v38, %v38
  %v944 = vmul.f32 %v39, %v39
  %v945 = vmul.f32 %v40, %v40
  %v946 = vmul.f32 %v41, %v41
  %v947 = vmul.f32 %v42, %v42
  %v948 = vmul.f32 %v43, %v43
  %v949 = vmul.f32 %v44, %v44
  %v950 = vmul.f32 %v45, %v45
  %v951 = vmul.f32 %v46, %v46
  %v952 = vmul.f32 %v47, %v47
  %v953 = vmul.f32 %v48, %v48
  %v954 = vmul.f32 %v49, %v49
  %v955 = vmul.f32 %v50, %v50
  %v956 = vmul.f32 %v51, %v51
  %v957 = vmul.f32 %v52, %v52
  %v958 = vmul.f32 %v53, %v53
  %v959 = vmul.f32 %v54, %v54
  %v960 = vmul.f32 %v55, %v55
  %v961 = vmul.f32 %v56, %v56
  %v962 = vmul.f32 %v57, %v57
  %v963 = vmul.f32 %v58, %v58
  %v964 = vmul.f32 %v59, %v59
  %v965 = vmul.f32 %v60, %v60
  %v966 = vmul.f32 %v61, %v61
  %v967 = vmul.f32 %v62, %v62
  %v968 = vmul.f32 %v63, %v63
  %v969 = vmul.f32 %v64, %v64
  %v970 = vmul.f32 %v65, %v65
  %v971 = vmul.f32 %v66, %v66
  %v972 = vmul.f32 %v67, %v67
  %v973 = vmul.f32 %v68, %v68
  %v974 = vmul.f32 %v69, %v69
  %v975 = vmul.f32 %v70, %v70
  %v976 = vmul.f32 %v71, %v71
  %v977 = vmul.f32 %v72, %v72
  %v978 = vmul.f32 %v73, %v73
  %v979 = vmul.f32 %v74, %v74
  %v980 = vmul.f32 %v75, %v75
  %v981 = vmul.f32 %v76, %v76
  %v982 = vmul.f32 %v77, %v77
  %v983 = vmul.f32 %v78, %v78
  %v984 = vmul.f32 %v79, %v79
  %v985 = vmul.f32 %v80, %v80
  %v986 = vmul.f32 %v81, %v81
  %v987 = vmul.f32 %v82, %v82
  %v988 = vmul.f32 %v83, %v83
  %v989 = vmul.f32 %v84, %v84
  %v990 = vmul.f32 %v85, %v85
  %v991 = vmul.f32 %v86, %v86
  %v992 = vmul.f32 %v87, %v87
  %v993 = vmul.f32 %v88, %v88
  %v994 = vmul.f32 %v89, %v89
  %v995 = vmul.f32 %v90, %v90
  %v996 = vmul.f32 %v91, %v91
  %v997 = vmul.f32 %v92, %v92
  %v998 = vmul.f32 %v93, %v93
  %v999 = vmul.f32 %v94, %v94
  %v1000 = vmul.f32 %v95, %v95
  %v1001 = vmul.f32 %v96, %v96
  %v1002 = vmul.f32 %v97, %v97
  %v1003 = vmul.f32 %v98, %v98
  %v1004 = vmul.f32 %v99, %v99
  %v1005 = vmul.f32 %v100, %v100
  %v1006 = vmul.f32 %v101, %v101
  %v1007 = vmul.f32 %v102, %v102
  %v1008 = vmul.f32 %v103, %v103
  %v1009 = vmul.f32 %v104, %v104
  %v1010 = vmul.f32 %v105, %v105
  %v1011 = vmul.f32 %v106, %v106
  %v1012 = vmul.f32 %v107, %v107
  %v1013 = vmul.f32 %v108, %v108
  %v1014 = vmul.f32 %v109, %v109
  %v1015 = vmul.f32 %v110, %v110
  %v1016 = vmul.f32 %v111, %v111
  %v1017 = vmul.f32 %v112, %v112
  %v1018 = vmul.f32 %v113, %v113
  %v1019 = vmul.f32 %v114, %v114
  %v1020 = vmul.f32 %v115, %v115
  %v1021 = vmul.f32 %v116, %v116
  %v1022 = vmul.f32 %v117, %v117
  %v1023 = vmul.f32 %v118, %v118
  %v1024 = vmul.f32 %v119, %v119
  %v1025 = vmul.f32 %v120, %v120
  %v1026 = vmul.f32 %v121, %v121
  %v1027 = vmul.f32 %v122, %v122
  %v1028 = vmul.f32 %v123, %v123
  %v1029 = vmul.f32 %v124, %v124
  %v1030 = vmul.f32 %v125, %v125
  %v1031 = vmul.f32 %v126, %v126
  %v1032 = vmul.f32 %v127, %v127
  %v1033 = vmul.f32 %v128, %v128
  %v1034 = vmul.f32 %v129, %v129
  %v1035 = vmul.f32 %v130, %v130
  %v1036 = vmul.f32 %v131, %v131
  %v1037 = vmul.f32 %v132, %v132
  %v1038 = vmul.f32 %v133, %v133
  %v1039 = vmul.f32 %v134, %v134
  %v1040 = vmul.f32 %v135, %v135
  %v1041 = vmul.f32 %v136, %v136
  %v1042 = vmul.f32 %v137, %v137
  %v1043 = vmul.f32 %v138, %v138
  %v1044 = vmul.f32 %v139, %v139
  %v1045 = vmul.f32 %v140, %v140
  %v1046 = vmul.f32 %v141, %v141
  %v1047 = vmul.f32 %v142, %v142
  %v1048 = vmul.f32 %v143, %v143
  %v1049 = vmul.f32 %v144, %v144
  %v1050 = vmul.f32 %v145, %v145
  %v1051 = vmul.f32 %v146, %v146
  %v1052 = vsel %vm659, %v924, 0.0
  %v1053 = vsel %vm659, %v925, 0.0
  %v1054 = vadd.f32 %v1052, %v1053
  %v1055 = vsel %vm659, %v926, 0.0
  %v1056 = vadd.f32 %v1054, %v1055
  %v1057 = vsel %vm659, %v927, 0.0
  %v1058 = vadd.f32 %v1056, %v1057
  %v1059 = vsel %vm659, %v928, 0.0
  %v1060 = vadd.f32 %v1058, %v1059
  %v1061 = vsel %vm659, %v929, 0.0
  %v1062 = vadd.f32 %v1060, %v1061
  %v1063 = vsel %vm659, %v930, 0.0
  %v1064 = vadd.f32 %v1062, %v1063
  %v1065 = vsel %vm659, %v931, 0.0
  %v1066 = vadd.f32 %v1064, %v1065
  %v1067 = vsel %vm659, %v932, 0.0
  %v1068 = vadd.f32 %v1066, %v1067
  %v1069 = vsel %vm659, %v933, 0.0
  %v1070 = vadd.f32 %v1068, %v1069
  %v1071 = vsel %vm659, %v934, 0.0
  %v1072 = vadd.f32 %v1070, %v1071
  %v1073 = vsel %vm659, %v935, 0.0
  %v1074 = vadd.f32 %v1072, %v1073
  %v1075 = vsel %vm659, %v936, 0.0
  %v1076 = vadd.f32 %v1074, %v1075
  %v1077 = vsel %vm659, %v937, 0.0
  %v1078 = vadd.f32 %v1076, %v1077
  %v1079 = vsel %vm659, %v938, 0.0
  %v1080 = vadd.f32 %v1078, %v1079
  %v1081 = vsel %vm659, %v939, 0.0
  %v1082 = vadd.f32 %v1080, %v1081
  %v1083 = vsel %vm659, %v940, 0.0
  %v1084 = vadd.f32 %v1082, %v1083
  %v1085 = vsel %vm659, %v941, 0.0
  %v1086 = vadd.f32 %v1084, %v1085
  %v1087 = vsel %vm659, %v942, 0.0
  %v1088 = vadd.f32 %v1086, %v1087
  %v1089 = vsel %vm659, %v943, 0.0
  %v1090 = vadd.f32 %v1088, %v1089
  %v1091 = vsel %vm659, %v944, 0.0
  %v1092 = vadd.f32 %v1090, %v1091
  %v1093 = vsel %vm659, %v945, 0.0
  %v1094 = vadd.f32 %v1092, %v1093
  %v1095 = vsel %vm659, %v946, 0.0
  %v1096 = vadd.f32 %v1094, %v1095
  %v1097 = vsel %vm659, %v947, 0.0
  %v1098 = vadd.f32 %v1096, %v1097
  %v1099 = vsel %vm659, %v948, 0.0
  %v1100 = vadd.f32 %v1098, %v1099
  %v1101 = vsel %vm659, %v949, 0.0
  %v1102 = vadd.f32 %v1100, %v1101
  %v1103 = vsel %vm659, %v950, 0.0
  %v1104 = vadd.f32 %v1102, %v1103
  %v1105 = vsel %vm659, %v951, 0.0
  %v1106 = vadd.f32 %v1104, %v1105
  %v1107 = vsel %vm659, %v952, 0.0
  %v1108 = vadd.f32 %v1106, %v1107
  %v1109 = vsel %vm659, %v953, 0.0
  %v1110 = vadd.f32 %v1108, %v1109
  %v1111 = vsel %vm659, %v954, 0.0
  %v1112 = vadd.f32 %v1110, %v1111
  %v1113 = vsel %vm659, %v955, 0.0
  %v1114 = vadd.f32 %v1112, %v1113
  %v1115 = vsel %vm659, %v956, 0.0
  %v1116 = vadd.f32 %v1114, %v1115
  %v1117 = vsel %vm659, %v957, 0.0
  %v1118 = vadd.f32 %v1116, %v1117
  %v1119 = vsel %vm659, %v958, 0.0
  %v1120 = vadd.f32 %v1118, %v1119
  %v1121 = vsel %vm659, %v959, 0.0
  %v1122 = vadd.f32 %v1120, %v1121
  %v1123 = vsel %vm659, %v960, 0.0
  %v1124 = vadd.f32 %v1122, %v1123
  %v1125 = vsel %vm659, %v961, 0.0
  %v1126 = vadd.f32 %v1124, %v1125
  %v1127 = vsel %vm659, %v962, 0.0
  %v1128 = vadd.f32 %v1126, %v1127
  %v1129 = vsel %vm659, %v963, 0.0
  %v1130 = vadd.f32 %v1128, %v1129
  %v1131 = vsel %vm659, %v964, 0.0
  %v1132 = vadd.f32 %v1130, %v1131
  %v1133 = vsel %vm659, %v965, 0.0
  %v1134 = vadd.f32 %v1132, %v1133
  %v1135 = vsel %vm659, %v966, 0.0
  %v1136 = vadd.f32 %v1134, %v1135
  %v1137 = vsel %vm659, %v967, 0.0
  %v1138 = vadd.f32 %v1136, %v1137
  %v1139 = vsel %vm659, %v968, 0.0
  %v1140 = vadd.f32 %v1138, %v1139
  %v1141 = vsel %vm659, %v969, 0.0
  %v1142 = vadd.f32 %v1140, %v1141
  %v1143 = vsel %vm659, %v970, 0.0
  %v1144 = vadd.f32 %v1142, %v1143
  %v1145 = vsel %vm659, %v971, 0.0
  %v1146 = vadd.f32 %v1144, %v1145
  %v1147 = vsel %vm659, %v972, 0.0
  %v1148 = vadd.f32 %v1146, %v1147
  %v1149 = vsel %vm659, %v973, 0.0
  %v1150 = vadd.f32 %v1148, %v1149
  %v1151 = vsel %vm659, %v974, 0.0
  %v1152 = vadd.f32 %v1150, %v1151
  %v1153 = vsel %vm659, %v975, 0.0
  %v1154 = vadd.f32 %v1152, %v1153
  %v1155 = vsel %vm659, %v976, 0.0
  %v1156 = vadd.f32 %v1154, %v1155
  %v1157 = vsel %vm659, %v977, 0.0
  %v1158 = vadd.f32 %v1156, %v1157
  %v1159 = vsel %vm659, %v978, 0.0
  %v1160 = vadd.f32 %v1158, %v1159
  %v1161 = vsel %vm659, %v979, 0.0
  %v1162 = vadd.f32 %v1160, %v1161
  %v1163 = vsel %vm659, %v980, 0.0
  %v1164 = vadd.f32 %v1162, %v1163
  %v1165 = vsel %vm659, %v981, 0.0
  %v1166 = vadd.f32 %v1164, %v1165
  %v1167 = vsel %vm659, %v982, 0.0
  %v1168 = vadd.f32 %v1166, %v1167
  %v1169 = vsel %vm659, %v983, 0.0
  %v1170 = vadd.f32 %v1168, %v1169
  %v1171 = vsel %vm659, %v984, 0.0
  %v1172 = vadd.f32 %v1170, %v1171
  %v1173 = vsel %vm659, %v985, 0.0
  %v1174 = vadd.f32 %v1172, %v1173
  %v1175 = vsel %vm659, %v986, 0.0
  %v1176 = vadd.f32 %v1174, %v1175
  %v1177 = vsel %vm659, %v987, 0.0
  %v1178 = vadd.f32 %v1176, %v1177
  %v1179 = vsel %vm659, %v988, 0.0
  %v1180 = vadd.f32 %v1178, %v1179
  %v1181 = vsel %vm659, %v989, 0.0
  %v1182 = vadd.f32 %v1180, %v1181
  %v1183 = vsel %vm659, %v990, 0.0
  %v1184 = vadd.f32 %v1182, %v1183
  %v1185 = vsel %vm659, %v991, 0.0
  %v1186 = vadd.f32 %v1184, %v1185
  %v1187 = vsel %vm659, %v992, 0.0
  %v1188 = vadd.f32 %v1186, %v1187
  %v1189 = vsel %vm659, %v993, 0.0
  %v1190 = vadd.f32 %v1188, %v1189
  %v1191 = vsel %vm659, %v994, 0.0
  %v1192 = vadd.f32 %v1190, %v1191
  %v1193 = vsel %vm659, %v995, 0.0
  %v1194 = vadd.f32 %v1192, %v1193
  %v1195 = vsel %vm659, %v996, 0.0
  %v1196 = vadd.f32 %v1194, %v1195
  %v1197 = vsel %vm659, %v997, 0.0
  %v1198 = vadd.f32 %v1196, %v1197
  %v1199 = vsel %vm659, %v998, 0.0
  %v1200 = vadd.f32 %v1198, %v1199
  %v1201 = vsel %vm659, %v999, 0.0
  %v1202 = vadd.f32 %v1200, %v1201
  %v1203 = vsel %vm659, %v1000, 0.0
  %v1204 = vadd.f32 %v1202, %v1203
  %v1205 = vsel %vm659, %v1001, 0.0
  %v1206 = vadd.f32 %v1204, %v1205
  %v1207 = vsel %vm659, %v1002, 0.0
  %v1208 = vadd.f32 %v1206, %v1207
  %v1209 = vsel %vm659, %v1003, 0.0
  %v1210 = vadd.f32 %v1208, %v1209
  %v1211 = vsel %vm659, %v1004, 0.0
  %v1212 = vadd.f32 %v1210, %v1211
  %v1213 = vsel %vm659, %v1005, 0.0
  %v1214 = vadd.f32 %v1212, %v1213
  %v1215 = vsel %vm659, %v1006, 0.0
  %v1216 = vadd.f32 %v1214, %v1215
  %v1217 = vsel %vm659, %v1007, 0.0
  %v1218 = vadd.f32 %v1216, %v1217
  %v1219 = vsel %vm659, %v1008, 0.0
  %v1220 = vadd.f32 %v1218, %v1219
  %v1221 = vsel %vm659, %v1009, 0.0
  %v1222 = vadd.f32 %v1220, %v1221
  %v1223 = vsel %vm659, %v1010, 0.0
  %v1224 = vadd.f32 %v1222, %v1223
  %v1225 = vsel %vm659, %v1011, 0.0
  %v1226 = vadd.f32 %v1224, %v1225
  %v1227 = vsel %vm659, %v1012, 0.0
  %v1228 = vadd.f32 %v1226, %v1227
  %v1229 = vsel %vm659, %v1013, 0.0
  %v1230 = vadd.f32 %v1228, %v1229
  %v1231 = vsel %vm659, %v1014, 0.0
  %v1232 = vadd.f32 %v1230, %v1231
  %v1233 = vsel %vm659, %v1015, 0.0
  %v1234 = vadd.f32 %v1232, %v1233
  %v1235 = vsel %vm659, %v1016, 0.0
  %v1236 = vadd.f32 %v1234, %v1235
  %v1237 = vsel %vm659, %v1017, 0.0
  %v1238 = vadd.f32 %v1236, %v1237
  %v1239 = vsel %vm659, %v1018, 0.0
  %v1240 = vadd.f32 %v1238, %v1239
  %v1241 = vsel %vm659, %v1019, 0.0
  %v1242 = vadd.f32 %v1240, %v1241
  %v1243 = vsel %vm659, %v1020, 0.0
  %v1244 = vadd.f32 %v1242, %v1243
  %v1245 = vsel %vm659, %v1021, 0.0
  %v1246 = vadd.f32 %v1244, %v1245
  %v1247 = vsel %vm659, %v1022, 0.0
  %v1248 = vadd.f32 %v1246, %v1247
  %v1249 = vsel %vm659, %v1023, 0.0
  %v1250 = vadd.f32 %v1248, %v1249
  %v1251 = vsel %vm659, %v1024, 0.0
  %v1252 = vadd.f32 %v1250, %v1251
  %v1253 = vsel %vm659, %v1025, 0.0
  %v1254 = vadd.f32 %v1252, %v1253
  %v1255 = vsel %vm659, %v1026, 0.0
  %v1256 = vadd.f32 %v1254, %v1255
  %v1257 = vsel %vm659, %v1027, 0.0
  %v1258 = vadd.f32 %v1256, %v1257
  %v1259 = vsel %vm659, %v1028, 0.0
  %v1260 = vadd.f32 %v1258, %v1259
  %v1261 = vsel %vm659, %v1029, 0.0
  %v1262 = vadd.f32 %v1260, %v1261
  %v1263 = vsel %vm659, %v1030, 0.0
  %v1264 = vadd.f32 %v1262, %v1263
  %v1265 = vsel %vm659, %v1031, 0.0
  %v1266 = vadd.f32 %v1264, %v1265
  %v1267 = vsel %vm659, %v1032, 0.0
  %v1268 = vadd.f32 %v1266, %v1267
  %v1269 = vsel %vm659, %v1033, 0.0
  %v1270 = vadd.f32 %v1268, %v1269
  %v1271 = vsel %vm659, %v1034, 0.0
  %v1272 = vadd.f32 %v1270, %v1271
  %v1273 = vsel %vm659, %v1035, 0.0
  %v1274 = vadd.f32 %v1272, %v1273
  %v1275 = vsel %vm659, %v1036, 0.0
  %v1276 = vadd.f32 %v1274, %v1275
  %v1277 = vsel %vm659, %v1037, 0.0
  %v1278 = vadd.f32 %v1276, %v1277
  %v1279 = vsel %vm659, %v1038, 0.0
  %v1280 = vadd.f32 %v1278, %v1279
  %v1281 = vsel %vm659, %v1039, 0.0
  %v1282 = vadd.f32 %v1280, %v1281
  %v1283 = vsel %vm659, %v1040, 0.0
  %v1284 = vadd.f32 %v1282, %v1283
  %v1285 = vsel %vm659, %v1041, 0.0
  %v1286 = vadd.f32 %v1284, %v1285
  %v1287 = vsel %vm659, %v1042, 0.0
  %v1288 = vadd.f32 %v1286, %v1287
  %v1289 = vsel %vm659, %v1043, 0.0
  %v1290 = vadd.f32 %v1288, %v1289
  %v1291 = vsel %vm659, %v1044, 0.0
  %v1292 = vadd.f32 %v1290, %v1291
  %v1293 = vsel %vm659, %v1045, 0.0
  %v1294 = vadd.f32 %v1292, %v1293
  %v1295 = vsel %vm659, %v1046, 0.0
  %v1296 = vadd.f32 %v1294, %v1295
  %v1297 = vsel %vm659, %v1047, 0.0
  %v1298 = vadd.f32 %v1296, %v1297
  %v1299 = vsel %vm659, %v1048, 0.0
  %v1300 = vadd.f32 %v1298, %v1299
  %v1301 = vsel %vm659, %v1049, 0.0
  %v1302 = vadd.f32 %v1300, %v1301
  %v1303 = vsel %vm659, %v1050, 0.0
  %v1304 = vadd.f32 %v1302, %v1303
  %v1305 = vsel %vm659, %v1051, 0.0
  %v1306 = vadd.f32 %v1304, %v1305
  %1307 = vadd.xlane.f32.xlu0 %v1306
  %v1308 = vpop.xlane.xlu0 %1307
  %v1309 = vrot.slane %v1308, 4
  %v1310 = vadd.f32 %v1308, %v1309
  %v1311 = vrot.slane %v1310, 2
  %v1312 = vadd.f32 %v1310, %v1311
  %v1313 = vrot.slane %v1312, 1
  %v1314 = vadd.f32 %v1312, %v1313
  %s1315 = vtos %v1314
  %v1316 = vmul.f32 %v19, %v147
  %v1317 = vmul.f32 %v20, %v148
  %v1318 = vmul.f32 %v21, %v149
  %v1319 = vmul.f32 %v22, %v150
  %v1320 = vmul.f32 %v23, %v151
  %v1321 = vmul.f32 %v24, %v152
  %v1322 = vmul.f32 %v25, %v153
  %v1323 = vmul.f32 %v26, %v154
  %v1324 = vmul.f32 %v27, %v155
  %v1325 = vmul.f32 %v28, %v156
  %v1326 = vmul.f32 %v29, %v157
  %v1327 = vmul.f32 %v30, %v158
  %v1328 = vmul.f32 %v31, %v159
  %v1329 = vmul.f32 %v32, %v160
  %v1330 = vmul.f32 %v33, %v161
  %v1331 = vmul.f32 %v34, %v162
  %v1332 = vmul.f32 %v35, %v163
  %v1333 = vmul.f32 %v36, %v164
  %v1334 = vmul.f32 %v37, %v165
  %v1335 = vmul.f32 %v38, %v166
  %v1336 = vmul.f32 %v39, %v167
  %v1337 = vmul.f32 %v40, %v168
  %v1338 = vmul.f32 %v41, %v169
  %v1339 = vmul.f32 %v42, %v170
  %v1340 = vmul.f32 %v43, %v171
  %v1341 = vmul.f32 %v44, %v172
  %v1342 = vmul.f32 %v45, %v173
  %v1343 = vmul.f32 %v46, %v174
  %v1344 = vmul.f32 %v47, %v175
  %v1345 = vmul.f32 %v48, %v176
  %v1346 = vmul.f32 %v49, %v177
  %v1347 = vmul.f32 %v50, %v178
  %v1348 = vmul.f32 %v51, %v179
  %v1349 = vmul.f32 %v52, %v180
  %v1350 = vmul.f32 %v53, %v181
  %v1351 = vmul.f32 %v54, %v182
  %v1352 = vmul.f32 %v55, %v183
  %v1353 = vmul.f32 %v56, %v184
  %v1354 = vmul.f32 %v57, %v185
  %v1355 = vmul.f32 %v58, %v186
  %v1356 = vmul.f32 %v59, %v187
  %v1357 = vmul.f32 %v60, %v188
  %v1358 = vmul.f32 %v61, %v189
  %v1359 = vmul.f32 %v62, %v190
  %v1360 = vmul.f32 %v63, %v191
  %v1361 = vmul.f32 %v64, %v192
  %v1362 = vmul.f32 %v65, %v193
  %v1363 = vmul.f32 %v66, %v194
  %v1364 = vmul.f32 %v67, %v195
  %v1365 = vmul.f32 %v68, %v196
  %v1366 = vmul.f32 %v69, %v197
  %v1367 = vmul.f32 %v70, %v198
  %v1368 = vmul.f32 %v71, %v199
  %v1369 = vmul.f32 %v72, %v200
  %v1370 = vmul.f32 %v73, %v201
  %v1371 = vmul.f32 %v74, %v202
  %v1372 = vmul.f32 %v75, %v203
  %v1373 = vmul.f32 %v76, %v204
  %v1374 = vmul.f32 %v77, %v205
  %v1375 = vmul.f32 %v78, %v206
  %v1376 = vmul.f32 %v79, %v207
  %v1377 = vmul.f32 %v80, %v208
  %v1378 = vmul.f32 %v81, %v209
  %v1379 = vmul.f32 %v82, %v210
  %v1380 = vmul.f32 %v83, %v211
  %v1381 = vmul.f32 %v84, %v212
  %v1382 = vmul.f32 %v85, %v213
  %v1383 = vmul.f32 %v86, %v214
  %v1384 = vmul.f32 %v87, %v215
  %v1385 = vmul.f32 %v88, %v216
  %v1386 = vmul.f32 %v89, %v217
  %v1387 = vmul.f32 %v90, %v218
  %v1388 = vmul.f32 %v91, %v219
  %v1389 = vmul.f32 %v92, %v220
  %v1390 = vmul.f32 %v93, %v221
  %v1391 = vmul.f32 %v94, %v222
  %v1392 = vmul.f32 %v95, %v223
  %v1393 = vmul.f32 %v96, %v224
  %v1394 = vmul.f32 %v97, %v225
  %v1395 = vmul.f32 %v98, %v226
  %v1396 = vmul.f32 %v99, %v227
  %v1397 = vmul.f32 %v100, %v228
  %v1398 = vmul.f32 %v101, %v229
  %v1399 = vmul.f32 %v102, %v230
  %v1400 = vmul.f32 %v103, %v231
  %v1401 = vmul.f32 %v104, %v232
  %v1402 = vmul.f32 %v105, %v233
  %v1403 = vmul.f32 %v106, %v234
  %v1404 = vmul.f32 %v107, %v235
  %v1405 = vmul.f32 %v108, %v236
  %v1406 = vmul.f32 %v109, %v237
  %v1407 = vmul.f32 %v110, %v238
  %v1408 = vmul.f32 %v111, %v239
  %v1409 = vmul.f32 %v112, %v240
  %v1410 = vmul.f32 %v113, %v241
  %v1411 = vmul.f32 %v114, %v242
  %v1412 = vmul.f32 %v115, %v243
  %v1413 = vmul.f32 %v116, %v244
  %v1414 = vmul.f32 %v117, %v245
  %v1415 = vmul.f32 %v118, %v246
  %v1416 = vmul.f32 %v119, %v247
  %v1417 = vmul.f32 %v120, %v248
  %v1418 = vmul.f32 %v121, %v249
  %v1419 = vmul.f32 %v122, %v250
  %v1420 = vmul.f32 %v123, %v251
  %v1421 = vmul.f32 %v124, %v252
  %v1422 = vmul.f32 %v125, %v253
  %v1423 = vmul.f32 %v126, %v254
  %v1424 = vmul.f32 %v127, %v255
  %v1425 = vmul.f32 %v128, %v256
  %v1426 = vmul.f32 %v129, %v257
  %v1427 = vmul.f32 %v130, %v258
  %v1428 = vmul.f32 %v131, %v259
  %v1429 = vmul.f32 %v132, %v260
  %v1430 = vmul.f32 %v133, %v261
  %v1431 = vmul.f32 %v134, %v262
  %v1432 = vmul.f32 %v135, %v263
  %v1433 = vmul.f32 %v136, %v264
  %v1434 = vmul.f32 %v137, %v265
  %v1435 = vmul.f32 %v138, %v266
  %v1436 = vmul.f32 %v139, %v267
  %v1437 = vmul.f32 %v140, %v268
  %v1438 = vmul.f32 %v141, %v269
  %v1439 = vmul.f32 %v142, %v270
  %v1440 = vmul.f32 %v143, %v271
  %v1441 = vmul.f32 %v144, %v272
  %v1442 = vmul.f32 %v145, %v273
  %v1443 = vmul.f32 %v146, %v274
  %v1444 = vsel %vm659, %v1316, 0.0
  %v1445 = vsel %vm659, %v1317, 0.0
  %v1446 = vadd.f32 %v1444, %v1445
  %v1447 = vsel %vm659, %v1318, 0.0
  %v1448 = vadd.f32 %v1446, %v1447
  %v1449 = vsel %vm659, %v1319, 0.0
  %v1450 = vadd.f32 %v1448, %v1449
  %v1451 = vsel %vm659, %v1320, 0.0
  %v1452 = vadd.f32 %v1450, %v1451
  %v1453 = vsel %vm659, %v1321, 0.0
  %v1454 = vadd.f32 %v1452, %v1453
  %v1455 = vsel %vm659, %v1322, 0.0
  %v1456 = vadd.f32 %v1454, %v1455
  %v1457 = vsel %vm659, %v1323, 0.0
  %v1458 = vadd.f32 %v1456, %v1457
  %v1459 = vsel %vm659, %v1324, 0.0
  %v1460 = vadd.f32 %v1458, %v1459
  %v1461 = vsel %vm659, %v1325, 0.0
  %v1462 = vadd.f32 %v1460, %v1461
  %v1463 = vsel %vm659, %v1326, 0.0
  %v1464 = vadd.f32 %v1462, %v1463
  %v1465 = vsel %vm659, %v1327, 0.0
  %v1466 = vadd.f32 %v1464, %v1465
  %v1467 = vsel %vm659, %v1328, 0.0
  %v1468 = vadd.f32 %v1466, %v1467
  %v1469 = vsel %vm659, %v1329, 0.0
  %v1470 = vadd.f32 %v1468, %v1469
  %v1471 = vsel %vm659, %v1330, 0.0
  %v1472 = vadd.f32 %v1470, %v1471
  %v1473 = vsel %vm659, %v1331, 0.0
  %v1474 = vadd.f32 %v1472, %v1473
  %v1475 = vsel %vm659, %v1332, 0.0
  %v1476 = vadd.f32 %v1474, %v1475
  %v1477 = vsel %vm659, %v1333, 0.0
  %v1478 = vadd.f32 %v1476, %v1477
  %v1479 = vsel %vm659, %v1334, 0.0
  %v1480 = vadd.f32 %v1478, %v1479
  %v1481 = vsel %vm659, %v1335, 0.0
  %v1482 = vadd.f32 %v1480, %v1481
  %v1483 = vsel %vm659, %v1336, 0.0
  %v1484 = vadd.f32 %v1482, %v1483
  %v1485 = vsel %vm659, %v1337, 0.0
  %v1486 = vadd.f32 %v1484, %v1485
  %v1487 = vsel %vm659, %v1338, 0.0
  %v1488 = vadd.f32 %v1486, %v1487
  %v1489 = vsel %vm659, %v1339, 0.0
  %v1490 = vadd.f32 %v1488, %v1489
  %v1491 = vsel %vm659, %v1340, 0.0
  %v1492 = vadd.f32 %v1490, %v1491
  %v1493 = vsel %vm659, %v1341, 0.0
  %v1494 = vadd.f32 %v1492, %v1493
  %v1495 = vsel %vm659, %v1342, 0.0
  %v1496 = vadd.f32 %v1494, %v1495
  %v1497 = vsel %vm659, %v1343, 0.0
  %v1498 = vadd.f32 %v1496, %v1497
  %v1499 = vsel %vm659, %v1344, 0.0
  %v1500 = vadd.f32 %v1498, %v1499
  %v1501 = vsel %vm659, %v1345, 0.0
  %v1502 = vadd.f32 %v1500, %v1501
  %v1503 = vsel %vm659, %v1346, 0.0
  %v1504 = vadd.f32 %v1502, %v1503
  %v1505 = vsel %vm659, %v1347, 0.0
  %v1506 = vadd.f32 %v1504, %v1505
  %v1507 = vsel %vm659, %v1348, 0.0
  %v1508 = vadd.f32 %v1506, %v1507
  %v1509 = vsel %vm659, %v1349, 0.0
  %v1510 = vadd.f32 %v1508, %v1509
  %v1511 = vsel %vm659, %v1350, 0.0
  %v1512 = vadd.f32 %v1510, %v1511
  %v1513 = vsel %vm659, %v1351, 0.0
  %v1514 = vadd.f32 %v1512, %v1513
  %v1515 = vsel %vm659, %v1352, 0.0
  %v1516 = vadd.f32 %v1514, %v1515
  %v1517 = vsel %vm659, %v1353, 0.0
  %v1518 = vadd.f32 %v1516, %v1517
  %v1519 = vsel %vm659, %v1354, 0.0
  %v1520 = vadd.f32 %v1518, %v1519
  %v1521 = vsel %vm659, %v1355, 0.0
  %v1522 = vadd.f32 %v1520, %v1521
  %v1523 = vsel %vm659, %v1356, 0.0
  %v1524 = vadd.f32 %v1522, %v1523
  %v1525 = vsel %vm659, %v1357, 0.0
  %v1526 = vadd.f32 %v1524, %v1525
  %v1527 = vsel %vm659, %v1358, 0.0
  %v1528 = vadd.f32 %v1526, %v1527
  %v1529 = vsel %vm659, %v1359, 0.0
  %v1530 = vadd.f32 %v1528, %v1529
  %v1531 = vsel %vm659, %v1360, 0.0
  %v1532 = vadd.f32 %v1530, %v1531
  %v1533 = vsel %vm659, %v1361, 0.0
  %v1534 = vadd.f32 %v1532, %v1533
  %v1535 = vsel %vm659, %v1362, 0.0
  %v1536 = vadd.f32 %v1534, %v1535
  %v1537 = vsel %vm659, %v1363, 0.0
  %v1538 = vadd.f32 %v1536, %v1537
  %v1539 = vsel %vm659, %v1364, 0.0
  %v1540 = vadd.f32 %v1538, %v1539
  %v1541 = vsel %vm659, %v1365, 0.0
  %v1542 = vadd.f32 %v1540, %v1541
  %v1543 = vsel %vm659, %v1366, 0.0
  %v1544 = vadd.f32 %v1542, %v1543
  %v1545 = vsel %vm659, %v1367, 0.0
  %v1546 = vadd.f32 %v1544, %v1545
  %v1547 = vsel %vm659, %v1368, 0.0
  %v1548 = vadd.f32 %v1546, %v1547
  %v1549 = vsel %vm659, %v1369, 0.0
  %v1550 = vadd.f32 %v1548, %v1549
  %v1551 = vsel %vm659, %v1370, 0.0
  %v1552 = vadd.f32 %v1550, %v1551
  %v1553 = vsel %vm659, %v1371, 0.0
  %v1554 = vadd.f32 %v1552, %v1553
  %v1555 = vsel %vm659, %v1372, 0.0
  %v1556 = vadd.f32 %v1554, %v1555
  %v1557 = vsel %vm659, %v1373, 0.0
  %v1558 = vadd.f32 %v1556, %v1557
  %v1559 = vsel %vm659, %v1374, 0.0
  %v1560 = vadd.f32 %v1558, %v1559
  %v1561 = vsel %vm659, %v1375, 0.0
  %v1562 = vadd.f32 %v1560, %v1561
  %v1563 = vsel %vm659, %v1376, 0.0
  %v1564 = vadd.f32 %v1562, %v1563
  %v1565 = vsel %vm659, %v1377, 0.0
  %v1566 = vadd.f32 %v1564, %v1565
  %v1567 = vsel %vm659, %v1378, 0.0
  %v1568 = vadd.f32 %v1566, %v1567
  %v1569 = vsel %vm659, %v1379, 0.0
  %v1570 = vadd.f32 %v1568, %v1569
  %v1571 = vsel %vm659, %v1380, 0.0
  %v1572 = vadd.f32 %v1570, %v1571
  %v1573 = vsel %vm659, %v1381, 0.0
  %v1574 = vadd.f32 %v1572, %v1573
  %v1575 = vsel %vm659, %v1382, 0.0
  %v1576 = vadd.f32 %v1574, %v1575
  %v1577 = vsel %vm659, %v1383, 0.0
  %v1578 = vadd.f32 %v1576, %v1577
  %v1579 = vsel %vm659, %v1384, 0.0
  %v1580 = vadd.f32 %v1578, %v1579
  %v1581 = vsel %vm659, %v1385, 0.0
  %v1582 = vadd.f32 %v1580, %v1581
  %v1583 = vsel %vm659, %v1386, 0.0
  %v1584 = vadd.f32 %v1582, %v1583
  %v1585 = vsel %vm659, %v1387, 0.0
  %v1586 = vadd.f32 %v1584, %v1585
  %v1587 = vsel %vm659, %v1388, 0.0
  %v1588 = vadd.f32 %v1586, %v1587
  %v1589 = vsel %vm659, %v1389, 0.0
  %v1590 = vadd.f32 %v1588, %v1589
  %v1591 = vsel %vm659, %v1390, 0.0
  %v1592 = vadd.f32 %v1590, %v1591
  %v1593 = vsel %vm659, %v1391, 0.0
  %v1594 = vadd.f32 %v1592, %v1593
  %v1595 = vsel %vm659, %v1392, 0.0
  %v1596 = vadd.f32 %v1594, %v1595
  %v1597 = vsel %vm659, %v1393, 0.0
  %v1598 = vadd.f32 %v1596, %v1597
  %v1599 = vsel %vm659, %v1394, 0.0
  %v1600 = vadd.f32 %v1598, %v1599
  %v1601 = vsel %vm659, %v1395, 0.0
  %v1602 = vadd.f32 %v1600, %v1601
  %v1603 = vsel %vm659, %v1396, 0.0
  %v1604 = vadd.f32 %v1602, %v1603
  %v1605 = vsel %vm659, %v1397, 0.0
  %v1606 = vadd.f32 %v1604, %v1605
  %v1607 = vsel %vm659, %v1398, 0.0
  %v1608 = vadd.f32 %v1606, %v1607
  %v1609 = vsel %vm659, %v1399, 0.0
  %v1610 = vadd.f32 %v1608, %v1609
  %v1611 = vsel %vm659, %v1400, 0.0
  %v1612 = vadd.f32 %v1610, %v1611
  %v1613 = vsel %vm659, %v1401, 0.0
  %v1614 = vadd.f32 %v1612, %v1613
  %v1615 = vsel %vm659, %v1402, 0.0
  %v1616 = vadd.f32 %v1614, %v1615
  %v1617 = vsel %vm659, %v1403, 0.0
  %v1618 = vadd.f32 %v1616, %v1617
  %v1619 = vsel %vm659, %v1404, 0.0
  %v1620 = vadd.f32 %v1618, %v1619
  %v1621 = vsel %vm659, %v1405, 0.0
  %v1622 = vadd.f32 %v1620, %v1621
  %v1623 = vsel %vm659, %v1406, 0.0
  %v1624 = vadd.f32 %v1622, %v1623
  %v1625 = vsel %vm659, %v1407, 0.0
  %v1626 = vadd.f32 %v1624, %v1625
  %v1627 = vsel %vm659, %v1408, 0.0
  %v1628 = vadd.f32 %v1626, %v1627
  %v1629 = vsel %vm659, %v1409, 0.0
  %v1630 = vadd.f32 %v1628, %v1629
  %v1631 = vsel %vm659, %v1410, 0.0
  %v1632 = vadd.f32 %v1630, %v1631
  %v1633 = vsel %vm659, %v1411, 0.0
  %v1634 = vadd.f32 %v1632, %v1633
  %v1635 = vsel %vm659, %v1412, 0.0
  %v1636 = vadd.f32 %v1634, %v1635
  %v1637 = vsel %vm659, %v1413, 0.0
  %v1638 = vadd.f32 %v1636, %v1637
  %v1639 = vsel %vm659, %v1414, 0.0
  %v1640 = vadd.f32 %v1638, %v1639
  %v1641 = vsel %vm659, %v1415, 0.0
  %v1642 = vadd.f32 %v1640, %v1641
  %v1643 = vsel %vm659, %v1416, 0.0
  %v1644 = vadd.f32 %v1642, %v1643
  %v1645 = vsel %vm659, %v1417, 0.0
  %v1646 = vadd.f32 %v1644, %v1645
  %v1647 = vsel %vm659, %v1418, 0.0
  %v1648 = vadd.f32 %v1646, %v1647
  %v1649 = vsel %vm659, %v1419, 0.0
  %v1650 = vadd.f32 %v1648, %v1649
  %v1651 = vsel %vm659, %v1420, 0.0
  %v1652 = vadd.f32 %v1650, %v1651
  %v1653 = vsel %vm659, %v1421, 0.0
  %v1654 = vadd.f32 %v1652, %v1653
  %v1655 = vsel %vm659, %v1422, 0.0
  %v1656 = vadd.f32 %v1654, %v1655
  %v1657 = vsel %vm659, %v1423, 0.0
  %v1658 = vadd.f32 %v1656, %v1657
  %v1659 = vsel %vm659, %v1424, 0.0
  %v1660 = vadd.f32 %v1658, %v1659
  %v1661 = vsel %vm659, %v1425, 0.0
  %v1662 = vadd.f32 %v1660, %v1661
  %v1663 = vsel %vm659, %v1426, 0.0
  %v1664 = vadd.f32 %v1662, %v1663
  %v1665 = vsel %vm659, %v1427, 0.0
  %v1666 = vadd.f32 %v1664, %v1665
  %v1667 = vsel %vm659, %v1428, 0.0
  %v1668 = vadd.f32 %v1666, %v1667
  %v1669 = vsel %vm659, %v1429, 0.0
  %v1670 = vadd.f32 %v1668, %v1669
  %v1671 = vsel %vm659, %v1430, 0.0
  %v1672 = vadd.f32 %v1670, %v1671
  %v1673 = vsel %vm659, %v1431, 0.0
  %v1674 = vadd.f32 %v1672, %v1673
  %v1675 = vsel %vm659, %v1432, 0.0
  %v1676 = vadd.f32 %v1674, %v1675
  %v1677 = vsel %vm659, %v1433, 0.0
  %v1678 = vadd.f32 %v1676, %v1677
  %v1679 = vsel %vm659, %v1434, 0.0
  %v1680 = vadd.f32 %v1678, %v1679
  %v1681 = vsel %vm659, %v1435, 0.0
  %v1682 = vadd.f32 %v1680, %v1681
  %v1683 = vsel %vm659, %v1436, 0.0
  %v1684 = vadd.f32 %v1682, %v1683
  %v1685 = vsel %vm659, %v1437, 0.0
  %v1686 = vadd.f32 %v1684, %v1685
  %v1687 = vsel %vm659, %v1438, 0.0
  %v1688 = vadd.f32 %v1686, %v1687
  %v1689 = vsel %vm659, %v1439, 0.0
  %v1690 = vadd.f32 %v1688, %v1689
  %v1691 = vsel %vm659, %v1440, 0.0
  %v1692 = vadd.f32 %v1690, %v1691
  %v1693 = vsel %vm659, %v1441, 0.0
  %v1694 = vadd.f32 %v1692, %v1693
  %v1695 = vsel %vm659, %v1442, 0.0
  %v1696 = vadd.f32 %v1694, %v1695
  %v1697 = vsel %vm659, %v1443, 0.0
  %v1698 = vadd.f32 %v1696, %v1697
  %1699 = vadd.xlane.f32.xlu0 %v1698
  %v1700 = vpop.xlane.xlu0 %1699
  %v1701 = vrot.slane %v1700, 4
  %v1702 = vadd.f32 %v1700, %v1701
  %v1703 = vrot.slane %v1702, 2
  %v1704 = vadd.f32 %v1702, %v1703
  %v1705 = vrot.slane %v1704, 1
  %v1706 = vadd.f32 %v1704, %v1705
  %s1707 = vtos %v1706
  %v1708 = vmul.f32 %v19, %v275
  %v1709 = vmul.f32 %v20, %v276
  %v1710 = vmul.f32 %v21, %v277
  %v1711 = vmul.f32 %v22, %v278
  %v1712 = vmul.f32 %v23, %v279
  %v1713 = vmul.f32 %v24, %v280
  %v1714 = vmul.f32 %v25, %v281
  %v1715 = vmul.f32 %v26, %v282
  %v1716 = vmul.f32 %v27, %v283
  %v1717 = vmul.f32 %v28, %v284
  %v1718 = vmul.f32 %v29, %v285
  %v1719 = vmul.f32 %v30, %v286
  %v1720 = vmul.f32 %v31, %v287
  %v1721 = vmul.f32 %v32, %v288
  %v1722 = vmul.f32 %v33, %v289
  %v1723 = vmul.f32 %v34, %v290
  %v1724 = vmul.f32 %v35, %v291
  %v1725 = vmul.f32 %v36, %v292
  %v1726 = vmul.f32 %v37, %v293
  %v1727 = vmul.f32 %v38, %v294
  %v1728 = vmul.f32 %v39, %v295
  %v1729 = vmul.f32 %v40, %v296
  %v1730 = vmul.f32 %v41, %v297
  %v1731 = vmul.f32 %v42, %v298
  %v1732 = vmul.f32 %v43, %v299
  %v1733 = vmul.f32 %v44, %v300
  %v1734 = vmul.f32 %v45, %v301
  %v1735 = vmul.f32 %v46, %v302
  %v1736 = vmul.f32 %v47, %v303
  %v1737 = vmul.f32 %v48, %v304
  %v1738 = vmul.f32 %v49, %v305
  %v1739 = vmul.f32 %v50, %v306
  %v1740 = vmul.f32 %v51, %v307
  %v1741 = vmul.f32 %v52, %v308
  %v1742 = vmul.f32 %v53, %v309
  %v1743 = vmul.f32 %v54, %v310
  %v1744 = vmul.f32 %v55, %v311
  %v1745 = vmul.f32 %v56, %v312
  %v1746 = vmul.f32 %v57, %v313
  %v1747 = vmul.f32 %v58, %v314
  %v1748 = vmul.f32 %v59, %v315
  %v1749 = vmul.f32 %v60, %v316
  %v1750 = vmul.f32 %v61, %v317
  %v1751 = vmul.f32 %v62, %v318
  %v1752 = vmul.f32 %v63, %v319
  %v1753 = vmul.f32 %v64, %v320
  %v1754 = vmul.f32 %v65, %v321
  %v1755 = vmul.f32 %v66, %v322
  %v1756 = vmul.f32 %v67, %v323
  %v1757 = vmul.f32 %v68, %v324
  %v1758 = vmul.f32 %v69, %v325
  %v1759 = vmul.f32 %v70, %v326
  %v1760 = vmul.f32 %v71, %v327
  %v1761 = vmul.f32 %v72, %v328
  %v1762 = vmul.f32 %v73, %v329
  %v1763 = vmul.f32 %v74, %v330
  %v1764 = vmul.f32 %v75, %v331
  %v1765 = vmul.f32 %v76, %v332
  %v1766 = vmul.f32 %v77, %v333
  %v1767 = vmul.f32 %v78, %v334
  %v1768 = vmul.f32 %v79, %v335
  %v1769 = vmul.f32 %v80, %v336
  %v1770 = vmul.f32 %v81, %v337
  %v1771 = vmul.f32 %v82, %v338
  %v1772 = vmul.f32 %v83, %v339
  %v1773 = vmul.f32 %v84, %v340
  %v1774 = vmul.f32 %v85, %v341
  %v1775 = vmul.f32 %v86, %v342
  %v1776 = vmul.f32 %v87, %v343
  %v1777 = vmul.f32 %v88, %v344
  %v1778 = vmul.f32 %v89, %v345
  %v1779 = vmul.f32 %v90, %v346
  %v1780 = vmul.f32 %v91, %v347
  %v1781 = vmul.f32 %v92, %v348
  %v1782 = vmul.f32 %v93, %v349
  %v1783 = vmul.f32 %v94, %v350
  %v1784 = vmul.f32 %v95, %v351
  %v1785 = vmul.f32 %v96, %v352
  %v1786 = vmul.f32 %v97, %v353
  %v1787 = vmul.f32 %v98, %v354
  %v1788 = vmul.f32 %v99, %v355
  %v1789 = vmul.f32 %v100, %v356
  %v1790 = vmul.f32 %v101, %v357
  %v1791 = vmul.f32 %v102, %v358
  %v1792 = vmul.f32 %v103, %v359
  %v1793 = vmul.f32 %v104, %v360
  %v1794 = vmul.f32 %v105, %v361
  %v1795 = vmul.f32 %v106, %v362
  %v1796 = vmul.f32 %v107, %v363
  %v1797 = vmul.f32 %v108, %v364
  %v1798 = vmul.f32 %v109, %v365
  %v1799 = vmul.f32 %v110, %v366
  %v1800 = vmul.f32 %v111, %v367
  %v1801 = vmul.f32 %v112, %v368
  %v1802 = vmul.f32 %v113, %v369
  %v1803 = vmul.f32 %v114, %v370
  %v1804 = vmul.f32 %v115, %v371
  %v1805 = vmul.f32 %v116, %v372
  %v1806 = vmul.f32 %v117, %v373
  %v1807 = vmul.f32 %v118, %v374
  %v1808 = vmul.f32 %v119, %v375
  %v1809 = vmul.f32 %v120, %v376
  %v1810 = vmul.f32 %v121, %v377
  %v1811 = vmul.f32 %v122, %v378
  %v1812 = vmul.f32 %v123, %v379
  %v1813 = vmul.f32 %v124, %v380
  %v1814 = vmul.f32 %v125, %v381
  %v1815 = vmul.f32 %v126, %v382
  %v1816 = vmul.f32 %v127, %v383
  %v1817 = vmul.f32 %v128, %v384
  %v1818 = vmul.f32 %v129, %v385
  %v1819 = vmul.f32 %v130, %v386
  %v1820 = vmul.f32 %v131, %v387
  %v1821 = vmul.f32 %v132, %v388
  %v1822 = vmul.f32 %v133, %v389
  %v1823 = vmul.f32 %v134, %v390
  %v1824 = vmul.f32 %v135, %v391
  %v1825 = vmul.f32 %v136, %v392
  %v1826 = vmul.f32 %v137, %v393
  %v1827 = vmul.f32 %v138, %v394
  %v1828 = vmul.f32 %v139, %v395
  %v1829 = vmul.f32 %v140, %v396
  %v1830 = vmul.f32 %v141, %v397
  %v1831 = vmul.f32 %v142, %v398
  %v1832 = vmul.f32 %v143, %v399
  %v1833 = vmul.f32 %v144, %v400
  %v1834 = vmul.f32 %v145, %v401
  %v1835 = vmul.f32 %v146, %v402
  %v1836 = vsel %vm659, %v1708, 0.0
  %v1837 = vsel %vm659, %v1709, 0.0
  %v1838 = vadd.f32 %v1836, %v1837
  %v1839 = vsel %vm659, %v1710, 0.0
  %v1840 = vadd.f32 %v1838, %v1839
  %v1841 = vsel %vm659, %v1711, 0.0
  %v1842 = vadd.f32 %v1840, %v1841
  %v1843 = vsel %vm659, %v1712, 0.0
  %v1844 = vadd.f32 %v1842, %v1843
  %v1845 = vsel %vm659, %v1713, 0.0
  %v1846 = vadd.f32 %v1844, %v1845
  %v1847 = vsel %vm659, %v1714, 0.0
  %v1848 = vadd.f32 %v1846, %v1847
  %v1849 = vsel %vm659, %v1715, 0.0
  %v1850 = vadd.f32 %v1848, %v1849
  %v1851 = vsel %vm659, %v1716, 0.0
  %v1852 = vadd.f32 %v1850, %v1851
  %v1853 = vsel %vm659, %v1717, 0.0
  %v1854 = vadd.f32 %v1852, %v1853
  %v1855 = vsel %vm659, %v1718, 0.0
  %v1856 = vadd.f32 %v1854, %v1855
  %v1857 = vsel %vm659, %v1719, 0.0
  %v1858 = vadd.f32 %v1856, %v1857
  %v1859 = vsel %vm659, %v1720, 0.0
  %v1860 = vadd.f32 %v1858, %v1859
  %v1861 = vsel %vm659, %v1721, 0.0
  %v1862 = vadd.f32 %v1860, %v1861
  %v1863 = vsel %vm659, %v1722, 0.0
  %v1864 = vadd.f32 %v1862, %v1863
  %v1865 = vsel %vm659, %v1723, 0.0
  %v1866 = vadd.f32 %v1864, %v1865
  %v1867 = vsel %vm659, %v1724, 0.0
  %v1868 = vadd.f32 %v1866, %v1867
  %v1869 = vsel %vm659, %v1725, 0.0
  %v1870 = vadd.f32 %v1868, %v1869
  %v1871 = vsel %vm659, %v1726, 0.0
  %v1872 = vadd.f32 %v1870, %v1871
  %v1873 = vsel %vm659, %v1727, 0.0
  %v1874 = vadd.f32 %v1872, %v1873
  %v1875 = vsel %vm659, %v1728, 0.0
  %v1876 = vadd.f32 %v1874, %v1875
  %v1877 = vsel %vm659, %v1729, 0.0
  %v1878 = vadd.f32 %v1876, %v1877
  %v1879 = vsel %vm659, %v1730, 0.0
  %v1880 = vadd.f32 %v1878, %v1879
  %v1881 = vsel %vm659, %v1731, 0.0
  %v1882 = vadd.f32 %v1880, %v1881
  %v1883 = vsel %vm659, %v1732, 0.0
  %v1884 = vadd.f32 %v1882, %v1883
  %v1885 = vsel %vm659, %v1733, 0.0
  %v1886 = vadd.f32 %v1884, %v1885
  %v1887 = vsel %vm659, %v1734, 0.0
  %v1888 = vadd.f32 %v1886, %v1887
  %v1889 = vsel %vm659, %v1735, 0.0
  %v1890 = vadd.f32 %v1888, %v1889
  %v1891 = vsel %vm659, %v1736, 0.0
  %v1892 = vadd.f32 %v1890, %v1891
  %v1893 = vsel %vm659, %v1737, 0.0
  %v1894 = vadd.f32 %v1892, %v1893
  %v1895 = vsel %vm659, %v1738, 0.0
  %v1896 = vadd.f32 %v1894, %v1895
  %v1897 = vsel %vm659, %v1739, 0.0
  %v1898 = vadd.f32 %v1896, %v1897
  %v1899 = vsel %vm659, %v1740, 0.0
  %v1900 = vadd.f32 %v1898, %v1899
  %v1901 = vsel %vm659, %v1741, 0.0
  %v1902 = vadd.f32 %v1900, %v1901
  %v1903 = vsel %vm659, %v1742, 0.0
  %v1904 = vadd.f32 %v1902, %v1903
  %v1905 = vsel %vm659, %v1743, 0.0
  %v1906 = vadd.f32 %v1904, %v1905
  %v1907 = vsel %vm659, %v1744, 0.0
  %v1908 = vadd.f32 %v1906, %v1907
  %v1909 = vsel %vm659, %v1745, 0.0
  %v1910 = vadd.f32 %v1908, %v1909
  %v1911 = vsel %vm659, %v1746, 0.0
  %v1912 = vadd.f32 %v1910, %v1911
  %v1913 = vsel %vm659, %v1747, 0.0
  %v1914 = vadd.f32 %v1912, %v1913
  %v1915 = vsel %vm659, %v1748, 0.0
  %v1916 = vadd.f32 %v1914, %v1915
  %v1917 = vsel %vm659, %v1749, 0.0
  %v1918 = vadd.f32 %v1916, %v1917
  %v1919 = vsel %vm659, %v1750, 0.0
  %v1920 = vadd.f32 %v1918, %v1919
  %v1921 = vsel %vm659, %v1751, 0.0
  %v1922 = vadd.f32 %v1920, %v1921
  %v1923 = vsel %vm659, %v1752, 0.0
  %v1924 = vadd.f32 %v1922, %v1923
  %v1925 = vsel %vm659, %v1753, 0.0
  %v1926 = vadd.f32 %v1924, %v1925
  %v1927 = vsel %vm659, %v1754, 0.0
  %v1928 = vadd.f32 %v1926, %v1927
  %v1929 = vsel %vm659, %v1755, 0.0
  %v1930 = vadd.f32 %v1928, %v1929
  %v1931 = vsel %vm659, %v1756, 0.0
  %v1932 = vadd.f32 %v1930, %v1931
  %v1933 = vsel %vm659, %v1757, 0.0
  %v1934 = vadd.f32 %v1932, %v1933
  %v1935 = vsel %vm659, %v1758, 0.0
  %v1936 = vadd.f32 %v1934, %v1935
  %v1937 = vsel %vm659, %v1759, 0.0
  %v1938 = vadd.f32 %v1936, %v1937
  %v1939 = vsel %vm659, %v1760, 0.0
  %v1940 = vadd.f32 %v1938, %v1939
  %v1941 = vsel %vm659, %v1761, 0.0
  %v1942 = vadd.f32 %v1940, %v1941
  %v1943 = vsel %vm659, %v1762, 0.0
  %v1944 = vadd.f32 %v1942, %v1943
  %v1945 = vsel %vm659, %v1763, 0.0
  %v1946 = vadd.f32 %v1944, %v1945
  %v1947 = vsel %vm659, %v1764, 0.0
  %v1948 = vadd.f32 %v1946, %v1947
  %v1949 = vsel %vm659, %v1765, 0.0
  %v1950 = vadd.f32 %v1948, %v1949
  %v1951 = vsel %vm659, %v1766, 0.0
  %v1952 = vadd.f32 %v1950, %v1951
  %v1953 = vsel %vm659, %v1767, 0.0
  %v1954 = vadd.f32 %v1952, %v1953
  %v1955 = vsel %vm659, %v1768, 0.0
  %v1956 = vadd.f32 %v1954, %v1955
  %v1957 = vsel %vm659, %v1769, 0.0
  %v1958 = vadd.f32 %v1956, %v1957
  %v1959 = vsel %vm659, %v1770, 0.0
  %v1960 = vadd.f32 %v1958, %v1959
  %v1961 = vsel %vm659, %v1771, 0.0
  %v1962 = vadd.f32 %v1960, %v1961
  %v1963 = vsel %vm659, %v1772, 0.0
  %v1964 = vadd.f32 %v1962, %v1963
  %v1965 = vsel %vm659, %v1773, 0.0
  %v1966 = vadd.f32 %v1964, %v1965
  %v1967 = vsel %vm659, %v1774, 0.0
  %v1968 = vadd.f32 %v1966, %v1967
  %v1969 = vsel %vm659, %v1775, 0.0
  %v1970 = vadd.f32 %v1968, %v1969
  %v1971 = vsel %vm659, %v1776, 0.0
  %v1972 = vadd.f32 %v1970, %v1971
  %v1973 = vsel %vm659, %v1777, 0.0
  %v1974 = vadd.f32 %v1972, %v1973
  %v1975 = vsel %vm659, %v1778, 0.0
  %v1976 = vadd.f32 %v1974, %v1975
  %v1977 = vsel %vm659, %v1779, 0.0
  %v1978 = vadd.f32 %v1976, %v1977
  %v1979 = vsel %vm659, %v1780, 0.0
  %v1980 = vadd.f32 %v1978, %v1979
  %v1981 = vsel %vm659, %v1781, 0.0
  %v1982 = vadd.f32 %v1980, %v1981
  %v1983 = vsel %vm659, %v1782, 0.0
  %v1984 = vadd.f32 %v1982, %v1983
  %v1985 = vsel %vm659, %v1783, 0.0
  %v1986 = vadd.f32 %v1984, %v1985
  %v1987 = vsel %vm659, %v1784, 0.0
  %v1988 = vadd.f32 %v1986, %v1987
  %v1989 = vsel %vm659, %v1785, 0.0
  %v1990 = vadd.f32 %v1988, %v1989
  %v1991 = vsel %vm659, %v1786, 0.0
  %v1992 = vadd.f32 %v1990, %v1991
  %v1993 = vsel %vm659, %v1787, 0.0
  %v1994 = vadd.f32 %v1992, %v1993
  %v1995 = vsel %vm659, %v1788, 0.0
  %v1996 = vadd.f32 %v1994, %v1995
  %v1997 = vsel %vm659, %v1789, 0.0
  %v1998 = vadd.f32 %v1996, %v1997
  %v1999 = vsel %vm659, %v1790, 0.0
  %v2000 = vadd.f32 %v1998, %v1999
  %v2001 = vsel %vm659, %v1791, 0.0
  %v2002 = vadd.f32 %v2000, %v2001
  %v2003 = vsel %vm659, %v1792, 0.0
  %v2004 = vadd.f32 %v2002, %v2003
  %v2005 = vsel %vm659, %v1793, 0.0
  %v2006 = vadd.f32 %v2004, %v2005
  %v2007 = vsel %vm659, %v1794, 0.0
  %v2008 = vadd.f32 %v2006, %v2007
  %v2009 = vsel %vm659, %v1795, 0.0
  %v2010 = vadd.f32 %v2008, %v2009
  %v2011 = vsel %vm659, %v1796, 0.0
  %v2012 = vadd.f32 %v2010, %v2011
  %v2013 = vsel %vm659, %v1797, 0.0
  %v2014 = vadd.f32 %v2012, %v2013
  %v2015 = vsel %vm659, %v1798, 0.0
  %v2016 = vadd.f32 %v2014, %v2015
  %v2017 = vsel %vm659, %v1799, 0.0
  %v2018 = vadd.f32 %v2016, %v2017
  %v2019 = vsel %vm659, %v1800, 0.0
  %v2020 = vadd.f32 %v2018, %v2019
  %v2021 = vsel %vm659, %v1801, 0.0
  %v2022 = vadd.f32 %v2020, %v2021
  %v2023 = vsel %vm659, %v1802, 0.0
  %v2024 = vadd.f32 %v2022, %v2023
  %v2025 = vsel %vm659, %v1803, 0.0
  %v2026 = vadd.f32 %v2024, %v2025
  %v2027 = vsel %vm659, %v1804, 0.0
  %v2028 = vadd.f32 %v2026, %v2027
  %v2029 = vsel %vm659, %v1805, 0.0
  %v2030 = vadd.f32 %v2028, %v2029
  %v2031 = vsel %vm659, %v1806, 0.0
  %v2032 = vadd.f32 %v2030, %v2031
  %v2033 = vsel %vm659, %v1807, 0.0
  %v2034 = vadd.f32 %v2032, %v2033
  %v2035 = vsel %vm659, %v1808, 0.0
  %v2036 = vadd.f32 %v2034, %v2035
  %v2037 = vsel %vm659, %v1809, 0.0
  %v2038 = vadd.f32 %v2036, %v2037
  %v2039 = vsel %vm659, %v1810, 0.0
  %v2040 = vadd.f32 %v2038, %v2039
  %v2041 = vsel %vm659, %v1811, 0.0
  %v2042 = vadd.f32 %v2040, %v2041
  %v2043 = vsel %vm659, %v1812, 0.0
  %v2044 = vadd.f32 %v2042, %v2043
  %v2045 = vsel %vm659, %v1813, 0.0
  %v2046 = vadd.f32 %v2044, %v2045
  %v2047 = vsel %vm659, %v1814, 0.0
  %v2048 = vadd.f32 %v2046, %v2047
  %v2049 = vsel %vm659, %v1815, 0.0
  %v2050 = vadd.f32 %v2048, %v2049
  %v2051 = vsel %vm659, %v1816, 0.0
  %v2052 = vadd.f32 %v2050, %v2051
  %v2053 = vsel %vm659, %v1817, 0.0
  %v2054 = vadd.f32 %v2052, %v2053
  %v2055 = vsel %vm659, %v1818, 0.0
  %v2056 = vadd.f32 %v2054, %v2055
  %v2057 = vsel %vm659, %v1819, 0.0
  %v2058 = vadd.f32 %v2056, %v2057
  %v2059 = vsel %vm659, %v1820, 0.0
  %v2060 = vadd.f32 %v2058, %v2059
  %v2061 = vsel %vm659, %v1821, 0.0
  %v2062 = vadd.f32 %v2060, %v2061
  %v2063 = vsel %vm659, %v1822, 0.0
  %v2064 = vadd.f32 %v2062, %v2063
  %v2065 = vsel %vm659, %v1823, 0.0
  %v2066 = vadd.f32 %v2064, %v2065
  %v2067 = vsel %vm659, %v1824, 0.0
  %v2068 = vadd.f32 %v2066, %v2067
  %v2069 = vsel %vm659, %v1825, 0.0
  %v2070 = vadd.f32 %v2068, %v2069
  %v2071 = vsel %vm659, %v1826, 0.0
  %v2072 = vadd.f32 %v2070, %v2071
  %v2073 = vsel %vm659, %v1827, 0.0
  %v2074 = vadd.f32 %v2072, %v2073
  %v2075 = vsel %vm659, %v1828, 0.0
  %v2076 = vadd.f32 %v2074, %v2075
  %v2077 = vsel %vm659, %v1829, 0.0
  %v2078 = vadd.f32 %v2076, %v2077
  %v2079 = vsel %vm659, %v1830, 0.0
  %v2080 = vadd.f32 %v2078, %v2079
  %v2081 = vsel %vm659, %v1831, 0.0
  %v2082 = vadd.f32 %v2080, %v2081
  %v2083 = vsel %vm659, %v1832, 0.0
  %v2084 = vadd.f32 %v2082, %v2083
  %v2085 = vsel %vm659, %v1833, 0.0
  %v2086 = vadd.f32 %v2084, %v2085
  %v2087 = vsel %vm659, %v1834, 0.0
  %v2088 = vadd.f32 %v2086, %v2087
  %v2089 = vsel %vm659, %v1835, 0.0
  %v2090 = vadd.f32 %v2088, %v2089
  %2091 = vadd.xlane.f32.xlu0 %v2090
  %v2092 = vpop.xlane.xlu0 %2091
  %v2093 = vrot.slane %v2092, 4
  %v2094 = vadd.f32 %v2092, %v2093
  %v2095 = vrot.slane %v2094, 2
  %v2096 = vadd.f32 %v2094, %v2095
  %v2097 = vrot.slane %v2096, 1
  %v2098 = vadd.f32 %v2096, %v2097
  %s2099 = vtos %v2098
  %v2100 = vmul.f32 %v147, %v147
  %v2101 = vmul.f32 %v148, %v148
  %v2102 = vmul.f32 %v149, %v149
  %v2103 = vmul.f32 %v150, %v150
  %v2104 = vmul.f32 %v151, %v151
  %v2105 = vmul.f32 %v152, %v152
  %v2106 = vmul.f32 %v153, %v153
  %v2107 = vmul.f32 %v154, %v154
  %v2108 = vmul.f32 %v155, %v155
  %v2109 = vmul.f32 %v156, %v156
  %v2110 = vmul.f32 %v157, %v157
  %v2111 = vmul.f32 %v158, %v158
  %v2112 = vmul.f32 %v159, %v159
  %v2113 = vmul.f32 %v160, %v160
  %v2114 = vmul.f32 %v161, %v161
  %v2115 = vmul.f32 %v162, %v162
  %v2116 = vmul.f32 %v163, %v163
  %v2117 = vmul.f32 %v164, %v164
  %v2118 = vmul.f32 %v165, %v165
  %v2119 = vmul.f32 %v166, %v166
  %v2120 = vmul.f32 %v167, %v167
  %v2121 = vmul.f32 %v168, %v168
  %v2122 = vmul.f32 %v169, %v169
  %v2123 = vmul.f32 %v170, %v170
  %v2124 = vmul.f32 %v171, %v171
  %v2125 = vmul.f32 %v172, %v172
  %v2126 = vmul.f32 %v173, %v173
  %v2127 = vmul.f32 %v174, %v174
  %v2128 = vmul.f32 %v175, %v175
  %v2129 = vmul.f32 %v176, %v176
  %v2130 = vmul.f32 %v177, %v177
  %v2131 = vmul.f32 %v178, %v178
  %v2132 = vmul.f32 %v179, %v179
  %v2133 = vmul.f32 %v180, %v180
  %v2134 = vmul.f32 %v181, %v181
  %v2135 = vmul.f32 %v182, %v182
  %v2136 = vmul.f32 %v183, %v183
  %v2137 = vmul.f32 %v184, %v184
  %v2138 = vmul.f32 %v185, %v185
  %v2139 = vmul.f32 %v186, %v186
  %v2140 = vmul.f32 %v187, %v187
  %v2141 = vmul.f32 %v188, %v188
  %v2142 = vmul.f32 %v189, %v189
  %v2143 = vmul.f32 %v190, %v190
  %v2144 = vmul.f32 %v191, %v191
  %v2145 = vmul.f32 %v192, %v192
  %v2146 = vmul.f32 %v193, %v193
  %v2147 = vmul.f32 %v194, %v194
  %v2148 = vmul.f32 %v195, %v195
  %v2149 = vmul.f32 %v196, %v196
  %v2150 = vmul.f32 %v197, %v197
  %v2151 = vmul.f32 %v198, %v198
  %v2152 = vmul.f32 %v199, %v199
  %v2153 = vmul.f32 %v200, %v200
  %v2154 = vmul.f32 %v201, %v201
  %v2155 = vmul.f32 %v202, %v202
  %v2156 = vmul.f32 %v203, %v203
  %v2157 = vmul.f32 %v204, %v204
  %v2158 = vmul.f32 %v205, %v205
  %v2159 = vmul.f32 %v206, %v206
  %v2160 = vmul.f32 %v207, %v207
  %v2161 = vmul.f32 %v208, %v208
  %v2162 = vmul.f32 %v209, %v209
  %v2163 = vmul.f32 %v210, %v210
  %v2164 = vmul.f32 %v211, %v211
  %v2165 = vmul.f32 %v212, %v212
  %v2166 = vmul.f32 %v213, %v213
  %v2167 = vmul.f32 %v214, %v214
  %v2168 = vmul.f32 %v215, %v215
  %v2169 = vmul.f32 %v216, %v216
  %v2170 = vmul.f32 %v217, %v217
  %v2171 = vmul.f32 %v218, %v218
  %v2172 = vmul.f32 %v219, %v219
  %v2173 = vmul.f32 %v220, %v220
  %v2174 = vmul.f32 %v221, %v221
  %v2175 = vmul.f32 %v222, %v222
  %v2176 = vmul.f32 %v223, %v223
  %v2177 = vmul.f32 %v224, %v224
  %v2178 = vmul.f32 %v225, %v225
  %v2179 = vmul.f32 %v226, %v226
  %v2180 = vmul.f32 %v227, %v227
  %v2181 = vmul.f32 %v228, %v228
  %v2182 = vmul.f32 %v229, %v229
  %v2183 = vmul.f32 %v230, %v230
  %v2184 = vmul.f32 %v231, %v231
  %v2185 = vmul.f32 %v232, %v232
  %v2186 = vmul.f32 %v233, %v233
  %v2187 = vmul.f32 %v234, %v234
  %v2188 = vmul.f32 %v235, %v235
  %v2189 = vmul.f32 %v236, %v236
  %v2190 = vmul.f32 %v237, %v237
  %v2191 = vmul.f32 %v238, %v238
  %v2192 = vmul.f32 %v239, %v239
  %v2193 = vmul.f32 %v240, %v240
  %v2194 = vmul.f32 %v241, %v241
  %v2195 = vmul.f32 %v242, %v242
  %v2196 = vmul.f32 %v243, %v243
  %v2197 = vmul.f32 %v244, %v244
  %v2198 = vmul.f32 %v245, %v245
  %v2199 = vmul.f32 %v246, %v246
  %v2200 = vmul.f32 %v247, %v247
  %v2201 = vmul.f32 %v248, %v248
  %v2202 = vmul.f32 %v249, %v249
  %v2203 = vmul.f32 %v250, %v250
  %v2204 = vmul.f32 %v251, %v251
  %v2205 = vmul.f32 %v252, %v252
  %v2206 = vmul.f32 %v253, %v253
  %v2207 = vmul.f32 %v254, %v254
  %v2208 = vmul.f32 %v255, %v255
  %v2209 = vmul.f32 %v256, %v256
  %v2210 = vmul.f32 %v257, %v257
  %v2211 = vmul.f32 %v258, %v258
  %v2212 = vmul.f32 %v259, %v259
  %v2213 = vmul.f32 %v260, %v260
  %v2214 = vmul.f32 %v261, %v261
  %v2215 = vmul.f32 %v262, %v262
  %v2216 = vmul.f32 %v263, %v263
  %v2217 = vmul.f32 %v264, %v264
  %v2218 = vmul.f32 %v265, %v265
  %v2219 = vmul.f32 %v266, %v266
  %v2220 = vmul.f32 %v267, %v267
  %v2221 = vmul.f32 %v268, %v268
  %v2222 = vmul.f32 %v269, %v269
  %v2223 = vmul.f32 %v270, %v270
  %v2224 = vmul.f32 %v271, %v271
  %v2225 = vmul.f32 %v272, %v272
  %v2226 = vmul.f32 %v273, %v273
  %v2227 = vmul.f32 %v274, %v274
  %v2228 = vsel %vm659, %v2100, 0.0
  %v2229 = vsel %vm659, %v2101, 0.0
  %v2230 = vadd.f32 %v2228, %v2229
  %v2231 = vsel %vm659, %v2102, 0.0
  %v2232 = vadd.f32 %v2230, %v2231
  %v2233 = vsel %vm659, %v2103, 0.0
  %v2234 = vadd.f32 %v2232, %v2233
  %v2235 = vsel %vm659, %v2104, 0.0
  %v2236 = vadd.f32 %v2234, %v2235
  %v2237 = vsel %vm659, %v2105, 0.0
  %v2238 = vadd.f32 %v2236, %v2237
  %v2239 = vsel %vm659, %v2106, 0.0
  %v2240 = vadd.f32 %v2238, %v2239
  %v2241 = vsel %vm659, %v2107, 0.0
  %v2242 = vadd.f32 %v2240, %v2241
  %v2243 = vsel %vm659, %v2108, 0.0
  %v2244 = vadd.f32 %v2242, %v2243
  %v2245 = vsel %vm659, %v2109, 0.0
  %v2246 = vadd.f32 %v2244, %v2245
  %v2247 = vsel %vm659, %v2110, 0.0
  %v2248 = vadd.f32 %v2246, %v2247
  %v2249 = vsel %vm659, %v2111, 0.0
  %v2250 = vadd.f32 %v2248, %v2249
  %v2251 = vsel %vm659, %v2112, 0.0
  %v2252 = vadd.f32 %v2250, %v2251
  %v2253 = vsel %vm659, %v2113, 0.0
  %v2254 = vadd.f32 %v2252, %v2253
  %v2255 = vsel %vm659, %v2114, 0.0
  %v2256 = vadd.f32 %v2254, %v2255
  %v2257 = vsel %vm659, %v2115, 0.0
  %v2258 = vadd.f32 %v2256, %v2257
  %v2259 = vsel %vm659, %v2116, 0.0
  %v2260 = vadd.f32 %v2258, %v2259
  %v2261 = vsel %vm659, %v2117, 0.0
  %v2262 = vadd.f32 %v2260, %v2261
  %v2263 = vsel %vm659, %v2118, 0.0
  %v2264 = vadd.f32 %v2262, %v2263
  %v2265 = vsel %vm659, %v2119, 0.0
  %v2266 = vadd.f32 %v2264, %v2265
  %v2267 = vsel %vm659, %v2120, 0.0
  %v2268 = vadd.f32 %v2266, %v2267
  %v2269 = vsel %vm659, %v2121, 0.0
  %v2270 = vadd.f32 %v2268, %v2269
  %v2271 = vsel %vm659, %v2122, 0.0
  %v2272 = vadd.f32 %v2270, %v2271
  %v2273 = vsel %vm659, %v2123, 0.0
  %v2274 = vadd.f32 %v2272, %v2273
  %v2275 = vsel %vm659, %v2124, 0.0
  %v2276 = vadd.f32 %v2274, %v2275
  %v2277 = vsel %vm659, %v2125, 0.0
  %v2278 = vadd.f32 %v2276, %v2277
  %v2279 = vsel %vm659, %v2126, 0.0
  %v2280 = vadd.f32 %v2278, %v2279
  %v2281 = vsel %vm659, %v2127, 0.0
  %v2282 = vadd.f32 %v2280, %v2281
  %v2283 = vsel %vm659, %v2128, 0.0
  %v2284 = vadd.f32 %v2282, %v2283
  %v2285 = vsel %vm659, %v2129, 0.0
  %v2286 = vadd.f32 %v2284, %v2285
  %v2287 = vsel %vm659, %v2130, 0.0
  %v2288 = vadd.f32 %v2286, %v2287
  %v2289 = vsel %vm659, %v2131, 0.0
  %v2290 = vadd.f32 %v2288, %v2289
  %v2291 = vsel %vm659, %v2132, 0.0
  %v2292 = vadd.f32 %v2290, %v2291
  %v2293 = vsel %vm659, %v2133, 0.0
  %v2294 = vadd.f32 %v2292, %v2293
  %v2295 = vsel %vm659, %v2134, 0.0
  %v2296 = vadd.f32 %v2294, %v2295
  %v2297 = vsel %vm659, %v2135, 0.0
  %v2298 = vadd.f32 %v2296, %v2297
  %v2299 = vsel %vm659, %v2136, 0.0
  %v2300 = vadd.f32 %v2298, %v2299
  %v2301 = vsel %vm659, %v2137, 0.0
  %v2302 = vadd.f32 %v2300, %v2301
  %v2303 = vsel %vm659, %v2138, 0.0
  %v2304 = vadd.f32 %v2302, %v2303
  %v2305 = vsel %vm659, %v2139, 0.0
  %v2306 = vadd.f32 %v2304, %v2305
  %v2307 = vsel %vm659, %v2140, 0.0
  %v2308 = vadd.f32 %v2306, %v2307
  %v2309 = vsel %vm659, %v2141, 0.0
  %v2310 = vadd.f32 %v2308, %v2309
  %v2311 = vsel %vm659, %v2142, 0.0
  %v2312 = vadd.f32 %v2310, %v2311
  %v2313 = vsel %vm659, %v2143, 0.0
  %v2314 = vadd.f32 %v2312, %v2313
  %v2315 = vsel %vm659, %v2144, 0.0
  %v2316 = vadd.f32 %v2314, %v2315
  %v2317 = vsel %vm659, %v2145, 0.0
  %v2318 = vadd.f32 %v2316, %v2317
  %v2319 = vsel %vm659, %v2146, 0.0
  %v2320 = vadd.f32 %v2318, %v2319
  %v2321 = vsel %vm659, %v2147, 0.0
  %v2322 = vadd.f32 %v2320, %v2321
  %v2323 = vsel %vm659, %v2148, 0.0
  %v2324 = vadd.f32 %v2322, %v2323
  %v2325 = vsel %vm659, %v2149, 0.0
  %v2326 = vadd.f32 %v2324, %v2325
  %v2327 = vsel %vm659, %v2150, 0.0
  %v2328 = vadd.f32 %v2326, %v2327
  %v2329 = vsel %vm659, %v2151, 0.0
  %v2330 = vadd.f32 %v2328, %v2329
  %v2331 = vsel %vm659, %v2152, 0.0
  %v2332 = vadd.f32 %v2330, %v2331
  %v2333 = vsel %vm659, %v2153, 0.0
  %v2334 = vadd.f32 %v2332, %v2333
  %v2335 = vsel %vm659, %v2154, 0.0
  %v2336 = vadd.f32 %v2334, %v2335
  %v2337 = vsel %vm659, %v2155, 0.0
  %v2338 = vadd.f32 %v2336, %v2337
  %v2339 = vsel %vm659, %v2156, 0.0
  %v2340 = vadd.f32 %v2338, %v2339
  %v2341 = vsel %vm659, %v2157, 0.0
  %v2342 = vadd.f32 %v2340, %v2341
  %v2343 = vsel %vm659, %v2158, 0.0
  %v2344 = vadd.f32 %v2342, %v2343
  %v2345 = vsel %vm659, %v2159, 0.0
  %v2346 = vadd.f32 %v2344, %v2345
  %v2347 = vsel %vm659, %v2160, 0.0
  %v2348 = vadd.f32 %v2346, %v2347
  %v2349 = vsel %vm659, %v2161, 0.0
  %v2350 = vadd.f32 %v2348, %v2349
  %v2351 = vsel %vm659, %v2162, 0.0
  %v2352 = vadd.f32 %v2350, %v2351
  %v2353 = vsel %vm659, %v2163, 0.0
  %v2354 = vadd.f32 %v2352, %v2353
  %v2355 = vsel %vm659, %v2164, 0.0
  %v2356 = vadd.f32 %v2354, %v2355
  %v2357 = vsel %vm659, %v2165, 0.0
  %v2358 = vadd.f32 %v2356, %v2357
  %v2359 = vsel %vm659, %v2166, 0.0
  %v2360 = vadd.f32 %v2358, %v2359
  %v2361 = vsel %vm659, %v2167, 0.0
  %v2362 = vadd.f32 %v2360, %v2361
  %v2363 = vsel %vm659, %v2168, 0.0
  %v2364 = vadd.f32 %v2362, %v2363
  %v2365 = vsel %vm659, %v2169, 0.0
  %v2366 = vadd.f32 %v2364, %v2365
  %v2367 = vsel %vm659, %v2170, 0.0
  %v2368 = vadd.f32 %v2366, %v2367
  %v2369 = vsel %vm659, %v2171, 0.0
  %v2370 = vadd.f32 %v2368, %v2369
  %v2371 = vsel %vm659, %v2172, 0.0
  %v2372 = vadd.f32 %v2370, %v2371
  %v2373 = vsel %vm659, %v2173, 0.0
  %v2374 = vadd.f32 %v2372, %v2373
  %v2375 = vsel %vm659, %v2174, 0.0
  %v2376 = vadd.f32 %v2374, %v2375
  %v2377 = vsel %vm659, %v2175, 0.0
  %v2378 = vadd.f32 %v2376, %v2377
  %v2379 = vsel %vm659, %v2176, 0.0
  %v2380 = vadd.f32 %v2378, %v2379
  %v2381 = vsel %vm659, %v2177, 0.0
  %v2382 = vadd.f32 %v2380, %v2381
  %v2383 = vsel %vm659, %v2178, 0.0
  %v2384 = vadd.f32 %v2382, %v2383
  %v2385 = vsel %vm659, %v2179, 0.0
  %v2386 = vadd.f32 %v2384, %v2385
  %v2387 = vsel %vm659, %v2180, 0.0
  %v2388 = vadd.f32 %v2386, %v2387
  %v2389 = vsel %vm659, %v2181, 0.0
  %v2390 = vadd.f32 %v2388, %v2389
  %v2391 = vsel %vm659, %v2182, 0.0
  %v2392 = vadd.f32 %v2390, %v2391
  %v2393 = vsel %vm659, %v2183, 0.0
  %v2394 = vadd.f32 %v2392, %v2393
  %v2395 = vsel %vm659, %v2184, 0.0
  %v2396 = vadd.f32 %v2394, %v2395
  %v2397 = vsel %vm659, %v2185, 0.0
  %v2398 = vadd.f32 %v2396, %v2397
  %v2399 = vsel %vm659, %v2186, 0.0
  %v2400 = vadd.f32 %v2398, %v2399
  %v2401 = vsel %vm659, %v2187, 0.0
  %v2402 = vadd.f32 %v2400, %v2401
  %v2403 = vsel %vm659, %v2188, 0.0
  %v2404 = vadd.f32 %v2402, %v2403
  %v2405 = vsel %vm659, %v2189, 0.0
  %v2406 = vadd.f32 %v2404, %v2405
  %v2407 = vsel %vm659, %v2190, 0.0
  %v2408 = vadd.f32 %v2406, %v2407
  %v2409 = vsel %vm659, %v2191, 0.0
  %v2410 = vadd.f32 %v2408, %v2409
  %v2411 = vsel %vm659, %v2192, 0.0
  %v2412 = vadd.f32 %v2410, %v2411
  %v2413 = vsel %vm659, %v2193, 0.0
  %v2414 = vadd.f32 %v2412, %v2413
  %v2415 = vsel %vm659, %v2194, 0.0
  %v2416 = vadd.f32 %v2414, %v2415
  %v2417 = vsel %vm659, %v2195, 0.0
  %v2418 = vadd.f32 %v2416, %v2417
  %v2419 = vsel %vm659, %v2196, 0.0
  %v2420 = vadd.f32 %v2418, %v2419
  %v2421 = vsel %vm659, %v2197, 0.0
  %v2422 = vadd.f32 %v2420, %v2421
  %v2423 = vsel %vm659, %v2198, 0.0
  %v2424 = vadd.f32 %v2422, %v2423
  %v2425 = vsel %vm659, %v2199, 0.0
  %v2426 = vadd.f32 %v2424, %v2425
  %v2427 = vsel %vm659, %v2200, 0.0
  %v2428 = vadd.f32 %v2426, %v2427
  %v2429 = vsel %vm659, %v2201, 0.0
  %v2430 = vadd.f32 %v2428, %v2429
  %v2431 = vsel %vm659, %v2202, 0.0
  %v2432 = vadd.f32 %v2430, %v2431
  %v2433 = vsel %vm659, %v2203, 0.0
  %v2434 = vadd.f32 %v2432, %v2433
  %v2435 = vsel %vm659, %v2204, 0.0
  %v2436 = vadd.f32 %v2434, %v2435
  %v2437 = vsel %vm659, %v2205, 0.0
  %v2438 = vadd.f32 %v2436, %v2437
  %v2439 = vsel %vm659, %v2206, 0.0
  %v2440 = vadd.f32 %v2438, %v2439
  %v2441 = vsel %vm659, %v2207, 0.0
  %v2442 = vadd.f32 %v2440, %v2441
  %v2443 = vsel %vm659, %v2208, 0.0
  %v2444 = vadd.f32 %v2442, %v2443
  %v2445 = vsel %vm659, %v2209, 0.0
  %v2446 = vadd.f32 %v2444, %v2445
  %v2447 = vsel %vm659, %v2210, 0.0
  %v2448 = vadd.f32 %v2446, %v2447
  %v2449 = vsel %vm659, %v2211, 0.0
  %v2450 = vadd.f32 %v2448, %v2449
  %v2451 = vsel %vm659, %v2212, 0.0
  %v2452 = vadd.f32 %v2450, %v2451
  %v2453 = vsel %vm659, %v2213, 0.0
  %v2454 = vadd.f32 %v2452, %v2453
  %v2455 = vsel %vm659, %v2214, 0.0
  %v2456 = vadd.f32 %v2454, %v2455
  %v2457 = vsel %vm659, %v2215, 0.0
  %v2458 = vadd.f32 %v2456, %v2457
  %v2459 = vsel %vm659, %v2216, 0.0
  %v2460 = vadd.f32 %v2458, %v2459
  %v2461 = vsel %vm659, %v2217, 0.0
  %v2462 = vadd.f32 %v2460, %v2461
  %v2463 = vsel %vm659, %v2218, 0.0
  %v2464 = vadd.f32 %v2462, %v2463
  %v2465 = vsel %vm659, %v2219, 0.0
  %v2466 = vadd.f32 %v2464, %v2465
  %v2467 = vsel %vm659, %v2220, 0.0
  %v2468 = vadd.f32 %v2466, %v2467
  %v2469 = vsel %vm659, %v2221, 0.0
  %v2470 = vadd.f32 %v2468, %v2469
  %v2471 = vsel %vm659, %v2222, 0.0
  %v2472 = vadd.f32 %v2470, %v2471
  %v2473 = vsel %vm659, %v2223, 0.0
  %v2474 = vadd.f32 %v2472, %v2473
  %v2475 = vsel %vm659, %v2224, 0.0
  %v2476 = vadd.f32 %v2474, %v2475
  %v2477 = vsel %vm659, %v2225, 0.0
  %v2478 = vadd.f32 %v2476, %v2477
  %v2479 = vsel %vm659, %v2226, 0.0
  %v2480 = vadd.f32 %v2478, %v2479
  %v2481 = vsel %vm659, %v2227, 0.0
  %v2482 = vadd.f32 %v2480, %v2481
  %2483 = vadd.xlane.f32.xlu0 %v2482
  %v2484 = vpop.xlane.xlu0 %2483
  %v2485 = vrot.slane %v2484, 4
  %v2486 = vadd.f32 %v2484, %v2485
  %v2487 = vrot.slane %v2486, 2
  %v2488 = vadd.f32 %v2486, %v2487
  %v2489 = vrot.slane %v2488, 1
  %v2490 = vadd.f32 %v2488, %v2489
  %s2491 = vtos %v2490
  %v2492 = vmul.f32 %v147, %v275
  %v2493 = vmul.f32 %v148, %v276
  %v2494 = vmul.f32 %v149, %v277
  %v2495 = vmul.f32 %v150, %v278
  %v2496 = vmul.f32 %v151, %v279
  %v2497 = vmul.f32 %v152, %v280
  %v2498 = vmul.f32 %v153, %v281
  %v2499 = vmul.f32 %v154, %v282
  %v2500 = vmul.f32 %v155, %v283
  %v2501 = vmul.f32 %v156, %v284
  %v2502 = vmul.f32 %v157, %v285
  %v2503 = vmul.f32 %v158, %v286
  %v2504 = vmul.f32 %v159, %v287
  %v2505 = vmul.f32 %v160, %v288
  %v2506 = vmul.f32 %v161, %v289
  %v2507 = vmul.f32 %v162, %v290
  %v2508 = vmul.f32 %v163, %v291
  %v2509 = vmul.f32 %v164, %v292
  %v2510 = vmul.f32 %v165, %v293
  %v2511 = vmul.f32 %v166, %v294
  %v2512 = vmul.f32 %v167, %v295
  %v2513 = vmul.f32 %v168, %v296
  %v2514 = vmul.f32 %v169, %v297
  %v2515 = vmul.f32 %v170, %v298
  %v2516 = vmul.f32 %v171, %v299
  %v2517 = vmul.f32 %v172, %v300
  %v2518 = vmul.f32 %v173, %v301
  %v2519 = vmul.f32 %v174, %v302
  %v2520 = vmul.f32 %v175, %v303
  %v2521 = vmul.f32 %v176, %v304
  %v2522 = vmul.f32 %v177, %v305
  %v2523 = vmul.f32 %v178, %v306
  %v2524 = vmul.f32 %v179, %v307
  %v2525 = vmul.f32 %v180, %v308
  %v2526 = vmul.f32 %v181, %v309
  %v2527 = vmul.f32 %v182, %v310
  %v2528 = vmul.f32 %v183, %v311
  %v2529 = vmul.f32 %v184, %v312
  %v2530 = vmul.f32 %v185, %v313
  %v2531 = vmul.f32 %v186, %v314
  %v2532 = vmul.f32 %v187, %v315
  %v2533 = vmul.f32 %v188, %v316
  %v2534 = vmul.f32 %v189, %v317
  %v2535 = vmul.f32 %v190, %v318
  %v2536 = vmul.f32 %v191, %v319
  %v2537 = vmul.f32 %v192, %v320
  %v2538 = vmul.f32 %v193, %v321
  %v2539 = vmul.f32 %v194, %v322
  %v2540 = vmul.f32 %v195, %v323
  %v2541 = vmul.f32 %v196, %v324
  %v2542 = vmul.f32 %v197, %v325
  %v2543 = vmul.f32 %v198, %v326
  %v2544 = vmul.f32 %v199, %v327
  %v2545 = vmul.f32 %v200, %v328
  %v2546 = vmul.f32 %v201, %v329
  %v2547 = vmul.f32 %v202, %v330
  %v2548 = vmul.f32 %v203, %v331
  %v2549 = vmul.f32 %v204, %v332
  %v2550 = vmul.f32 %v205, %v333
  %v2551 = vmul.f32 %v206, %v334
  %v2552 = vmul.f32 %v207, %v335
  %v2553 = vmul.f32 %v208, %v336
  %v2554 = vmul.f32 %v209, %v337
  %v2555 = vmul.f32 %v210, %v338
  %v2556 = vmul.f32 %v211, %v339
  %v2557 = vmul.f32 %v212, %v340
  %v2558 = vmul.f32 %v213, %v341
  %v2559 = vmul.f32 %v214, %v342
  %v2560 = vmul.f32 %v215, %v343
  %v2561 = vmul.f32 %v216, %v344
  %v2562 = vmul.f32 %v217, %v345
  %v2563 = vmul.f32 %v218, %v346
  %v2564 = vmul.f32 %v219, %v347
  %v2565 = vmul.f32 %v220, %v348
  %v2566 = vmul.f32 %v221, %v349
  %v2567 = vmul.f32 %v222, %v350
  %v2568 = vmul.f32 %v223, %v351
  %v2569 = vmul.f32 %v224, %v352
  %v2570 = vmul.f32 %v225, %v353
  %v2571 = vmul.f32 %v226, %v354
  %v2572 = vmul.f32 %v227, %v355
  %v2573 = vmul.f32 %v228, %v356
  %v2574 = vmul.f32 %v229, %v357
  %v2575 = vmul.f32 %v230, %v358
  %v2576 = vmul.f32 %v231, %v359
  %v2577 = vmul.f32 %v232, %v360
  %v2578 = vmul.f32 %v233, %v361
  %v2579 = vmul.f32 %v234, %v362
  %v2580 = vmul.f32 %v235, %v363
  %v2581 = vmul.f32 %v236, %v364
  %v2582 = vmul.f32 %v237, %v365
  %v2583 = vmul.f32 %v238, %v366
  %v2584 = vmul.f32 %v239, %v367
  %v2585 = vmul.f32 %v240, %v368
  %v2586 = vmul.f32 %v241, %v369
  %v2587 = vmul.f32 %v242, %v370
  %v2588 = vmul.f32 %v243, %v371
  %v2589 = vmul.f32 %v244, %v372
  %v2590 = vmul.f32 %v245, %v373
  %v2591 = vmul.f32 %v246, %v374
  %v2592 = vmul.f32 %v247, %v375
  %v2593 = vmul.f32 %v248, %v376
  %v2594 = vmul.f32 %v249, %v377
  %v2595 = vmul.f32 %v250, %v378
  %v2596 = vmul.f32 %v251, %v379
  %v2597 = vmul.f32 %v252, %v380
  %v2598 = vmul.f32 %v253, %v381
  %v2599 = vmul.f32 %v254, %v382
  %v2600 = vmul.f32 %v255, %v383
  %v2601 = vmul.f32 %v256, %v384
  %v2602 = vmul.f32 %v257, %v385
  %v2603 = vmul.f32 %v258, %v386
  %v2604 = vmul.f32 %v259, %v387
  %v2605 = vmul.f32 %v260, %v388
  %v2606 = vmul.f32 %v261, %v389
  %v2607 = vmul.f32 %v262, %v390
  %v2608 = vmul.f32 %v263, %v391
  %v2609 = vmul.f32 %v264, %v392
  %v2610 = vmul.f32 %v265, %v393
  %v2611 = vmul.f32 %v266, %v394
  %v2612 = vmul.f32 %v267, %v395
  %v2613 = vmul.f32 %v268, %v396
  %v2614 = vmul.f32 %v269, %v397
  %v2615 = vmul.f32 %v270, %v398
  %v2616 = vmul.f32 %v271, %v399
  %v2617 = vmul.f32 %v272, %v400
  %v2618 = vmul.f32 %v273, %v401
  %v2619 = vmul.f32 %v274, %v402
  %v2620 = vsel %vm659, %v2492, 0.0
  %v2621 = vsel %vm659, %v2493, 0.0
  %v2622 = vadd.f32 %v2620, %v2621
  %v2623 = vsel %vm659, %v2494, 0.0
  %v2624 = vadd.f32 %v2622, %v2623
  %v2625 = vsel %vm659, %v2495, 0.0
  %v2626 = vadd.f32 %v2624, %v2625
  %v2627 = vsel %vm659, %v2496, 0.0
  %v2628 = vadd.f32 %v2626, %v2627
  %v2629 = vsel %vm659, %v2497, 0.0
  %v2630 = vadd.f32 %v2628, %v2629
  %v2631 = vsel %vm659, %v2498, 0.0
  %v2632 = vadd.f32 %v2630, %v2631
  %v2633 = vsel %vm659, %v2499, 0.0
  %v2634 = vadd.f32 %v2632, %v2633
  %v2635 = vsel %vm659, %v2500, 0.0
  %v2636 = vadd.f32 %v2634, %v2635
  %v2637 = vsel %vm659, %v2501, 0.0
  %v2638 = vadd.f32 %v2636, %v2637
  %v2639 = vsel %vm659, %v2502, 0.0
  %v2640 = vadd.f32 %v2638, %v2639
  %v2641 = vsel %vm659, %v2503, 0.0
  %v2642 = vadd.f32 %v2640, %v2641
  %v2643 = vsel %vm659, %v2504, 0.0
  %v2644 = vadd.f32 %v2642, %v2643
  %v2645 = vsel %vm659, %v2505, 0.0
  %v2646 = vadd.f32 %v2644, %v2645
  %v2647 = vsel %vm659, %v2506, 0.0
  %v2648 = vadd.f32 %v2646, %v2647
  %v2649 = vsel %vm659, %v2507, 0.0
  %v2650 = vadd.f32 %v2648, %v2649
  %v2651 = vsel %vm659, %v2508, 0.0
  %v2652 = vadd.f32 %v2650, %v2651
  %v2653 = vsel %vm659, %v2509, 0.0
  %v2654 = vadd.f32 %v2652, %v2653
  %v2655 = vsel %vm659, %v2510, 0.0
  %v2656 = vadd.f32 %v2654, %v2655
  %v2657 = vsel %vm659, %v2511, 0.0
  %v2658 = vadd.f32 %v2656, %v2657
  %v2659 = vsel %vm659, %v2512, 0.0
  %v2660 = vadd.f32 %v2658, %v2659
  %v2661 = vsel %vm659, %v2513, 0.0
  %v2662 = vadd.f32 %v2660, %v2661
  %v2663 = vsel %vm659, %v2514, 0.0
  %v2664 = vadd.f32 %v2662, %v2663
  %v2665 = vsel %vm659, %v2515, 0.0
  %v2666 = vadd.f32 %v2664, %v2665
  %v2667 = vsel %vm659, %v2516, 0.0
  %v2668 = vadd.f32 %v2666, %v2667
  %v2669 = vsel %vm659, %v2517, 0.0
  %v2670 = vadd.f32 %v2668, %v2669
  %v2671 = vsel %vm659, %v2518, 0.0
  %v2672 = vadd.f32 %v2670, %v2671
  %v2673 = vsel %vm659, %v2519, 0.0
  %v2674 = vadd.f32 %v2672, %v2673
  %v2675 = vsel %vm659, %v2520, 0.0
  %v2676 = vadd.f32 %v2674, %v2675
  %v2677 = vsel %vm659, %v2521, 0.0
  %v2678 = vadd.f32 %v2676, %v2677
  %v2679 = vsel %vm659, %v2522, 0.0
  %v2680 = vadd.f32 %v2678, %v2679
  %v2681 = vsel %vm659, %v2523, 0.0
  %v2682 = vadd.f32 %v2680, %v2681
  %v2683 = vsel %vm659, %v2524, 0.0
  %v2684 = vadd.f32 %v2682, %v2683
  %v2685 = vsel %vm659, %v2525, 0.0
  %v2686 = vadd.f32 %v2684, %v2685
  %v2687 = vsel %vm659, %v2526, 0.0
  %v2688 = vadd.f32 %v2686, %v2687
  %v2689 = vsel %vm659, %v2527, 0.0
  %v2690 = vadd.f32 %v2688, %v2689
  %v2691 = vsel %vm659, %v2528, 0.0
  %v2692 = vadd.f32 %v2690, %v2691
  %v2693 = vsel %vm659, %v2529, 0.0
  %v2694 = vadd.f32 %v2692, %v2693
  %v2695 = vsel %vm659, %v2530, 0.0
  %v2696 = vadd.f32 %v2694, %v2695
  %v2697 = vsel %vm659, %v2531, 0.0
  %v2698 = vadd.f32 %v2696, %v2697
  %v2699 = vsel %vm659, %v2532, 0.0
  %v2700 = vadd.f32 %v2698, %v2699
  %v2701 = vsel %vm659, %v2533, 0.0
  %v2702 = vadd.f32 %v2700, %v2701
  %v2703 = vsel %vm659, %v2534, 0.0
  %v2704 = vadd.f32 %v2702, %v2703
  %v2705 = vsel %vm659, %v2535, 0.0
  %v2706 = vadd.f32 %v2704, %v2705
  %v2707 = vsel %vm659, %v2536, 0.0
  %v2708 = vadd.f32 %v2706, %v2707
  %v2709 = vsel %vm659, %v2537, 0.0
  %v2710 = vadd.f32 %v2708, %v2709
  %v2711 = vsel %vm659, %v2538, 0.0
  %v2712 = vadd.f32 %v2710, %v2711
  %v2713 = vsel %vm659, %v2539, 0.0
  %v2714 = vadd.f32 %v2712, %v2713
  %v2715 = vsel %vm659, %v2540, 0.0
  %v2716 = vadd.f32 %v2714, %v2715
  %v2717 = vsel %vm659, %v2541, 0.0
  %v2718 = vadd.f32 %v2716, %v2717
  %v2719 = vsel %vm659, %v2542, 0.0
  %v2720 = vadd.f32 %v2718, %v2719
  %v2721 = vsel %vm659, %v2543, 0.0
  %v2722 = vadd.f32 %v2720, %v2721
  %v2723 = vsel %vm659, %v2544, 0.0
  %v2724 = vadd.f32 %v2722, %v2723
  %v2725 = vsel %vm659, %v2545, 0.0
  %v2726 = vadd.f32 %v2724, %v2725
  %v2727 = vsel %vm659, %v2546, 0.0
  %v2728 = vadd.f32 %v2726, %v2727
  %v2729 = vsel %vm659, %v2547, 0.0
  %v2730 = vadd.f32 %v2728, %v2729
  %v2731 = vsel %vm659, %v2548, 0.0
  %v2732 = vadd.f32 %v2730, %v2731
  %v2733 = vsel %vm659, %v2549, 0.0
  %v2734 = vadd.f32 %v2732, %v2733
  %v2735 = vsel %vm659, %v2550, 0.0
  %v2736 = vadd.f32 %v2734, %v2735
  %v2737 = vsel %vm659, %v2551, 0.0
  %v2738 = vadd.f32 %v2736, %v2737
  %v2739 = vsel %vm659, %v2552, 0.0
  %v2740 = vadd.f32 %v2738, %v2739
  %v2741 = vsel %vm659, %v2553, 0.0
  %v2742 = vadd.f32 %v2740, %v2741
  %v2743 = vsel %vm659, %v2554, 0.0
  %v2744 = vadd.f32 %v2742, %v2743
  %v2745 = vsel %vm659, %v2555, 0.0
  %v2746 = vadd.f32 %v2744, %v2745
  %v2747 = vsel %vm659, %v2556, 0.0
  %v2748 = vadd.f32 %v2746, %v2747
  %v2749 = vsel %vm659, %v2557, 0.0
  %v2750 = vadd.f32 %v2748, %v2749
  %v2751 = vsel %vm659, %v2558, 0.0
  %v2752 = vadd.f32 %v2750, %v2751
  %v2753 = vsel %vm659, %v2559, 0.0
  %v2754 = vadd.f32 %v2752, %v2753
  %v2755 = vsel %vm659, %v2560, 0.0
  %v2756 = vadd.f32 %v2754, %v2755
  %v2757 = vsel %vm659, %v2561, 0.0
  %v2758 = vadd.f32 %v2756, %v2757
  %v2759 = vsel %vm659, %v2562, 0.0
  %v2760 = vadd.f32 %v2758, %v2759
  %v2761 = vsel %vm659, %v2563, 0.0
  %v2762 = vadd.f32 %v2760, %v2761
  %v2763 = vsel %vm659, %v2564, 0.0
  %v2764 = vadd.f32 %v2762, %v2763
  %v2765 = vsel %vm659, %v2565, 0.0
  %v2766 = vadd.f32 %v2764, %v2765
  %v2767 = vsel %vm659, %v2566, 0.0
  %v2768 = vadd.f32 %v2766, %v2767
  %v2769 = vsel %vm659, %v2567, 0.0
  %v2770 = vadd.f32 %v2768, %v2769
  %v2771 = vsel %vm659, %v2568, 0.0
  %v2772 = vadd.f32 %v2770, %v2771
  %v2773 = vsel %vm659, %v2569, 0.0
  %v2774 = vadd.f32 %v2772, %v2773
  %v2775 = vsel %vm659, %v2570, 0.0
  %v2776 = vadd.f32 %v2774, %v2775
  %v2777 = vsel %vm659, %v2571, 0.0
  %v2778 = vadd.f32 %v2776, %v2777
  %v2779 = vsel %vm659, %v2572, 0.0
  %v2780 = vadd.f32 %v2778, %v2779
  %v2781 = vsel %vm659, %v2573, 0.0
  %v2782 = vadd.f32 %v2780, %v2781
  %v2783 = vsel %vm659, %v2574, 0.0
  %v2784 = vadd.f32 %v2782, %v2783
  %v2785 = vsel %vm659, %v2575, 0.0
  %v2786 = vadd.f32 %v2784, %v2785
  %v2787 = vsel %vm659, %v2576, 0.0
  %v2788 = vadd.f32 %v2786, %v2787
  %v2789 = vsel %vm659, %v2577, 0.0
  %v2790 = vadd.f32 %v2788, %v2789
  %v2791 = vsel %vm659, %v2578, 0.0
  %v2792 = vadd.f32 %v2790, %v2791
  %v2793 = vsel %vm659, %v2579, 0.0
  %v2794 = vadd.f32 %v2792, %v2793
  %v2795 = vsel %vm659, %v2580, 0.0
  %v2796 = vadd.f32 %v2794, %v2795
  %v2797 = vsel %vm659, %v2581, 0.0
  %v2798 = vadd.f32 %v2796, %v2797
  %v2799 = vsel %vm659, %v2582, 0.0
  %v2800 = vadd.f32 %v2798, %v2799
  %v2801 = vsel %vm659, %v2583, 0.0
  %v2802 = vadd.f32 %v2800, %v2801
  %v2803 = vsel %vm659, %v2584, 0.0
  %v2804 = vadd.f32 %v2802, %v2803
  %v2805 = vsel %vm659, %v2585, 0.0
  %v2806 = vadd.f32 %v2804, %v2805
  %v2807 = vsel %vm659, %v2586, 0.0
  %v2808 = vadd.f32 %v2806, %v2807
  %v2809 = vsel %vm659, %v2587, 0.0
  %v2810 = vadd.f32 %v2808, %v2809
  %v2811 = vsel %vm659, %v2588, 0.0
  %v2812 = vadd.f32 %v2810, %v2811
  %v2813 = vsel %vm659, %v2589, 0.0
  %v2814 = vadd.f32 %v2812, %v2813
  %v2815 = vsel %vm659, %v2590, 0.0
  %v2816 = vadd.f32 %v2814, %v2815
  %v2817 = vsel %vm659, %v2591, 0.0
  %v2818 = vadd.f32 %v2816, %v2817
  %v2819 = vsel %vm659, %v2592, 0.0
  %v2820 = vadd.f32 %v2818, %v2819
  %v2821 = vsel %vm659, %v2593, 0.0
  %v2822 = vadd.f32 %v2820, %v2821
  %v2823 = vsel %vm659, %v2594, 0.0
  %v2824 = vadd.f32 %v2822, %v2823
  %v2825 = vsel %vm659, %v2595, 0.0
  %v2826 = vadd.f32 %v2824, %v2825
  %v2827 = vsel %vm659, %v2596, 0.0
  %v2828 = vadd.f32 %v2826, %v2827
  %v2829 = vsel %vm659, %v2597, 0.0
  %v2830 = vadd.f32 %v2828, %v2829
  %v2831 = vsel %vm659, %v2598, 0.0
  %v2832 = vadd.f32 %v2830, %v2831
  %v2833 = vsel %vm659, %v2599, 0.0
  %v2834 = vadd.f32 %v2832, %v2833
  %v2835 = vsel %vm659, %v2600, 0.0
  %v2836 = vadd.f32 %v2834, %v2835
  %v2837 = vsel %vm659, %v2601, 0.0
  %v2838 = vadd.f32 %v2836, %v2837
  %v2839 = vsel %vm659, %v2602, 0.0
  %v2840 = vadd.f32 %v2838, %v2839
  %v2841 = vsel %vm659, %v2603, 0.0
  %v2842 = vadd.f32 %v2840, %v2841
  %v2843 = vsel %vm659, %v2604, 0.0
  %v2844 = vadd.f32 %v2842, %v2843
  %v2845 = vsel %vm659, %v2605, 0.0
  %v2846 = vadd.f32 %v2844, %v2845
  %v2847 = vsel %vm659, %v2606, 0.0
  %v2848 = vadd.f32 %v2846, %v2847
  %v2849 = vsel %vm659, %v2607, 0.0
  %v2850 = vadd.f32 %v2848, %v2849
  %v2851 = vsel %vm659, %v2608, 0.0
  %v2852 = vadd.f32 %v2850, %v2851
  %v2853 = vsel %vm659, %v2609, 0.0
  %v2854 = vadd.f32 %v2852, %v2853
  %v2855 = vsel %vm659, %v2610, 0.0
  %v2856 = vadd.f32 %v2854, %v2855
  %v2857 = vsel %vm659, %v2611, 0.0
  %v2858 = vadd.f32 %v2856, %v2857
  %v2859 = vsel %vm659, %v2612, 0.0
  %v2860 = vadd.f32 %v2858, %v2859
  %v2861 = vsel %vm659, %v2613, 0.0
  %v2862 = vadd.f32 %v2860, %v2861
  %v2863 = vsel %vm659, %v2614, 0.0
  %v2864 = vadd.f32 %v2862, %v2863
  %v2865 = vsel %vm659, %v2615, 0.0
  %v2866 = vadd.f32 %v2864, %v2865
  %v2867 = vsel %vm659, %v2616, 0.0
  %v2868 = vadd.f32 %v2866, %v2867
  %v2869 = vsel %vm659, %v2617, 0.0
  %v2870 = vadd.f32 %v2868, %v2869
  %v2871 = vsel %vm659, %v2618, 0.0
  %v2872 = vadd.f32 %v2870, %v2871
  %v2873 = vsel %vm659, %v2619, 0.0
  %v2874 = vadd.f32 %v2872, %v2873
  %2875 = vadd.xlane.f32.xlu0 %v2874
  %v2876 = vpop.xlane.xlu0 %2875
  %v2877 = vrot.slane %v2876, 4
  %v2878 = vadd.f32 %v2876, %v2877
  %v2879 = vrot.slane %v2878, 2
  %v2880 = vadd.f32 %v2878, %v2879
  %v2881 = vrot.slane %v2880, 1
  %v2882 = vadd.f32 %v2880, %v2881
  %s2883 = vtos %v2882
  %v2884 = vmul.f32 %v275, %v275
  %v2885 = vmul.f32 %v276, %v276
  %v2886 = vmul.f32 %v277, %v277
  %v2887 = vmul.f32 %v278, %v278
  %v2888 = vmul.f32 %v279, %v279
  %v2889 = vmul.f32 %v280, %v280
  %v2890 = vmul.f32 %v281, %v281
  %v2891 = vmul.f32 %v282, %v282
  %v2892 = vmul.f32 %v283, %v283
  %v2893 = vmul.f32 %v284, %v284
  %v2894 = vmul.f32 %v285, %v285
  %v2895 = vmul.f32 %v286, %v286
  %v2896 = vmul.f32 %v287, %v287
  %v2897 = vmul.f32 %v288, %v288
  %v2898 = vmul.f32 %v289, %v289
  %v2899 = vmul.f32 %v290, %v290
  %v2900 = vmul.f32 %v291, %v291
  %v2901 = vmul.f32 %v292, %v292
  %v2902 = vmul.f32 %v293, %v293
  %v2903 = vmul.f32 %v294, %v294
  %v2904 = vmul.f32 %v295, %v295
  %v2905 = vmul.f32 %v296, %v296
  %v2906 = vmul.f32 %v297, %v297
  %v2907 = vmul.f32 %v298, %v298
  %v2908 = vmul.f32 %v299, %v299
  %v2909 = vmul.f32 %v300, %v300
  %v2910 = vmul.f32 %v301, %v301
  %v2911 = vmul.f32 %v302, %v302
  %v2912 = vmul.f32 %v303, %v303
  %v2913 = vmul.f32 %v304, %v304
  %v2914 = vmul.f32 %v305, %v305
  %v2915 = vmul.f32 %v306, %v306
  %v2916 = vmul.f32 %v307, %v307
  %v2917 = vmul.f32 %v308, %v308
  %v2918 = vmul.f32 %v309, %v309
  %v2919 = vmul.f32 %v310, %v310
  %v2920 = vmul.f32 %v311, %v311
  %v2921 = vmul.f32 %v312, %v312
  %v2922 = vmul.f32 %v313, %v313
  %v2923 = vmul.f32 %v314, %v314
  %v2924 = vmul.f32 %v315, %v315
  %v2925 = vmul.f32 %v316, %v316
  %v2926 = vmul.f32 %v317, %v317
  %v2927 = vmul.f32 %v318, %v318
  %v2928 = vmul.f32 %v319, %v319
  %v2929 = vmul.f32 %v320, %v320
  %v2930 = vmul.f32 %v321, %v321
  %v2931 = vmul.f32 %v322, %v322
  %v2932 = vmul.f32 %v323, %v323
  %v2933 = vmul.f32 %v324, %v324
  %v2934 = vmul.f32 %v325, %v325
  %v2935 = vmul.f32 %v326, %v326
  %v2936 = vmul.f32 %v327, %v327
  %v2937 = vmul.f32 %v328, %v328
  %v2938 = vmul.f32 %v329, %v329
  %v2939 = vmul.f32 %v330, %v330
  %v2940 = vmul.f32 %v331, %v331
  %v2941 = vmul.f32 %v332, %v332
  %v2942 = vmul.f32 %v333, %v333
  %v2943 = vmul.f32 %v334, %v334
  %v2944 = vmul.f32 %v335, %v335
  %v2945 = vmul.f32 %v336, %v336
  %v2946 = vmul.f32 %v337, %v337
  %v2947 = vmul.f32 %v338, %v338
  %v2948 = vmul.f32 %v339, %v339
  %v2949 = vmul.f32 %v340, %v340
  %v2950 = vmul.f32 %v341, %v341
  %v2951 = vmul.f32 %v342, %v342
  %v2952 = vmul.f32 %v343, %v343
  %v2953 = vmul.f32 %v344, %v344
  %v2954 = vmul.f32 %v345, %v345
  %v2955 = vmul.f32 %v346, %v346
  %v2956 = vmul.f32 %v347, %v347
  %v2957 = vmul.f32 %v348, %v348
  %v2958 = vmul.f32 %v349, %v349
  %v2959 = vmul.f32 %v350, %v350
  %v2960 = vmul.f32 %v351, %v351
  %v2961 = vmul.f32 %v352, %v352
  %v2962 = vmul.f32 %v353, %v353
  %v2963 = vmul.f32 %v354, %v354
  %v2964 = vmul.f32 %v355, %v355
  %v2965 = vmul.f32 %v356, %v356
  %v2966 = vmul.f32 %v357, %v357
  %v2967 = vmul.f32 %v358, %v358
  %v2968 = vmul.f32 %v359, %v359
  %v2969 = vmul.f32 %v360, %v360
  %v2970 = vmul.f32 %v361, %v361
  %v2971 = vmul.f32 %v362, %v362
  %v2972 = vmul.f32 %v363, %v363
  %v2973 = vmul.f32 %v364, %v364
  %v2974 = vmul.f32 %v365, %v365
  %v2975 = vmul.f32 %v366, %v366
  %v2976 = vmul.f32 %v367, %v367
  %v2977 = vmul.f32 %v368, %v368
  %v2978 = vmul.f32 %v369, %v369
  %v2979 = vmul.f32 %v370, %v370
  %v2980 = vmul.f32 %v371, %v371
  %v2981 = vmul.f32 %v372, %v372
  %v2982 = vmul.f32 %v373, %v373
  %v2983 = vmul.f32 %v374, %v374
  %v2984 = vmul.f32 %v375, %v375
  %v2985 = vmul.f32 %v376, %v376
  %v2986 = vmul.f32 %v377, %v377
  %v2987 = vmul.f32 %v378, %v378
  %v2988 = vmul.f32 %v379, %v379
  %v2989 = vmul.f32 %v380, %v380
  %v2990 = vmul.f32 %v381, %v381
  %v2991 = vmul.f32 %v382, %v382
  %v2992 = vmul.f32 %v383, %v383
  %v2993 = vmul.f32 %v384, %v384
  %v2994 = vmul.f32 %v385, %v385
  %v2995 = vmul.f32 %v386, %v386
  %v2996 = vmul.f32 %v387, %v387
  %v2997 = vmul.f32 %v388, %v388
  %v2998 = vmul.f32 %v389, %v389
  %v2999 = vmul.f32 %v390, %v390
  %v3000 = vmul.f32 %v391, %v391
  %v3001 = vmul.f32 %v392, %v392
  %v3002 = vmul.f32 %v393, %v393
  %v3003 = vmul.f32 %v394, %v394
  %v3004 = vmul.f32 %v395, %v395
  %v3005 = vmul.f32 %v396, %v396
  %v3006 = vmul.f32 %v397, %v397
  %v3007 = vmul.f32 %v398, %v398
  %v3008 = vmul.f32 %v399, %v399
  %v3009 = vmul.f32 %v400, %v400
  %v3010 = vmul.f32 %v401, %v401
  %v3011 = vmul.f32 %v402, %v402
  %v3012 = vsel %vm659, %v2884, 0.0
  %v3013 = vsel %vm659, %v2885, 0.0
  %v3014 = vadd.f32 %v3012, %v3013
  %v3015 = vsel %vm659, %v2886, 0.0
  %v3016 = vadd.f32 %v3014, %v3015
  %v3017 = vsel %vm659, %v2887, 0.0
  %v3018 = vadd.f32 %v3016, %v3017
  %v3019 = vsel %vm659, %v2888, 0.0
  %v3020 = vadd.f32 %v3018, %v3019
  %v3021 = vsel %vm659, %v2889, 0.0
  %v3022 = vadd.f32 %v3020, %v3021
  %v3023 = vsel %vm659, %v2890, 0.0
  %v3024 = vadd.f32 %v3022, %v3023
  %v3025 = vsel %vm659, %v2891, 0.0
  %v3026 = vadd.f32 %v3024, %v3025
  %v3027 = vsel %vm659, %v2892, 0.0
  %v3028 = vadd.f32 %v3026, %v3027
  %v3029 = vsel %vm659, %v2893, 0.0
  %v3030 = vadd.f32 %v3028, %v3029
  %v3031 = vsel %vm659, %v2894, 0.0
  %v3032 = vadd.f32 %v3030, %v3031
  %v3033 = vsel %vm659, %v2895, 0.0
  %v3034 = vadd.f32 %v3032, %v3033
  %v3035 = vsel %vm659, %v2896, 0.0
  %v3036 = vadd.f32 %v3034, %v3035
  %v3037 = vsel %vm659, %v2897, 0.0
  %v3038 = vadd.f32 %v3036, %v3037
  %v3039 = vsel %vm659, %v2898, 0.0
  %v3040 = vadd.f32 %v3038, %v3039
  %v3041 = vsel %vm659, %v2899, 0.0
  %v3042 = vadd.f32 %v3040, %v3041
  %v3043 = vsel %vm659, %v2900, 0.0
  %v3044 = vadd.f32 %v3042, %v3043
  %v3045 = vsel %vm659, %v2901, 0.0
  %v3046 = vadd.f32 %v3044, %v3045
  %v3047 = vsel %vm659, %v2902, 0.0
  %v3048 = vadd.f32 %v3046, %v3047
  %v3049 = vsel %vm659, %v2903, 0.0
  %v3050 = vadd.f32 %v3048, %v3049
  %v3051 = vsel %vm659, %v2904, 0.0
  %v3052 = vadd.f32 %v3050, %v3051
  %v3053 = vsel %vm659, %v2905, 0.0
  %v3054 = vadd.f32 %v3052, %v3053
  %v3055 = vsel %vm659, %v2906, 0.0
  %v3056 = vadd.f32 %v3054, %v3055
  %v3057 = vsel %vm659, %v2907, 0.0
  %v3058 = vadd.f32 %v3056, %v3057
  %v3059 = vsel %vm659, %v2908, 0.0
  %v3060 = vadd.f32 %v3058, %v3059
  %v3061 = vsel %vm659, %v2909, 0.0
  %v3062 = vadd.f32 %v3060, %v3061
  %v3063 = vsel %vm659, %v2910, 0.0
  %v3064 = vadd.f32 %v3062, %v3063
  %v3065 = vsel %vm659, %v2911, 0.0
  %v3066 = vadd.f32 %v3064, %v3065
  %v3067 = vsel %vm659, %v2912, 0.0
  %v3068 = vadd.f32 %v3066, %v3067
  %v3069 = vsel %vm659, %v2913, 0.0
  %v3070 = vadd.f32 %v3068, %v3069
  %v3071 = vsel %vm659, %v2914, 0.0
  %v3072 = vadd.f32 %v3070, %v3071
  %v3073 = vsel %vm659, %v2915, 0.0
  %v3074 = vadd.f32 %v3072, %v3073
  %v3075 = vsel %vm659, %v2916, 0.0
  %v3076 = vadd.f32 %v3074, %v3075
  %v3077 = vsel %vm659, %v2917, 0.0
  %v3078 = vadd.f32 %v3076, %v3077
  %v3079 = vsel %vm659, %v2918, 0.0
  %v3080 = vadd.f32 %v3078, %v3079
  %v3081 = vsel %vm659, %v2919, 0.0
  %v3082 = vadd.f32 %v3080, %v3081
  %v3083 = vsel %vm659, %v2920, 0.0
  %v3084 = vadd.f32 %v3082, %v3083
  %v3085 = vsel %vm659, %v2921, 0.0
  %v3086 = vadd.f32 %v3084, %v3085
  %v3087 = vsel %vm659, %v2922, 0.0
  %v3088 = vadd.f32 %v3086, %v3087
  %v3089 = vsel %vm659, %v2923, 0.0
  %v3090 = vadd.f32 %v3088, %v3089
  %v3091 = vsel %vm659, %v2924, 0.0
  %v3092 = vadd.f32 %v3090, %v3091
  %v3093 = vsel %vm659, %v2925, 0.0
  %v3094 = vadd.f32 %v3092, %v3093
  %v3095 = vsel %vm659, %v2926, 0.0
  %v3096 = vadd.f32 %v3094, %v3095
  %v3097 = vsel %vm659, %v2927, 0.0
  %v3098 = vadd.f32 %v3096, %v3097
  %v3099 = vsel %vm659, %v2928, 0.0
  %v3100 = vadd.f32 %v3098, %v3099
  %v3101 = vsel %vm659, %v2929, 0.0
  %v3102 = vadd.f32 %v3100, %v3101
  %v3103 = vsel %vm659, %v2930, 0.0
  %v3104 = vadd.f32 %v3102, %v3103
  %v3105 = vsel %vm659, %v2931, 0.0
  %v3106 = vadd.f32 %v3104, %v3105
  %v3107 = vsel %vm659, %v2932, 0.0
  %v3108 = vadd.f32 %v3106, %v3107
  %v3109 = vsel %vm659, %v2933, 0.0
  %v3110 = vadd.f32 %v3108, %v3109
  %v3111 = vsel %vm659, %v2934, 0.0
  %v3112 = vadd.f32 %v3110, %v3111
  %v3113 = vsel %vm659, %v2935, 0.0
  %v3114 = vadd.f32 %v3112, %v3113
  %v3115 = vsel %vm659, %v2936, 0.0
  %v3116 = vadd.f32 %v3114, %v3115
  %v3117 = vsel %vm659, %v2937, 0.0
  %v3118 = vadd.f32 %v3116, %v3117
  %v3119 = vsel %vm659, %v2938, 0.0
  %v3120 = vadd.f32 %v3118, %v3119
  %v3121 = vsel %vm659, %v2939, 0.0
  %v3122 = vadd.f32 %v3120, %v3121
  %v3123 = vsel %vm659, %v2940, 0.0
  %v3124 = vadd.f32 %v3122, %v3123
  %v3125 = vsel %vm659, %v2941, 0.0
  %v3126 = vadd.f32 %v3124, %v3125
  %v3127 = vsel %vm659, %v2942, 0.0
  %v3128 = vadd.f32 %v3126, %v3127
  %v3129 = vsel %vm659, %v2943, 0.0
  %v3130 = vadd.f32 %v3128, %v3129
  %v3131 = vsel %vm659, %v2944, 0.0
  %v3132 = vadd.f32 %v3130, %v3131
  %v3133 = vsel %vm659, %v2945, 0.0
  %v3134 = vadd.f32 %v3132, %v3133
  %v3135 = vsel %vm659, %v2946, 0.0
  %v3136 = vadd.f32 %v3134, %v3135
  %v3137 = vsel %vm659, %v2947, 0.0
  %v3138 = vadd.f32 %v3136, %v3137
  %v3139 = vsel %vm659, %v2948, 0.0
  %v3140 = vadd.f32 %v3138, %v3139
  %v3141 = vsel %vm659, %v2949, 0.0
  %v3142 = vadd.f32 %v3140, %v3141
  %v3143 = vsel %vm659, %v2950, 0.0
  %v3144 = vadd.f32 %v3142, %v3143
  %v3145 = vsel %vm659, %v2951, 0.0
  %v3146 = vadd.f32 %v3144, %v3145
  %v3147 = vsel %vm659, %v2952, 0.0
  %v3148 = vadd.f32 %v3146, %v3147
  %v3149 = vsel %vm659, %v2953, 0.0
  %v3150 = vadd.f32 %v3148, %v3149
  %v3151 = vsel %vm659, %v2954, 0.0
  %v3152 = vadd.f32 %v3150, %v3151
  %v3153 = vsel %vm659, %v2955, 0.0
  %v3154 = vadd.f32 %v3152, %v3153
  %v3155 = vsel %vm659, %v2956, 0.0
  %v3156 = vadd.f32 %v3154, %v3155
  %v3157 = vsel %vm659, %v2957, 0.0
  %v3158 = vadd.f32 %v3156, %v3157
  %v3159 = vsel %vm659, %v2958, 0.0
  %v3160 = vadd.f32 %v3158, %v3159
  %v3161 = vsel %vm659, %v2959, 0.0
  %v3162 = vadd.f32 %v3160, %v3161
  %v3163 = vsel %vm659, %v2960, 0.0
  %v3164 = vadd.f32 %v3162, %v3163
  %v3165 = vsel %vm659, %v2961, 0.0
  %v3166 = vadd.f32 %v3164, %v3165
  %v3167 = vsel %vm659, %v2962, 0.0
  %v3168 = vadd.f32 %v3166, %v3167
  %v3169 = vsel %vm659, %v2963, 0.0
  %v3170 = vadd.f32 %v3168, %v3169
  %v3171 = vsel %vm659, %v2964, 0.0
  %v3172 = vadd.f32 %v3170, %v3171
  %v3173 = vsel %vm659, %v2965, 0.0
  %v3174 = vadd.f32 %v3172, %v3173
  %v3175 = vsel %vm659, %v2966, 0.0
  %v3176 = vadd.f32 %v3174, %v3175
  %v3177 = vsel %vm659, %v2967, 0.0
  %v3178 = vadd.f32 %v3176, %v3177
  %v3179 = vsel %vm659, %v2968, 0.0
  %v3180 = vadd.f32 %v3178, %v3179
  %v3181 = vsel %vm659, %v2969, 0.0
  %v3182 = vadd.f32 %v3180, %v3181
  %v3183 = vsel %vm659, %v2970, 0.0
  %v3184 = vadd.f32 %v3182, %v3183
  %v3185 = vsel %vm659, %v2971, 0.0
  %v3186 = vadd.f32 %v3184, %v3185
  %v3187 = vsel %vm659, %v2972, 0.0
  %v3188 = vadd.f32 %v3186, %v3187
  %v3189 = vsel %vm659, %v2973, 0.0
  %v3190 = vadd.f32 %v3188, %v3189
  %v3191 = vsel %vm659, %v2974, 0.0
  %v3192 = vadd.f32 %v3190, %v3191
  %v3193 = vsel %vm659, %v2975, 0.0
  %v3194 = vadd.f32 %v3192, %v3193
  %v3195 = vsel %vm659, %v2976, 0.0
  %v3196 = vadd.f32 %v3194, %v3195
  %v3197 = vsel %vm659, %v2977, 0.0
  %v3198 = vadd.f32 %v3196, %v3197
  %v3199 = vsel %vm659, %v2978, 0.0
  %v3200 = vadd.f32 %v3198, %v3199
  %v3201 = vsel %vm659, %v2979, 0.0
  %v3202 = vadd.f32 %v3200, %v3201
  %v3203 = vsel %vm659, %v2980, 0.0
  %v3204 = vadd.f32 %v3202, %v3203
  %v3205 = vsel %vm659, %v2981, 0.0
  %v3206 = vadd.f32 %v3204, %v3205
  %v3207 = vsel %vm659, %v2982, 0.0
  %v3208 = vadd.f32 %v3206, %v3207
  %v3209 = vsel %vm659, %v2983, 0.0
  %v3210 = vadd.f32 %v3208, %v3209
  %v3211 = vsel %vm659, %v2984, 0.0
  %v3212 = vadd.f32 %v3210, %v3211
  %v3213 = vsel %vm659, %v2985, 0.0
  %v3214 = vadd.f32 %v3212, %v3213
  %v3215 = vsel %vm659, %v2986, 0.0
  %v3216 = vadd.f32 %v3214, %v3215
  %v3217 = vsel %vm659, %v2987, 0.0
  %v3218 = vadd.f32 %v3216, %v3217
  %v3219 = vsel %vm659, %v2988, 0.0
  %v3220 = vadd.f32 %v3218, %v3219
  %v3221 = vsel %vm659, %v2989, 0.0
  %v3222 = vadd.f32 %v3220, %v3221
  %v3223 = vsel %vm659, %v2990, 0.0
  %v3224 = vadd.f32 %v3222, %v3223
  %v3225 = vsel %vm659, %v2991, 0.0
  %v3226 = vadd.f32 %v3224, %v3225
  %v3227 = vsel %vm659, %v2992, 0.0
  %v3228 = vadd.f32 %v3226, %v3227
  %v3229 = vsel %vm659, %v2993, 0.0
  %v3230 = vadd.f32 %v3228, %v3229
  %v3231 = vsel %vm659, %v2994, 0.0
  %v3232 = vadd.f32 %v3230, %v3231
  %v3233 = vsel %vm659, %v2995, 0.0
  %v3234 = vadd.f32 %v3232, %v3233
  %v3235 = vsel %vm659, %v2996, 0.0
  %v3236 = vadd.f32 %v3234, %v3235
  %v3237 = vsel %vm659, %v2997, 0.0
  %v3238 = vadd.f32 %v3236, %v3237
  %v3239 = vsel %vm659, %v2998, 0.0
  %v3240 = vadd.f32 %v3238, %v3239
  %v3241 = vsel %vm659, %v2999, 0.0
  %v3242 = vadd.f32 %v3240, %v3241
  %v3243 = vsel %vm659, %v3000, 0.0
  %v3244 = vadd.f32 %v3242, %v3243
  %v3245 = vsel %vm659, %v3001, 0.0
  %v3246 = vadd.f32 %v3244, %v3245
  %v3247 = vsel %vm659, %v3002, 0.0
  %v3248 = vadd.f32 %v3246, %v3247
  %v3249 = vsel %vm659, %v3003, 0.0
  %v3250 = vadd.f32 %v3248, %v3249
  %v3251 = vsel %vm659, %v3004, 0.0
  %v3252 = vadd.f32 %v3250, %v3251
  %v3253 = vsel %vm659, %v3005, 0.0
  %v3254 = vadd.f32 %v3252, %v3253
  %v3255 = vsel %vm659, %v3006, 0.0
  %v3256 = vadd.f32 %v3254, %v3255
  %v3257 = vsel %vm659, %v3007, 0.0
  %v3258 = vadd.f32 %v3256, %v3257
  %v3259 = vsel %vm659, %v3008, 0.0
  %v3260 = vadd.f32 %v3258, %v3259
  %v3261 = vsel %vm659, %v3009, 0.0
  %v3262 = vadd.f32 %v3260, %v3261
  %v3263 = vsel %vm659, %v3010, 0.0
  %v3264 = vadd.f32 %v3262, %v3263
  %v3265 = vsel %vm659, %v3011, 0.0
  %v3266 = vadd.f32 %v3264, %v3265
  %3267 = vadd.xlane.f32.xlu0 %v3266
  %v3268 = vpop.xlane.xlu0 %3267
  %v3269 = vrot.slane %v3268, 4
  %v3270 = vadd.f32 %v3268, %v3269
  %v3271 = vrot.slane %v3270, 2
  %v3272 = vadd.f32 %v3270, %v3271
  %v3273 = vrot.slane %v3272, 1
  %v3274 = vadd.f32 %v3272, %v3273
  %s3275 = vtos %v3274
  %vm3276 = vcmp.eq.s32.totalorder %v18, 0
  %v3277 = vstv %s923
  %v3278 = vsel %vm3276, %v3277, 0.0
  %vm3279 = vcmp.eq.s32.totalorder %v18, 1
  %v3280 = vstv %s1315
  %v3281 = vsel %vm3279, %v3280, %v3278
  %vm3282 = vcmp.eq.s32.totalorder %v18, 2
  %v3283 = vstv %s1707
  %v3284 = vsel %vm3282, %v3283, %v3281
  %vm3285 = vcmp.eq.s32.totalorder %v18, 3
  %v3286 = vstv %s2099
  %v3287 = vsel %vm3285, %v3286, %v3284
  %vm3288 = vcmp.eq.s32.totalorder %v18, 4
  %v3289 = vstv %s2491
  %v3290 = vsel %vm3288, %v3289, %v3287
  %vm3291 = vcmp.eq.s32.totalorder %v18, 5
  %v3292 = vstv %s2883
  %v3293 = vsel %vm3291, %v3292, %v3290
  %vm3294 = vcmp.eq.s32.totalorder %v18, 6
  %v3295 = vstv %s3275
  %v3296 = vsel %vm3294, %v3295, %v3293
  %3297 = vst [vmem:[%s4] sm:$0x1] %v3296
  %v3298 = vld [vmem:[%s1 + $0x1] sm:$0x1]
  %v3299 = vld [vmem:[%s1 + $0x2] sm:$0x1]
  %v3300 = vld [vmem:[%s1 + $0x3] sm:$0x1]
  %v3301 = vadd.f32 %v3298, %v3299
  %v3302 = vadd.f32 %v3301, %v3300
  %vm3303 = vcmask 253952
  %v3304 = vsel %vm3303, %v3302, 0.0
  %3305 = vadd.xlane.f32.xlu0 %v3304
  %v3306 = vpop.xlane.xlu0 %3305
  %v3307 = vrot.slane %v3306, 4
  %v3308 = vadd.f32 %v3306, %v3307
  %v3309 = vrot.slane %v3308, 2
  %v3310 = vadd.f32 %v3308, %v3309
  %v3311 = vrot.slane %v3310, 1
  %v3312 = vadd.f32 %v3310, %v3311
  %s3313 = vtos %v3312
  %v3314 = vmul.f32 %v3298, %v3298
  %v3315 = vsel %vm3303, %v3314, 0.0
  %3316 = vadd.xlane.f32.xlu0 %v3315
  %v3317 = vpop.xlane.xlu0 %3316
  %v3318 = vrot.slane %v3317, 4
  %v3319 = vadd.f32 %v3317, %v3318
  %v3320 = vrot.slane %v3319, 2
  %v3321 = vadd.f32 %v3319, %v3320
  %v3322 = vrot.slane %v3321, 1
  %v3323 = vadd.f32 %v3321, %v3322
  %s3324 = vtos %v3323
  %v3325 = vmul.f32 %v3298, %v3299
  %v3326 = vsel %vm3303, %v3325, 0.0
  %3327 = vadd.xlane.f32.xlu0 %v3326
  %v3328 = vpop.xlane.xlu0 %3327
  %v3329 = vrot.slane %v3328, 4
  %v3330 = vadd.f32 %v3328, %v3329
  %v3331 = vrot.slane %v3330, 2
  %v3332 = vadd.f32 %v3330, %v3331
  %v3333 = vrot.slane %v3332, 1
  %v3334 = vadd.f32 %v3332, %v3333
  %s3335 = vtos %v3334
  %v3336 = vmul.f32 %v3298, %v3300
  %v3337 = vsel %vm3303, %v3336, 0.0
  %3338 = vadd.xlane.f32.xlu0 %v3337
  %v3339 = vpop.xlane.xlu0 %3338
  %v3340 = vrot.slane %v3339, 4
  %v3341 = vadd.f32 %v3339, %v3340
  %v3342 = vrot.slane %v3341, 2
  %v3343 = vadd.f32 %v3341, %v3342
  %v3344 = vrot.slane %v3343, 1
  %v3345 = vadd.f32 %v3343, %v3344
  %s3346 = vtos %v3345
  %v3347 = vmul.f32 %v3299, %v3299
  %v3348 = vsel %vm3303, %v3347, 0.0
  %3349 = vadd.xlane.f32.xlu0 %v3348
  %v3350 = vpop.xlane.xlu0 %3349
  %v3351 = vrot.slane %v3350, 4
  %v3352 = vadd.f32 %v3350, %v3351
  %v3353 = vrot.slane %v3352, 2
  %v3354 = vadd.f32 %v3352, %v3353
  %v3355 = vrot.slane %v3354, 1
  %v3356 = vadd.f32 %v3354, %v3355
  %s3357 = vtos %v3356
  %v3358 = vmul.f32 %v3299, %v3300
  %v3359 = vsel %vm3303, %v3358, 0.0
  %3360 = vadd.xlane.f32.xlu0 %v3359
  %v3361 = vpop.xlane.xlu0 %3360
  %v3362 = vrot.slane %v3361, 4
  %v3363 = vadd.f32 %v3361, %v3362
  %v3364 = vrot.slane %v3363, 2
  %v3365 = vadd.f32 %v3363, %v3364
  %v3366 = vrot.slane %v3365, 1
  %v3367 = vadd.f32 %v3365, %v3366
  %s3368 = vtos %v3367
  %v3369 = vmul.f32 %v3300, %v3300
  %v3370 = vsel %vm3303, %v3369, 0.0
  %3371 = vadd.xlane.f32.xlu0 %v3370
  %v3372 = vpop.xlane.xlu0 %3371
  %v3373 = vrot.slane %v3372, 4
  %v3374 = vadd.f32 %v3372, %v3373
  %v3375 = vrot.slane %v3374, 2
  %v3376 = vadd.f32 %v3374, %v3375
  %v3377 = vrot.slane %v3376, 1
  %v3378 = vadd.f32 %v3376, %v3377
  %s3379 = vtos %v3378
  %v3380 = vstv %s3313
  %v3381 = vsel %vm3276, %v3380, 0.0
  %v3382 = vstv %s3324
  %v3383 = vsel %vm3279, %v3382, %v3381
  %v3384 = vstv %s3335
  %v3385 = vsel %vm3282, %v3384, %v3383
  %v3386 = vstv %s3346
  %v3387 = vsel %vm3285, %v3386, %v3385
  %v3388 = vstv %s3357
  %v3389 = vsel %vm3288, %v3388, %v3387
  %v3390 = vstv %s3368
  %v3391 = vsel %vm3291, %v3390, %v3389
  %v3392 = vstv %s3379
  %v3393 = vsel %vm3294, %v3392, %v3391
  %3394 = vst [vmem:[%s4 + $0x1] sm:$0x1] %v3393
  %v3395 = vld [vmem:[%s2 + $0x20] sm:$0xff]
  %v3396 = vld [vmem:[%s2 + $0x28] sm:$0xff]
  %v3397 = vld [vmem:[%s2 + $0x30] sm:$0xff]
  %v3398 = vld [vmem:[%s2 + $0x38] sm:$0xff]
  %v3399 = vld [vmem:[%s2 + $0x40] sm:$0xff]
  %v3400 = vld [vmem:[%s2 + $0x48] sm:$0xff]
  %v3401 = vld [vmem:[%s2 + $0x50] sm:$0xff]
  %v3402 = vld [vmem:[%s2 + $0x58] sm:$0xff]
  %v3403 = vld [vmem:[%s2 + $0x60] sm:$0xff]
  %v3404 = vld [vmem:[%s2 + $0x68] sm:$0xff]
  %v3405 = vld [vmem:[%s2 + $0x70] sm:$0xff]
  %v3406 = vld [vmem:[%s2 + $0x78] sm:$0xff]
  %v3407 = vadd.f32 %v3395, %v3399
  %v3408 = vadd.f32 %v3396, %v3400
  %v3409 = vadd.f32 %v3397, %v3401
  %v3410 = vadd.f32 %v3398, %v3402
  %v3411 = vadd.f32 %v3407, %v3403
  %v3412 = vadd.f32 %v3408, %v3404
  %v3413 = vadd.f32 %v3409, %v3405
  %v3414 = vadd.f32 %v3410, %v3406
  %v3415 = vsel %vm659, %v3411, 0.0
  %v3416 = vsel %vm659, %v3412, 0.0
  %v3417 = vadd.f32 %v3415, %v3416
  %v3418 = vsel %vm659, %v3413, 0.0
  %v3419 = vadd.f32 %v3417, %v3418
  %v3420 = vsel %vm659, %v3414, 0.0
  %v3421 = vadd.f32 %v3419, %v3420
  %3422 = vadd.xlane.f32.xlu0 %v3421
  %v3423 = vpop.xlane.xlu0 %3422
  %v3424 = vrot.slane %v3423, 4
  %v3425 = vadd.f32 %v3423, %v3424
  %v3426 = vrot.slane %v3425, 2
  %v3427 = vadd.f32 %v3425, %v3426
  %v3428 = vrot.slane %v3427, 1
  %v3429 = vadd.f32 %v3427, %v3428
  %s3430 = vtos %v3429
  %v3431 = vmul.f32 %v3395, %v3395
  %v3432 = vmul.f32 %v3396, %v3396
  %v3433 = vmul.f32 %v3397, %v3397
  %v3434 = vmul.f32 %v3398, %v3398
  %v3435 = vsel %vm659, %v3431, 0.0
  %v3436 = vsel %vm659, %v3432, 0.0
  %v3437 = vadd.f32 %v3435, %v3436
  %v3438 = vsel %vm659, %v3433, 0.0
  %v3439 = vadd.f32 %v3437, %v3438
  %v3440 = vsel %vm659, %v3434, 0.0
  %v3441 = vadd.f32 %v3439, %v3440
  %3442 = vadd.xlane.f32.xlu0 %v3441
  %v3443 = vpop.xlane.xlu0 %3442
  %v3444 = vrot.slane %v3443, 4
  %v3445 = vadd.f32 %v3443, %v3444
  %v3446 = vrot.slane %v3445, 2
  %v3447 = vadd.f32 %v3445, %v3446
  %v3448 = vrot.slane %v3447, 1
  %v3449 = vadd.f32 %v3447, %v3448
  %s3450 = vtos %v3449
  %v3451 = vmul.f32 %v3395, %v3399
  %v3452 = vmul.f32 %v3396, %v3400
  %v3453 = vmul.f32 %v3397, %v3401
  %v3454 = vmul.f32 %v3398, %v3402
  %v3455 = vsel %vm659, %v3451, 0.0
  %v3456 = vsel %vm659, %v3452, 0.0
  %v3457 = vadd.f32 %v3455, %v3456
  %v3458 = vsel %vm659, %v3453, 0.0
  %v3459 = vadd.f32 %v3457, %v3458
  %v3460 = vsel %vm659, %v3454, 0.0
  %v3461 = vadd.f32 %v3459, %v3460
  %3462 = vadd.xlane.f32.xlu0 %v3461
  %v3463 = vpop.xlane.xlu0 %3462
  %v3464 = vrot.slane %v3463, 4
  %v3465 = vadd.f32 %v3463, %v3464
  %v3466 = vrot.slane %v3465, 2
  %v3467 = vadd.f32 %v3465, %v3466
  %v3468 = vrot.slane %v3467, 1
  %v3469 = vadd.f32 %v3467, %v3468
  %s3470 = vtos %v3469
  %v3471 = vmul.f32 %v3395, %v3403
  %v3472 = vmul.f32 %v3396, %v3404
  %v3473 = vmul.f32 %v3397, %v3405
  %v3474 = vmul.f32 %v3398, %v3406
  %v3475 = vsel %vm659, %v3471, 0.0
  %v3476 = vsel %vm659, %v3472, 0.0
  %v3477 = vadd.f32 %v3475, %v3476
  %v3478 = vsel %vm659, %v3473, 0.0
  %v3479 = vadd.f32 %v3477, %v3478
  %v3480 = vsel %vm659, %v3474, 0.0
  %v3481 = vadd.f32 %v3479, %v3480
  %3482 = vadd.xlane.f32.xlu0 %v3481
  %v3483 = vpop.xlane.xlu0 %3482
  %v3484 = vrot.slane %v3483, 4
  %v3485 = vadd.f32 %v3483, %v3484
  %v3486 = vrot.slane %v3485, 2
  %v3487 = vadd.f32 %v3485, %v3486
  %v3488 = vrot.slane %v3487, 1
  %v3489 = vadd.f32 %v3487, %v3488
  %s3490 = vtos %v3489
  %v3491 = vmul.f32 %v3399, %v3399
  %v3492 = vmul.f32 %v3400, %v3400
  %v3493 = vmul.f32 %v3401, %v3401
  %v3494 = vmul.f32 %v3402, %v3402
  %v3495 = vsel %vm659, %v3491, 0.0
  %v3496 = vsel %vm659, %v3492, 0.0
  %v3497 = vadd.f32 %v3495, %v3496
  %v3498 = vsel %vm659, %v3493, 0.0
  %v3499 = vadd.f32 %v3497, %v3498
  %v3500 = vsel %vm659, %v3494, 0.0
  %v3501 = vadd.f32 %v3499, %v3500
  %3502 = vadd.xlane.f32.xlu0 %v3501
  %v3503 = vpop.xlane.xlu0 %3502
  %v3504 = vrot.slane %v3503, 4
  %v3505 = vadd.f32 %v3503, %v3504
  %v3506 = vrot.slane %v3505, 2
  %v3507 = vadd.f32 %v3505, %v3506
  %v3508 = vrot.slane %v3507, 1
  %v3509 = vadd.f32 %v3507, %v3508
  %s3510 = vtos %v3509
  %v3511 = vmul.f32 %v3399, %v3403
  %v3512 = vmul.f32 %v3400, %v3404
  %v3513 = vmul.f32 %v3401, %v3405
  %v3514 = vmul.f32 %v3402, %v3406
  %v3515 = vsel %vm659, %v3511, 0.0
  %v3516 = vsel %vm659, %v3512, 0.0
  %v3517 = vadd.f32 %v3515, %v3516
  %v3518 = vsel %vm659, %v3513, 0.0
  %v3519 = vadd.f32 %v3517, %v3518
  %v3520 = vsel %vm659, %v3514, 0.0
  %v3521 = vadd.f32 %v3519, %v3520
  %3522 = vadd.xlane.f32.xlu0 %v3521
  %v3523 = vpop.xlane.xlu0 %3522
  %v3524 = vrot.slane %v3523, 4
  %v3525 = vadd.f32 %v3523, %v3524
  %v3526 = vrot.slane %v3525, 2
  %v3527 = vadd.f32 %v3525, %v3526
  %v3528 = vrot.slane %v3527, 1
  %v3529 = vadd.f32 %v3527, %v3528
  %s3530 = vtos %v3529
  %v3531 = vmul.f32 %v3403, %v3403
  %v3532 = vmul.f32 %v3404, %v3404
  %v3533 = vmul.f32 %v3405, %v3405
  %v3534 = vmul.f32 %v3406, %v3406
  %v3535 = vsel %vm659, %v3531, 0.0
  %v3536 = vsel %vm659, %v3532, 0.0
  %v3537 = vadd.f32 %v3535, %v3536
  %v3538 = vsel %vm659, %v3533, 0.0
  %v3539 = vadd.f32 %v3537, %v3538
  %v3540 = vsel %vm659, %v3534, 0.0
  %v3541 = vadd.f32 %v3539, %v3540
  %3542 = vadd.xlane.f32.xlu0 %v3541
  %v3543 = vpop.xlane.xlu0 %3542
  %v3544 = vrot.slane %v3543, 4
  %v3545 = vadd.f32 %v3543, %v3544
  %v3546 = vrot.slane %v3545, 2
  %v3547 = vadd.f32 %v3545, %v3546
  %v3548 = vrot.slane %v3547, 1
  %v3549 = vadd.f32 %v3547, %v3548
  %s3550 = vtos %v3549
  %v3551 = vstv %s3430
  %v3552 = vsel %vm3276, %v3551, 0.0
  %v3553 = vstv %s3450
  %v3554 = vsel %vm3279, %v3553, %v3552
  %v3555 = vstv %s3470
  %v3556 = vsel %vm3282, %v3555, %v3554
  %v3557 = vstv %s3490
  %v3558 = vsel %vm3285, %v3557, %v3556
  %v3559 = vstv %s3510
  %v3560 = vsel %vm3288, %v3559, %v3558
  %v3561 = vstv %s3530
  %v3562 = vsel %vm3291, %v3561, %v3560
  %v3563 = vstv %s3550
  %v3564 = vsel %vm3294, %v3563, %v3562
  %3565 = vst [vmem:[%s4 + $0x2] sm:$0x1] %v3564
  %v3566 = vld [vmem:[%s3 + $0x1] sm:$0x1]
  %v3567 = vld [vmem:[%s3 + $0x2] sm:$0x1]
  %v3568 = vld [vmem:[%s3 + $0x3] sm:$0x1]
  %v3569 = vadd.f32 %v3566, %v3567
  %v3570 = vadd.f32 %v3569, %v3568
  %v3571 = vsel %vm3303, %v3570, 0.0
  %3572 = vadd.xlane.f32.xlu0 %v3571
  %v3573 = vpop.xlane.xlu0 %3572
  %v3574 = vrot.slane %v3573, 4
  %v3575 = vadd.f32 %v3573, %v3574
  %v3576 = vrot.slane %v3575, 2
  %v3577 = vadd.f32 %v3575, %v3576
  %v3578 = vrot.slane %v3577, 1
  %v3579 = vadd.f32 %v3577, %v3578
  %s3580 = vtos %v3579
  %v3581 = vmul.f32 %v3566, %v3566
  %v3582 = vsel %vm3303, %v3581, 0.0
  %3583 = vadd.xlane.f32.xlu0 %v3582
  %v3584 = vpop.xlane.xlu0 %3583
  %v3585 = vrot.slane %v3584, 4
  %v3586 = vadd.f32 %v3584, %v3585
  %v3587 = vrot.slane %v3586, 2
  %v3588 = vadd.f32 %v3586, %v3587
  %v3589 = vrot.slane %v3588, 1
  %v3590 = vadd.f32 %v3588, %v3589
  %s3591 = vtos %v3590
  %v3592 = vmul.f32 %v3566, %v3567
  %v3593 = vsel %vm3303, %v3592, 0.0
  %3594 = vadd.xlane.f32.xlu0 %v3593
  %v3595 = vpop.xlane.xlu0 %3594
  %v3596 = vrot.slane %v3595, 4
  %v3597 = vadd.f32 %v3595, %v3596
  %v3598 = vrot.slane %v3597, 2
  %v3599 = vadd.f32 %v3597, %v3598
  %v3600 = vrot.slane %v3599, 1
  %v3601 = vadd.f32 %v3599, %v3600
  %s3602 = vtos %v3601
  %v3603 = vmul.f32 %v3566, %v3568
  %v3604 = vsel %vm3303, %v3603, 0.0
  %3605 = vadd.xlane.f32.xlu0 %v3604
  %v3606 = vpop.xlane.xlu0 %3605
  %v3607 = vrot.slane %v3606, 4
  %v3608 = vadd.f32 %v3606, %v3607
  %v3609 = vrot.slane %v3608, 2
  %v3610 = vadd.f32 %v3608, %v3609
  %v3611 = vrot.slane %v3610, 1
  %v3612 = vadd.f32 %v3610, %v3611
  %s3613 = vtos %v3612
  %v3614 = vmul.f32 %v3567, %v3567
  %v3615 = vsel %vm3303, %v3614, 0.0
  %3616 = vadd.xlane.f32.xlu0 %v3615
  %v3617 = vpop.xlane.xlu0 %3616
  %v3618 = vrot.slane %v3617, 4
  %v3619 = vadd.f32 %v3617, %v3618
  %v3620 = vrot.slane %v3619, 2
  %v3621 = vadd.f32 %v3619, %v3620
  %v3622 = vrot.slane %v3621, 1
  %v3623 = vadd.f32 %v3621, %v3622
  %s3624 = vtos %v3623
  %v3625 = vmul.f32 %v3567, %v3568
  %v3626 = vsel %vm3303, %v3625, 0.0
  %3627 = vadd.xlane.f32.xlu0 %v3626
  %v3628 = vpop.xlane.xlu0 %3627
  %v3629 = vrot.slane %v3628, 4
  %v3630 = vadd.f32 %v3628, %v3629
  %v3631 = vrot.slane %v3630, 2
  %v3632 = vadd.f32 %v3630, %v3631
  %v3633 = vrot.slane %v3632, 1
  %v3634 = vadd.f32 %v3632, %v3633
  %s3635 = vtos %v3634
  %v3636 = vmul.f32 %v3568, %v3568
  %v3637 = vsel %vm3303, %v3636, 0.0
  %3638 = vadd.xlane.f32.xlu0 %v3637
  %v3639 = vpop.xlane.xlu0 %3638
  %v3640 = vrot.slane %v3639, 4
  %v3641 = vadd.f32 %v3639, %v3640
  %v3642 = vrot.slane %v3641, 2
  %v3643 = vadd.f32 %v3641, %v3642
  %v3644 = vrot.slane %v3643, 1
  %v3645 = vadd.f32 %v3643, %v3644
  %s3646 = vtos %v3645
  %v3647 = vstv %s3580
  %v3648 = vsel %vm3276, %v3647, 0.0
  %v3649 = vstv %s3591
  %v3650 = vsel %vm3279, %v3649, %v3648
  %v3651 = vstv %s3602
  %v3652 = vsel %vm3282, %v3651, %v3650
  %v3653 = vstv %s3613
  %v3654 = vsel %vm3285, %v3653, %v3652
  %v3655 = vstv %s3624
  %v3656 = vsel %vm3288, %v3655, %v3654
  %v3657 = vstv %s3635
  %v3658 = vsel %vm3291, %v3657, %v3656
  %v3659 = vstv %s3646
  %v3660 = vsel %vm3294, %v3659, %v3658
  %3661 = vst [vmem:[%s4 + $0x3] sm:$0x1] %v3660
  // Predicated region
  $region18: #{adamerging_forward.2} parent=0 // pred_check
    _
  $region19: #{adamerging_forward.2} parent=0 // pred_check_branch
    %3663 = sbr.rel (0) target = $region21
  $region20: #{adamerging_forward.2} parent=0 // pred_region
    _
  $region21: #{adamerging_forward.2} parent=0 // pred_fallthru
    _
  // Predicated region
  $region22: #{adamerging_forward.2} parent=0 // pred_check
    _
  $region23: #{adamerging_forward.2} parent=0 // pred_check_branch
    %3665 = sbr.rel (0) target = $region25
  $region24: #{adamerging_forward.2} parent=0 // pred_region
    _
  $region25: #{adamerging_forward.2} parent=0 // pred_fallthru
    _

</llo_original>
